<compile_context>
chip_gen: v6e
topology: v6e:2x2x1
jax: 0.10.0
libtpu: 0.0.40
codegen_flags: <defaults>
</compile_context>

<pallas_src>
import functools

import jax
import jax.numpy as jnp
from jax import lax
from jax.experimental import pallas as pl
from jax.experimental.pallas import tpu as pltpu


VMEM_LIMIT = 48 * 1024 * 1024  # below v7x 64 MiB physical, above default scoped


def _cdiv(a, b):
    return (a + b - 1) // b


def _round_up(a, b):
    return _cdiv(a, b) * b


def _pick_tm(m, target=512):
    """Row tile for the 1x1 GEMMs: big (HBM roofline) but >= 2 grid blocks."""
    tm = target
    while tm > 8 and m < 2 * tm:
        tm //= 2
    return max(8, min(tm, _round_up(m, 8)))


# ---------------------------------------------------------------------------
# Generic fused 1x1 conv kernel:  out_j = SiLU( sum_i x_i @ W_ij + b_j )
#   - n_in inputs (shared HBM read), n_out outputs, bf16 matmul, f32 accumulate.
#   - covers: cv1+cv2 fused (1 in, 2 out), bottleneck cv1 (1 in, 1 out),
#             cv3 over the channel concat (2 in, 1 out) with split weights.
# ---------------------------------------------------------------------------
def _conv1x1_kernel(*refs, n_in, n_out):
    xs = refs[:n_in]
    ws = refs[n_in:n_in + n_in * n_out]
    bs = refs[n_in + n_in * n_out:n_in + n_in * n_out + n_out]
    outs = refs[n_in + n_in * n_out + n_out:]

    xv = [x[...] for x in xs]                       # bf16 tiles
    for j in range(n_out):
        acc = jnp.dot(xv[0], ws[j * n_in][...],
                      preferred_element_type=jnp.float32)
        for i in range(1, n_in):
            acc = acc + jnp.dot(xv[i], ws[j * n_in + i][...],
                                preferred_element_type=jnp.float32)
        y = acc + bs[j][...]                        # folded BN bias (f32)
        y = y * jax.nn.sigmoid(y)                   # SiLU
        outs[j][...] = y.astype(outs[j].dtype)


def fused_conv1x1(xs, ws, bs, out_dtypes):
    """xs: list of (M, K_i) bf16.  ws: flat list (n_out * n_in) of (K_i, C_j)
    bf16 (BN scale folded in).  bs: list of (1, C_j) f32.  Returns list of
    (M, C_j) arrays."""
    n_in, n_out = len(xs), len(bs)
    m = xs[0].shape[0]
    tm = _pick_tm(m)
    mp = _round_up(m, tm)
    if mp != m:
        xs = [jnp.pad(x, ((0, mp - m), (0, 0))) for x in xs]

    in_specs = ([pl.BlockSpec((tm, int(x.shape[1])), lambda i: (i, 0)) for x in xs]
                + [pl.BlockSpec(tuple(w.shape), lambda i: (0, 0)) for w in ws]
                + [pl.BlockSpec(tuple(b.shape), lambda i: (0, 0)) for b in bs])
    out_specs = [pl.BlockSpec((tm, int(b.shape[1])), lambda i: (i, 0)) for b in bs]
    out_shape = [jax.ShapeDtypeStruct((mp, int(b.shape[1])), dt)
                 for b, dt in zip(bs, out_dtypes)]

    outs = pl.pallas_call(
        functools.partial(_conv1x1_kernel, n_in=n_in, n_out=n_out),
        out_shape=out_shape,
        grid_spec=pltpu.PrefetchScalarGridSpec(
            num_scalar_prefetch=0, grid=(mp // tm,),
            in_specs=in_specs, out_specs=out_specs),
        compiler_params=pltpu.CompilerParams(
            dimension_semantics=("parallel",),
            vmem_limit_bytes=VMEM_LIMIT),
    )(*xs, *ws, *bs)

    if mp != m:
        outs = [o[:m] for o in outs]
    return list(outs)


# ---------------------------------------------------------------------------
# Fused 3x3 conv (stride 1, "same" pad):  im2col fused in-kernel.
#
# The spatially padded image (N, H+2, W+2, Cin) is flattened to a canvas
# Xf = (N*(H+2)*(W+2), Cin).  For an output-canvas row r (top-left indexing),
#   out[r] = sum_{t=(ky,kx)} Xf[r + ky*Wp + kx] @ W_t,
# so a band of R output rows only needs input rows [b*R, b*R + R + 2*Wp + 2).
# Each grid step gets the band block plus a small halo block, builds the 9
# shifted tap windows in a VMEM scratch, and accumulates 9 bf16 matmuls in f32.
# Invalid canvas rows/columns (the pad positions) are computed but discarded.
# ---------------------------------------------------------------------------
def _conv3x3_kernel(*refs, R, R2, Wp, has_res):
    if has_res:
        x0_ref, x1_ref, w_ref, b_ref, res_ref, o_ref, xcat_ref = refs
    else:
        x0_ref, x1_ref, w_ref, b_ref, o_ref, xcat_ref = refs
        res_ref = None

    # Assemble band + halo in VMEM (this is the fused im2col staging buffer).
    xcat_ref[0:R, :] = x0_ref[...].astype(jnp.float32)
    xcat_ref[R:R + R2, :] = x1_ref[...].astype(jnp.float32)

    acc = None
    for t in range(9):
        ky, kx = divmod(t, 3)
        d = ky * Wp + kx
        lhs = xcat_ref[d:d + R, :].astype(jnp.bfloat16)   # shifted tap window
        part = jnp.dot(lhs, w_ref[t], preferred_element_type=jnp.float32)
        acc = part if acc is None else acc + part

    y = acc + b_ref[...]                 # folded BN bias
    y = y * jax.nn.sigmoid(y)            # SiLU
    if has_res:
        y = y + res_ref[...].astype(jnp.float32)   # Bottleneck shortcut
    o_ref[...] = y.astype(o_ref.dtype)


def conv_block_3x3(x_flat, p, N, H, W, residual=None):
    """x_flat: (N*H*W, Cin) bf16 -> (N*H*W, Cout) bf16.  `p['w']`: (9, Cin, Cout)
    bf16 (BN scale folded), `p['bias']`: (1, Cout) f32."""
    Cin = p["w"].shape[1]
    Cout = p["w"].shape[2]
    Hp, Wp = H + 2, W + 2
    Mc = N * Hp * Wp
    M = N * H * W

    # Spatial "same" padding (cheap glue, ~1.2x of x -- not a 9x im2col).
    x = x_flat.reshape(N, H, W, Cin)
    xp = jnp.pad(x, ((0, 0), (1, 1), (1, 1), (0, 0))).reshape(Mc, Cin)

    # Band size R (multiple of the halo block R2) and halo block size R2.
    R2 = _round_up(2 * Wp + 2, 8)
    target = 512 if Mc >= 1024 else max(R2, _round_up(max(Mc // 2, 8), 8))
    R = _cdiv(target, R2) * R2
    Mcp = _round_up(Mc, R)
    grid_n = Mcp // R

    # Tail padding so the (i+1)-th neighbor block always exists.
    xp = jnp.pad(xp, ((0, Mcp + R - Mc), (0, 0)))

    res_c = None
    if residual is not None:
        r = residual.reshape(N, H, W, Cout)
        r = jnp.pad(r, ((0, 0), (0, 2), (0, 2), (0, 0))).reshape(Mc, Cout)
        res_c = jnp.pad(r, ((0, Mcp - Mc), (0, 0)))

    in_specs = [
        pl.BlockSpec((R, Cin), lambda i: (i, 0)),                      # band
        pl.BlockSpec((R2, Cin), lambda i: ((i + 1) * (R // R2), 0)),   # halo
        pl.BlockSpec((9, Cin, Cout), lambda i: (0, 0, 0)),             # taps
        pl.BlockSpec((1, Cout), lambda i: (0, 0)),                     # bias
    ]
    args = [xp, xp, p["w"], p["bias"]]
    if res_c is not None:
        in_specs.append(pl.BlockSpec((R, Cout), lambda i: (i, 0)))
        args.append(res_c)

    out_c = pl.pallas_call(
        functools.partial(_conv3x3_kernel, R=R, R2=R2, Wp=Wp,
                          has_res=res_c is not None),
        out_shape=jax.ShapeDtypeStruct((Mcp, Cout), jnp.bfloat16),
        grid_spec=pltpu.PrefetchScalarGridSpec(
            num_scalar_prefetch=0, grid=(grid_n,),
            in_specs=in_specs,
            out_specs=pl.BlockSpec((R, Cout), lambda i: (i, 0)),
            scratch_shapes=[pltpu.VMEM((R + R2, Cin), jnp.float32)]),
        compiler_params=pltpu.CompilerParams(
            dimension_semantics=("parallel",),
            vmem_limit_bytes=VMEM_LIMIT),
    )(*args)

    # Strip the canvas pad rows / columns (valid region is [:H, :W]).
    out = out_c[:Mc].reshape(N, Hp, Wp, Cout)[:, :H, :W, :].reshape(M, Cout)
    return out


# ---------------------------------------------------------------------------
# Parameter construction (deterministic, synthetic) with BN folding into the
# weights (scale) and a per-channel bias.  Weights stored bf16, bias f32.
# ---------------------------------------------------------------------------
def _init_conv_params(key, cin, cout, k):
    kw, kg, kb, km, kv = jax.random.split(key, 5)
    w_oihw = jax.random.normal(kw, (cout, cin, k, k), jnp.float32) * 0.1
    gamma = 1.0 + 0.1 * jax.random.normal(kg, (cout,), jnp.float32)
    beta = 0.1 * jax.random.normal(kb, (cout,), jnp.float32)
    mean = 0.1 * jax.random.normal(km, (cout,), jnp.float32)
    var = jax.random.uniform(kv, (cout,), jnp.float32, minval=0.5, maxval=1.5)
    eps = 1e-5                                      # nn.BatchNorm2d default
    scale = gamma / jnp.sqrt(var + eps)
    bias = beta - mean * scale
    w_folded = w_oihw * scale[:, None, None, None]  # fold BN scale into weights
    if k == 1:
        w = jnp.transpose(w_folded[:, :, 0, 0], (1, 0)).astype(jnp.bfloat16)
    else:
        # (O, I, ky, kx) -> (ky, kx, I, O) -> (9, I, O), tap t = ky*3 + kx.
        w = jnp.transpose(w_folded, (2, 3, 1, 0)).reshape(
            k * k, cin, cout).astype(jnp.bfloat16)
    return {"w": w, "bias": bias.reshape(1, cout).astype(jnp.float32), "k": k}


def init_c3_params(key, c1, c2, n=1, shortcut=True, g=1, e=0.5):
    assert g == 1, "grouped conv not implemented"   # TODO(synk): groups
    c_ = int(c2 * e)
    keys = jax.random.split(key, 3 + 2 * n)
    return {
        "cv1": _init_conv_params(keys[0], c1, c_, 1),
        "cv2": _init_conv_params(keys[1], c1, c_, 1),
        "cv3": _init_conv_params(keys[2], 2 * c_, c2, 1),
        "m": [{"cv1": _init_conv_params(keys[3 + 2 * i], c_, c_, 1),
               "cv2": _init_conv_params(keys[4 + 2 * i], c_, c_, 3)}
              for i in range(n)],
        "shortcut": bool(shortcut),   # inside C3, Bottleneck has c1 == c2 == c_
        "c_": c_,
    }


# ---------------------------------------------------------------------------
# C3 forward (Pallas) and a matching pure-JAX reference for validation
# ---------------------------------------------------------------------------
def c3_forward(x_nchw, params):
    N, c1, H, W = x_nchw.shape
    c_ = params["c_"]
    c2 = params["cv3"]["bias"].shape[1]

    x = jnp.transpose(x_nchw, (0, 2, 3, 1)).astype(jnp.bfloat16)   # NCHW -> NHWC
    xf = x.reshape(N * H * W, c1)

    # cv1 and cv2 share one HBM read of x: one fused kernel, two outputs.
    y, y2 = fused_conv1x1(
        [xf],
        [params["cv1"]["w"], params["cv2"]["w"]],
        [params["cv1"]["bias"], params["cv2"]["bias"]],
        [jnp.bfloat16, jnp.bfloat16])

    for bp in params["m"]:
        (t,) = fused_conv1x1([y], [bp["cv1"]["w"]], [bp["cv1"]["bias"]],
                             [jnp.bfloat16])
        y = conv_block_3x3(t, bp["cv2"], N, H, W,
                           residual=y if params["shortcut"] else None)

    # cv3 over the channel concat, fused: two inputs + split weights,
    # so the (M, 2c_) concat never touches HBM.
    w3 = params["cv3"]["w"]
    (out,) = fused_conv1x1([y, y2], [w3[:c_], w3[c_:]],
                           [params["cv3"]["bias"]], [jnp.float32])
    return jnp.transpose(out.reshape(N, H, W, c2), (0, 3, 1, 2))   # -> NCHW


def _ref_conv(x_nhwc, p):
    k = p["k"]
    if k == 1:
        cin, cout = p["w"].shape
        w_hwio = p["w"].reshape(1, 1, cin, cout)
    else:
        _, cin, cout = p["w"].shape
        w_hwio = p["w"].reshape(k, k, cin, cout)
    y = lax.conv_general_dilated(
        x_nhwc, w_hwio, (1, 1), "SAME" if k == 3 else "VALID",
        dimension_numbers=("NHWC", "HWIO", "NHWC"),
        preferred_element_type=jnp.float32)
    y = y + p["bias"].reshape(1, 1, 1, cout)
    return y * jax.nn.sigmoid(y)     # f32; caller casts for chaining


def c3_reference(x_nchw, params):
    x = jnp.transpose(x_nchw, (0, 2, 3, 1)).astype(jnp.bfloat16)
    y = _ref_conv(x, params["cv1"]).astype(jnp.bfloat16)
    y2 = _ref_conv(x, params["cv2"]).astype(jnp.bfloat16)
    for bp in params["m"]:
        t = _ref_conv(y, bp["cv1"]).astype(jnp.bfloat16)
        t = _ref_conv(t, bp["cv2"])               # f32
        if params["shortcut"]:
            t = t + y.astype(jnp.float32)
        y = t.astype(jnp.bfloat16)
    cat = jnp.concatenate([y, y2], axis=-1)
    out = _ref_conv(cat, params["cv3"])           # f32
    return jnp.transpose(out, (0, 3, 1, 2))


if __name__ == "__main__":
    key = jax.random.PRNGKey(0)
    kx, kp = jax.random.split(key)

    # Small shapes consistent with C3: batch=2, c1=c2=8 (so c_=4), spatial=16.
    c1, c2, n = 8, 8, 1
    x = jax.random.normal(kx, (2, c1, 16, 16), jnp.float32)
    params = init_c3_params(kp, c1, c2, n=n, shortcut=True, g=1, e=0.5)

    fwd = jax.jit(lambda inp: c3_forward(inp, params))
    out = jax.block_until_ready(fwd(x))
    ref = jax.block_until_ready(c3_reference(x, params))

    assert out.shape == (2, c2, 16, 16), out.shape
    err = float(jnp.max(jnp.abs(out - ref)))
    # bf16 matmul path vs f32-accumulated bf16 reference: loose-ish tolerance.
    assert jnp.allclose(out, ref, atol=2e-2, rtol=2e-2), f"mismatch, max err {err}"
    print("KERNEL_OK")
</pallas_src>

<mosaic_0001>
module attributes {stable_mosaic.version = 11 : i64} {
  func.func @_conv1x1_kernel(%arg0: i32, %arg1: memref<256x8xbf16, #tpu.memory_space<vmem>>, %arg2: memref<8x4xbf16, #tpu.memory_space<vmem>>, %arg3: memref<8x4xbf16, #tpu.memory_space<vmem>>, %arg4: memref<1x4xf32, #tpu.memory_space<vmem>>, %arg5: memref<1x4xf32, #tpu.memory_space<vmem>>, %arg6: memref<256x4xbf16, #tpu.memory_space<vmem>>, %arg7: memref<256x4xbf16, #tpu.memory_space<vmem>>) attributes {dimension_semantics = [#tpu.dimension_semantics<parallel>], iteration_bounds = array<i64: 2>, scalar_prefetch = 0 : i64, scratch_operands = 0 : i64, tpu.core_type = #tpu.core_type<tc>, window_params = [{transform_indices = @transform_0, window_bounds = array<i64: 256, 8>}, {pipeline_mode = #tpu.pipeline_mode<synchronous>, transform_indices = @transform_1, window_bounds = array<i64: 8, 4>}, {pipeline_mode = #tpu.pipeline_mode<synchronous>, transform_indices = @transform_2, window_bounds = array<i64: 8, 4>}, {pipeline_mode = #tpu.pipeline_mode<synchronous>, transform_indices = @transform_3, window_bounds = array<i64: 1, 4>}, {pipeline_mode = #tpu.pipeline_mode<synchronous>, transform_indices = @transform_4, window_bounds = array<i64: 1, 4>}, {transform_indices = @transform_5, window_bounds = array<i64: 256, 4>}, {transform_indices = @transform_6, window_bounds = array<i64: 256, 4>}]} {
    %c0 = arith.constant 0 : index
    %c0_0 = arith.constant 0 : index
    %0 = vector.load %arg1[%c0, %c0_0] : memref<256x8xbf16, #tpu.memory_space<vmem>>, vector<256x8xbf16>
    %c0_1 = arith.constant 0 : index
    %c0_2 = arith.constant 0 : index
    %1 = vector.load %arg2[%c0_1, %c0_2] : memref<8x4xbf16, #tpu.memory_space<vmem>>, vector<8x4xbf16>
    %cst = arith.constant dense<0.000000e+00> : vector<256x4xf32>
    %2 = tpu.matmul %0, %1, %cst {dimension_numbers = #tpu.dot_dimension_numbers<[1], [0], [0], [1], [0, 0, 1, 1], [], []>} : vector<256x8xbf16>, vector<8x4xbf16>, vector<256x4xf32> -> vector<256x4xf32>
    %c0_3 = arith.constant 0 : index
    %c0_4 = arith.constant 0 : index
    %3 = vector.load %arg4[%c0_3, %c0_4] : memref<1x4xf32, #tpu.memory_space<vmem>>, vector<1x4xf32>
    %4 = vector.broadcast %3 : vector<1x4xf32> to vector<256x4xf32>
    %5 = arith.addf %2, %4 : vector<256x4xf32>
    %6 = arith.negf %5 : vector<256x4xf32>
    %7 = math.exp %6 : vector<256x4xf32>
    %cst_5 = arith.constant 1.000000e+00 : f32
    %8 = vector.broadcast %cst_5 : f32 to vector<256x4xf32>
    %9 = arith.addf %8, %7 : vector<256x4xf32>
    %10 = arith.divf %8, %9 : vector<256x4xf32>
    %11 = arith.mulf %5, %10 : vector<256x4xf32>
    %12 = arith.truncf %11 : vector<256x4xf32> to vector<256x4xbf16>
    %c0_6 = arith.constant 0 : index
    %c0_7 = arith.constant 0 : index
    %13 = vector.load %arg6[%c0_6, %c0_7] : memref<256x4xbf16, #tpu.memory_space<vmem>>, vector<256x4xbf16>
    tpu.vector_store %arg6[%c0_6, %c0_7], %12 {strides = array<i32>} : memref<256x4xbf16, #tpu.memory_space<vmem>>, vector<256x4xbf16>,
    %c0_8 = arith.constant 0 : index
    %c0_9 = arith.constant 0 : index
    %14 = vector.load %arg3[%c0_8, %c0_9] : memref<8x4xbf16, #tpu.memory_space<vmem>>, vector<8x4xbf16>
    %cst_10 = arith.constant dense<0.000000e+00> : vector<256x4xf32>
    %15 = tpu.matmul %0, %14, %cst_10 {dimension_numbers = #tpu.dot_dimension_numbers<[1], [0], [0], [1], [0, 0, 1, 1], [], []>} : vector<256x8xbf16>, vector<8x4xbf16>, vector<256x4xf32> -> vector<256x4xf32>
    %c0_11 = arith.constant 0 : index
    %c0_12 = arith.constant 0 : index
    %16 = vector.load %arg5[%c0_11, %c0_12] : memref<1x4xf32, #tpu.memory_space<vmem>>, vector<1x4xf32>
    %17 = vector.broadcast %16 : vector<1x4xf32> to vector<256x4xf32>
    %18 = arith.addf %15, %17 : vector<256x4xf32>
    %19 = arith.negf %18 : vector<256x4xf32>
    %20 = math.exp %19 : vector<256x4xf32>
    %cst_13 = arith.constant 1.000000e+00 : f32
    %21 = vector.broadcast %cst_13 : f32 to vector<256x4xf32>
    %22 = arith.addf %21, %20 : vector<256x4xf32>
    %23 = arith.divf %21, %22 : vector<256x4xf32>
    %24 = arith.mulf %18, %23 : vector<256x4xf32>
    %25 = arith.truncf %24 : vector<256x4xf32> to vector<256x4xbf16>
    %c0_14 = arith.constant 0 : index
    %c0_15 = arith.constant 0 : index
    %26 = vector.load %arg7[%c0_14, %c0_15] : memref<256x4xbf16, #tpu.memory_space<vmem>>, vector<256x4xbf16>
    tpu.vector_store %arg7[%c0_14, %c0_15], %25 {strides = array<i32>} : memref<256x4xbf16, #tpu.memory_space<vmem>>, vector<256x4xbf16>,
    return
  }
  func.func @transform_0(%arg0: i32) -> (i32, i32) {
    %c0_i32 = arith.constant 0 : i32
    %c0_i32_0 = arith.constant 0 : i32
    return %arg0, %c0_i32 : i32, i32
  }
  func.func @transform_1(%arg0: i32) -> (i32, i32) {
    %c0_i32 = arith.constant 0 : i32
    %c0_i32_0 = arith.constant 0 : i32
    %c0_i32_1 = arith.constant 0 : i32
    return %c0_i32, %c0_i32_0 : i32, i32
  }
  func.func @transform_2(%arg0: i32) -> (i32, i32) {
    %c0_i32 = arith.constant 0 : i32
    %c0_i32_0 = arith.constant 0 : i32
    %c0_i32_1 = arith.constant 0 : i32
    return %c0_i32, %c0_i32_0 : i32, i32
  }
  func.func @transform_3(%arg0: i32) -> (i32, i32) {
    %c0_i32 = arith.constant 0 : i32
    %c0_i32_0 = arith.constant 0 : i32
    %c0_i32_1 = arith.constant 0 : i32
    return %c0_i32, %c0_i32_0 : i32, i32
  }
  func.func @transform_4(%arg0: i32) -> (i32, i32) {
    %c0_i32 = arith.constant 0 : i32
    %c0_i32_0 = arith.constant 0 : i32
    %c0_i32_1 = arith.constant 0 : i32
    return %c0_i32, %c0_i32_0 : i32, i32
  }
  func.func @transform_5(%arg0: i32) -> (i32, i32) {
    %c0_i32 = arith.constant 0 : i32
    %c0_i32_0 = arith.constant 0 : i32
    return %arg0, %c0_i32 : i32, i32
  }
  func.func @transform_6(%arg0: i32) -> (i32, i32) {
    %c0_i32 = arith.constant 0 : i32
    %c0_i32_0 = arith.constant 0 : i32
    return %arg0, %c0_i32 : i32, i32
  }
}

module attributes {stable_mosaic.version = 11 : i64} {
  func.func @_conv1x1_kernel(%arg0: i32, %arg1: memref<256x4xbf16, #tpu.memory_space<vmem>>, %arg2: memref<4x4xbf16, #tpu.memory_space<vmem>>, %arg3: memref<1x4xf32, #tpu.memory_space<vmem>>, %arg4: memref<256x4xbf16, #tpu.memory_space<vmem>>) attributes {dimension_semantics = [#tpu.dimension_semantics<parallel>], iteration_bounds = array<i64: 2>, scalar_prefetch = 0 : i64, scratch_operands = 0 : i64, tpu.core_type = #tpu.core_type<tc>, window_params = [{transform_indices = @transform_0, window_bounds = array<i64: 256, 4>}, {pipeline_mode = #tpu.pipeline_mode<synchronous>, transform_indices = @transform_1, window_bounds = array<i64: 4, 4>}, {pipeline_mode = #tpu.pipeline_mode<synchronous>, transform_indices = @transform_2, window_bounds = array<i64: 1, 4>}, {transform_indices = @transform_3, window_bounds = array<i64: 256, 4>}]} {
    %c0 = arith.constant 0 : index
    %c0_0 = arith.constant 0 : index
    %0 = vector.load %arg1[%c0, %c0_0] : memref<256x4xbf16, #tpu.memory_space<vmem>>, vector<256x4xbf16>
    %c0_1 = arith.constant 0 : index
    %c0_2 = arith.constant 0 : index
    %1 = vector.load %arg2[%c0_1, %c0_2] : memref<4x4xbf16, #tpu.memory_space<vmem>>, vector<4x4xbf16>
    %cst = arith.constant dense<0.000000e+00> : vector<256x4xf32>
    %2 = tpu.matmul %0, %1, %cst {dimension_numbers = #tpu.dot_dimension_numbers<[1], [0], [0], [1], [0, 0, 1, 1], [], []>} : vector<256x4xbf16>, vector<4x4xbf16>, vector<256x4xf32> -> vector<256x4xf32>
    %c0_3 = arith.constant 0 : index
    %c0_4 = arith.constant 0 : index
    %3 = vector.load %arg3[%c0_3, %c0_4] : memref<1x4xf32, #tpu.memory_space<vmem>>, vector<1x4xf32>
    %4 = vector.broadcast %3 : vector<1x4xf32> to vector<256x4xf32>
    %5 = arith.addf %2, %4 : vector<256x4xf32>
    %6 = arith.negf %5 : vector<256x4xf32>
    %7 = math.exp %6 : vector<256x4xf32>
    %cst_5 = arith.constant 1.000000e+00 : f32
    %8 = vector.broadcast %cst_5 : f32 to vector<256x4xf32>
    %9 = arith.addf %8, %7 : vector<256x4xf32>
    %10 = arith.divf %8, %9 : vector<256x4xf32>
    %11 = arith.mulf %5, %10 : vector<256x4xf32>
    %12 = arith.truncf %11 : vector<256x4xf32> to vector<256x4xbf16>
    %c0_6 = arith.constant 0 : index
    %c0_7 = arith.constant 0 : index
    %13 = vector.load %arg4[%c0_6, %c0_7] : memref<256x4xbf16, #tpu.memory_space<vmem>>, vector<256x4xbf16>
    tpu.vector_store %arg4[%c0_6, %c0_7], %12 {strides = array<i32>} : memref<256x4xbf16, #tpu.memory_space<vmem>>, vector<256x4xbf16>,
    return
  }
  func.func @transform_0(%arg0: i32) -> (i32, i32) {
    %c0_i32 = arith.constant 0 : i32
    %c0_i32_0 = arith.constant 0 : i32
    return %arg0, %c0_i32 : i32, i32
  }
  func.func @transform_1(%arg0: i32) -> (i32, i32) {
    %c0_i32 = arith.constant 0 : i32
    %c0_i32_0 = arith.constant 0 : i32
    %c0_i32_1 = arith.constant 0 : i32
    return %c0_i32, %c0_i32_0 : i32, i32
  }
  func.func @transform_2(%arg0: i32) -> (i32, i32) {
    %c0_i32 = arith.constant 0 : i32
    %c0_i32_0 = arith.constant 0 : i32
    %c0_i32_1 = arith.constant 0 : i32
    return %c0_i32, %c0_i32_0 : i32, i32
  }
  func.func @transform_3(%arg0: i32) -> (i32, i32) {
    %c0_i32 = arith.constant 0 : i32
    %c0_i32_0 = arith.constant 0 : i32
    return %arg0, %c0_i32 : i32, i32
  }
}

module attributes {stable_mosaic.version = 11 : i64} {
  func.func @_conv3x3_kernel(%arg0: i32, %arg1: memref<360x4xbf16, #tpu.memory_space<vmem>>, %arg2: memref<40x4xbf16, #tpu.memory_space<vmem>>, %arg3: memref<9x4x4xbf16, #tpu.memory_space<vmem>>, %arg4: memref<1x4xf32, #tpu.memory_space<vmem>>, %arg5: memref<360x4xbf16, #tpu.memory_space<vmem>>, %arg6: memref<360x4xbf16, #tpu.memory_space<vmem>>, %arg7: memref<400x4xf32, #tpu.memory_space<vmem>>) attributes {dimension_semantics = [#tpu.dimension_semantics<parallel>], iteration_bounds = array<i64: 2>, scalar_prefetch = 0 : i64, scratch_operands = 1 : i64, tpu.core_type = #tpu.core_type<tc>, window_params = [{transform_indices = @transform_0, window_bounds = array<i64: 360, 4>}, {transform_indices = @transform_1, window_bounds = array<i64: 40, 4>}, {pipeline_mode = #tpu.pipeline_mode<synchronous>, transform_indices = @transform_2, window_bounds = array<i64: 9, 4, 4>}, {pipeline_mode = #tpu.pipeline_mode<synchronous>, transform_indices = @transform_3, window_bounds = array<i64: 1, 4>}, {transform_indices = @transform_4, window_bounds = array<i64: 360, 4>}, {transform_indices = @transform_5, window_bounds = array<i64: 360, 4>}]} {
    %c0 = arith.constant 0 : index
    %c0_0 = arith.constant 0 : index
    %0 = vector.load %arg1[%c0, %c0_0] : memref<360x4xbf16, #tpu.memory_space<vmem>>, vector<360x4xbf16>
    %1 = arith.extf %0 : vector<360x4xbf16> to vector<360x4xf32>
    %c0_1 = arith.constant 0 : index
    %c0_2 = arith.constant 0 : index
    %2 = vector.load %arg7[%c0_1, %c0_2] : memref<400x4xf32, #tpu.memory_space<vmem>>, vector<360x4xf32>
    tpu.vector_store %arg7[%c0_1, %c0_2], %1 {strides = array<i32>} : memref<400x4xf32, #tpu.memory_space<vmem>>, vector<360x4xf32>,
    %c0_3 = arith.constant 0 : index
    %c0_4 = arith.constant 0 : index
    %3 = vector.load %arg2[%c0_3, %c0_4] : memref<40x4xbf16, #tpu.memory_space<vmem>>, vector<40x4xbf16>
    %4 = arith.extf %3 : vector<40x4xbf16> to vector<40x4xf32>
    %c360 = arith.constant 360 : index
    %c0_5 = arith.constant 0 : index
    %5 = vector.load %arg7[%c360, %c0_5] : memref<400x4xf32, #tpu.memory_space<vmem>>, vector<40x4xf32>
    tpu.vector_store %arg7[%c360, %c0_5], %4 {strides = array<i32>} : memref<400x4xf32, #tpu.memory_space<vmem>>, vector<40x4xf32>,
    %c0_6 = arith.constant 0 : index
    %c0_7 = arith.constant 0 : index
    %6 = vector.load %arg7[%c0_6, %c0_7] : memref<400x4xf32, #tpu.memory_space<vmem>>, vector<360x4xf32>
    %7 = arith.truncf %6 : vector<360x4xf32> to vector<360x4xbf16>
    %c0_8 = arith.constant 0 : index
    %c0_9 = arith.constant 0 : index
    %c0_10 = arith.constant 0 : index
    %8 = vector.load %arg3[%c0_8, %c0_9, %c0_10] : memref<9x4x4xbf16, #tpu.memory_space<vmem>>, vector<1x4x4xbf16>
    %9 = vector.shape_cast %8 : vector<1x4x4xbf16> to vector<4x4xbf16>
    %cst = arith.constant dense<0.000000e+00> : vector<360x4xf32>
    %10 = tpu.matmul %7, %9, %cst {dimension_numbers = #tpu.dot_dimension_numbers<[1], [0], [0], [1], [0, 0, 1, 1], [], []>} : vector<360x4xbf16>, vector<4x4xbf16>, vector<360x4xf32> -> vector<360x4xf32>
    %c1 = arith.constant 1 : index
    %c0_11 = arith.constant 0 : index
    %11 = vector.load %arg7[%c1, %c0_11] : memref<400x4xf32, #tpu.memory_space<vmem>>, vector<360x4xf32>
    %12 = arith.truncf %11 : vector<360x4xf32> to vector<360x4xbf16>
    %c1_12 = arith.constant 1 : index
    %c0_13 = arith.constant 0 : index
    %c0_14 = arith.constant 0 : index
    %13 = vector.load %arg3[%c1_12, %c0_13, %c0_14] : memref<9x4x4xbf16, #tpu.memory_space<vmem>>, vector<1x4x4xbf16>
    %14 = vector.shape_cast %13 : vector<1x4x4xbf16> to vector<4x4xbf16>
    %cst_15 = arith.constant dense<0.000000e+00> : vector<360x4xf32>
    %15 = tpu.matmul %12, %14, %cst_15 {dimension_numbers = #tpu.dot_dimension_numbers<[1], [0], [0], [1], [0, 0, 1, 1], [], []>} : vector<360x4xbf16>, vector<4x4xbf16>, vector<360x4xf32> -> vector<360x4xf32>
    %16 = arith.addf %10, %15 : vector<360x4xf32>
    %c2 = arith.constant 2 : index
    %c0_16 = arith.constant 0 : index
    %17 = vector.load %arg7[%c2, %c0_16] : memref<400x4xf32, #tpu.memory_space<vmem>>, vector<360x4xf32>
    %18 = arith.truncf %17 : vector<360x4xf32> to vector<360x4xbf16>
    %c2_17 = arith.constant 2 : index
    %c0_18 = arith.constant 0 : index
    %c0_19 = arith.constant 0 : index
    %19 = vector.load %arg3[%c2_17, %c0_18, %c0_19] : memref<9x4x4xbf16, #tpu.memory_space<vmem>>, vector<1x4x4xbf16>
    %20 = vector.shape_cast %19 : vector<1x4x4xbf16> to vector<4x4xbf16>
    %cst_20 = arith.constant dense<0.000000e+00> : vector<360x4xf32>
    %21 = tpu.matmul %18, %20, %cst_20 {dimension_numbers = #tpu.dot_dimension_numbers<[1], [0], [0], [1], [0, 0, 1, 1], [], []>} : vector<360x4xbf16>, vector<4x4xbf16>, vector<360x4xf32> -> vector<360x4xf32>
    %22 = arith.addf %16, %21 : vector<360x4xf32>
    %c18 = arith.constant 18 : index
    %c0_21 = arith.constant 0 : index
    %23 = vector.load %arg7[%c18, %c0_21] : memref<400x4xf32, #tpu.memory_space<vmem>>, vector<360x4xf32>
    %24 = arith.truncf %23 : vector<360x4xf32> to vector<360x4xbf16>
    %c3 = arith.constant 3 : index
    %c0_22 = arith.constant 0 : index
    %c0_23 = arith.constant 0 : index
    %25 = vector.load %arg3[%c3, %c0_22, %c0_23] : memref<9x4x4xbf16, #tpu.memory_space<vmem>>, vector<1x4x4xbf16>
    %26 = vector.shape_cast %25 : vector<1x4x4xbf16> to vector<4x4xbf16>
    %cst_24 = arith.constant dense<0.000000e+00> : vector<360x4xf32>
    %27 = tpu.matmul %24, %26, %cst_24 {dimension_numbers = #tpu.dot_dimension_numbers<[1], [0], [0], [1], [0, 0, 1, 1], [], []>} : vector<360x4xbf16>, vector<4x4xbf16>, vector<360x4xf32> -> vector<360x4xf32>
    %28 = arith.addf %22, %27 : vector<360x4xf32>
    %c19 = arith.constant 19 : index
    %c0_25 = arith.constant 0 : index
    %29 = vector.load %arg7[%c19, %c0_25] : memref<400x4xf32, #tpu.memory_space<vmem>>, vector<360x4xf32>
    %30 = arith.truncf %29 : vector<360x4xf32> to vector<360x4xbf16>
    %c4 = arith.constant 4 : index
    %c0_26 = arith.constant 0 : index
    %c0_27 = arith.constant 0 : index
    %31 = vector.load %arg3[%c4, %c0_26, %c0_27] : memref<9x4x4xbf16, #tpu.memory_space<vmem>>, vector<1x4x4xbf16>
    %32 = vector.shape_cast %31 : vector<1x4x4xbf16> to vector<4x4xbf16>
    %cst_28 = arith.constant dense<0.000000e+00> : vector<360x4xf32>
    %33 = tpu.matmul %30, %32, %cst_28 {dimension_numbers = #tpu.dot_dimension_numbers<[1], [0], [0], [1], [0, 0, 1, 1], [], []>} : vector<360x4xbf16>, vector<4x4xbf16>, vector<360x4xf32> -> vector<360x4xf32>
    %34 = arith.addf %28, %33 : vector<360x4xf32>
    %c20 = arith.constant 20 : index
    %c0_29 = arith.constant 0 : index
    %35 = vector.load %arg7[%c20, %c0_29] : memref<400x4xf32, #tpu.memory_space<vmem>>, vector<360x4xf32>
    %36 = arith.truncf %35 : vector<360x4xf32> to vector<360x4xbf16>
    %c5 = arith.constant 5 : index
    %c0_30 = arith.constant 0 : index
    %c0_31 = arith.constant 0 : index
    %37 = vector.load %arg3[%c5, %c0_30, %c0_31] : memref<9x4x4xbf16, #tpu.memory_space<vmem>>, vector<1x4x4xbf16>
    %38 = vector.shape_cast %37 : vector<1x4x4xbf16> to vector<4x4xbf16>
    %cst_32 = arith.constant dense<0.000000e+00> : vector<360x4xf32>
    %39 = tpu.matmul %36, %38, %cst_32 {dimension_numbers = #tpu.dot_dimension_numbers<[1], [0], [0], [1], [0, 0, 1, 1], [], []>} : vector<360x4xbf16>, vector<4x4xbf16>, vector<360x4xf32> -> vector<360x4xf32>
    %40 = arith.addf %34, %39 : vector<360x4xf32>
    %c36 = arith.constant 36 : index
    %c0_33 = arith.constant 0 : index
    %41 = vector.load %arg7[%c36, %c0_33] : memref<400x4xf32, #tpu.memory_space<vmem>>, vector<360x4xf32>
    %42 = arith.truncf %41 : vector<360x4xf32> to vector<360x4xbf16>
    %c6 = arith.constant 6 : index
    %c0_34 = arith.constant 0 : index
    %c0_35 = arith.constant 0 : index
    %43 = vector.load %arg3[%c6, %c0_34, %c0_35] : memref<9x4x4xbf16, #tpu.memory_space<vmem>>, vector<1x4x4xbf16>
    %44 = vector.shape_cast %43 : vector<1x4x4xbf16> to vector<4x4xbf16>
    %cst_36 = arith.constant dense<0.000000e+00> : vector<360x4xf32>
    %45 = tpu.matmul %42, %44, %cst_36 {dimension_numbers = #tpu.dot_dimension_numbers<[1], [0], [0], [1], [0, 0, 1, 1], [], []>} : vector<360x4xbf16>, vector<4x4xbf16>, vector<360x4xf32> -> vector<360x4xf32>
    %46 = arith.addf %40, %45 : vector<360x4xf32>
    %c37 = arith.constant 37 : index
    %c0_37 = arith.constant 0 : index
    %47 = vector.load %arg7[%c37, %c0_37] : memref<400x4xf32, #tpu.memory_space<vmem>>, vector<360x4xf32>
    %48 = arith.truncf %47 : vector<360x4xf32> to vector<360x4xbf16>
    %c7 = arith.constant 7 : index
    %c0_38 = arith.constant 0 : index
    %c0_39 = arith.constant 0 : index
    %49 = vector.load %arg3[%c7, %c0_38, %c0_39] : memref<9x4x4xbf16, #tpu.memory_space<vmem>>, vector<1x4x4xbf16>
    %50 = vector.shape_cast %49 : vector<1x4x4xbf16> to vector<4x4xbf16>
    %cst_40 = arith.constant dense<0.000000e+00> : vector<360x4xf32>
    %51 = tpu.matmul %48, %50, %cst_40 {dimension_numbers = #tpu.dot_dimension_numbers<[1], [0], [0], [1], [0, 0, 1, 1], [], []>} : vector<360x4xbf16>, vector<4x4xbf16>, vector<360x4xf32> -> vector<360x4xf32>
    %52 = arith.addf %46, %51 : vector<360x4xf32>
    %c38 = arith.constant 38 : index
    %c0_41 = arith.constant 0 : index
    %53 = vector.load %arg7[%c38, %c0_41] : memref<400x4xf32, #tpu.memory_space<vmem>>, vector<360x4xf32>
    %54 = arith.truncf %53 : vector<360x4xf32> to vector<360x4xbf16>
    %c8 = arith.constant 8 : index
    %c0_42 = arith.constant 0 : index
    %c0_43 = arith.constant 0 : index
    %55 = vector.load %arg3[%c8, %c0_42, %c0_43] : memref<9x4x4xbf16, #tpu.memory_space<vmem>>, vector<1x4x4xbf16>
    %56 = vector.shape_cast %55 : vector<1x4x4xbf16> to vector<4x4xbf16>
    %cst_44 = arith.constant dense<0.000000e+00> : vector<360x4xf32>
    %57 = tpu.matmul %54, %56, %cst_44 {dimension_numbers = #tpu.dot_dimension_numbers<[1], [0], [0], [1], [0, 0, 1, 1], [], []>} : vector<360x4xbf16>, vector<4x4xbf16>, vector<360x4xf32> -> vector<360x4xf32>
    %58 = arith.addf %52, %57 : vector<360x4xf32>
    %c0_45 = arith.constant 0 : index
    %c0_46 = arith.constant 0 : index
    %59 = vector.load %arg4[%c0_45, %c0_46] : memref<1x4xf32, #tpu.memory_space<vmem>>, vector<1x4xf32>
    %60 = vector.broadcast %59 : vector<1x4xf32> to vector<360x4xf32>
    %61 = arith.addf %58, %60 : vector<360x4xf32>
    %62 = arith.negf %61 : vector<360x4xf32>
    %63 = math.exp %62 : vector<360x4xf32>
    %cst_47 = arith.constant 1.000000e+00 : f32
    %64 = vector.broadcast %cst_47 : f32 to vector<360x4xf32>
    %65 = arith.addf %64, %63 : vector<360x4xf32>
    %66 = arith.divf %64, %65 : vector<360x4xf32>
    %67 = arith.mulf %61, %66 : vector<360x4xf32>
    %c0_48 = arith.constant 0 : index
    %c0_49 = arith.constant 0 : index
    %68 = vector.load %arg5[%c0_48, %c0_49] : memref<360x4xbf16, #tpu.memory_space<vmem>>, vector<360x4xbf16>
    %69 = arith.extf %68 : vector<360x4xbf16> to vector<360x4xf32>
    %70 = arith.addf %67, %69 : vector<360x4xf32>
    %71 = arith.truncf %70 : vector<360x4xf32> to vector<360x4xbf16>
    %c0_50 = arith.constant 0 : index
    %c0_51 = arith.constant 0 : index
    %72 = vector.load %arg6[%c0_50, %c0_51] : memref<360x4xbf16, #tpu.memory_space<vmem>>, vector<360x4xbf16>
    tpu.vector_store %arg6[%c0_50, %c0_51], %71 {strides = array<i32>} : memref<360x4xbf16, #tpu.memory_space<vmem>>, vector<360x4xbf16>,
    return
  }
  func.func @transform_0(%arg0: i32) -> (i32, i32) {
    %c0_i32 = arith.constant 0 : i32
    %c0_i32_0 = arith.constant 0 : i32
    return %arg0, %c0_i32 : i32, i32
  }
  func.func @transform_1(%arg0: i32) -> (i32, i32) {
    %c1_i32 = arith.constant 1 : i32
    %0 = arith.addi %arg0, %c1_i32 : i32
    %c9_i32 = arith.constant 9 : i32
    %1 = arith.muli %0, %c9_i32 : i32
    %c0_i32 = arith.constant 0 : i32
    %c0_i32_0 = arith.constant 0 : i32
    return %1, %c0_i32 : i32, i32
  }
  func.func @transform_2(%arg0: i32) -> (i32, i32, i32) {
    %c0_i32 = arith.constant 0 : i32
    %c0_i32_0 = arith.constant 0 : i32
    %c0_i32_1 = arith.constant 0 : i32
    %c0_i32_2 = arith.constant 0 : i32
    return %c0_i32, %c0_i32_0, %c0_i32_1 : i32, i32, i32
  }
  func.func @transform_3(%arg0: i32) -> (i32, i32) {
    %c0_i32 = arith.constant 0 : i32
    %c0_i32_0 = arith.constant 0 : i32
    %c0_i32_1 = arith.constant 0 : i32
    return %c0_i32, %c0_i32_0 : i32, i32
  }
  func.func @transform_4(%arg0: i32) -> (i32, i32) {
    %c0_i32 = arith.constant 0 : i32
    %c0_i32_0 = arith.constant 0 : i32
    return %arg0, %c0_i32 : i32, i32
  }
  func.func @transform_5(%arg0: i32) -> (i32, i32) {
    %c0_i32 = arith.constant 0 : i32
    %c0_i32_0 = arith.constant 0 : i32
    return %arg0, %c0_i32 : i32, i32
  }
}

module attributes {stable_mosaic.version = 11 : i64} {
  func.func @_conv1x1_kernel(%arg0: i32, %arg1: memref<256x4xbf16, #tpu.memory_space<vmem>>, %arg2: memref<256x4xbf16, #tpu.memory_space<vmem>>, %arg3: memref<4x8xbf16, #tpu.memory_space<vmem>>, %arg4: memref<4x8xbf16, #tpu.memory_space<vmem>>, %arg5: memref<1x8xf32, #tpu.memory_space<vmem>>, %arg6: memref<256x8xf32, #tpu.memory_space<vmem>>) attributes {dimension_semantics = [#tpu.dimension_semantics<parallel>], iteration_bounds = array<i64: 2>, scalar_prefetch = 0 : i64, scratch_operands = 0 : i64, tpu.core_type = #tpu.core_type<tc>, window_params = [{transform_indices = @transform_0, window_bounds = array<i64: 256, 4>}, {transform_indices = @transform_1, window_bounds = array<i64: 256, 4>}, {pipeline_mode = #tpu.pipeline_mode<synchronous>, transform_indices = @transform_2, window_bounds = array<i64: 4, 8>}, {pipeline_mode = #tpu.pipeline_mode<synchronous>, transform_indices = @transform_3, window_bounds = array<i64: 4, 8>}, {pipeline_mode = #tpu.pipeline_mode<synchronous>, transform_indices = @transform_4, window_bounds = array<i64: 1, 8>}, {transform_indices = @transform_5, window_bounds = array<i64: 256, 8>}]} {
    %c0 = arith.constant 0 : index
    %c0_0 = arith.constant 0 : index
    %0 = vector.load %arg1[%c0, %c0_0] : memref<256x4xbf16, #tpu.memory_space<vmem>>, vector<256x4xbf16>
    %c0_1 = arith.constant 0 : index
    %c0_2 = arith.constant 0 : index
    %1 = vector.load %arg2[%c0_1, %c0_2] : memref<256x4xbf16, #tpu.memory_space<vmem>>, vector<256x4xbf16>
    %c0_3 = arith.constant 0 : index
    %c0_4 = arith.constant 0 : index
    %2 = vector.load %arg3[%c0_3, %c0_4] : memref<4x8xbf16, #tpu.memory_space<vmem>>, vector<4x8xbf16>
    %cst = arith.constant dense<0.000000e+00> : vector<256x8xf32>
    %3 = tpu.matmul %0, %2, %cst {dimension_numbers = #tpu.dot_dimension_numbers<[1], [0], [0], [1], [0, 0, 1, 1], [], []>} : vector<256x4xbf16>, vector<4x8xbf16>, vector<256x8xf32> -> vector<256x8xf32>
    %c0_5 = arith.constant 0 : index
    %c0_6 = arith.constant 0 : index
    %4 = vector.load %arg4[%c0_5, %c0_6] : memref<4x8xbf16, #tpu.memory_space<vmem>>, vector<4x8xbf16>
    %cst_7 = arith.constant dense<0.000000e+00> : vector<256x8xf32>
    %5 = tpu.matmul %1, %4, %cst_7 {dimension_numbers = #tpu.dot_dimension_numbers<[1], [0], [0], [1], [0, 0, 1, 1], [], []>} : vector<256x4xbf16>, vector<4x8xbf16>, vector<256x8xf32> -> vector<256x8xf32>
    %6 = arith.addf %3, %5 : vector<256x8xf32>
    %c0_8 = arith.constant 0 : index
    %c0_9 = arith.constant 0 : index
    %7 = vector.load %arg5[%c0_8, %c0_9] : memref<1x8xf32, #tpu.memory_space<vmem>>, vector<1x8xf32>
    %8 = vector.broadcast %7 : vector<1x8xf32> to vector<256x8xf32>
    %9 = arith.addf %6, %8 : vector<256x8xf32>
    %10 = arith.negf %9 : vector<256x8xf32>
    %11 = math.exp %10 : vector<256x8xf32>
    %cst_10 = arith.constant 1.000000e+00 : f32
    %12 = vector.broadcast %cst_10 : f32 to vector<256x8xf32>
    %13 = arith.addf %12, %11 : vector<256x8xf32>
    %14 = arith.divf %12, %13 : vector<256x8xf32>
    %15 = arith.mulf %9, %14 : vector<256x8xf32>
    %c0_11 = arith.constant 0 : index
    %c0_12 = arith.constant 0 : index
    %16 = vector.load %arg6[%c0_11, %c0_12] : memref<256x8xf32, #tpu.memory_space<vmem>>, vector<256x8xf32>
    tpu.vector_store %arg6[%c0_11, %c0_12], %15 {strides = array<i32>} : memref<256x8xf32, #tpu.memory_space<vmem>>, vector<256x8xf32>,
    return
  }
  func.func @transform_0(%arg0: i32) -> (i32, i32) {
    %c0_i32 = arith.constant 0 : i32
    %c0_i32_0 = arith.constant 0 : i32
    return %arg0, %c0_i32 : i32, i32
  }
  func.func @transform_1(%arg0: i32) -> (i32, i32) {
    %c0_i32 = arith.constant 0 : i32
    %c0_i32_0 = arith.constant 0 : i32
    return %arg0, %c0_i32 : i32, i32
  }
  func.func @transform_2(%arg0: i32) -> (i32, i32) {
    %c0_i32 = arith.constant 0 : i32
    %c0_i32_0 = arith.constant 0 : i32
    %c0_i32_1 = arith.constant 0 : i32
    return %c0_i32, %c0_i32_0 : i32, i32
  }
  func.func @transform_3(%arg0: i32) -> (i32, i32) {
    %c0_i32 = arith.constant 0 : i32
    %c0_i32_0 = arith.constant 0 : i32
    %c0_i32_1 = arith.constant 0 : i32
    return %c0_i32, %c0_i32_0 : i32, i32
  }
  func.func @transform_4(%arg0: i32) -> (i32, i32) {
    %c0_i32 = arith.constant 0 : i32
    %c0_i32_0 = arith.constant 0 : i32
    %c0_i32_1 = arith.constant 0 : i32
    return %c0_i32, %c0_i32_0 : i32, i32
  }
  func.func @transform_5(%arg0: i32) -> (i32, i32) {
    %c0_i32 = arith.constant 0 : i32
    %c0_i32_0 = arith.constant 0 : i32
    return %arg0, %c0_i32 : i32, i32
  }
}

</mosaic_0001>

<llo_original>
// kernel: _lambda_.5
$region0: #{_lambda_.5}
  #allocation0 [shape = 'u32[]', space=smem, size = 0x4, offset = 0x4, fixed_abs, tag = 'smem constant byte address 0x4 - core index']
  #allocation1 [shape = 'u32[144,128]{1,0:T(1,128)}', space=vmem, size = 0x12000, scoped, tag = 'internal scratch']
  %s0 = inlined_call_operand.vmem [shape: bf16[512,4], index: 0, kind: input, shape index: {}]
  %s1 = inlined_call_operand.vmem [shape: bf16[4,4], index: 1, kind: input, shape index: {}]
  %s2 = inlined_call_operand.vmem [shape: f32[1,4], index: 2, kind: input, shape index: {}]
  %s3 = inlined_call_operand.vmem [shape: bf16[512,4], index: 3, kind: output, shape index: {}]
  %s4 = sld [smem:[#allocation0]]
  $region45: #{_lambda_.5} parent=0
    _
  %s6 = ssub.s32 1, %s4
  %s7 = scalar_select 0, %s6, %s4
  loop: start=0, step=1, limit=4
  $region2: #{_lambda_.5} parent=0 // loop_pre_header
    _
  $region3: #{_lambda_.5} parent=0 // loop_header
    %s9 = sphi 0, %s13
    %p10 = scmp.ge.s32.totalorder %s9, 4
    %s19 = sphi 0, %s21
    %s22 = sphi 0, %s19
    %s23 = sphi 0, %s22
    %s39 = sphi 0, %s23
    %s43 = sphi 0, %s43
    %s45 = sphi 0, %s43
    %s46 = sphi 0, %s45
    %s60 = sphi 0, %s46
    %s64 = sphi 0, %s64
    %s66 = sphi 0, %s64
    %s67 = sphi 0, %s66
    %s81 = sphi 0, %s67
    %s87 = sphi 0, %s89
    %s90 = sphi 0, %s87
    %s91 = sphi 0, %s90
    %s107 = sphi 0, %s91
  $region4: #{_lambda_.5} parent=0 // loop_header_branch
    %12 = sbr.rel (%p10) target = $region8
  $region5: #{_lambda_.5} parent=0 // loop_body
    %s14 = ssub.s32 %s9, 1
    %s15 = ssub.s32 %s9, 2
    %s16 = sadd.s32 %s9, 1
    %s17 = ssub.s32 %s9, %s16
    %p18 = scmp.eq.s32.totalorder %s17, 0
    %s20 = sadd.s32 %s19, 1
    %s21 = scalar_select %p18, %s19, %s20
    %p24 = pneg %p18
    %p25 = scmp.eq.s32.totalorder %s9, 1
    %p26 = por %p24, %p25
    %p27 = scmp.ne.s32.totalorder %s19, %s22
    %p28 = scmp.eq.s32.totalorder %s9, 0
    %p29 = por %p27, %p28
    %p30 = scmp.ne.s32.totalorder %s19, %s22
    %p31 = scmp.eq.s32.totalorder %s14, 1
    %p32 = por %p30, %p31
    %p33 = scmp.ne.s32.totalorder %s22, %s23
    %p34 = scmp.eq.s32.totalorder %s14, 0
    %p35 = por %p33, %p34
    %p36 = scmp.ne.s32.totalorder %s22, %s23
    %p37 = scmp.eq.s32.totalorder %s15, 1
    %p38 = por %p36, %p37
    %p40 = scmp.ne.s32.totalorder %s23, %s39
    %p41 = scmp.eq.s32.totalorder %s15, 0
    %p42 = por %p40, %p41
    %s44 = sadd.s32 %s43, 1
    %p47 = scmp.eq.s32.totalorder %s9, 1
    %p48 = scmp.ne.s32.totalorder %s43, %s45
    %p49 = scmp.eq.s32.totalorder %s9, 0
    %p50 = por %p48, %p49
    %p51 = scmp.ne.s32.totalorder %s43, %s45
    %p52 = scmp.eq.s32.totalorder %s14, 1
    %p53 = por %p51, %p52
    %p54 = scmp.ne.s32.totalorder %s45, %s46
    %p55 = scmp.eq.s32.totalorder %s14, 0
    %p56 = por %p54, %p55
    %p57 = scmp.ne.s32.totalorder %s45, %s46
    %p58 = scmp.eq.s32.totalorder %s15, 1
    %p59 = por %p57, %p58
    %p61 = scmp.ne.s32.totalorder %s46, %s60
    %p62 = scmp.eq.s32.totalorder %s15, 0
    %p63 = por %p61, %p62
    %s65 = sadd.s32 %s64, 1
    %p68 = scmp.eq.s32.totalorder %s9, 1
    %p69 = scmp.ne.s32.totalorder %s64, %s66
    %p70 = scmp.eq.s32.totalorder %s9, 0
    %p71 = por %p69, %p70
    %p72 = scmp.ne.s32.totalorder %s64, %s66
    %p73 = scmp.eq.s32.totalorder %s14, 1
    %p74 = por %p72, %p73
    %p75 = scmp.ne.s32.totalorder %s66, %s67
    %p76 = scmp.eq.s32.totalorder %s14, 0
    %p77 = por %p75, %p76
    %p78 = scmp.ne.s32.totalorder %s66, %s67
    %p79 = scmp.eq.s32.totalorder %s15, 1
    %p80 = por %p78, %p79
    %p82 = scmp.ne.s32.totalorder %s67, %s81
    %p83 = scmp.eq.s32.totalorder %s15, 0
    %p84 = por %p82, %p83
    %s85 = ssub.s32 %s9, %s16
    %p86 = scmp.eq.s32.totalorder %s85, 0
    %s88 = sadd.s32 %s87, 1
    %s89 = scalar_select %p86, %s87, %s88
    %p92 = pneg %p86
    %p93 = scmp.eq.s32.totalorder %s9, 1
    %p94 = por %p92, %p93
    %p95 = scmp.ne.s32.totalorder %s87, %s90
    %p96 = scmp.eq.s32.totalorder %s9, 0
    %p97 = por %p95, %p96
    %p98 = scmp.ne.s32.totalorder %s87, %s90
    %p99 = scmp.eq.s32.totalorder %s14, 1
    %p100 = por %p98, %p99
    %p101 = scmp.ne.s32.totalorder %s90, %s91
    %p102 = scmp.eq.s32.totalorder %s14, 0
    %p103 = por %p101, %p102
    %p104 = scmp.ne.s32.totalorder %s90, %s91
    %p105 = scmp.eq.s32.totalorder %s15, 1
    %p106 = por %p104, %p105
    %p108 = scmp.ne.s32.totalorder %s91, %s107
    %p109 = scmp.eq.s32.totalorder %s15, 0
    %p110 = por %p108, %p109
    %p111 = scmp.le.s32.totalorder 1, %s9
    %p112 = scmp.lt.s32.totalorder %s9, 3
    %p113 = pnand %p111, %p112
    %p114 = pneg %p113
    // Predicated region
    $region9: #{_lambda_.5} parent=5 // pred_check
      _
    $region10: #{_lambda_.5} parent=5 // pred_check_branch
      %116 = sbr.rel (%p113) target = $region12
    $region11: #{_lambda_.5} parent=5 // pred_region
      %s117 = ssub.s32 %s9, 1
      // Predicated region
      $region13: #{_lambda_.5} parent=11 // pred_check
        %p118 = pneg %p56
      $region14: #{_lambda_.5} parent=11 // pred_check_branch
        %120 = sbr.rel (%p118) target = $region16
      $region15: #{_lambda_.5} parent=11 // pred_region
        _
      $region16: #{_lambda_.5} parent=11 // pred_fallthru
        _
      // Predicated region
      $region17: #{_lambda_.5} parent=11 // pred_check
        %p121 = pneg %p77
      $region18: #{_lambda_.5} parent=11 // pred_check_branch
        %123 = sbr.rel (%p121) target = $region20
      $region19: #{_lambda_.5} parent=11 // pred_region
        _
      $region20: #{_lambda_.5} parent=11 // pred_fallthru
        _
    $region12: #{_lambda_.5} parent=5 // pred_fallthru
      _
    %p124 = scmp.lt.s32.totalorder %s9, 2
    // Predicated region
    $region21: #{_lambda_.5} parent=5 // pred_check
      %p125 = pneg %p124
    $region22: #{_lambda_.5} parent=5 // pred_check_branch
      %127 = sbr.rel (%p125) target = $region24
    $region23: #{_lambda_.5} parent=5 // pred_region
      // Predicated region
      $region25: #{_lambda_.5} parent=23 // pred_check
        %p128 = pneg %p29
      $region26: #{_lambda_.5} parent=23 // pred_check_branch
        %130 = sbr.rel (%p128) target = $region28
      $region27: #{_lambda_.5} parent=23 // pred_region
        %s131 = smul.u32 32, %s9
        %p132 = scmp.lt.s32.totalorder %s131, 63
        %s133 = scalar_select %p132, %s131, 63
        %s134 = smul.addr %s133, 4
        %s135 = scalar_lea.vmem %s0, %s134
        %s136 = smul.u32 32, %s9
      $region28: #{_lambda_.5} parent=23 // pred_fallthru
        _
    $region24: #{_lambda_.5} parent=5 // pred_fallthru
      _
    %p137 = scmp.le.s32.totalorder 1, %s9
    %p138 = scmp.lt.s32.totalorder %s9, 3
    %p139 = pnand %p137, %p138
    %p140 = pneg %p139
    // Predicated region
    $region29: #{_lambda_.5} parent=5 // pred_check
      _
    $region30: #{_lambda_.5} parent=5 // pred_check_branch
      %142 = sbr.rel (%p139) target = $region32
    $region31: #{_lambda_.5} parent=5 // pred_region
      %s143 = ssub.s32 %s9, 1
      %s144 = smul.u32 32, %s14
      %p145 = scmp.lt.s32.totalorder %s144, 63
      %s146 = scalar_select %p145, %s144, 63
      %s147 = smul.addr %s146, 4
      %s148 = scalar_lea.vmem %s0, %s147
      %p149 = pneg %p35
      %p150 = pneg %p32
      %p151 = pneg %p56
      %p152 = pneg %p53
      %p153 = pneg %p77
      %p154 = pneg %p74
      %p155 = pneg %p103
      %p156 = pneg %p100
      %s157 = smul.u32 32, %s14
      %p158 = scmp.lt.s32.totalorder %s157, 63
      %s159 = scalar_select %p158, %s157, 63
      %s160 = smul.addr %s159, 4
      %s161 = scalar_lea.vmem %s3, %s160
      %s162 = smul.u32 32, %s14
      %p163 = scmp.lt.s32.totalorder %s162, 63
      %s164 = scalar_select %p163, %s162, 63
      %s165 = smul.addr %s164, 4
      %s166 = scalar_lea.vmem %s0, %s165
      %s167 = smul.u32 32, %s14
      %s168 = smul.u32 32, %s14
      %p169 = scmp.lt.s32.totalorder %s168, 63
      %s170 = scalar_select %p169, %s168, 63
      %s171 = smul.addr %s170, 4
      %s172 = scalar_lea.vmem %s3, %s171
      %s173 = smul.u32 32, %s14
      %v175 = vld [vmem:[%s166] sm:$0xf]
      %v176 = vld [vmem:[%s166 + $0x4] sm:$0xf]
      %v177 = vld [vmem:[%s166 + $0x8] sm:$0xf]
      %v178 = vld [vmem:[%s166 + $0xc] sm:$0xf]
      %v179 = vld [vmem:[%s166 + $0x10] sm:$0xf]
      %v180 = vld [vmem:[%s166 + $0x14] sm:$0xf]
      %v181 = vld [vmem:[%s166 + $0x18] sm:$0xf]
      %v182 = vld [vmem:[%s166 + $0x1c] sm:$0xf]
      %v183 = vld [vmem:[%s166 + $0x20] sm:$0xf]
      %v184 = vld [vmem:[%s166 + $0x24] sm:$0xf]
      %v185 = vld [vmem:[%s166 + $0x28] sm:$0xf]
      %v186 = vld [vmem:[%s166 + $0x2c] sm:$0xf]
      %v187 = vld [vmem:[%s166 + $0x30] sm:$0xf]
      %v188 = vld [vmem:[%s166 + $0x34] sm:$0xf]
      %v189 = vld [vmem:[%s166 + $0x38] sm:$0xf]
      %v190 = vld [vmem:[%s166 + $0x3c] sm:$0xf]
      %v191 = vld [vmem:[%s166 + $0x40] sm:$0xf]
      %v192 = vld [vmem:[%s166 + $0x44] sm:$0xf]
      %v193 = vld [vmem:[%s166 + $0x48] sm:$0xf]
      %v194 = vld [vmem:[%s166 + $0x4c] sm:$0xf]
      %v195 = vld [vmem:[%s166 + $0x50] sm:$0xf]
      %v196 = vld [vmem:[%s166 + $0x54] sm:$0xf]
      %v197 = vld [vmem:[%s166 + $0x58] sm:$0xf]
      %v198 = vld [vmem:[%s166 + $0x5c] sm:$0xf]
      %v199 = vld [vmem:[%s166 + $0x60] sm:$0xf]
      %v200 = vld [vmem:[%s166 + $0x64] sm:$0xf]
      %v201 = vld [vmem:[%s166 + $0x68] sm:$0xf]
      %v202 = vld [vmem:[%s166 + $0x6c] sm:$0xf]
      %v203 = vld [vmem:[%s166 + $0x70] sm:$0xf]
      %v204 = vld [vmem:[%s166 + $0x74] sm:$0xf]
      %v205 = vld [vmem:[%s166 + $0x78] sm:$0xf]
      %v206 = vld [vmem:[%s166 + $0x7c] sm:$0xf]
      %v207 = vld [vmem:[%s1] sm:$0x3]
      %v208 = vld [vmem:[%s2] sm:$0x1]
      %v210 = vlaneseq
      %v211 = vshrl.u32 %v210, 7
      %v212 = vsub.s32 0, %v211
      %v213 = vrot.slane %v208, %v212
      %v247 = vunpack.c.l.b16 %v175
      %v248 = vunpack.c.l.b16 %v176
      %v249 = vunpack.c.l.b16 %v177
      %v250 = vunpack.c.l.b16 %v178
      %v251 = vunpack.c.l.b16 %v179
      %v252 = vunpack.c.l.b16 %v180
      %v253 = vunpack.c.l.b16 %v181
      %v254 = vunpack.c.l.b16 %v182
      %v255 = vunpack.c.l.b16 %v183
      %v256 = vunpack.c.l.b16 %v184
      %v257 = vunpack.c.l.b16 %v185
      %v258 = vunpack.c.l.b16 %v186
      %v259 = vunpack.c.l.b16 %v187
      %v260 = vunpack.c.l.b16 %v188
      %v261 = vunpack.c.l.b16 %v189
      %v262 = vunpack.c.l.b16 %v190
      %v263 = vunpack.c.l.b16 %v191
      %v264 = vunpack.c.l.b16 %v192
      %v265 = vunpack.c.l.b16 %v193
      %v266 = vunpack.c.l.b16 %v194
      %v267 = vunpack.c.l.b16 %v195
      %v268 = vunpack.c.l.b16 %v196
      %v269 = vunpack.c.l.b16 %v197
      %v270 = vunpack.c.l.b16 %v198
      %v271 = vunpack.c.l.b16 %v199
      %v272 = vunpack.c.l.b16 %v200
      %v273 = vunpack.c.l.b16 %v201
      %v274 = vunpack.c.l.b16 %v202
      %v275 = vunpack.c.l.b16 %v203
      %v276 = vunpack.c.l.b16 %v204
      %v277 = vunpack.c.l.b16 %v205
      %v278 = vunpack.c.l.b16 %v206
      %v279 = vpack.c.b16 %v248, %v247
      %v280 = vpack.c.b16 %v250, %v249
      %v281 = vpack.c.b16 %v252, %v251
      %v282 = vpack.c.b16 %v254, %v253
      %v283 = vpack.c.b16 %v256, %v255
      %v284 = vpack.c.b16 %v258, %v257
      %v285 = vpack.c.b16 %v260, %v259
      %v286 = vpack.c.b16 %v262, %v261
      %v287 = vpack.c.b16 %v264, %v263
      %v288 = vpack.c.b16 %v266, %v265
      %v289 = vpack.c.b16 %v268, %v267
      %v290 = vpack.c.b16 %v270, %v269
      %v291 = vpack.c.b16 %v272, %v271
      %v292 = vpack.c.b16 %v274, %v273
      %v293 = vpack.c.b16 %v276, %v275
      %v294 = vpack.c.b16 %v278, %v277
      %vm295 = vcmask 31744
      %v297 = vsel %vm295, %v279, 0
      %v300 = vsel %vm295, %v280, 0
      %v303 = vsel %vm295, %v281, 0
      %v306 = vsel %vm295, %v282, 0
      %v309 = vsel %vm295, %v283, 0
      %v312 = vsel %vm295, %v284, 0
      %v315 = vsel %vm295, %v285, 0
      %v318 = vsel %vm295, %v286, 0
      %v321 = vsel %vm295, %v287, 0
      %v324 = vsel %vm295, %v288, 0
      %v327 = vsel %vm295, %v289, 0
      %v330 = vsel %vm295, %v290, 0
      %v333 = vsel %vm295, %v291, 0
      %v336 = vsel %vm295, %v292, 0
      %v339 = vsel %vm295, %v293, 0
      %v342 = vsel %vm295, %v294, 0
      %vm344 = vcmask 1041408
      %v346 = vsel %vm344, %v207, 0
      %348 = vmatprep.subr.bf16.mxu0 0
      %349 = vmatpush1.bf16.msra.mxu0 0
      %350 = vmatprep.subr.bf16.mxu0 0
      %351 = vmatpush1.bf16.msra.mxu0 0
      %352 = vmatprep.subr.bf16.mxu0 0
      %353 = vmatpush1.bf16.msra.mxu0 0
      %354 = vmatprep.subr.bf16.mxu0 0
      %355 = vmatpush1.bf16.msra.mxu0 0
      %356 = vmatprep.subr.bf16.mxu0 0
      %357 = vmatpush1.bf16.msra.mxu0 0
      %358 = vmatprep.subr.bf16.mxu0 0
      %359 = vmatpush1.bf16.msra.mxu0 0
      %360 = vmatprep.subr.bf16.mxu0 0
      %361 = vmatpush1.bf16.msra.mxu0 0
      %362 = vmatprep.subr.bf16.mxu0 0
      %363 = vmatpush1.bf16.msra.mxu0 %v346
      %364 = vmatprep.subr.bf16.mxu0 0
      %365 = vmatpush2.bf16.msra.mxu0 0
      %366 = vmatprep.subr.bf16.mxu0 0
      %367 = vmatpush2.bf16.msra.mxu0 0
      %368 = vmatprep.subr.bf16.mxu0 0
      %369 = vmatpush2.bf16.msra.mxu0 0
      %370 = vmatprep.subr.bf16.mxu0 0
      %371 = vmatpush2.bf16.msra.mxu0 0
      %372 = vmatprep.subr.bf16.mxu0 0
      %373 = vmatpush2.bf16.msra.mxu0 0
      %374 = vmatprep.subr.bf16.mxu0 0
      %375 = vmatpush2.bf16.msra.mxu0 0
      %376 = vmatprep.subr.bf16.mxu0 0
      %377 = vmatpush2.bf16.msra.mxu0 0
      %378 = vmatprep.subr.bf16.mxu0 0
      %379 = vmatpush2.bf16.msra.mxu0 0
      %380 = vmatprep.mubr.bf16.mxu0 0
      %381 = vmatmul.mubr.bf16.gmra.mxu0 %v297
      %v382 = vpop.f32.mrf.mxu0
      %v383 = vadd.f32 %v213, %v382
      %v384 = vpop.f32.mrf.mxu0
      %v385 = vpop.f32.mrf.mxu0
      %v386 = vadd.f32 %v213, %v385
      %v387 = vpop.f32.mrf.mxu0
      %388 = vmatprep.mubr.bf16.mxu0 0
      %389 = vmatmul.mubr.bf16.gmra.mxu0 %v300
      %v390 = vpop.f32.mrf.mxu0
      %v391 = vadd.f32 %v213, %v390
      %v392 = vpop.f32.mrf.mxu0
      %v393 = vpop.f32.mrf.mxu0
      %v394 = vadd.f32 %v213, %v393
      %v395 = vpop.f32.mrf.mxu0
      %396 = vmatprep.mubr.bf16.mxu0 0
      %397 = vmatmul.mubr.bf16.gmra.mxu0 %v303
      %v398 = vpop.f32.mrf.mxu0
      %v399 = vadd.f32 %v213, %v398
      %v400 = vpop.f32.mrf.mxu0
      %v401 = vpop.f32.mrf.mxu0
      %v402 = vadd.f32 %v213, %v401
      %v403 = vpop.f32.mrf.mxu0
      %404 = vmatprep.mubr.bf16.mxu0 0
      %405 = vmatmul.mubr.bf16.gmra.mxu0 %v306
      %v406 = vpop.f32.mrf.mxu0
      %v407 = vadd.f32 %v213, %v406
      %v408 = vpop.f32.mrf.mxu0
      %v409 = vpop.f32.mrf.mxu0
      %v410 = vadd.f32 %v213, %v409
      %v411 = vpop.f32.mrf.mxu0
      %412 = vmatprep.mubr.bf16.mxu0 0
      %413 = vmatmul.mubr.bf16.gmra.mxu0 %v309
      %v414 = vpop.f32.mrf.mxu0
      %v415 = vadd.f32 %v213, %v414
      %v416 = vpop.f32.mrf.mxu0
      %v417 = vpop.f32.mrf.mxu0
      %v418 = vadd.f32 %v213, %v417
      %v419 = vpop.f32.mrf.mxu0
      %420 = vmatprep.mubr.bf16.mxu0 0
      %421 = vmatmul.mubr.bf16.gmra.mxu0 %v312
      %v422 = vpop.f32.mrf.mxu0
      %v423 = vadd.f32 %v213, %v422
      %v424 = vpop.f32.mrf.mxu0
      %v425 = vpop.f32.mrf.mxu0
      %v426 = vadd.f32 %v213, %v425
      %v427 = vpop.f32.mrf.mxu0
      %428 = vmatprep.mubr.bf16.mxu0 0
      %429 = vmatmul.mubr.bf16.gmra.mxu0 %v315
      %v430 = vpop.f32.mrf.mxu0
      %v431 = vadd.f32 %v213, %v430
      %v432 = vpop.f32.mrf.mxu0
      %v433 = vpop.f32.mrf.mxu0
      %v434 = vadd.f32 %v213, %v433
      %v435 = vpop.f32.mrf.mxu0
      %436 = vmatprep.mubr.bf16.mxu0 0
      %437 = vmatmul.mubr.bf16.gmra.mxu0 %v318
      %v438 = vpop.f32.mrf.mxu0
      %v439 = vadd.f32 %v213, %v438
      %v440 = vpop.f32.mrf.mxu0
      %v441 = vpop.f32.mrf.mxu0
      %v442 = vadd.f32 %v213, %v441
      %v443 = vpop.f32.mrf.mxu0
      %444 = vmatprep.mubr.bf16.mxu0 0
      %445 = vmatmul.mubr.bf16.gmra.mxu0 %v321
      %v446 = vpop.f32.mrf.mxu0
      %v447 = vadd.f32 %v213, %v446
      %v448 = vpop.f32.mrf.mxu0
      %v449 = vpop.f32.mrf.mxu0
      %v450 = vadd.f32 %v213, %v449
      %v451 = vpop.f32.mrf.mxu0
      %452 = vmatprep.mubr.bf16.mxu0 0
      %453 = vmatmul.mubr.bf16.gmra.mxu0 %v324
      %v454 = vpop.f32.mrf.mxu0
      %v455 = vadd.f32 %v213, %v454
      %v456 = vpop.f32.mrf.mxu0
      %v457 = vpop.f32.mrf.mxu0
      %v458 = vadd.f32 %v213, %v457
      %v459 = vpop.f32.mrf.mxu0
      %460 = vmatprep.mubr.bf16.mxu0 0
      %461 = vmatmul.mubr.bf16.gmra.mxu0 %v327
      %v462 = vpop.f32.mrf.mxu0
      %v463 = vadd.f32 %v213, %v462
      %v464 = vpop.f32.mrf.mxu0
      %v465 = vpop.f32.mrf.mxu0
      %v466 = vadd.f32 %v213, %v465
      %v467 = vpop.f32.mrf.mxu0
      %468 = vmatprep.mubr.bf16.mxu0 0
      %469 = vmatmul.mubr.bf16.gmra.mxu0 %v330
      %v470 = vpop.f32.mrf.mxu0
      %v471 = vadd.f32 %v213, %v470
      %v472 = vpop.f32.mrf.mxu0
      %v473 = vpop.f32.mrf.mxu0
      %v474 = vadd.f32 %v213, %v473
      %v475 = vpop.f32.mrf.mxu0
      %476 = vmatprep.mubr.bf16.mxu0 0
      %477 = vmatmul.mubr.bf16.gmra.mxu0 %v333
      %v478 = vpop.f32.mrf.mxu0
      %v479 = vadd.f32 %v213, %v478
      %v480 = vpop.f32.mrf.mxu0
      %v481 = vpop.f32.mrf.mxu0
      %v482 = vadd.f32 %v213, %v481
      %v483 = vpop.f32.mrf.mxu0
      %484 = vmatprep.mubr.bf16.mxu0 0
      %485 = vmatmul.mubr.bf16.gmra.mxu0 %v336
      %v486 = vpop.f32.mrf.mxu0
      %v487 = vadd.f32 %v213, %v486
      %v488 = vpop.f32.mrf.mxu0
      %v489 = vpop.f32.mrf.mxu0
      %v490 = vadd.f32 %v213, %v489
      %v491 = vpop.f32.mrf.mxu0
      %492 = vmatprep.mubr.bf16.mxu0 0
      %493 = vmatmul.mubr.bf16.gmra.mxu0 %v339
      %v494 = vpop.f32.mrf.mxu0
      %v495 = vadd.f32 %v213, %v494
      %v496 = vpop.f32.mrf.mxu0
      %v497 = vpop.f32.mrf.mxu0
      %v498 = vadd.f32 %v213, %v497
      %v499 = vpop.f32.mrf.mxu0
      %500 = vmatprep.mubr.bf16.mxu0 0
      %501 = vmatmul.mubr.bf16.gmra.mxu0 %v342
      %v502 = vpop.f32.mrf.mxu0
      %v503 = vadd.f32 %v213, %v502
      %v504 = vpop.f32.mrf.mxu0
      %v505 = vpop.f32.mrf.mxu0
      %v506 = vadd.f32 %v213, %v505
      %v507 = vpop.f32.mrf.mxu0
      %508 = vdwg.mxu0
      %v509 = vxor.u32 %v383, 2147483648
      %v510 = vxor.u32 %v386, 2147483648
      %v511 = vxor.u32 %v391, 2147483648
      %v512 = vxor.u32 %v394, 2147483648
      %v513 = vxor.u32 %v399, 2147483648
      %v514 = vxor.u32 %v402, 2147483648
      %v515 = vxor.u32 %v407, 2147483648
      %v516 = vxor.u32 %v410, 2147483648
      %v517 = vxor.u32 %v415, 2147483648
      %v518 = vxor.u32 %v418, 2147483648
      %v519 = vxor.u32 %v423, 2147483648
      %v520 = vxor.u32 %v426, 2147483648
      %v521 = vxor.u32 %v431, 2147483648
      %v522 = vxor.u32 %v434, 2147483648
      %v523 = vxor.u32 %v439, 2147483648
      %v524 = vxor.u32 %v442, 2147483648
      %v525 = vxor.u32 %v447, 2147483648
      %v526 = vxor.u32 %v450, 2147483648
      %v527 = vxor.u32 %v455, 2147483648
      %v528 = vxor.u32 %v458, 2147483648
      %v529 = vxor.u32 %v463, 2147483648
      %v530 = vxor.u32 %v466, 2147483648
      %v531 = vxor.u32 %v471, 2147483648
      %v532 = vxor.u32 %v474, 2147483648
      %v533 = vxor.u32 %v479, 2147483648
      %v534 = vxor.u32 %v482, 2147483648
      %v535 = vxor.u32 %v487, 2147483648
      %v536 = vxor.u32 %v490, 2147483648
      %v537 = vxor.u32 %v495, 2147483648
      %v538 = vxor.u32 %v498, 2147483648
      %v539 = vxor.u32 %v503, 2147483648
      %v540 = vxor.u32 %v506, 2147483648
      %v541 = vmul.f32 %v509, 1.442695
      %v542 = vpow.pop %v541
      %v543 = vmul.f32 %v510, 1.442695
      %v544 = vpow.pop %v543
      %v545 = vmul.f32 %v511, 1.442695
      %v546 = vpow.pop %v545
      %v547 = vmul.f32 %v512, 1.442695
      %v548 = vpow.pop %v547
      %v549 = vmul.f32 %v513, 1.442695
      %v550 = vpow.pop %v549
      %v551 = vmul.f32 %v514, 1.442695
      %v552 = vpow.pop %v551
      %v553 = vmul.f32 %v515, 1.442695
      %v554 = vpow.pop %v553
      %v555 = vmul.f32 %v516, 1.442695
      %v556 = vpow.pop %v555
      %v557 = vmul.f32 %v517, 1.442695
      %v558 = vpow.pop %v557
      %v559 = vmul.f32 %v518, 1.442695
      %v560 = vpow.pop %v559
      %v561 = vmul.f32 %v519, 1.442695
      %v562 = vpow.pop %v561
      %v563 = vmul.f32 %v520, 1.442695
      %v564 = vpow.pop %v563
      %v565 = vmul.f32 %v521, 1.442695
      %v566 = vpow.pop %v565
      %v567 = vmul.f32 %v522, 1.442695
      %v568 = vpow.pop %v567
      %v569 = vmul.f32 %v523, 1.442695
      %v570 = vpow.pop %v569
      %v571 = vmul.f32 %v524, 1.442695
      %v572 = vpow.pop %v571
      %v573 = vmul.f32 %v525, 1.442695
      %v574 = vpow.pop %v573
      %v575 = vmul.f32 %v526, 1.442695
      %v576 = vpow.pop %v575
      %v577 = vmul.f32 %v527, 1.442695
      %v578 = vpow.pop %v577
      %v579 = vmul.f32 %v528, 1.442695
      %v580 = vpow.pop %v579
      %v581 = vmul.f32 %v529, 1.442695
      %v582 = vpow.pop %v581
      %v583 = vmul.f32 %v530, 1.442695
      %v584 = vpow.pop %v583
      %v585 = vmul.f32 %v531, 1.442695
      %v586 = vpow.pop %v585
      %v587 = vmul.f32 %v532, 1.442695
      %v588 = vpow.pop %v587
      %v589 = vmul.f32 %v533, 1.442695
      %v590 = vpow.pop %v589
      %v591 = vmul.f32 %v534, 1.442695
      %v592 = vpow.pop %v591
      %v593 = vmul.f32 %v535, 1.442695
      %v594 = vpow.pop %v593
      %v595 = vmul.f32 %v536, 1.442695
      %v596 = vpow.pop %v595
      %v597 = vmul.f32 %v537, 1.442695
      %v598 = vpow.pop %v597
      %v599 = vmul.f32 %v538, 1.442695
      %v600 = vpow.pop %v599
      %v601 = vmul.f32 %v539, 1.442695
      %v602 = vpow.pop %v601
      %v603 = vmul.f32 %v540, 1.442695
      %v604 = vpow.pop %v603
      %v605 = vadd.f32 %v542, 1.0
      %v606 = vadd.f32 %v544, 1.0
      %v607 = vadd.f32 %v546, 1.0
      %v608 = vadd.f32 %v548, 1.0
      %v609 = vadd.f32 %v550, 1.0
      %v610 = vadd.f32 %v552, 1.0
      %v611 = vadd.f32 %v554, 1.0
      %v612 = vadd.f32 %v556, 1.0
      %v613 = vadd.f32 %v558, 1.0
      %v614 = vadd.f32 %v560, 1.0
      %v615 = vadd.f32 %v562, 1.0
      %v616 = vadd.f32 %v564, 1.0
      %v617 = vadd.f32 %v566, 1.0
      %v618 = vadd.f32 %v568, 1.0
      %v619 = vadd.f32 %v570, 1.0
      %v620 = vadd.f32 %v572, 1.0
      %v621 = vadd.f32 %v574, 1.0
      %v622 = vadd.f32 %v576, 1.0
      %v623 = vadd.f32 %v578, 1.0
      %v624 = vadd.f32 %v580, 1.0
      %v625 = vadd.f32 %v582, 1.0
      %v626 = vadd.f32 %v584, 1.0
      %v627 = vadd.f32 %v586, 1.0
      %v628 = vadd.f32 %v588, 1.0
      %v629 = vadd.f32 %v590, 1.0
      %v630 = vadd.f32 %v592, 1.0
      %v631 = vadd.f32 %v594, 1.0
      %v632 = vadd.f32 %v596, 1.0
      %v633 = vadd.f32 %v598, 1.0
      %v634 = vadd.f32 %v600, 1.0
      %v635 = vadd.f32 %v602, 1.0
      %v636 = vadd.f32 %v604, 1.0
      %v637 = vrcp.pop %v605
      %v638 = vmul.f32 1.0, %v637
      %v639 = vrcp.pop %v606
      %v640 = vmul.f32 1.0, %v639
      %v641 = vrcp.pop %v607
      %v642 = vmul.f32 1.0, %v641
      %v643 = vrcp.pop %v608
      %v644 = vmul.f32 1.0, %v643
      %v645 = vrcp.pop %v609
      %v646 = vmul.f32 1.0, %v645
      %v647 = vrcp.pop %v610
      %v648 = vmul.f32 1.0, %v647
      %v649 = vrcp.pop %v611
      %v650 = vmul.f32 1.0, %v649
      %v651 = vrcp.pop %v612
      %v652 = vmul.f32 1.0, %v651
      %v653 = vrcp.pop %v613
      %v654 = vmul.f32 1.0, %v653
      %v655 = vrcp.pop %v614
      %v656 = vmul.f32 1.0, %v655
      %v657 = vrcp.pop %v615
      %v658 = vmul.f32 1.0, %v657
      %v659 = vrcp.pop %v616
      %v660 = vmul.f32 1.0, %v659
      %v661 = vrcp.pop %v617
      %v662 = vmul.f32 1.0, %v661
      %v663 = vrcp.pop %v618
      %v664 = vmul.f32 1.0, %v663
      %v665 = vrcp.pop %v619
      %v666 = vmul.f32 1.0, %v665
      %v667 = vrcp.pop %v620
      %v668 = vmul.f32 1.0, %v667
      %v669 = vrcp.pop %v621
      %v670 = vmul.f32 1.0, %v669
      %v671 = vrcp.pop %v622
      %v672 = vmul.f32 1.0, %v671
      %v673 = vrcp.pop %v623
      %v674 = vmul.f32 1.0, %v673
      %v675 = vrcp.pop %v624
      %v676 = vmul.f32 1.0, %v675
      %v677 = vrcp.pop %v625
      %v678 = vmul.f32 1.0, %v677
      %v679 = vrcp.pop %v626
      %v680 = vmul.f32 1.0, %v679
      %v681 = vrcp.pop %v627
      %v682 = vmul.f32 1.0, %v681
      %v683 = vrcp.pop %v628
      %v684 = vmul.f32 1.0, %v683
      %v685 = vrcp.pop %v629
      %v686 = vmul.f32 1.0, %v685
      %v687 = vrcp.pop %v630
      %v688 = vmul.f32 1.0, %v687
      %v689 = vrcp.pop %v631
      %v690 = vmul.f32 1.0, %v689
      %v691 = vrcp.pop %v632
      %v692 = vmul.f32 1.0, %v691
      %v693 = vrcp.pop %v633
      %v694 = vmul.f32 1.0, %v693
      %v695 = vrcp.pop %v634
      %v696 = vmul.f32 1.0, %v695
      %v697 = vrcp.pop %v635
      %v698 = vmul.f32 1.0, %v697
      %v699 = vrcp.pop %v636
      %v700 = vmul.f32 1.0, %v699
      %v701 = vmul.f32 %v383, %v638
      %v702 = vmul.f32 %v386, %v640
      %v703 = vmul.f32 %v391, %v642
      %v704 = vmul.f32 %v394, %v644
      %v705 = vmul.f32 %v399, %v646
      %v706 = vmul.f32 %v402, %v648
      %v707 = vmul.f32 %v407, %v650
      %v708 = vmul.f32 %v410, %v652
      %v709 = vmul.f32 %v415, %v654
      %v710 = vmul.f32 %v418, %v656
      %v711 = vmul.f32 %v423, %v658
      %v712 = vmul.f32 %v426, %v660
      %v713 = vmul.f32 %v431, %v662
      %v714 = vmul.f32 %v434, %v664
      %v715 = vmul.f32 %v439, %v666
      %v716 = vmul.f32 %v442, %v668
      %v717 = vmul.f32 %v447, %v670
      %v718 = vmul.f32 %v450, %v672
      %v719 = vmul.f32 %v455, %v674
      %v720 = vmul.f32 %v458, %v676
      %v721 = vmul.f32 %v463, %v678
      %v722 = vmul.f32 %v466, %v680
      %v723 = vmul.f32 %v471, %v682
      %v724 = vmul.f32 %v474, %v684
      %v725 = vmul.f32 %v479, %v686
      %v726 = vmul.f32 %v482, %v688
      %v727 = vmul.f32 %v487, %v690
      %v728 = vmul.f32 %v490, %v692
      %v729 = vmul.f32 %v495, %v694
      %v730 = vmul.f32 %v498, %v696
      %v731 = vmul.f32 %v503, %v698
      %v732 = vmul.f32 %v506, %v700
      %v733 = vpack.c.bf16 %v702, %v701
      %v734 = vpack.c.bf16 %v704, %v703
      %v735 = vpack.c.bf16 %v706, %v705
      %v736 = vpack.c.bf16 %v708, %v707
      %v737 = vpack.c.bf16 %v710, %v709
      %v738 = vpack.c.bf16 %v712, %v711
      %v739 = vpack.c.bf16 %v714, %v713
      %v740 = vpack.c.bf16 %v716, %v715
      %v741 = vpack.c.bf16 %v718, %v717
      %v742 = vpack.c.bf16 %v720, %v719
      %v743 = vpack.c.bf16 %v722, %v721
      %v744 = vpack.c.bf16 %v724, %v723
      %v745 = vpack.c.bf16 %v726, %v725
      %v746 = vpack.c.bf16 %v728, %v727
      %v747 = vpack.c.bf16 %v730, %v729
      %v748 = vpack.c.bf16 %v732, %v731
      %v765 = vunpack.c.l.b16 %v733
      %v766 = vunpack.c.h.b16 %v733
      %v767 = vunpack.c.l.b16 %v734
      %v768 = vunpack.c.h.b16 %v734
      %v769 = vunpack.c.l.b16 %v735
      %v770 = vunpack.c.h.b16 %v735
      %v771 = vunpack.c.l.b16 %v736
      %v772 = vunpack.c.h.b16 %v736
      %v773 = vunpack.c.l.b16 %v737
      %v774 = vunpack.c.h.b16 %v737
      %v775 = vunpack.c.l.b16 %v738
      %v776 = vunpack.c.h.b16 %v738
      %v777 = vunpack.c.l.b16 %v739
      %v778 = vunpack.c.h.b16 %v739
      %v779 = vunpack.c.l.b16 %v740
      %v780 = vunpack.c.h.b16 %v740
      %v781 = vunpack.c.l.b16 %v741
      %v782 = vunpack.c.h.b16 %v741
      %v783 = vunpack.c.l.b16 %v742
      %v784 = vunpack.c.h.b16 %v742
      %v785 = vunpack.c.l.b16 %v743
      %v786 = vunpack.c.h.b16 %v743
      %v787 = vunpack.c.l.b16 %v744
      %v788 = vunpack.c.h.b16 %v744
      %v789 = vunpack.c.l.b16 %v745
      %v790 = vunpack.c.h.b16 %v745
      %v791 = vunpack.c.l.b16 %v746
      %v792 = vunpack.c.h.b16 %v746
      %v793 = vunpack.c.l.b16 %v747
      %v794 = vunpack.c.h.b16 %v747
      %v795 = vunpack.c.l.b16 %v748
      %v796 = vunpack.c.h.b16 %v748
      %v797 = vpack.c.b16 %v765, %v765
      %v798 = vpack.c.b16 %v766, %v766
      %v799 = vpack.c.b16 %v767, %v767
      %v800 = vpack.c.b16 %v768, %v768
      %v801 = vpack.c.b16 %v769, %v769
      %v802 = vpack.c.b16 %v770, %v770
      %v803 = vpack.c.b16 %v771, %v771
      %v804 = vpack.c.b16 %v772, %v772
      %v805 = vpack.c.b16 %v773, %v773
      %v806 = vpack.c.b16 %v774, %v774
      %v807 = vpack.c.b16 %v775, %v775
      %v808 = vpack.c.b16 %v776, %v776
      %v809 = vpack.c.b16 %v777, %v777
      %v810 = vpack.c.b16 %v778, %v778
      %v811 = vpack.c.b16 %v779, %v779
      %v812 = vpack.c.b16 %v780, %v780
      %v813 = vpack.c.b16 %v781, %v781
      %v814 = vpack.c.b16 %v782, %v782
      %v815 = vpack.c.b16 %v783, %v783
      %v816 = vpack.c.b16 %v784, %v784
      %v817 = vpack.c.b16 %v785, %v785
      %v818 = vpack.c.b16 %v786, %v786
      %v819 = vpack.c.b16 %v787, %v787
      %v820 = vpack.c.b16 %v788, %v788
      %v821 = vpack.c.b16 %v789, %v789
      %v822 = vpack.c.b16 %v790, %v790
      %v823 = vpack.c.b16 %v791, %v791
      %v824 = vpack.c.b16 %v792, %v792
      %v825 = vpack.c.b16 %v793, %v793
      %v826 = vpack.c.b16 %v794, %v794
      %v827 = vpack.c.b16 %v795, %v795
      %v828 = vpack.c.b16 %v796, %v796
      %vm861 = vcmask 27648
      %862 = vst.msk [vmem:[%s172] sm:$0xf] %vm861, %v797
      %863 = vst.msk [vmem:[%s172 + $0x4] sm:$0xf] %vm861, %v798
      %864 = vst.msk [vmem:[%s172 + $0x8] sm:$0xf] %vm861, %v799
      %865 = vst.msk [vmem:[%s172 + $0xc] sm:$0xf] %vm861, %v800
      %866 = vst.msk [vmem:[%s172 + $0x10] sm:$0xf] %vm861, %v801
      %867 = vst.msk [vmem:[%s172 + $0x14] sm:$0xf] %vm861, %v802
      %868 = vst.msk [vmem:[%s172 + $0x18] sm:$0xf] %vm861, %v803
      %869 = vst.msk [vmem:[%s172 + $0x1c] sm:$0xf] %vm861, %v804
      %870 = vst.msk [vmem:[%s172 + $0x20] sm:$0xf] %vm861, %v805
      %871 = vst.msk [vmem:[%s172 + $0x24] sm:$0xf] %vm861, %v806
      %872 = vst.msk [vmem:[%s172 + $0x28] sm:$0xf] %vm861, %v807
      %873 = vst.msk [vmem:[%s172 + $0x2c] sm:$0xf] %vm861, %v808
      %874 = vst.msk [vmem:[%s172 + $0x30] sm:$0xf] %vm861, %v809
      %875 = vst.msk [vmem:[%s172 + $0x34] sm:$0xf] %vm861, %v810
      %876 = vst.msk [vmem:[%s172 + $0x38] sm:$0xf] %vm861, %v811
      %877 = vst.msk [vmem:[%s172 + $0x3c] sm:$0xf] %vm861, %v812
      %878 = vst.msk [vmem:[%s172 + $0x40] sm:$0xf] %vm861, %v813
      %879 = vst.msk [vmem:[%s172 + $0x44] sm:$0xf] %vm861, %v814
      %880 = vst.msk [vmem:[%s172 + $0x48] sm:$0xf] %vm861, %v815
      %881 = vst.msk [vmem:[%s172 + $0x4c] sm:$0xf] %vm861, %v816
      %882 = vst.msk [vmem:[%s172 + $0x50] sm:$0xf] %vm861, %v817
      %883 = vst.msk [vmem:[%s172 + $0x54] sm:$0xf] %vm861, %v818
      %884 = vst.msk [vmem:[%s172 + $0x58] sm:$0xf] %vm861, %v819
      %885 = vst.msk [vmem:[%s172 + $0x5c] sm:$0xf] %vm861, %v820
      %886 = vst.msk [vmem:[%s172 + $0x60] sm:$0xf] %vm861, %v821
      %887 = vst.msk [vmem:[%s172 + $0x64] sm:$0xf] %vm861, %v822
      %888 = vst.msk [vmem:[%s172 + $0x68] sm:$0xf] %vm861, %v823
      %889 = vst.msk [vmem:[%s172 + $0x6c] sm:$0xf] %vm861, %v824
      %890 = vst.msk [vmem:[%s172 + $0x70] sm:$0xf] %vm861, %v825
      %891 = vst.msk [vmem:[%s172 + $0x74] sm:$0xf] %vm861, %v826
      %892 = vst.msk [vmem:[%s172 + $0x78] sm:$0xf] %vm861, %v827
      %893 = vst.msk [vmem:[%s172 + $0x7c] sm:$0xf] %vm861, %v828
      %s894 = smul.u32 32, %s14
      %p895 = scmp.lt.s32.totalorder %s894, 63
      %s896 = scalar_select %p895, %s894, 63
      %s897 = smul.addr %s896, 4
      %s898 = scalar_lea.vmem %s3, %s897
      // Predicated region
      $region33: #{_lambda_.5} parent=31 // pred_check
        %p899 = pneg %p100
      $region34: #{_lambda_.5} parent=31 // pred_check_branch
        %901 = sbr.rel (%p899) target = $region36
      $region35: #{_lambda_.5} parent=31 // pred_region
        %s902 = smul.u32 32, %s14
      $region36: #{_lambda_.5} parent=31 // pred_fallthru
        _
    $region32: #{_lambda_.5} parent=5 // pred_fallthru
      _
    %p903 = scmp.le.s32.totalorder 2, %s9
    // Predicated region
    $region37: #{_lambda_.5} parent=5 // pred_check
      %p904 = pneg %p903
    $region38: #{_lambda_.5} parent=5 // pred_check_branch
      %906 = sbr.rel (%p904) target = $region40
    $region39: #{_lambda_.5} parent=5 // pred_region
      %s907 = ssub.s32 %s9, 2
      // Predicated region
      $region41: #{_lambda_.5} parent=39 // pred_check
        %p908 = pneg %p106
      $region42: #{_lambda_.5} parent=39 // pred_check_branch
        %910 = sbr.rel (%p908) target = $region44
      $region43: #{_lambda_.5} parent=39 // pred_region
        %s911 = smul.u32 32, %s15
        %p912 = scmp.lt.s32.totalorder %s911, 63
        %s913 = scalar_select %p912, %s911, 63
        %s914 = smul.addr %s913, 4
        %s915 = scalar_lea.vmem %s3, %s914
      $region44: #{_lambda_.5} parent=39 // pred_fallthru
        _
    $region40: #{_lambda_.5} parent=5 // pred_fallthru
      _
  $region6: #{_lambda_.5} parent=0 // loop_footer
    %s13 = sadd.s32 1, %s9
  $region7: #{_lambda_.5} parent=0 // loop_footer_branch
    %8 = sbr.rel target = $region3
  $region8: #{_lambda_.5} parent=0 // loop_exit
    _

// kernel: _lambda_.4
$region0: #{_lambda_.4}
  #allocation0 [shape = 'u32[]', space=smem, size = 0x4, offset = 0x4, fixed_abs, tag = 'smem constant byte address 0x4 - core index']
  #allocation1 [shape = 'u32[144,128]{1,0:T(1,128)}', space=vmem, size = 0x12000, scoped, tag = 'internal scratch']
  %s0 = inlined_call_operand.vmem [shape: bf16[512,8], index: 0, kind: input, shape index: {}]
  %s1 = inlined_call_operand.vmem [shape: bf16[8,4], index: 1, kind: input, shape index: {}]
  %s2 = inlined_call_operand.vmem [shape: bf16[8,4], index: 2, kind: input, shape index: {}]
  %s3 = inlined_call_operand.vmem [shape: f32[1,4], index: 3, kind: input, shape index: {}]
  %s4 = inlined_call_operand.vmem [shape: f32[1,4], index: 4, kind: input, shape index: {}]
  %s5 = inlined_call_operand.vmem [shape: bf16[512,4], index: 5, kind: output, shape index: {0}]
  %s6 = inlined_call_operand.vmem [shape: bf16[512,4], index: 6, kind: output, shape index: {1}]
  %7 = xla_tuple %s5, %s6
  %s8 = sld [smem:[#allocation0]]
  $region61: #{_lambda_.4} parent=0
    _
  %s10 = ssub.s32 1, %s8
  %s11 = scalar_select 0, %s10, %s8
  loop: start=0, step=1, limit=4
  $region2: #{_lambda_.4} parent=0 // loop_pre_header
    _
  $region3: #{_lambda_.4} parent=0 // loop_header
    %s13 = sphi 0, %s17
    %p14 = scmp.ge.s32.totalorder %s13, 4
    %s23 = sphi 0, %s25
    %s26 = sphi 0, %s23
    %s27 = sphi 0, %s26
    %s43 = sphi 0, %s27
    %s47 = sphi 0, %s47
    %s49 = sphi 0, %s47
    %s50 = sphi 0, %s49
    %s64 = sphi 0, %s50
    %s68 = sphi 0, %s68
    %s70 = sphi 0, %s68
    %s71 = sphi 0, %s70
    %s85 = sphi 0, %s71
    %s89 = sphi 0, %s89
    %s91 = sphi 0, %s89
    %s92 = sphi 0, %s91
    %s106 = sphi 0, %s92
    %s110 = sphi 0, %s110
    %s112 = sphi 0, %s110
    %s113 = sphi 0, %s112
    %s127 = sphi 0, %s113
    %s133 = sphi 0, %s135
    %s136 = sphi 0, %s133
    %s137 = sphi 0, %s136
    %s153 = sphi 0, %s137
    %s159 = sphi 0, %s161
    %s162 = sphi 0, %s159
    %s163 = sphi 0, %s162
    %s179 = sphi 0, %s163
  $region4: #{_lambda_.4} parent=0 // loop_header_branch
    %16 = sbr.rel (%p14) target = $region8
  $region5: #{_lambda_.4} parent=0 // loop_body
    %s18 = ssub.s32 %s13, 1
    %s19 = ssub.s32 %s13, 2
    %s20 = sadd.s32 %s13, 1
    %s21 = ssub.s32 %s13, %s20
    %p22 = scmp.eq.s32.totalorder %s21, 0
    %s24 = sadd.s32 %s23, 1
    %s25 = scalar_select %p22, %s23, %s24
    %p28 = pneg %p22
    %p29 = scmp.eq.s32.totalorder %s13, 1
    %p30 = por %p28, %p29
    %p31 = scmp.ne.s32.totalorder %s23, %s26
    %p32 = scmp.eq.s32.totalorder %s13, 0
    %p33 = por %p31, %p32
    %p34 = scmp.ne.s32.totalorder %s23, %s26
    %p35 = scmp.eq.s32.totalorder %s18, 1
    %p36 = por %p34, %p35
    %p37 = scmp.ne.s32.totalorder %s26, %s27
    %p38 = scmp.eq.s32.totalorder %s18, 0
    %p39 = por %p37, %p38
    %p40 = scmp.ne.s32.totalorder %s26, %s27
    %p41 = scmp.eq.s32.totalorder %s19, 1
    %p42 = por %p40, %p41
    %p44 = scmp.ne.s32.totalorder %s27, %s43
    %p45 = scmp.eq.s32.totalorder %s19, 0
    %p46 = por %p44, %p45
    %s48 = sadd.s32 %s47, 1
    %p51 = scmp.eq.s32.totalorder %s13, 1
    %p52 = scmp.ne.s32.totalorder %s47, %s49
    %p53 = scmp.eq.s32.totalorder %s13, 0
    %p54 = por %p52, %p53
    %p55 = scmp.ne.s32.totalorder %s47, %s49
    %p56 = scmp.eq.s32.totalorder %s18, 1
    %p57 = por %p55, %p56
    %p58 = scmp.ne.s32.totalorder %s49, %s50
    %p59 = scmp.eq.s32.totalorder %s18, 0
    %p60 = por %p58, %p59
    %p61 = scmp.ne.s32.totalorder %s49, %s50
    %p62 = scmp.eq.s32.totalorder %s19, 1
    %p63 = por %p61, %p62
    %p65 = scmp.ne.s32.totalorder %s50, %s64
    %p66 = scmp.eq.s32.totalorder %s19, 0
    %p67 = por %p65, %p66
    %s69 = sadd.s32 %s68, 1
    %p72 = scmp.eq.s32.totalorder %s13, 1
    %p73 = scmp.ne.s32.totalorder %s68, %s70
    %p74 = scmp.eq.s32.totalorder %s13, 0
    %p75 = por %p73, %p74
    %p76 = scmp.ne.s32.totalorder %s68, %s70
    %p77 = scmp.eq.s32.totalorder %s18, 1
    %p78 = por %p76, %p77
    %p79 = scmp.ne.s32.totalorder %s70, %s71
    %p80 = scmp.eq.s32.totalorder %s18, 0
    %p81 = por %p79, %p80
    %p82 = scmp.ne.s32.totalorder %s70, %s71
    %p83 = scmp.eq.s32.totalorder %s19, 1
    %p84 = por %p82, %p83
    %p86 = scmp.ne.s32.totalorder %s71, %s85
    %p87 = scmp.eq.s32.totalorder %s19, 0
    %p88 = por %p86, %p87
    %s90 = sadd.s32 %s89, 1
    %p93 = scmp.eq.s32.totalorder %s13, 1
    %p94 = scmp.ne.s32.totalorder %s89, %s91
    %p95 = scmp.eq.s32.totalorder %s13, 0
    %p96 = por %p94, %p95
    %p97 = scmp.ne.s32.totalorder %s89, %s91
    %p98 = scmp.eq.s32.totalorder %s18, 1
    %p99 = por %p97, %p98
    %p100 = scmp.ne.s32.totalorder %s91, %s92
    %p101 = scmp.eq.s32.totalorder %s18, 0
    %p102 = por %p100, %p101
    %p103 = scmp.ne.s32.totalorder %s91, %s92
    %p104 = scmp.eq.s32.totalorder %s19, 1
    %p105 = por %p103, %p104
    %p107 = scmp.ne.s32.totalorder %s92, %s106
    %p108 = scmp.eq.s32.totalorder %s19, 0
    %p109 = por %p107, %p108
    %s111 = sadd.s32 %s110, 1
    %p114 = scmp.eq.s32.totalorder %s13, 1
    %p115 = scmp.ne.s32.totalorder %s110, %s112
    %p116 = scmp.eq.s32.totalorder %s13, 0
    %p117 = por %p115, %p116
    %p118 = scmp.ne.s32.totalorder %s110, %s112
    %p119 = scmp.eq.s32.totalorder %s18, 1
    %p120 = por %p118, %p119
    %p121 = scmp.ne.s32.totalorder %s112, %s113
    %p122 = scmp.eq.s32.totalorder %s18, 0
    %p123 = por %p121, %p122
    %p124 = scmp.ne.s32.totalorder %s112, %s113
    %p125 = scmp.eq.s32.totalorder %s19, 1
    %p126 = por %p124, %p125
    %p128 = scmp.ne.s32.totalorder %s113, %s127
    %p129 = scmp.eq.s32.totalorder %s19, 0
    %p130 = por %p128, %p129
    %s131 = ssub.s32 %s13, %s20
    %p132 = scmp.eq.s32.totalorder %s131, 0
    %s134 = sadd.s32 %s133, 1
    %s135 = scalar_select %p132, %s133, %s134
    %p138 = pneg %p132
    %p139 = scmp.eq.s32.totalorder %s13, 1
    %p140 = por %p138, %p139
    %p141 = scmp.ne.s32.totalorder %s133, %s136
    %p142 = scmp.eq.s32.totalorder %s13, 0
    %p143 = por %p141, %p142
    %p144 = scmp.ne.s32.totalorder %s133, %s136
    %p145 = scmp.eq.s32.totalorder %s18, 1
    %p146 = por %p144, %p145
    %p147 = scmp.ne.s32.totalorder %s136, %s137
    %p148 = scmp.eq.s32.totalorder %s18, 0
    %p149 = por %p147, %p148
    %p150 = scmp.ne.s32.totalorder %s136, %s137
    %p151 = scmp.eq.s32.totalorder %s19, 1
    %p152 = por %p150, %p151
    %p154 = scmp.ne.s32.totalorder %s137, %s153
    %p155 = scmp.eq.s32.totalorder %s19, 0
    %p156 = por %p154, %p155
    %s157 = ssub.s32 %s13, %s20
    %p158 = scmp.eq.s32.totalorder %s157, 0
    %s160 = sadd.s32 %s159, 1
    %s161 = scalar_select %p158, %s159, %s160
    %p164 = pneg %p158
    %p165 = scmp.eq.s32.totalorder %s13, 1
    %p166 = por %p164, %p165
    %p167 = scmp.ne.s32.totalorder %s159, %s162
    %p168 = scmp.eq.s32.totalorder %s13, 0
    %p169 = por %p167, %p168
    %p170 = scmp.ne.s32.totalorder %s159, %s162
    %p171 = scmp.eq.s32.totalorder %s18, 1
    %p172 = por %p170, %p171
    %p173 = scmp.ne.s32.totalorder %s162, %s163
    %p174 = scmp.eq.s32.totalorder %s18, 0
    %p175 = por %p173, %p174
    %p176 = scmp.ne.s32.totalorder %s162, %s163
    %p177 = scmp.eq.s32.totalorder %s19, 1
    %p178 = por %p176, %p177
    %p180 = scmp.ne.s32.totalorder %s163, %s179
    %p181 = scmp.eq.s32.totalorder %s19, 0
    %p182 = por %p180, %p181
    %p183 = scmp.le.s32.totalorder 1, %s13
    %p184 = scmp.lt.s32.totalorder %s13, 3
    %p185 = pnand %p183, %p184
    %p186 = pneg %p185
    // Predicated region
    $region9: #{_lambda_.4} parent=5 // pred_check
      _
    $region10: #{_lambda_.4} parent=5 // pred_check_branch
      %188 = sbr.rel (%p185) target = $region12
    $region11: #{_lambda_.4} parent=5 // pred_region
      %s189 = ssub.s32 %s13, 1
      // Predicated region
      $region13: #{_lambda_.4} parent=11 // pred_check
        %p190 = pneg %p60
      $region14: #{_lambda_.4} parent=11 // pred_check_branch
        %192 = sbr.rel (%p190) target = $region16
      $region15: #{_lambda_.4} parent=11 // pred_region
        _
      $region16: #{_lambda_.4} parent=11 // pred_fallthru
        _
      // Predicated region
      $region17: #{_lambda_.4} parent=11 // pred_check
        %p193 = pneg %p81
      $region18: #{_lambda_.4} parent=11 // pred_check_branch
        %195 = sbr.rel (%p193) target = $region20
      $region19: #{_lambda_.4} parent=11 // pred_region
        _
      $region20: #{_lambda_.4} parent=11 // pred_fallthru
        _
      // Predicated region
      $region21: #{_lambda_.4} parent=11 // pred_check
        %p196 = pneg %p102
      $region22: #{_lambda_.4} parent=11 // pred_check_branch
        %198 = sbr.rel (%p196) target = $region24
      $region23: #{_lambda_.4} parent=11 // pred_region
        _
      $region24: #{_lambda_.4} parent=11 // pred_fallthru
        _
      // Predicated region
      $region25: #{_lambda_.4} parent=11 // pred_check
        %p199 = pneg %p123
      $region26: #{_lambda_.4} parent=11 // pred_check_branch
        %201 = sbr.rel (%p199) target = $region28
      $region27: #{_lambda_.4} parent=11 // pred_region
        _
      $region28: #{_lambda_.4} parent=11 // pred_fallthru
        _
    $region12: #{_lambda_.4} parent=5 // pred_fallthru
      _
    %p202 = scmp.lt.s32.totalorder %s13, 2
    // Predicated region
    $region29: #{_lambda_.4} parent=5 // pred_check
      %p203 = pneg %p202
    $region30: #{_lambda_.4} parent=5 // pred_check_branch
      %205 = sbr.rel (%p203) target = $region32
    $region31: #{_lambda_.4} parent=5 // pred_region
      // Predicated region
      $region33: #{_lambda_.4} parent=31 // pred_check
        %p206 = pneg %p33
      $region34: #{_lambda_.4} parent=31 // pred_check_branch
        %208 = sbr.rel (%p206) target = $region36
      $region35: #{_lambda_.4} parent=31 // pred_region
        %s209 = smul.u32 32, %s13
        %p210 = scmp.lt.s32.totalorder %s209, 63
        %s211 = scalar_select %p210, %s209, 63
        %s212 = smul.addr %s211, 4
        %s213 = scalar_lea.vmem %s0, %s212
        %s214 = smul.u32 32, %s13
      $region36: #{_lambda_.4} parent=31 // pred_fallthru
        _
    $region32: #{_lambda_.4} parent=5 // pred_fallthru
      _
    %p215 = scmp.le.s32.totalorder 1, %s13
    %p216 = scmp.lt.s32.totalorder %s13, 3
    %p217 = pnand %p215, %p216
    %p218 = pneg %p217
    // Predicated region
    $region37: #{_lambda_.4} parent=5 // pred_check
      _
    $region38: #{_lambda_.4} parent=5 // pred_check_branch
      %220 = sbr.rel (%p217) target = $region40
    $region39: #{_lambda_.4} parent=5 // pred_region
      %s221 = ssub.s32 %s13, 1
      %s222 = smul.u32 32, %s18
      %p223 = scmp.lt.s32.totalorder %s222, 63
      %s224 = scalar_select %p223, %s222, 63
      %s225 = smul.addr %s224, 4
      %s226 = scalar_lea.vmem %s0, %s225
      %p227 = pneg %p39
      %p228 = pneg %p36
      %p229 = pneg %p60
      %p230 = pneg %p57
      %p231 = pneg %p81
      %p232 = pneg %p78
      %p233 = pneg %p102
      %p234 = pneg %p99
      %p235 = pneg %p123
      %p236 = pneg %p120
      %p237 = pneg %p149
      %p238 = pneg %p146
      %s239 = smul.u32 32, %s18
      %p240 = scmp.lt.s32.totalorder %s239, 63
      %s241 = scalar_select %p240, %s239, 63
      %s242 = smul.addr %s241, 4
      %s243 = scalar_lea.vmem %s5, %s242
      %p244 = pneg %p175
      %p245 = pneg %p172
      %s246 = smul.u32 32, %s18
      %p247 = scmp.lt.s32.totalorder %s246, 63
      %s248 = scalar_select %p247, %s246, 63
      %s249 = smul.addr %s248, 4
      %s250 = scalar_lea.vmem %s6, %s249
      %s251 = smul.u32 32, %s18
      %p252 = scmp.lt.s32.totalorder %s251, 63
      %s253 = scalar_select %p252, %s251, 63
      %s254 = smul.addr %s253, 4
      %s255 = scalar_lea.vmem %s0, %s254
      %s256 = smul.u32 32, %s18
      %s257 = smul.u32 32, %s18
      %p258 = scmp.lt.s32.totalorder %s257, 63
      %s259 = scalar_select %p258, %s257, 63
      %s260 = smul.addr %s259, 4
      %s261 = scalar_lea.vmem %s5, %s260
      %s262 = smul.u32 32, %s18
      %s263 = smul.u32 32, %s18
      %p264 = scmp.lt.s32.totalorder %s263, 63
      %s265 = scalar_select %p264, %s263, 63
      %s266 = smul.addr %s265, 4
      %s267 = scalar_lea.vmem %s6, %s266
      %s268 = smul.u32 32, %s18
      %v270 = vld [vmem:[%s255] sm:$0xf]
      %v271 = vld [vmem:[%s255 + $0x4] sm:$0xf]
      %v272 = vld [vmem:[%s255 + $0x8] sm:$0xf]
      %v273 = vld [vmem:[%s255 + $0xc] sm:$0xf]
      %v274 = vld [vmem:[%s255 + $0x10] sm:$0xf]
      %v275 = vld [vmem:[%s255 + $0x14] sm:$0xf]
      %v276 = vld [vmem:[%s255 + $0x18] sm:$0xf]
      %v277 = vld [vmem:[%s255 + $0x1c] sm:$0xf]
      %v278 = vld [vmem:[%s255 + $0x20] sm:$0xf]
      %v279 = vld [vmem:[%s255 + $0x24] sm:$0xf]
      %v280 = vld [vmem:[%s255 + $0x28] sm:$0xf]
      %v281 = vld [vmem:[%s255 + $0x2c] sm:$0xf]
      %v282 = vld [vmem:[%s255 + $0x30] sm:$0xf]
      %v283 = vld [vmem:[%s255 + $0x34] sm:$0xf]
      %v284 = vld [vmem:[%s255 + $0x38] sm:$0xf]
      %v285 = vld [vmem:[%s255 + $0x3c] sm:$0xf]
      %v286 = vld [vmem:[%s255 + $0x40] sm:$0xf]
      %v287 = vld [vmem:[%s255 + $0x44] sm:$0xf]
      %v288 = vld [vmem:[%s255 + $0x48] sm:$0xf]
      %v289 = vld [vmem:[%s255 + $0x4c] sm:$0xf]
      %v290 = vld [vmem:[%s255 + $0x50] sm:$0xf]
      %v291 = vld [vmem:[%s255 + $0x54] sm:$0xf]
      %v292 = vld [vmem:[%s255 + $0x58] sm:$0xf]
      %v293 = vld [vmem:[%s255 + $0x5c] sm:$0xf]
      %v294 = vld [vmem:[%s255 + $0x60] sm:$0xf]
      %v295 = vld [vmem:[%s255 + $0x64] sm:$0xf]
      %v296 = vld [vmem:[%s255 + $0x68] sm:$0xf]
      %v297 = vld [vmem:[%s255 + $0x6c] sm:$0xf]
      %v298 = vld [vmem:[%s255 + $0x70] sm:$0xf]
      %v299 = vld [vmem:[%s255 + $0x74] sm:$0xf]
      %v300 = vld [vmem:[%s255 + $0x78] sm:$0xf]
      %v301 = vld [vmem:[%s255 + $0x7c] sm:$0xf]
      %v302 = vld [vmem:[%s1] sm:$0xf]
      %v303 = vld [vmem:[%s3] sm:$0x1]
      %v305 = vlaneseq
      %v306 = vshrl.u32 %v305, 7
      %v307 = vsub.s32 0, %v306
      %v308 = vrot.slane %v303, %v307
      %v342 = vunpack.c.l.b16 %v270
      %v343 = vunpack.c.l.b16 %v271
      %v344 = vunpack.c.l.b16 %v272
      %v345 = vunpack.c.l.b16 %v273
      %v346 = vunpack.c.l.b16 %v274
      %v347 = vunpack.c.l.b16 %v275
      %v348 = vunpack.c.l.b16 %v276
      %v349 = vunpack.c.l.b16 %v277
      %v350 = vunpack.c.l.b16 %v278
      %v351 = vunpack.c.l.b16 %v279
      %v352 = vunpack.c.l.b16 %v280
      %v353 = vunpack.c.l.b16 %v281
      %v354 = vunpack.c.l.b16 %v282
      %v355 = vunpack.c.l.b16 %v283
      %v356 = vunpack.c.l.b16 %v284
      %v357 = vunpack.c.l.b16 %v285
      %v358 = vunpack.c.l.b16 %v286
      %v359 = vunpack.c.l.b16 %v287
      %v360 = vunpack.c.l.b16 %v288
      %v361 = vunpack.c.l.b16 %v289
      %v362 = vunpack.c.l.b16 %v290
      %v363 = vunpack.c.l.b16 %v291
      %v364 = vunpack.c.l.b16 %v292
      %v365 = vunpack.c.l.b16 %v293
      %v366 = vunpack.c.l.b16 %v294
      %v367 = vunpack.c.l.b16 %v295
      %v368 = vunpack.c.l.b16 %v296
      %v369 = vunpack.c.l.b16 %v297
      %v370 = vunpack.c.l.b16 %v298
      %v371 = vunpack.c.l.b16 %v299
      %v372 = vunpack.c.l.b16 %v300
      %v373 = vunpack.c.l.b16 %v301
      %v374 = vpack.c.b16 %v343, %v342
      %v375 = vpack.c.b16 %v345, %v344
      %v376 = vpack.c.b16 %v347, %v346
      %v377 = vpack.c.b16 %v349, %v348
      %v378 = vpack.c.b16 %v351, %v350
      %v379 = vpack.c.b16 %v353, %v352
      %v380 = vpack.c.b16 %v355, %v354
      %v381 = vpack.c.b16 %v357, %v356
      %v382 = vpack.c.b16 %v359, %v358
      %v383 = vpack.c.b16 %v361, %v360
      %v384 = vpack.c.b16 %v363, %v362
      %v385 = vpack.c.b16 %v365, %v364
      %v386 = vpack.c.b16 %v367, %v366
      %v387 = vpack.c.b16 %v369, %v368
      %v388 = vpack.c.b16 %v371, %v370
      %v389 = vpack.c.b16 %v373, %v372
      %vm390 = vcmask 64512
      %v392 = vsel %vm390, %v374, 0
      %v395 = vsel %vm390, %v375, 0
      %v398 = vsel %vm390, %v376, 0
      %v401 = vsel %vm390, %v377, 0
      %v404 = vsel %vm390, %v378, 0
      %v407 = vsel %vm390, %v379, 0
      %v410 = vsel %vm390, %v380, 0
      %v413 = vsel %vm390, %v381, 0
      %v416 = vsel %vm390, %v382, 0
      %v419 = vsel %vm390, %v383, 0
      %v422 = vsel %vm390, %v384, 0
      %v425 = vsel %vm390, %v385, 0
      %v428 = vsel %vm390, %v386, 0
      %v431 = vsel %vm390, %v387, 0
      %v434 = vsel %vm390, %v388, 0
      %v437 = vsel %vm390, %v389, 0
      %vm439 = vcmask 1043456
      %v441 = vsel %vm439, %v302, 0
      %443 = vmatprep.subr.bf16.mxu0 0
      %444 = vmatpush1.bf16.msra.mxu0 0
      %445 = vmatprep.subr.bf16.mxu0 0
      %446 = vmatpush1.bf16.msra.mxu0 0
      %447 = vmatprep.subr.bf16.mxu0 0
      %448 = vmatpush1.bf16.msra.mxu0 0
      %449 = vmatprep.subr.bf16.mxu0 0
      %450 = vmatpush1.bf16.msra.mxu0 0
      %451 = vmatprep.subr.bf16.mxu0 0
      %452 = vmatpush1.bf16.msra.mxu0 0
      %453 = vmatprep.subr.bf16.mxu0 0
      %454 = vmatpush1.bf16.msra.mxu0 0
      %455 = vmatprep.subr.bf16.mxu0 0
      %456 = vmatpush1.bf16.msra.mxu0 0
      %457 = vmatprep.subr.bf16.mxu0 0
      %458 = vmatpush1.bf16.msra.mxu0 %v441
      %459 = vmatprep.subr.bf16.mxu0 0
      %460 = vmatpush2.bf16.msra.mxu0 0
      %461 = vmatprep.subr.bf16.mxu0 0
      %462 = vmatpush2.bf16.msra.mxu0 0
      %463 = vmatprep.subr.bf16.mxu0 0
      %464 = vmatpush2.bf16.msra.mxu0 0
      %465 = vmatprep.subr.bf16.mxu0 0
      %466 = vmatpush2.bf16.msra.mxu0 0
      %467 = vmatprep.subr.bf16.mxu0 0
      %468 = vmatpush2.bf16.msra.mxu0 0
      %469 = vmatprep.subr.bf16.mxu0 0
      %470 = vmatpush2.bf16.msra.mxu0 0
      %471 = vmatprep.subr.bf16.mxu0 0
      %472 = vmatpush2.bf16.msra.mxu0 0
      %473 = vmatprep.subr.bf16.mxu0 0
      %474 = vmatpush2.bf16.msra.mxu0 0
      %475 = vmatprep.mubr.bf16.mxu0 0
      %476 = vmatmul.mubr.bf16.gmra.mxu0 %v392
      %v477 = vpop.f32.mrf.mxu0
      %v478 = vadd.f32 %v308, %v477
      %v479 = vpop.f32.mrf.mxu0
      %v480 = vpop.f32.mrf.mxu0
      %v481 = vadd.f32 %v308, %v480
      %v482 = vpop.f32.mrf.mxu0
      %483 = vmatprep.mubr.bf16.mxu0 0
      %484 = vmatmul.mubr.bf16.gmra.mxu0 %v395
      %v485 = vpop.f32.mrf.mxu0
      %v486 = vadd.f32 %v308, %v485
      %v487 = vpop.f32.mrf.mxu0
      %v488 = vpop.f32.mrf.mxu0
      %v489 = vadd.f32 %v308, %v488
      %v490 = vpop.f32.mrf.mxu0
      %491 = vmatprep.mubr.bf16.mxu0 0
      %492 = vmatmul.mubr.bf16.gmra.mxu0 %v398
      %v493 = vpop.f32.mrf.mxu0
      %v494 = vadd.f32 %v308, %v493
      %v495 = vpop.f32.mrf.mxu0
      %v496 = vpop.f32.mrf.mxu0
      %v497 = vadd.f32 %v308, %v496
      %v498 = vpop.f32.mrf.mxu0
      %499 = vmatprep.mubr.bf16.mxu0 0
      %500 = vmatmul.mubr.bf16.gmra.mxu0 %v401
      %v501 = vpop.f32.mrf.mxu0
      %v502 = vadd.f32 %v308, %v501
      %v503 = vpop.f32.mrf.mxu0
      %v504 = vpop.f32.mrf.mxu0
      %v505 = vadd.f32 %v308, %v504
      %v506 = vpop.f32.mrf.mxu0
      %507 = vmatprep.mubr.bf16.mxu0 0
      %508 = vmatmul.mubr.bf16.gmra.mxu0 %v404
      %v509 = vpop.f32.mrf.mxu0
      %v510 = vadd.f32 %v308, %v509
      %v511 = vpop.f32.mrf.mxu0
      %v512 = vpop.f32.mrf.mxu0
      %v513 = vadd.f32 %v308, %v512
      %v514 = vpop.f32.mrf.mxu0
      %515 = vmatprep.mubr.bf16.mxu0 0
      %516 = vmatmul.mubr.bf16.gmra.mxu0 %v407
      %v517 = vpop.f32.mrf.mxu0
      %v518 = vadd.f32 %v308, %v517
      %v519 = vpop.f32.mrf.mxu0
      %v520 = vpop.f32.mrf.mxu0
      %v521 = vadd.f32 %v308, %v520
      %v522 = vpop.f32.mrf.mxu0
      %523 = vmatprep.mubr.bf16.mxu0 0
      %524 = vmatmul.mubr.bf16.gmra.mxu0 %v410
      %v525 = vpop.f32.mrf.mxu0
      %v526 = vadd.f32 %v308, %v525
      %v527 = vpop.f32.mrf.mxu0
      %v528 = vpop.f32.mrf.mxu0
      %v529 = vadd.f32 %v308, %v528
      %v530 = vpop.f32.mrf.mxu0
      %531 = vmatprep.mubr.bf16.mxu0 0
      %532 = vmatmul.mubr.bf16.gmra.mxu0 %v413
      %v533 = vpop.f32.mrf.mxu0
      %v534 = vadd.f32 %v308, %v533
      %v535 = vpop.f32.mrf.mxu0
      %v536 = vpop.f32.mrf.mxu0
      %v537 = vadd.f32 %v308, %v536
      %v538 = vpop.f32.mrf.mxu0
      %539 = vmatprep.mubr.bf16.mxu0 0
      %540 = vmatmul.mubr.bf16.gmra.mxu0 %v416
      %v541 = vpop.f32.mrf.mxu0
      %v542 = vadd.f32 %v308, %v541
      %v543 = vpop.f32.mrf.mxu0
      %v544 = vpop.f32.mrf.mxu0
      %v545 = vadd.f32 %v308, %v544
      %v546 = vpop.f32.mrf.mxu0
      %547 = vmatprep.mubr.bf16.mxu0 0
      %548 = vmatmul.mubr.bf16.gmra.mxu0 %v419
      %v549 = vpop.f32.mrf.mxu0
      %v550 = vadd.f32 %v308, %v549
      %v551 = vpop.f32.mrf.mxu0
      %v552 = vpop.f32.mrf.mxu0
      %v553 = vadd.f32 %v308, %v552
      %v554 = vpop.f32.mrf.mxu0
      %555 = vmatprep.mubr.bf16.mxu0 0
      %556 = vmatmul.mubr.bf16.gmra.mxu0 %v422
      %v557 = vpop.f32.mrf.mxu0
      %v558 = vadd.f32 %v308, %v557
      %v559 = vpop.f32.mrf.mxu0
      %v560 = vpop.f32.mrf.mxu0
      %v561 = vadd.f32 %v308, %v560
      %v562 = vpop.f32.mrf.mxu0
      %563 = vmatprep.mubr.bf16.mxu0 0
      %564 = vmatmul.mubr.bf16.gmra.mxu0 %v425
      %v565 = vpop.f32.mrf.mxu0
      %v566 = vadd.f32 %v308, %v565
      %v567 = vpop.f32.mrf.mxu0
      %v568 = vpop.f32.mrf.mxu0
      %v569 = vadd.f32 %v308, %v568
      %v570 = vpop.f32.mrf.mxu0
      %571 = vmatprep.mubr.bf16.mxu0 0
      %572 = vmatmul.mubr.bf16.gmra.mxu0 %v428
      %v573 = vpop.f32.mrf.mxu0
      %v574 = vadd.f32 %v308, %v573
      %v575 = vpop.f32.mrf.mxu0
      %v576 = vpop.f32.mrf.mxu0
      %v577 = vadd.f32 %v308, %v576
      %v578 = vpop.f32.mrf.mxu0
      %579 = vmatprep.mubr.bf16.mxu0 0
      %580 = vmatmul.mubr.bf16.gmra.mxu0 %v431
      %v581 = vpop.f32.mrf.mxu0
      %v582 = vadd.f32 %v308, %v581
      %v583 = vpop.f32.mrf.mxu0
      %v584 = vpop.f32.mrf.mxu0
      %v585 = vadd.f32 %v308, %v584
      %v586 = vpop.f32.mrf.mxu0
      %587 = vmatprep.mubr.bf16.mxu0 0
      %588 = vmatmul.mubr.bf16.gmra.mxu0 %v434
      %v589 = vpop.f32.mrf.mxu0
      %v590 = vadd.f32 %v308, %v589
      %v591 = vpop.f32.mrf.mxu0
      %v592 = vpop.f32.mrf.mxu0
      %v593 = vadd.f32 %v308, %v592
      %v594 = vpop.f32.mrf.mxu0
      %595 = vmatprep.mubr.bf16.mxu0 0
      %596 = vmatmul.mubr.bf16.gmra.mxu0 %v437
      %v597 = vpop.f32.mrf.mxu0
      %v598 = vadd.f32 %v308, %v597
      %v599 = vpop.f32.mrf.mxu0
      %v600 = vpop.f32.mrf.mxu0
      %v601 = vadd.f32 %v308, %v600
      %v602 = vpop.f32.mrf.mxu0
      %603 = vdwg.mxu0
      %v604 = vxor.u32 %v478, 2147483648
      %v605 = vxor.u32 %v481, 2147483648
      %v606 = vxor.u32 %v486, 2147483648
      %v607 = vxor.u32 %v489, 2147483648
      %v608 = vxor.u32 %v494, 2147483648
      %v609 = vxor.u32 %v497, 2147483648
      %v610 = vxor.u32 %v502, 2147483648
      %v611 = vxor.u32 %v505, 2147483648
      %v612 = vxor.u32 %v510, 2147483648
      %v613 = vxor.u32 %v513, 2147483648
      %v614 = vxor.u32 %v518, 2147483648
      %v615 = vxor.u32 %v521, 2147483648
      %v616 = vxor.u32 %v526, 2147483648
      %v617 = vxor.u32 %v529, 2147483648
      %v618 = vxor.u32 %v534, 2147483648
      %v619 = vxor.u32 %v537, 2147483648
      %v620 = vxor.u32 %v542, 2147483648
      %v621 = vxor.u32 %v545, 2147483648
      %v622 = vxor.u32 %v550, 2147483648
      %v623 = vxor.u32 %v553, 2147483648
      %v624 = vxor.u32 %v558, 2147483648
      %v625 = vxor.u32 %v561, 2147483648
      %v626 = vxor.u32 %v566, 2147483648
      %v627 = vxor.u32 %v569, 2147483648
      %v628 = vxor.u32 %v574, 2147483648
      %v629 = vxor.u32 %v577, 2147483648
      %v630 = vxor.u32 %v582, 2147483648
      %v631 = vxor.u32 %v585, 2147483648
      %v632 = vxor.u32 %v590, 2147483648
      %v633 = vxor.u32 %v593, 2147483648
      %v634 = vxor.u32 %v598, 2147483648
      %v635 = vxor.u32 %v601, 2147483648
      %v636 = vmul.f32 %v604, 1.442695
      %v637 = vpow.pop %v636
      %v638 = vmul.f32 %v605, 1.442695
      %v639 = vpow.pop %v638
      %v640 = vmul.f32 %v606, 1.442695
      %v641 = vpow.pop %v640
      %v642 = vmul.f32 %v607, 1.442695
      %v643 = vpow.pop %v642
      %v644 = vmul.f32 %v608, 1.442695
      %v645 = vpow.pop %v644
      %v646 = vmul.f32 %v609, 1.442695
      %v647 = vpow.pop %v646
      %v648 = vmul.f32 %v610, 1.442695
      %v649 = vpow.pop %v648
      %v650 = vmul.f32 %v611, 1.442695
      %v651 = vpow.pop %v650
      %v652 = vmul.f32 %v612, 1.442695
      %v653 = vpow.pop %v652
      %v654 = vmul.f32 %v613, 1.442695
      %v655 = vpow.pop %v654
      %v656 = vmul.f32 %v614, 1.442695
      %v657 = vpow.pop %v656
      %v658 = vmul.f32 %v615, 1.442695
      %v659 = vpow.pop %v658
      %v660 = vmul.f32 %v616, 1.442695
      %v661 = vpow.pop %v660
      %v662 = vmul.f32 %v617, 1.442695
      %v663 = vpow.pop %v662
      %v664 = vmul.f32 %v618, 1.442695
      %v665 = vpow.pop %v664
      %v666 = vmul.f32 %v619, 1.442695
      %v667 = vpow.pop %v666
      %v668 = vmul.f32 %v620, 1.442695
      %v669 = vpow.pop %v668
      %v670 = vmul.f32 %v621, 1.442695
      %v671 = vpow.pop %v670
      %v672 = vmul.f32 %v622, 1.442695
      %v673 = vpow.pop %v672
      %v674 = vmul.f32 %v623, 1.442695
      %v675 = vpow.pop %v674
      %v676 = vmul.f32 %v624, 1.442695
      %v677 = vpow.pop %v676
      %v678 = vmul.f32 %v625, 1.442695
      %v679 = vpow.pop %v678
      %v680 = vmul.f32 %v626, 1.442695
      %v681 = vpow.pop %v680
      %v682 = vmul.f32 %v627, 1.442695
      %v683 = vpow.pop %v682
      %v684 = vmul.f32 %v628, 1.442695
      %v685 = vpow.pop %v684
      %v686 = vmul.f32 %v629, 1.442695
      %v687 = vpow.pop %v686
      %v688 = vmul.f32 %v630, 1.442695
      %v689 = vpow.pop %v688
      %v690 = vmul.f32 %v631, 1.442695
      %v691 = vpow.pop %v690
      %v692 = vmul.f32 %v632, 1.442695
      %v693 = vpow.pop %v692
      %v694 = vmul.f32 %v633, 1.442695
      %v695 = vpow.pop %v694
      %v696 = vmul.f32 %v634, 1.442695
      %v697 = vpow.pop %v696
      %v698 = vmul.f32 %v635, 1.442695
      %v699 = vpow.pop %v698
      %v700 = vadd.f32 %v637, 1.0
      %v701 = vadd.f32 %v639, 1.0
      %v702 = vadd.f32 %v641, 1.0
      %v703 = vadd.f32 %v643, 1.0
      %v704 = vadd.f32 %v645, 1.0
      %v705 = vadd.f32 %v647, 1.0
      %v706 = vadd.f32 %v649, 1.0
      %v707 = vadd.f32 %v651, 1.0
      %v708 = vadd.f32 %v653, 1.0
      %v709 = vadd.f32 %v655, 1.0
      %v710 = vadd.f32 %v657, 1.0
      %v711 = vadd.f32 %v659, 1.0
      %v712 = vadd.f32 %v661, 1.0
      %v713 = vadd.f32 %v663, 1.0
      %v714 = vadd.f32 %v665, 1.0
      %v715 = vadd.f32 %v667, 1.0
      %v716 = vadd.f32 %v669, 1.0
      %v717 = vadd.f32 %v671, 1.0
      %v718 = vadd.f32 %v673, 1.0
      %v719 = vadd.f32 %v675, 1.0
      %v720 = vadd.f32 %v677, 1.0
      %v721 = vadd.f32 %v679, 1.0
      %v722 = vadd.f32 %v681, 1.0
      %v723 = vadd.f32 %v683, 1.0
      %v724 = vadd.f32 %v685, 1.0
      %v725 = vadd.f32 %v687, 1.0
      %v726 = vadd.f32 %v689, 1.0
      %v727 = vadd.f32 %v691, 1.0
      %v728 = vadd.f32 %v693, 1.0
      %v729 = vadd.f32 %v695, 1.0
      %v730 = vadd.f32 %v697, 1.0
      %v731 = vadd.f32 %v699, 1.0
      %v732 = vrcp.pop %v700
      %v733 = vmul.f32 1.0, %v732
      %v734 = vrcp.pop %v701
      %v735 = vmul.f32 1.0, %v734
      %v736 = vrcp.pop %v702
      %v737 = vmul.f32 1.0, %v736
      %v738 = vrcp.pop %v703
      %v739 = vmul.f32 1.0, %v738
      %v740 = vrcp.pop %v704
      %v741 = vmul.f32 1.0, %v740
      %v742 = vrcp.pop %v705
      %v743 = vmul.f32 1.0, %v742
      %v744 = vrcp.pop %v706
      %v745 = vmul.f32 1.0, %v744
      %v746 = vrcp.pop %v707
      %v747 = vmul.f32 1.0, %v746
      %v748 = vrcp.pop %v708
      %v749 = vmul.f32 1.0, %v748
      %v750 = vrcp.pop %v709
      %v751 = vmul.f32 1.0, %v750
      %v752 = vrcp.pop %v710
      %v753 = vmul.f32 1.0, %v752
      %v754 = vrcp.pop %v711
      %v755 = vmul.f32 1.0, %v754
      %v756 = vrcp.pop %v712
      %v757 = vmul.f32 1.0, %v756
      %v758 = vrcp.pop %v713
      %v759 = vmul.f32 1.0, %v758
      %v760 = vrcp.pop %v714
      %v761 = vmul.f32 1.0, %v760
      %v762 = vrcp.pop %v715
      %v763 = vmul.f32 1.0, %v762
      %v764 = vrcp.pop %v716
      %v765 = vmul.f32 1.0, %v764
      %v766 = vrcp.pop %v717
      %v767 = vmul.f32 1.0, %v766
      %v768 = vrcp.pop %v718
      %v769 = vmul.f32 1.0, %v768
      %v770 = vrcp.pop %v719
      %v771 = vmul.f32 1.0, %v770
      %v772 = vrcp.pop %v720
      %v773 = vmul.f32 1.0, %v772
      %v774 = vrcp.pop %v721
      %v775 = vmul.f32 1.0, %v774
      %v776 = vrcp.pop %v722
      %v777 = vmul.f32 1.0, %v776
      %v778 = vrcp.pop %v723
      %v779 = vmul.f32 1.0, %v778
      %v780 = vrcp.pop %v724
      %v781 = vmul.f32 1.0, %v780
      %v782 = vrcp.pop %v725
      %v783 = vmul.f32 1.0, %v782
      %v784 = vrcp.pop %v726
      %v785 = vmul.f32 1.0, %v784
      %v786 = vrcp.pop %v727
      %v787 = vmul.f32 1.0, %v786
      %v788 = vrcp.pop %v728
      %v789 = vmul.f32 1.0, %v788
      %v790 = vrcp.pop %v729
      %v791 = vmul.f32 1.0, %v790
      %v792 = vrcp.pop %v730
      %v793 = vmul.f32 1.0, %v792
      %v794 = vrcp.pop %v731
      %v795 = vmul.f32 1.0, %v794
      %v796 = vmul.f32 %v478, %v733
      %v797 = vmul.f32 %v481, %v735
      %v798 = vmul.f32 %v486, %v737
      %v799 = vmul.f32 %v489, %v739
      %v800 = vmul.f32 %v494, %v741
      %v801 = vmul.f32 %v497, %v743
      %v802 = vmul.f32 %v502, %v745
      %v803 = vmul.f32 %v505, %v747
      %v804 = vmul.f32 %v510, %v749
      %v805 = vmul.f32 %v513, %v751
      %v806 = vmul.f32 %v518, %v753
      %v807 = vmul.f32 %v521, %v755
      %v808 = vmul.f32 %v526, %v757
      %v809 = vmul.f32 %v529, %v759
      %v810 = vmul.f32 %v534, %v761
      %v811 = vmul.f32 %v537, %v763
      %v812 = vmul.f32 %v542, %v765
      %v813 = vmul.f32 %v545, %v767
      %v814 = vmul.f32 %v550, %v769
      %v815 = vmul.f32 %v553, %v771
      %v816 = vmul.f32 %v558, %v773
      %v817 = vmul.f32 %v561, %v775
      %v818 = vmul.f32 %v566, %v777
      %v819 = vmul.f32 %v569, %v779
      %v820 = vmul.f32 %v574, %v781
      %v821 = vmul.f32 %v577, %v783
      %v822 = vmul.f32 %v582, %v785
      %v823 = vmul.f32 %v585, %v787
      %v824 = vmul.f32 %v590, %v789
      %v825 = vmul.f32 %v593, %v791
      %v826 = vmul.f32 %v598, %v793
      %v827 = vmul.f32 %v601, %v795
      %v828 = vpack.c.bf16 %v797, %v796
      %v829 = vpack.c.bf16 %v799, %v798
      %v830 = vpack.c.bf16 %v801, %v800
      %v831 = vpack.c.bf16 %v803, %v802
      %v832 = vpack.c.bf16 %v805, %v804
      %v833 = vpack.c.bf16 %v807, %v806
      %v834 = vpack.c.bf16 %v809, %v808
      %v835 = vpack.c.bf16 %v811, %v810
      %v836 = vpack.c.bf16 %v813, %v812
      %v837 = vpack.c.bf16 %v815, %v814
      %v838 = vpack.c.bf16 %v817, %v816
      %v839 = vpack.c.bf16 %v819, %v818
      %v840 = vpack.c.bf16 %v821, %v820
      %v841 = vpack.c.bf16 %v823, %v822
      %v842 = vpack.c.bf16 %v825, %v824
      %v843 = vpack.c.bf16 %v827, %v826
      %v860 = vunpack.c.l.b16 %v828
      %v861 = vunpack.c.h.b16 %v828
      %v862 = vunpack.c.l.b16 %v829
      %v863 = vunpack.c.h.b16 %v829
      %v864 = vunpack.c.l.b16 %v830
      %v865 = vunpack.c.h.b16 %v830
      %v866 = vunpack.c.l.b16 %v831
      %v867 = vunpack.c.h.b16 %v831
      %v868 = vunpack.c.l.b16 %v832
      %v869 = vunpack.c.h.b16 %v832
      %v870 = vunpack.c.l.b16 %v833
      %v871 = vunpack.c.h.b16 %v833
      %v872 = vunpack.c.l.b16 %v834
      %v873 = vunpack.c.h.b16 %v834
      %v874 = vunpack.c.l.b16 %v835
      %v875 = vunpack.c.h.b16 %v835
      %v876 = vunpack.c.l.b16 %v836
      %v877 = vunpack.c.h.b16 %v836
      %v878 = vunpack.c.l.b16 %v837
      %v879 = vunpack.c.h.b16 %v837
      %v880 = vunpack.c.l.b16 %v838
      %v881 = vunpack.c.h.b16 %v838
      %v882 = vunpack.c.l.b16 %v839
      %v883 = vunpack.c.h.b16 %v839
      %v884 = vunpack.c.l.b16 %v840
      %v885 = vunpack.c.h.b16 %v840
      %v886 = vunpack.c.l.b16 %v841
      %v887 = vunpack.c.h.b16 %v841
      %v888 = vunpack.c.l.b16 %v842
      %v889 = vunpack.c.h.b16 %v842
      %v890 = vunpack.c.l.b16 %v843
      %v891 = vunpack.c.h.b16 %v843
      %v892 = vpack.c.b16 %v860, %v860
      %v893 = vpack.c.b16 %v861, %v861
      %v894 = vpack.c.b16 %v862, %v862
      %v895 = vpack.c.b16 %v863, %v863
      %v896 = vpack.c.b16 %v864, %v864
      %v897 = vpack.c.b16 %v865, %v865
      %v898 = vpack.c.b16 %v866, %v866
      %v899 = vpack.c.b16 %v867, %v867
      %v900 = vpack.c.b16 %v868, %v868
      %v901 = vpack.c.b16 %v869, %v869
      %v902 = vpack.c.b16 %v870, %v870
      %v903 = vpack.c.b16 %v871, %v871
      %v904 = vpack.c.b16 %v872, %v872
      %v905 = vpack.c.b16 %v873, %v873
      %v906 = vpack.c.b16 %v874, %v874
      %v907 = vpack.c.b16 %v875, %v875
      %v908 = vpack.c.b16 %v876, %v876
      %v909 = vpack.c.b16 %v877, %v877
      %v910 = vpack.c.b16 %v878, %v878
      %v911 = vpack.c.b16 %v879, %v879
      %v912 = vpack.c.b16 %v880, %v880
      %v913 = vpack.c.b16 %v881, %v881
      %v914 = vpack.c.b16 %v882, %v882
      %v915 = vpack.c.b16 %v883, %v883
      %v916 = vpack.c.b16 %v884, %v884
      %v917 = vpack.c.b16 %v885, %v885
      %v918 = vpack.c.b16 %v886, %v886
      %v919 = vpack.c.b16 %v887, %v887
      %v920 = vpack.c.b16 %v888, %v888
      %v921 = vpack.c.b16 %v889, %v889
      %v922 = vpack.c.b16 %v890, %v890
      %v923 = vpack.c.b16 %v891, %v891
      %vm956 = vcmask 27648
      %957 = vst.msk [vmem:[%s261] sm:$0xf] %vm956, %v892
      %958 = vst.msk [vmem:[%s261 + $0x4] sm:$0xf] %vm956, %v893
      %959 = vst.msk [vmem:[%s261 + $0x8] sm:$0xf] %vm956, %v894
      %960 = vst.msk [vmem:[%s261 + $0xc] sm:$0xf] %vm956, %v895
      %961 = vst.msk [vmem:[%s261 + $0x10] sm:$0xf] %vm956, %v896
      %962 = vst.msk [vmem:[%s261 + $0x14] sm:$0xf] %vm956, %v897
      %963 = vst.msk [vmem:[%s261 + $0x18] sm:$0xf] %vm956, %v898
      %964 = vst.msk [vmem:[%s261 + $0x1c] sm:$0xf] %vm956, %v899
      %965 = vst.msk [vmem:[%s261 + $0x20] sm:$0xf] %vm956, %v900
      %966 = vst.msk [vmem:[%s261 + $0x24] sm:$0xf] %vm956, %v901
      %967 = vst.msk [vmem:[%s261 + $0x28] sm:$0xf] %vm956, %v902
      %968 = vst.msk [vmem:[%s261 + $0x2c] sm:$0xf] %vm956, %v903
      %969 = vst.msk [vmem:[%s261 + $0x30] sm:$0xf] %vm956, %v904
      %970 = vst.msk [vmem:[%s261 + $0x34] sm:$0xf] %vm956, %v905
      %971 = vst.msk [vmem:[%s261 + $0x38] sm:$0xf] %vm956, %v906
      %972 = vst.msk [vmem:[%s261 + $0x3c] sm:$0xf] %vm956, %v907
      %973 = vst.msk [vmem:[%s261 + $0x40] sm:$0xf] %vm956, %v908
      %974 = vst.msk [vmem:[%s261 + $0x44] sm:$0xf] %vm956, %v909
      %975 = vst.msk [vmem:[%s261 + $0x48] sm:$0xf] %vm956, %v910
      %976 = vst.msk [vmem:[%s261 + $0x4c] sm:$0xf] %vm956, %v911
      %977 = vst.msk [vmem:[%s261 + $0x50] sm:$0xf] %vm956, %v912
      %978 = vst.msk [vmem:[%s261 + $0x54] sm:$0xf] %vm956, %v913
      %979 = vst.msk [vmem:[%s261 + $0x58] sm:$0xf] %vm956, %v914
      %980 = vst.msk [vmem:[%s261 + $0x5c] sm:$0xf] %vm956, %v915
      %981 = vst.msk [vmem:[%s261 + $0x60] sm:$0xf] %vm956, %v916
      %982 = vst.msk [vmem:[%s261 + $0x64] sm:$0xf] %vm956, %v917
      %983 = vst.msk [vmem:[%s261 + $0x68] sm:$0xf] %vm956, %v918
      %984 = vst.msk [vmem:[%s261 + $0x6c] sm:$0xf] %vm956, %v919
      %985 = vst.msk [vmem:[%s261 + $0x70] sm:$0xf] %vm956, %v920
      %986 = vst.msk [vmem:[%s261 + $0x74] sm:$0xf] %vm956, %v921
      %987 = vst.msk [vmem:[%s261 + $0x78] sm:$0xf] %vm956, %v922
      %988 = vst.msk [vmem:[%s261 + $0x7c] sm:$0xf] %vm956, %v923
      %v989 = vld [vmem:[%s2] sm:$0xf]
      %v990 = vld [vmem:[%s4] sm:$0x1]
      %v992 = vlaneseq
      %v993 = vshrl.u32 %v992, 7
      %v994 = vsub.s32 0, %v993
      %v995 = vrot.slane %v990, %v994
      %v998 = vsel %vm439, %v989, 0
      %1000 = vmatprep.subr.bf16.mxu0 0
      %1001 = vmatpush1.bf16.msra.mxu0 0
      %1002 = vmatprep.subr.bf16.mxu0 0
      %1003 = vmatpush1.bf16.msra.mxu0 0
      %1004 = vmatprep.subr.bf16.mxu0 0
      %1005 = vmatpush1.bf16.msra.mxu0 0
      %1006 = vmatprep.subr.bf16.mxu0 0
      %1007 = vmatpush1.bf16.msra.mxu0 0
      %1008 = vmatprep.subr.bf16.mxu0 0
      %1009 = vmatpush1.bf16.msra.mxu0 0
      %1010 = vmatprep.subr.bf16.mxu0 0
      %1011 = vmatpush1.bf16.msra.mxu0 0
      %1012 = vmatprep.subr.bf16.mxu0 0
      %1013 = vmatpush1.bf16.msra.mxu0 0
      %1014 = vmatprep.subr.bf16.mxu0 0
      %1015 = vmatpush1.bf16.msra.mxu0 %v998
      %1016 = vmatprep.subr.bf16.mxu0 0
      %1017 = vmatpush2.bf16.msra.mxu0 0
      %1018 = vmatprep.subr.bf16.mxu0 0
      %1019 = vmatpush2.bf16.msra.mxu0 0
      %1020 = vmatprep.subr.bf16.mxu0 0
      %1021 = vmatpush2.bf16.msra.mxu0 0
      %1022 = vmatprep.subr.bf16.mxu0 0
      %1023 = vmatpush2.bf16.msra.mxu0 0
      %1024 = vmatprep.subr.bf16.mxu0 0
      %1025 = vmatpush2.bf16.msra.mxu0 0
      %1026 = vmatprep.subr.bf16.mxu0 0
      %1027 = vmatpush2.bf16.msra.mxu0 0
      %1028 = vmatprep.subr.bf16.mxu0 0
      %1029 = vmatpush2.bf16.msra.mxu0 0
      %1030 = vmatprep.subr.bf16.mxu0 0
      %1031 = vmatpush2.bf16.msra.mxu0 0
      %1032 = vmatprep.mubr.bf16.mxu0 0
      %1033 = vmatmul.mubr.bf16.gmra.mxu0 %v392
      %v1034 = vpop.f32.mrf.mxu0
      %v1035 = vadd.f32 %v995, %v1034
      %v1036 = vpop.f32.mrf.mxu0
      %v1037 = vpop.f32.mrf.mxu0
      %v1038 = vadd.f32 %v995, %v1037
      %v1039 = vpop.f32.mrf.mxu0
      %1040 = vmatprep.mubr.bf16.mxu0 0
      %1041 = vmatmul.mubr.bf16.gmra.mxu0 %v395
      %v1042 = vpop.f32.mrf.mxu0
      %v1043 = vadd.f32 %v995, %v1042
      %v1044 = vpop.f32.mrf.mxu0
      %v1045 = vpop.f32.mrf.mxu0
      %v1046 = vadd.f32 %v995, %v1045
      %v1047 = vpop.f32.mrf.mxu0
      %1048 = vmatprep.mubr.bf16.mxu0 0
      %1049 = vmatmul.mubr.bf16.gmra.mxu0 %v398
      %v1050 = vpop.f32.mrf.mxu0
      %v1051 = vadd.f32 %v995, %v1050
      %v1052 = vpop.f32.mrf.mxu0
      %v1053 = vpop.f32.mrf.mxu0
      %v1054 = vadd.f32 %v995, %v1053
      %v1055 = vpop.f32.mrf.mxu0
      %1056 = vmatprep.mubr.bf16.mxu0 0
      %1057 = vmatmul.mubr.bf16.gmra.mxu0 %v401
      %v1058 = vpop.f32.mrf.mxu0
      %v1059 = vadd.f32 %v995, %v1058
      %v1060 = vpop.f32.mrf.mxu0
      %v1061 = vpop.f32.mrf.mxu0
      %v1062 = vadd.f32 %v995, %v1061
      %v1063 = vpop.f32.mrf.mxu0
      %1064 = vmatprep.mubr.bf16.mxu0 0
      %1065 = vmatmul.mubr.bf16.gmra.mxu0 %v404
      %v1066 = vpop.f32.mrf.mxu0
      %v1067 = vadd.f32 %v995, %v1066
      %v1068 = vpop.f32.mrf.mxu0
      %v1069 = vpop.f32.mrf.mxu0
      %v1070 = vadd.f32 %v995, %v1069
      %v1071 = vpop.f32.mrf.mxu0
      %1072 = vmatprep.mubr.bf16.mxu0 0
      %1073 = vmatmul.mubr.bf16.gmra.mxu0 %v407
      %v1074 = vpop.f32.mrf.mxu0
      %v1075 = vadd.f32 %v995, %v1074
      %v1076 = vpop.f32.mrf.mxu0
      %v1077 = vpop.f32.mrf.mxu0
      %v1078 = vadd.f32 %v995, %v1077
      %v1079 = vpop.f32.mrf.mxu0
      %1080 = vmatprep.mubr.bf16.mxu0 0
      %1081 = vmatmul.mubr.bf16.gmra.mxu0 %v410
      %v1082 = vpop.f32.mrf.mxu0
      %v1083 = vadd.f32 %v995, %v1082
      %v1084 = vpop.f32.mrf.mxu0
      %v1085 = vpop.f32.mrf.mxu0
      %v1086 = vadd.f32 %v995, %v1085
      %v1087 = vpop.f32.mrf.mxu0
      %1088 = vmatprep.mubr.bf16.mxu0 0
      %1089 = vmatmul.mubr.bf16.gmra.mxu0 %v413
      %v1090 = vpop.f32.mrf.mxu0
      %v1091 = vadd.f32 %v995, %v1090
      %v1092 = vpop.f32.mrf.mxu0
      %v1093 = vpop.f32.mrf.mxu0
      %v1094 = vadd.f32 %v995, %v1093
      %v1095 = vpop.f32.mrf.mxu0
      %1096 = vmatprep.mubr.bf16.mxu0 0
      %1097 = vmatmul.mubr.bf16.gmra.mxu0 %v416
      %v1098 = vpop.f32.mrf.mxu0
      %v1099 = vadd.f32 %v995, %v1098
      %v1100 = vpop.f32.mrf.mxu0
      %v1101 = vpop.f32.mrf.mxu0
      %v1102 = vadd.f32 %v995, %v1101
      %v1103 = vpop.f32.mrf.mxu0
      %1104 = vmatprep.mubr.bf16.mxu0 0
      %1105 = vmatmul.mubr.bf16.gmra.mxu0 %v419
      %v1106 = vpop.f32.mrf.mxu0
      %v1107 = vadd.f32 %v995, %v1106
      %v1108 = vpop.f32.mrf.mxu0
      %v1109 = vpop.f32.mrf.mxu0
      %v1110 = vadd.f32 %v995, %v1109
      %v1111 = vpop.f32.mrf.mxu0
      %1112 = vmatprep.mubr.bf16.mxu0 0
      %1113 = vmatmul.mubr.bf16.gmra.mxu0 %v422
      %v1114 = vpop.f32.mrf.mxu0
      %v1115 = vadd.f32 %v995, %v1114
      %v1116 = vpop.f32.mrf.mxu0
      %v1117 = vpop.f32.mrf.mxu0
      %v1118 = vadd.f32 %v995, %v1117
      %v1119 = vpop.f32.mrf.mxu0
      %1120 = vmatprep.mubr.bf16.mxu0 0
      %1121 = vmatmul.mubr.bf16.gmra.mxu0 %v425
      %v1122 = vpop.f32.mrf.mxu0
      %v1123 = vadd.f32 %v995, %v1122
      %v1124 = vpop.f32.mrf.mxu0
      %v1125 = vpop.f32.mrf.mxu0
      %v1126 = vadd.f32 %v995, %v1125
      %v1127 = vpop.f32.mrf.mxu0
      %1128 = vmatprep.mubr.bf16.mxu0 0
      %1129 = vmatmul.mubr.bf16.gmra.mxu0 %v428
      %v1130 = vpop.f32.mrf.mxu0
      %v1131 = vadd.f32 %v995, %v1130
      %v1132 = vpop.f32.mrf.mxu0
      %v1133 = vpop.f32.mrf.mxu0
      %v1134 = vadd.f32 %v995, %v1133
      %v1135 = vpop.f32.mrf.mxu0
      %1136 = vmatprep.mubr.bf16.mxu0 0
      %1137 = vmatmul.mubr.bf16.gmra.mxu0 %v431
      %v1138 = vpop.f32.mrf.mxu0
      %v1139 = vadd.f32 %v995, %v1138
      %v1140 = vpop.f32.mrf.mxu0
      %v1141 = vpop.f32.mrf.mxu0
      %v1142 = vadd.f32 %v995, %v1141
      %v1143 = vpop.f32.mrf.mxu0
      %1144 = vmatprep.mubr.bf16.mxu0 0
      %1145 = vmatmul.mubr.bf16.gmra.mxu0 %v434
      %v1146 = vpop.f32.mrf.mxu0
      %v1147 = vadd.f32 %v995, %v1146
      %v1148 = vpop.f32.mrf.mxu0
      %v1149 = vpop.f32.mrf.mxu0
      %v1150 = vadd.f32 %v995, %v1149
      %v1151 = vpop.f32.mrf.mxu0
      %1152 = vmatprep.mubr.bf16.mxu0 0
      %1153 = vmatmul.mubr.bf16.gmra.mxu0 %v437
      %v1154 = vpop.f32.mrf.mxu0
      %v1155 = vadd.f32 %v995, %v1154
      %v1156 = vpop.f32.mrf.mxu0
      %v1157 = vpop.f32.mrf.mxu0
      %v1158 = vadd.f32 %v995, %v1157
      %v1159 = vpop.f32.mrf.mxu0
      %1160 = vdwg.mxu0
      %v1161 = vxor.u32 %v1035, 2147483648
      %v1162 = vxor.u32 %v1038, 2147483648
      %v1163 = vxor.u32 %v1043, 2147483648
      %v1164 = vxor.u32 %v1046, 2147483648
      %v1165 = vxor.u32 %v1051, 2147483648
      %v1166 = vxor.u32 %v1054, 2147483648
      %v1167 = vxor.u32 %v1059, 2147483648
      %v1168 = vxor.u32 %v1062, 2147483648
      %v1169 = vxor.u32 %v1067, 2147483648
      %v1170 = vxor.u32 %v1070, 2147483648
      %v1171 = vxor.u32 %v1075, 2147483648
      %v1172 = vxor.u32 %v1078, 2147483648
      %v1173 = vxor.u32 %v1083, 2147483648
      %v1174 = vxor.u32 %v1086, 2147483648
      %v1175 = vxor.u32 %v1091, 2147483648
      %v1176 = vxor.u32 %v1094, 2147483648
      %v1177 = vxor.u32 %v1099, 2147483648
      %v1178 = vxor.u32 %v1102, 2147483648
      %v1179 = vxor.u32 %v1107, 2147483648
      %v1180 = vxor.u32 %v1110, 2147483648
      %v1181 = vxor.u32 %v1115, 2147483648
      %v1182 = vxor.u32 %v1118, 2147483648
      %v1183 = vxor.u32 %v1123, 2147483648
      %v1184 = vxor.u32 %v1126, 2147483648
      %v1185 = vxor.u32 %v1131, 2147483648
      %v1186 = vxor.u32 %v1134, 2147483648
      %v1187 = vxor.u32 %v1139, 2147483648
      %v1188 = vxor.u32 %v1142, 2147483648
      %v1189 = vxor.u32 %v1147, 2147483648
      %v1190 = vxor.u32 %v1150, 2147483648
      %v1191 = vxor.u32 %v1155, 2147483648
      %v1192 = vxor.u32 %v1158, 2147483648
      %v1193 = vmul.f32 %v1161, 1.442695
      %v1194 = vpow.pop %v1193
      %v1195 = vmul.f32 %v1162, 1.442695
      %v1196 = vpow.pop %v1195
      %v1197 = vmul.f32 %v1163, 1.442695
      %v1198 = vpow.pop %v1197
      %v1199 = vmul.f32 %v1164, 1.442695
      %v1200 = vpow.pop %v1199
      %v1201 = vmul.f32 %v1165, 1.442695
      %v1202 = vpow.pop %v1201
      %v1203 = vmul.f32 %v1166, 1.442695
      %v1204 = vpow.pop %v1203
      %v1205 = vmul.f32 %v1167, 1.442695
      %v1206 = vpow.pop %v1205
      %v1207 = vmul.f32 %v1168, 1.442695
      %v1208 = vpow.pop %v1207
      %v1209 = vmul.f32 %v1169, 1.442695
      %v1210 = vpow.pop %v1209
      %v1211 = vmul.f32 %v1170, 1.442695
      %v1212 = vpow.pop %v1211
      %v1213 = vmul.f32 %v1171, 1.442695
      %v1214 = vpow.pop %v1213
      %v1215 = vmul.f32 %v1172, 1.442695
      %v1216 = vpow.pop %v1215
      %v1217 = vmul.f32 %v1173, 1.442695
      %v1218 = vpow.pop %v1217
      %v1219 = vmul.f32 %v1174, 1.442695
      %v1220 = vpow.pop %v1219
      %v1221 = vmul.f32 %v1175, 1.442695
      %v1222 = vpow.pop %v1221
      %v1223 = vmul.f32 %v1176, 1.442695
      %v1224 = vpow.pop %v1223
      %v1225 = vmul.f32 %v1177, 1.442695
      %v1226 = vpow.pop %v1225
      %v1227 = vmul.f32 %v1178, 1.442695
      %v1228 = vpow.pop %v1227
      %v1229 = vmul.f32 %v1179, 1.442695
      %v1230 = vpow.pop %v1229
      %v1231 = vmul.f32 %v1180, 1.442695
      %v1232 = vpow.pop %v1231
      %v1233 = vmul.f32 %v1181, 1.442695
      %v1234 = vpow.pop %v1233
      %v1235 = vmul.f32 %v1182, 1.442695
      %v1236 = vpow.pop %v1235
      %v1237 = vmul.f32 %v1183, 1.442695
      %v1238 = vpow.pop %v1237
      %v1239 = vmul.f32 %v1184, 1.442695
      %v1240 = vpow.pop %v1239
      %v1241 = vmul.f32 %v1185, 1.442695
      %v1242 = vpow.pop %v1241
      %v1243 = vmul.f32 %v1186, 1.442695
      %v1244 = vpow.pop %v1243
      %v1245 = vmul.f32 %v1187, 1.442695
      %v1246 = vpow.pop %v1245
      %v1247 = vmul.f32 %v1188, 1.442695
      %v1248 = vpow.pop %v1247
      %v1249 = vmul.f32 %v1189, 1.442695
      %v1250 = vpow.pop %v1249
      %v1251 = vmul.f32 %v1190, 1.442695
      %v1252 = vpow.pop %v1251
      %v1253 = vmul.f32 %v1191, 1.442695
      %v1254 = vpow.pop %v1253
      %v1255 = vmul.f32 %v1192, 1.442695
      %v1256 = vpow.pop %v1255
      %v1257 = vadd.f32 %v1194, 1.0
      %v1258 = vadd.f32 %v1196, 1.0
      %v1259 = vadd.f32 %v1198, 1.0
      %v1260 = vadd.f32 %v1200, 1.0
      %v1261 = vadd.f32 %v1202, 1.0
      %v1262 = vadd.f32 %v1204, 1.0
      %v1263 = vadd.f32 %v1206, 1.0
      %v1264 = vadd.f32 %v1208, 1.0
      %v1265 = vadd.f32 %v1210, 1.0
      %v1266 = vadd.f32 %v1212, 1.0
      %v1267 = vadd.f32 %v1214, 1.0
      %v1268 = vadd.f32 %v1216, 1.0
      %v1269 = vadd.f32 %v1218, 1.0
      %v1270 = vadd.f32 %v1220, 1.0
      %v1271 = vadd.f32 %v1222, 1.0
      %v1272 = vadd.f32 %v1224, 1.0
      %v1273 = vadd.f32 %v1226, 1.0
      %v1274 = vadd.f32 %v1228, 1.0
      %v1275 = vadd.f32 %v1230, 1.0
      %v1276 = vadd.f32 %v1232, 1.0
      %v1277 = vadd.f32 %v1234, 1.0
      %v1278 = vadd.f32 %v1236, 1.0
      %v1279 = vadd.f32 %v1238, 1.0
      %v1280 = vadd.f32 %v1240, 1.0
      %v1281 = vadd.f32 %v1242, 1.0
      %v1282 = vadd.f32 %v1244, 1.0
      %v1283 = vadd.f32 %v1246, 1.0
      %v1284 = vadd.f32 %v1248, 1.0
      %v1285 = vadd.f32 %v1250, 1.0
      %v1286 = vadd.f32 %v1252, 1.0
      %v1287 = vadd.f32 %v1254, 1.0
      %v1288 = vadd.f32 %v1256, 1.0
      %v1289 = vrcp.pop %v1257
      %v1290 = vmul.f32 1.0, %v1289
      %v1291 = vrcp.pop %v1258
      %v1292 = vmul.f32 1.0, %v1291
      %v1293 = vrcp.pop %v1259
      %v1294 = vmul.f32 1.0, %v1293
      %v1295 = vrcp.pop %v1260
      %v1296 = vmul.f32 1.0, %v1295
      %v1297 = vrcp.pop %v1261
      %v1298 = vmul.f32 1.0, %v1297
      %v1299 = vrcp.pop %v1262
      %v1300 = vmul.f32 1.0, %v1299
      %v1301 = vrcp.pop %v1263
      %v1302 = vmul.f32 1.0, %v1301
      %v1303 = vrcp.pop %v1264
      %v1304 = vmul.f32 1.0, %v1303
      %v1305 = vrcp.pop %v1265
      %v1306 = vmul.f32 1.0, %v1305
      %v1307 = vrcp.pop %v1266
      %v1308 = vmul.f32 1.0, %v1307
      %v1309 = vrcp.pop %v1267
      %v1310 = vmul.f32 1.0, %v1309
      %v1311 = vrcp.pop %v1268
      %v1312 = vmul.f32 1.0, %v1311
      %v1313 = vrcp.pop %v1269
      %v1314 = vmul.f32 1.0, %v1313
      %v1315 = vrcp.pop %v1270
      %v1316 = vmul.f32 1.0, %v1315
      %v1317 = vrcp.pop %v1271
      %v1318 = vmul.f32 1.0, %v1317
      %v1319 = vrcp.pop %v1272
      %v1320 = vmul.f32 1.0, %v1319
      %v1321 = vrcp.pop %v1273
      %v1322 = vmul.f32 1.0, %v1321
      %v1323 = vrcp.pop %v1274
      %v1324 = vmul.f32 1.0, %v1323
      %v1325 = vrcp.pop %v1275
      %v1326 = vmul.f32 1.0, %v1325
      %v1327 = vrcp.pop %v1276
      %v1328 = vmul.f32 1.0, %v1327
      %v1329 = vrcp.pop %v1277
      %v1330 = vmul.f32 1.0, %v1329
      %v1331 = vrcp.pop %v1278
      %v1332 = vmul.f32 1.0, %v1331
      %v1333 = vrcp.pop %v1279
      %v1334 = vmul.f32 1.0, %v1333
      %v1335 = vrcp.pop %v1280
      %v1336 = vmul.f32 1.0, %v1335
      %v1337 = vrcp.pop %v1281
      %v1338 = vmul.f32 1.0, %v1337
      %v1339 = vrcp.pop %v1282
      %v1340 = vmul.f32 1.0, %v1339
      %v1341 = vrcp.pop %v1283
      %v1342 = vmul.f32 1.0, %v1341
      %v1343 = vrcp.pop %v1284
      %v1344 = vmul.f32 1.0, %v1343
      %v1345 = vrcp.pop %v1285
      %v1346 = vmul.f32 1.0, %v1345
      %v1347 = vrcp.pop %v1286
      %v1348 = vmul.f32 1.0, %v1347
      %v1349 = vrcp.pop %v1287
      %v1350 = vmul.f32 1.0, %v1349
      %v1351 = vrcp.pop %v1288
      %v1352 = vmul.f32 1.0, %v1351
      %v1353 = vmul.f32 %v1035, %v1290
      %v1354 = vmul.f32 %v1038, %v1292
      %v1355 = vmul.f32 %v1043, %v1294
      %v1356 = vmul.f32 %v1046, %v1296
      %v1357 = vmul.f32 %v1051, %v1298
      %v1358 = vmul.f32 %v1054, %v1300
      %v1359 = vmul.f32 %v1059, %v1302
      %v1360 = vmul.f32 %v1062, %v1304
      %v1361 = vmul.f32 %v1067, %v1306
      %v1362 = vmul.f32 %v1070, %v1308
      %v1363 = vmul.f32 %v1075, %v1310
      %v1364 = vmul.f32 %v1078, %v1312
      %v1365 = vmul.f32 %v1083, %v1314
      %v1366 = vmul.f32 %v1086, %v1316
      %v1367 = vmul.f32 %v1091, %v1318
      %v1368 = vmul.f32 %v1094, %v1320
      %v1369 = vmul.f32 %v1099, %v1322
      %v1370 = vmul.f32 %v1102, %v1324
      %v1371 = vmul.f32 %v1107, %v1326
      %v1372 = vmul.f32 %v1110, %v1328
      %v1373 = vmul.f32 %v1115, %v1330
      %v1374 = vmul.f32 %v1118, %v1332
      %v1375 = vmul.f32 %v1123, %v1334
      %v1376 = vmul.f32 %v1126, %v1336
      %v1377 = vmul.f32 %v1131, %v1338
      %v1378 = vmul.f32 %v1134, %v1340
      %v1379 = vmul.f32 %v1139, %v1342
      %v1380 = vmul.f32 %v1142, %v1344
      %v1381 = vmul.f32 %v1147, %v1346
      %v1382 = vmul.f32 %v1150, %v1348
      %v1383 = vmul.f32 %v1155, %v1350
      %v1384 = vmul.f32 %v1158, %v1352
      %v1385 = vpack.c.bf16 %v1354, %v1353
      %v1386 = vpack.c.bf16 %v1356, %v1355
      %v1387 = vpack.c.bf16 %v1358, %v1357
      %v1388 = vpack.c.bf16 %v1360, %v1359
      %v1389 = vpack.c.bf16 %v1362, %v1361
      %v1390 = vpack.c.bf16 %v1364, %v1363
      %v1391 = vpack.c.bf16 %v1366, %v1365
      %v1392 = vpack.c.bf16 %v1368, %v1367
      %v1393 = vpack.c.bf16 %v1370, %v1369
      %v1394 = vpack.c.bf16 %v1372, %v1371
      %v1395 = vpack.c.bf16 %v1374, %v1373
      %v1396 = vpack.c.bf16 %v1376, %v1375
      %v1397 = vpack.c.bf16 %v1378, %v1377
      %v1398 = vpack.c.bf16 %v1380, %v1379
      %v1399 = vpack.c.bf16 %v1382, %v1381
      %v1400 = vpack.c.bf16 %v1384, %v1383
      %v1417 = vunpack.c.l.b16 %v1385
      %v1418 = vunpack.c.h.b16 %v1385
      %v1419 = vunpack.c.l.b16 %v1386
      %v1420 = vunpack.c.h.b16 %v1386
      %v1421 = vunpack.c.l.b16 %v1387
      %v1422 = vunpack.c.h.b16 %v1387
      %v1423 = vunpack.c.l.b16 %v1388
      %v1424 = vunpack.c.h.b16 %v1388
      %v1425 = vunpack.c.l.b16 %v1389
      %v1426 = vunpack.c.h.b16 %v1389
      %v1427 = vunpack.c.l.b16 %v1390
      %v1428 = vunpack.c.h.b16 %v1390
      %v1429 = vunpack.c.l.b16 %v1391
      %v1430 = vunpack.c.h.b16 %v1391
      %v1431 = vunpack.c.l.b16 %v1392
      %v1432 = vunpack.c.h.b16 %v1392
      %v1433 = vunpack.c.l.b16 %v1393
      %v1434 = vunpack.c.h.b16 %v1393
      %v1435 = vunpack.c.l.b16 %v1394
      %v1436 = vunpack.c.h.b16 %v1394
      %v1437 = vunpack.c.l.b16 %v1395
      %v1438 = vunpack.c.h.b16 %v1395
      %v1439 = vunpack.c.l.b16 %v1396
      %v1440 = vunpack.c.h.b16 %v1396
      %v1441 = vunpack.c.l.b16 %v1397
      %v1442 = vunpack.c.h.b16 %v1397
      %v1443 = vunpack.c.l.b16 %v1398
      %v1444 = vunpack.c.h.b16 %v1398
      %v1445 = vunpack.c.l.b16 %v1399
      %v1446 = vunpack.c.h.b16 %v1399
      %v1447 = vunpack.c.l.b16 %v1400
      %v1448 = vunpack.c.h.b16 %v1400
      %v1449 = vpack.c.b16 %v1417, %v1417
      %v1450 = vpack.c.b16 %v1418, %v1418
      %v1451 = vpack.c.b16 %v1419, %v1419
      %v1452 = vpack.c.b16 %v1420, %v1420
      %v1453 = vpack.c.b16 %v1421, %v1421
      %v1454 = vpack.c.b16 %v1422, %v1422
      %v1455 = vpack.c.b16 %v1423, %v1423
      %v1456 = vpack.c.b16 %v1424, %v1424
      %v1457 = vpack.c.b16 %v1425, %v1425
      %v1458 = vpack.c.b16 %v1426, %v1426
      %v1459 = vpack.c.b16 %v1427, %v1427
      %v1460 = vpack.c.b16 %v1428, %v1428
      %v1461 = vpack.c.b16 %v1429, %v1429
      %v1462 = vpack.c.b16 %v1430, %v1430
      %v1463 = vpack.c.b16 %v1431, %v1431
      %v1464 = vpack.c.b16 %v1432, %v1432
      %v1465 = vpack.c.b16 %v1433, %v1433
      %v1466 = vpack.c.b16 %v1434, %v1434
      %v1467 = vpack.c.b16 %v1435, %v1435
      %v1468 = vpack.c.b16 %v1436, %v1436
      %v1469 = vpack.c.b16 %v1437, %v1437
      %v1470 = vpack.c.b16 %v1438, %v1438
      %v1471 = vpack.c.b16 %v1439, %v1439
      %v1472 = vpack.c.b16 %v1440, %v1440
      %v1473 = vpack.c.b16 %v1441, %v1441
      %v1474 = vpack.c.b16 %v1442, %v1442
      %v1475 = vpack.c.b16 %v1443, %v1443
      %v1476 = vpack.c.b16 %v1444, %v1444
      %v1477 = vpack.c.b16 %v1445, %v1445
      %v1478 = vpack.c.b16 %v1446, %v1446
      %v1479 = vpack.c.b16 %v1447, %v1447
      %v1480 = vpack.c.b16 %v1448, %v1448
      %1513 = vst.msk [vmem:[%s267] sm:$0xf] %vm956, %v1449
      %1514 = vst.msk [vmem:[%s267 + $0x4] sm:$0xf] %vm956, %v1450
      %1515 = vst.msk [vmem:[%s267 + $0x8] sm:$0xf] %vm956, %v1451
      %1516 = vst.msk [vmem:[%s267 + $0xc] sm:$0xf] %vm956, %v1452
      %1517 = vst.msk [vmem:[%s267 + $0x10] sm:$0xf] %vm956, %v1453
      %1518 = vst.msk [vmem:[%s267 + $0x14] sm:$0xf] %vm956, %v1454
      %1519 = vst.msk [vmem:[%s267 + $0x18] sm:$0xf] %vm956, %v1455
      %1520 = vst.msk [vmem:[%s267 + $0x1c] sm:$0xf] %vm956, %v1456
      %1521 = vst.msk [vmem:[%s267 + $0x20] sm:$0xf] %vm956, %v1457
      %1522 = vst.msk [vmem:[%s267 + $0x24] sm:$0xf] %vm956, %v1458
      %1523 = vst.msk [vmem:[%s267 + $0x28] sm:$0xf] %vm956, %v1459
      %1524 = vst.msk [vmem:[%s267 + $0x2c] sm:$0xf] %vm956, %v1460
      %1525 = vst.msk [vmem:[%s267 + $0x30] sm:$0xf] %vm956, %v1461
      %1526 = vst.msk [vmem:[%s267 + $0x34] sm:$0xf] %vm956, %v1462
      %1527 = vst.msk [vmem:[%s267 + $0x38] sm:$0xf] %vm956, %v1463
      %1528 = vst.msk [vmem:[%s267 + $0x3c] sm:$0xf] %vm956, %v1464
      %1529 = vst.msk [vmem:[%s267 + $0x40] sm:$0xf] %vm956, %v1465
      %1530 = vst.msk [vmem:[%s267 + $0x44] sm:$0xf] %vm956, %v1466
      %1531 = vst.msk [vmem:[%s267 + $0x48] sm:$0xf] %vm956, %v1467
      %1532 = vst.msk [vmem:[%s267 + $0x4c] sm:$0xf] %vm956, %v1468
      %1533 = vst.msk [vmem:[%s267 + $0x50] sm:$0xf] %vm956, %v1469
      %1534 = vst.msk [vmem:[%s267 + $0x54] sm:$0xf] %vm956, %v1470
      %1535 = vst.msk [vmem:[%s267 + $0x58] sm:$0xf] %vm956, %v1471
      %1536 = vst.msk [vmem:[%s267 + $0x5c] sm:$0xf] %vm956, %v1472
      %1537 = vst.msk [vmem:[%s267 + $0x60] sm:$0xf] %vm956, %v1473
      %1538 = vst.msk [vmem:[%s267 + $0x64] sm:$0xf] %vm956, %v1474
      %1539 = vst.msk [vmem:[%s267 + $0x68] sm:$0xf] %vm956, %v1475
      %1540 = vst.msk [vmem:[%s267 + $0x6c] sm:$0xf] %vm956, %v1476
      %1541 = vst.msk [vmem:[%s267 + $0x70] sm:$0xf] %vm956, %v1477
      %1542 = vst.msk [vmem:[%s267 + $0x74] sm:$0xf] %vm956, %v1478
      %1543 = vst.msk [vmem:[%s267 + $0x78] sm:$0xf] %vm956, %v1479
      %1544 = vst.msk [vmem:[%s267 + $0x7c] sm:$0xf] %vm956, %v1480
      %s1545 = smul.u32 32, %s18
      %p1546 = scmp.lt.s32.totalorder %s1545, 63
      %s1547 = scalar_select %p1546, %s1545, 63
      %s1548 = smul.addr %s1547, 4
      %s1549 = scalar_lea.vmem %s5, %s1548
      %s1550 = smul.u32 32, %s18
      %p1551 = scmp.lt.s32.totalorder %s1550, 63
      %s1552 = scalar_select %p1551, %s1550, 63
      %s1553 = smul.addr %s1552, 4
      %s1554 = scalar_lea.vmem %s6, %s1553
      // Predicated region
      $region41: #{_lambda_.4} parent=39 // pred_check
        %p1555 = pneg %p146
      $region42: #{_lambda_.4} parent=39 // pred_check_branch
        %1557 = sbr.rel (%p1555) target = $region44
      $region43: #{_lambda_.4} parent=39 // pred_region
        %s1558 = smul.u32 32, %s18
      $region44: #{_lambda_.4} parent=39 // pred_fallthru
        _
      // Predicated region
      $region45: #{_lambda_.4} parent=39 // pred_check
        %p1559 = pneg %p172
      $region46: #{_lambda_.4} parent=39 // pred_check_branch
        %1561 = sbr.rel (%p1559) target = $region48
      $region47: #{_lambda_.4} parent=39 // pred_region
        %s1562 = smul.u32 32, %s18
      $region48: #{_lambda_.4} parent=39 // pred_fallthru
        _
    $region40: #{_lambda_.4} parent=5 // pred_fallthru
      _
    %p1563 = scmp.le.s32.totalorder 2, %s13
    // Predicated region
    $region49: #{_lambda_.4} parent=5 // pred_check
      %p1564 = pneg %p1563
    $region50: #{_lambda_.4} parent=5 // pred_check_branch
      %1566 = sbr.rel (%p1564) target = $region52
    $region51: #{_lambda_.4} parent=5 // pred_region
      %s1567 = ssub.s32 %s13, 2
      // Predicated region
      $region53: #{_lambda_.4} parent=51 // pred_check
        %p1568 = pneg %p152
      $region54: #{_lambda_.4} parent=51 // pred_check_branch
        %1570 = sbr.rel (%p1568) target = $region56
      $region55: #{_lambda_.4} parent=51 // pred_region
        %s1571 = smul.u32 32, %s19
        %p1572 = scmp.lt.s32.totalorder %s1571, 63
        %s1573 = scalar_select %p1572, %s1571, 63
        %s1574 = smul.addr %s1573, 4
        %s1575 = scalar_lea.vmem %s5, %s1574
      $region56: #{_lambda_.4} parent=51 // pred_fallthru
        _
      // Predicated region
      $region57: #{_lambda_.4} parent=51 // pred_check
        %p1576 = pneg %p178
      $region58: #{_lambda_.4} parent=51 // pred_check_branch
        %1578 = sbr.rel (%p1576) target = $region60
      $region59: #{_lambda_.4} parent=51 // pred_region
        %s1579 = smul.u32 32, %s19
        %p1580 = scmp.lt.s32.totalorder %s1579, 63
        %s1581 = scalar_select %p1580, %s1579, 63
        %s1582 = smul.addr %s1581, 4
        %s1583 = scalar_lea.vmem %s6, %s1582
      $region60: #{_lambda_.4} parent=51 // pred_fallthru
        _
    $region52: #{_lambda_.4} parent=5 // pred_fallthru
      _
  $region6: #{_lambda_.4} parent=0 // loop_footer
    %s17 = sadd.s32 1, %s13
  $region7: #{_lambda_.4} parent=0 // loop_footer_branch
    %12 = sbr.rel target = $region3
  $region8: #{_lambda_.4} parent=0 // loop_exit
    _

// kernel: _lambda_.7
$region0: #{_lambda_.7}
  #allocation0 [shape = 'u32[]', space=smem, size = 0x4, offset = 0x4, fixed_abs, tag = 'smem constant byte address 0x4 - core index']
  #allocation1 [shape = 'u32[144,128]{1,0:T(1,128)}', space=vmem, size = 0x12000, scoped, tag = 'internal scratch']
  %s0 = inlined_call_operand.vmem [shape: bf16[512,4], index: 0, kind: input, shape index: {}]
  %s1 = inlined_call_operand.vmem [shape: bf16[512,4], index: 1, kind: input, shape index: {}]
  %s2 = inlined_call_operand.vmem [shape: bf16[4,8], index: 2, kind: input, shape index: {}]
  %s3 = inlined_call_operand.vmem [shape: bf16[4,8], index: 3, kind: input, shape index: {}]
  %s4 = inlined_call_operand.vmem [shape: f32[1,8], index: 4, kind: input, shape index: {}]
  %s5 = inlined_call_operand.vmem [shape: f32[512,8], index: 5, kind: output, shape index: {}]
  %s6 = sld [smem:[#allocation0]]
  $region53: #{_lambda_.7} parent=0
    _
  %s8 = ssub.s32 1, %s6
  %s9 = scalar_select 0, %s8, %s6
  loop: start=0, step=1, limit=4
  $region2: #{_lambda_.7} parent=0 // loop_pre_header
    _
  $region3: #{_lambda_.7} parent=0 // loop_header
    %s11 = sphi 0, %s15
    %p12 = scmp.ge.s32.totalorder %s11, 4
    %s21 = sphi 0, %s23
    %s24 = sphi 0, %s21
    %s25 = sphi 0, %s24
    %s41 = sphi 0, %s25
    %s47 = sphi 0, %s49
    %s50 = sphi 0, %s47
    %s51 = sphi 0, %s50
    %s67 = sphi 0, %s51
    %s71 = sphi 0, %s71
    %s73 = sphi 0, %s71
    %s74 = sphi 0, %s73
    %s88 = sphi 0, %s74
    %s92 = sphi 0, %s92
    %s94 = sphi 0, %s92
    %s95 = sphi 0, %s94
    %s109 = sphi 0, %s95
    %s113 = sphi 0, %s113
    %s115 = sphi 0, %s113
    %s116 = sphi 0, %s115
    %s130 = sphi 0, %s116
    %s136 = sphi 0, %s138
    %s139 = sphi 0, %s136
    %s140 = sphi 0, %s139
    %s156 = sphi 0, %s140
  $region4: #{_lambda_.7} parent=0 // loop_header_branch
    %14 = sbr.rel (%p12) target = $region8
  $region5: #{_lambda_.7} parent=0 // loop_body
    %s16 = ssub.s32 %s11, 1
    %s17 = ssub.s32 %s11, 2
    %s18 = sadd.s32 %s11, 1
    %s19 = ssub.s32 %s11, %s18
    %p20 = scmp.eq.s32.totalorder %s19, 0
    %s22 = sadd.s32 %s21, 1
    %s23 = scalar_select %p20, %s21, %s22
    %p26 = pneg %p20
    %p27 = scmp.eq.s32.totalorder %s11, 1
    %p28 = por %p26, %p27
    %p29 = scmp.ne.s32.totalorder %s21, %s24
    %p30 = scmp.eq.s32.totalorder %s11, 0
    %p31 = por %p29, %p30
    %p32 = scmp.ne.s32.totalorder %s21, %s24
    %p33 = scmp.eq.s32.totalorder %s16, 1
    %p34 = por %p32, %p33
    %p35 = scmp.ne.s32.totalorder %s24, %s25
    %p36 = scmp.eq.s32.totalorder %s16, 0
    %p37 = por %p35, %p36
    %p38 = scmp.ne.s32.totalorder %s24, %s25
    %p39 = scmp.eq.s32.totalorder %s17, 1
    %p40 = por %p38, %p39
    %p42 = scmp.ne.s32.totalorder %s25, %s41
    %p43 = scmp.eq.s32.totalorder %s17, 0
    %p44 = por %p42, %p43
    %s45 = ssub.s32 %s11, %s18
    %p46 = scmp.eq.s32.totalorder %s45, 0
    %s48 = sadd.s32 %s47, 1
    %s49 = scalar_select %p46, %s47, %s48
    %p52 = pneg %p46
    %p53 = scmp.eq.s32.totalorder %s11, 1
    %p54 = por %p52, %p53
    %p55 = scmp.ne.s32.totalorder %s47, %s50
    %p56 = scmp.eq.s32.totalorder %s11, 0
    %p57 = por %p55, %p56
    %p58 = scmp.ne.s32.totalorder %s47, %s50
    %p59 = scmp.eq.s32.totalorder %s16, 1
    %p60 = por %p58, %p59
    %p61 = scmp.ne.s32.totalorder %s50, %s51
    %p62 = scmp.eq.s32.totalorder %s16, 0
    %p63 = por %p61, %p62
    %p64 = scmp.ne.s32.totalorder %s50, %s51
    %p65 = scmp.eq.s32.totalorder %s17, 1
    %p66 = por %p64, %p65
    %p68 = scmp.ne.s32.totalorder %s51, %s67
    %p69 = scmp.eq.s32.totalorder %s17, 0
    %p70 = por %p68, %p69
    %s72 = sadd.s32 %s71, 1
    %p75 = scmp.eq.s32.totalorder %s11, 1
    %p76 = scmp.ne.s32.totalorder %s71, %s73
    %p77 = scmp.eq.s32.totalorder %s11, 0
    %p78 = por %p76, %p77
    %p79 = scmp.ne.s32.totalorder %s71, %s73
    %p80 = scmp.eq.s32.totalorder %s16, 1
    %p81 = por %p79, %p80
    %p82 = scmp.ne.s32.totalorder %s73, %s74
    %p83 = scmp.eq.s32.totalorder %s16, 0
    %p84 = por %p82, %p83
    %p85 = scmp.ne.s32.totalorder %s73, %s74
    %p86 = scmp.eq.s32.totalorder %s17, 1
    %p87 = por %p85, %p86
    %p89 = scmp.ne.s32.totalorder %s74, %s88
    %p90 = scmp.eq.s32.totalorder %s17, 0
    %p91 = por %p89, %p90
    %s93 = sadd.s32 %s92, 1
    %p96 = scmp.eq.s32.totalorder %s11, 1
    %p97 = scmp.ne.s32.totalorder %s92, %s94
    %p98 = scmp.eq.s32.totalorder %s11, 0
    %p99 = por %p97, %p98
    %p100 = scmp.ne.s32.totalorder %s92, %s94
    %p101 = scmp.eq.s32.totalorder %s16, 1
    %p102 = por %p100, %p101
    %p103 = scmp.ne.s32.totalorder %s94, %s95
    %p104 = scmp.eq.s32.totalorder %s16, 0
    %p105 = por %p103, %p104
    %p106 = scmp.ne.s32.totalorder %s94, %s95
    %p107 = scmp.eq.s32.totalorder %s17, 1
    %p108 = por %p106, %p107
    %p110 = scmp.ne.s32.totalorder %s95, %s109
    %p111 = scmp.eq.s32.totalorder %s17, 0
    %p112 = por %p110, %p111
    %s114 = sadd.s32 %s113, 1
    %p117 = scmp.eq.s32.totalorder %s11, 1
    %p118 = scmp.ne.s32.totalorder %s113, %s115
    %p119 = scmp.eq.s32.totalorder %s11, 0
    %p120 = por %p118, %p119
    %p121 = scmp.ne.s32.totalorder %s113, %s115
    %p122 = scmp.eq.s32.totalorder %s16, 1
    %p123 = por %p121, %p122
    %p124 = scmp.ne.s32.totalorder %s115, %s116
    %p125 = scmp.eq.s32.totalorder %s16, 0
    %p126 = por %p124, %p125
    %p127 = scmp.ne.s32.totalorder %s115, %s116
    %p128 = scmp.eq.s32.totalorder %s17, 1
    %p129 = por %p127, %p128
    %p131 = scmp.ne.s32.totalorder %s116, %s130
    %p132 = scmp.eq.s32.totalorder %s17, 0
    %p133 = por %p131, %p132
    %s134 = ssub.s32 %s11, %s18
    %p135 = scmp.eq.s32.totalorder %s134, 0
    %s137 = sadd.s32 %s136, 1
    %s138 = scalar_select %p135, %s136, %s137
    %p141 = pneg %p135
    %p142 = scmp.eq.s32.totalorder %s11, 1
    %p143 = por %p141, %p142
    %p144 = scmp.ne.s32.totalorder %s136, %s139
    %p145 = scmp.eq.s32.totalorder %s11, 0
    %p146 = por %p144, %p145
    %p147 = scmp.ne.s32.totalorder %s136, %s139
    %p148 = scmp.eq.s32.totalorder %s16, 1
    %p149 = por %p147, %p148
    %p150 = scmp.ne.s32.totalorder %s139, %s140
    %p151 = scmp.eq.s32.totalorder %s16, 0
    %p152 = por %p150, %p151
    %p153 = scmp.ne.s32.totalorder %s139, %s140
    %p154 = scmp.eq.s32.totalorder %s17, 1
    %p155 = por %p153, %p154
    %p157 = scmp.ne.s32.totalorder %s140, %s156
    %p158 = scmp.eq.s32.totalorder %s17, 0
    %p159 = por %p157, %p158
    %p160 = scmp.le.s32.totalorder 1, %s11
    %p161 = scmp.lt.s32.totalorder %s11, 3
    %p162 = pnand %p160, %p161
    %p163 = pneg %p162
    // Predicated region
    $region9: #{_lambda_.7} parent=5 // pred_check
      _
    $region10: #{_lambda_.7} parent=5 // pred_check_branch
      %165 = sbr.rel (%p162) target = $region12
    $region11: #{_lambda_.7} parent=5 // pred_region
      %s166 = ssub.s32 %s11, 1
      // Predicated region
      $region13: #{_lambda_.7} parent=11 // pred_check
        %p167 = pneg %p84
      $region14: #{_lambda_.7} parent=11 // pred_check_branch
        %169 = sbr.rel (%p167) target = $region16
      $region15: #{_lambda_.7} parent=11 // pred_region
        _
      $region16: #{_lambda_.7} parent=11 // pred_fallthru
        _
      // Predicated region
      $region17: #{_lambda_.7} parent=11 // pred_check
        %p170 = pneg %p105
      $region18: #{_lambda_.7} parent=11 // pred_check_branch
        %172 = sbr.rel (%p170) target = $region20
      $region19: #{_lambda_.7} parent=11 // pred_region
        _
      $region20: #{_lambda_.7} parent=11 // pred_fallthru
        _
      // Predicated region
      $region21: #{_lambda_.7} parent=11 // pred_check
        %p173 = pneg %p126
      $region22: #{_lambda_.7} parent=11 // pred_check_branch
        %175 = sbr.rel (%p173) target = $region24
      $region23: #{_lambda_.7} parent=11 // pred_region
        _
      $region24: #{_lambda_.7} parent=11 // pred_fallthru
        _
    $region12: #{_lambda_.7} parent=5 // pred_fallthru
      _
    %p176 = scmp.lt.s32.totalorder %s11, 2
    // Predicated region
    $region25: #{_lambda_.7} parent=5 // pred_check
      %p177 = pneg %p176
    $region26: #{_lambda_.7} parent=5 // pred_check_branch
      %179 = sbr.rel (%p177) target = $region28
    $region27: #{_lambda_.7} parent=5 // pred_region
      // Predicated region
      $region29: #{_lambda_.7} parent=27 // pred_check
        %p180 = pneg %p31
      $region30: #{_lambda_.7} parent=27 // pred_check_branch
        %182 = sbr.rel (%p180) target = $region32
      $region31: #{_lambda_.7} parent=27 // pred_region
        %s183 = smul.u32 32, %s11
        %p184 = scmp.lt.s32.totalorder %s183, 63
        %s185 = scalar_select %p184, %s183, 63
        %s186 = smul.addr %s185, 4
        %s187 = scalar_lea.vmem %s0, %s186
        %s188 = smul.u32 32, %s11
      $region32: #{_lambda_.7} parent=27 // pred_fallthru
        _
      // Predicated region
      $region33: #{_lambda_.7} parent=27 // pred_check
        %p189 = pneg %p57
      $region34: #{_lambda_.7} parent=27 // pred_check_branch
        %191 = sbr.rel (%p189) target = $region36
      $region35: #{_lambda_.7} parent=27 // pred_region
        %s192 = smul.u32 32, %s11
        %p193 = scmp.lt.s32.totalorder %s192, 63
        %s194 = scalar_select %p193, %s192, 63
        %s195 = smul.addr %s194, 4
        %s196 = scalar_lea.vmem %s1, %s195
        %s197 = smul.u32 32, %s11
      $region36: #{_lambda_.7} parent=27 // pred_fallthru
        _
    $region28: #{_lambda_.7} parent=5 // pred_fallthru
      _
    %p198 = scmp.le.s32.totalorder 1, %s11
    %p199 = scmp.lt.s32.totalorder %s11, 3
    %p200 = pnand %p198, %p199
    %p201 = pneg %p200
    // Predicated region
    $region37: #{_lambda_.7} parent=5 // pred_check
      _
    $region38: #{_lambda_.7} parent=5 // pred_check_branch
      %203 = sbr.rel (%p200) target = $region40
    $region39: #{_lambda_.7} parent=5 // pred_region
      %s204 = ssub.s32 %s11, 1
      %s205 = smul.u32 32, %s16
      %p206 = scmp.lt.s32.totalorder %s205, 63
      %s207 = scalar_select %p206, %s205, 63
      %s208 = smul.addr %s207, 4
      %s209 = scalar_lea.vmem %s0, %s208
      %p210 = pneg %p37
      %p211 = pneg %p34
      %s212 = smul.u32 32, %s16
      %p213 = scmp.lt.s32.totalorder %s212, 63
      %s214 = scalar_select %p213, %s212, 63
      %s215 = smul.addr %s214, 4
      %s216 = scalar_lea.vmem %s1, %s215
      %p217 = pneg %p63
      %p218 = pneg %p60
      %p219 = pneg %p84
      %p220 = pneg %p81
      %p221 = pneg %p105
      %p222 = pneg %p102
      %p223 = pneg %p126
      %p224 = pneg %p123
      %p225 = pneg %p152
      %p226 = pneg %p149
      %s227 = smul.u32 32, %s16
      %p228 = scmp.lt.s32.totalorder %s227, 63
      %s229 = scalar_select %p228, %s227, 63
      %s230 = smul.addr %s229, 8
      %s231 = scalar_lea.vmem %s5, %s230
      %s232 = smul.u32 32, %s16
      %p233 = scmp.lt.s32.totalorder %s232, 63
      %s234 = scalar_select %p233, %s232, 63
      %s235 = smul.addr %s234, 4
      %s236 = scalar_lea.vmem %s0, %s235
      %s237 = smul.u32 32, %s16
      %s238 = smul.u32 32, %s16
      %p239 = scmp.lt.s32.totalorder %s238, 63
      %s240 = scalar_select %p239, %s238, 63
      %s241 = smul.addr %s240, 4
      %s242 = scalar_lea.vmem %s1, %s241
      %s243 = smul.u32 32, %s16
      %s244 = smul.u32 32, %s16
      %p245 = scmp.lt.s32.totalorder %s244, 63
      %s246 = scalar_select %p245, %s244, 63
      %s247 = smul.addr %s246, 8
      %s248 = scalar_lea.vmem %s5, %s247
      %s249 = smul.u32 32, %s16
      %v251 = vld [vmem:[%s236] sm:$0xf]
      %v252 = vld [vmem:[%s236 + $0x4] sm:$0xf]
      %v253 = vld [vmem:[%s236 + $0x8] sm:$0xf]
      %v254 = vld [vmem:[%s236 + $0xc] sm:$0xf]
      %v255 = vld [vmem:[%s236 + $0x10] sm:$0xf]
      %v256 = vld [vmem:[%s236 + $0x14] sm:$0xf]
      %v257 = vld [vmem:[%s236 + $0x18] sm:$0xf]
      %v258 = vld [vmem:[%s236 + $0x1c] sm:$0xf]
      %v259 = vld [vmem:[%s236 + $0x20] sm:$0xf]
      %v260 = vld [vmem:[%s236 + $0x24] sm:$0xf]
      %v261 = vld [vmem:[%s236 + $0x28] sm:$0xf]
      %v262 = vld [vmem:[%s236 + $0x2c] sm:$0xf]
      %v263 = vld [vmem:[%s236 + $0x30] sm:$0xf]
      %v264 = vld [vmem:[%s236 + $0x34] sm:$0xf]
      %v265 = vld [vmem:[%s236 + $0x38] sm:$0xf]
      %v266 = vld [vmem:[%s236 + $0x3c] sm:$0xf]
      %v267 = vld [vmem:[%s236 + $0x40] sm:$0xf]
      %v268 = vld [vmem:[%s236 + $0x44] sm:$0xf]
      %v269 = vld [vmem:[%s236 + $0x48] sm:$0xf]
      %v270 = vld [vmem:[%s236 + $0x4c] sm:$0xf]
      %v271 = vld [vmem:[%s236 + $0x50] sm:$0xf]
      %v272 = vld [vmem:[%s236 + $0x54] sm:$0xf]
      %v273 = vld [vmem:[%s236 + $0x58] sm:$0xf]
      %v274 = vld [vmem:[%s236 + $0x5c] sm:$0xf]
      %v275 = vld [vmem:[%s236 + $0x60] sm:$0xf]
      %v276 = vld [vmem:[%s236 + $0x64] sm:$0xf]
      %v277 = vld [vmem:[%s236 + $0x68] sm:$0xf]
      %v278 = vld [vmem:[%s236 + $0x6c] sm:$0xf]
      %v279 = vld [vmem:[%s236 + $0x70] sm:$0xf]
      %v280 = vld [vmem:[%s236 + $0x74] sm:$0xf]
      %v281 = vld [vmem:[%s236 + $0x78] sm:$0xf]
      %v282 = vld [vmem:[%s236 + $0x7c] sm:$0xf]
      %v283 = vld [vmem:[%s242] sm:$0xf]
      %v284 = vld [vmem:[%s242 + $0x4] sm:$0xf]
      %v285 = vld [vmem:[%s242 + $0x8] sm:$0xf]
      %v286 = vld [vmem:[%s242 + $0xc] sm:$0xf]
      %v287 = vld [vmem:[%s242 + $0x10] sm:$0xf]
      %v288 = vld [vmem:[%s242 + $0x14] sm:$0xf]
      %v289 = vld [vmem:[%s242 + $0x18] sm:$0xf]
      %v290 = vld [vmem:[%s242 + $0x1c] sm:$0xf]
      %v291 = vld [vmem:[%s242 + $0x20] sm:$0xf]
      %v292 = vld [vmem:[%s242 + $0x24] sm:$0xf]
      %v293 = vld [vmem:[%s242 + $0x28] sm:$0xf]
      %v294 = vld [vmem:[%s242 + $0x2c] sm:$0xf]
      %v295 = vld [vmem:[%s242 + $0x30] sm:$0xf]
      %v296 = vld [vmem:[%s242 + $0x34] sm:$0xf]
      %v297 = vld [vmem:[%s242 + $0x38] sm:$0xf]
      %v298 = vld [vmem:[%s242 + $0x3c] sm:$0xf]
      %v299 = vld [vmem:[%s242 + $0x40] sm:$0xf]
      %v300 = vld [vmem:[%s242 + $0x44] sm:$0xf]
      %v301 = vld [vmem:[%s242 + $0x48] sm:$0xf]
      %v302 = vld [vmem:[%s242 + $0x4c] sm:$0xf]
      %v303 = vld [vmem:[%s242 + $0x50] sm:$0xf]
      %v304 = vld [vmem:[%s242 + $0x54] sm:$0xf]
      %v305 = vld [vmem:[%s242 + $0x58] sm:$0xf]
      %v306 = vld [vmem:[%s242 + $0x5c] sm:$0xf]
      %v307 = vld [vmem:[%s242 + $0x60] sm:$0xf]
      %v308 = vld [vmem:[%s242 + $0x64] sm:$0xf]
      %v309 = vld [vmem:[%s242 + $0x68] sm:$0xf]
      %v310 = vld [vmem:[%s242 + $0x6c] sm:$0xf]
      %v311 = vld [vmem:[%s242 + $0x70] sm:$0xf]
      %v312 = vld [vmem:[%s242 + $0x74] sm:$0xf]
      %v313 = vld [vmem:[%s242 + $0x78] sm:$0xf]
      %v314 = vld [vmem:[%s242 + $0x7c] sm:$0xf]
      %v315 = vld [vmem:[%s2] sm:$0x3]
      %v316 = vld [vmem:[%s3] sm:$0x3]
      %v349 = vunpack.c.l.b16 %v283
      %v350 = vunpack.c.l.b16 %v284
      %v351 = vunpack.c.l.b16 %v285
      %v352 = vunpack.c.l.b16 %v286
      %v353 = vunpack.c.l.b16 %v287
      %v354 = vunpack.c.l.b16 %v288
      %v355 = vunpack.c.l.b16 %v289
      %v356 = vunpack.c.l.b16 %v290
      %v357 = vunpack.c.l.b16 %v291
      %v358 = vunpack.c.l.b16 %v292
      %v359 = vunpack.c.l.b16 %v293
      %v360 = vunpack.c.l.b16 %v294
      %v361 = vunpack.c.l.b16 %v295
      %v362 = vunpack.c.l.b16 %v296
      %v363 = vunpack.c.l.b16 %v297
      %v364 = vunpack.c.l.b16 %v298
      %v365 = vunpack.c.l.b16 %v299
      %v366 = vunpack.c.l.b16 %v300
      %v367 = vunpack.c.l.b16 %v301
      %v368 = vunpack.c.l.b16 %v302
      %v369 = vunpack.c.l.b16 %v303
      %v370 = vunpack.c.l.b16 %v304
      %v371 = vunpack.c.l.b16 %v305
      %v372 = vunpack.c.l.b16 %v306
      %v373 = vunpack.c.l.b16 %v307
      %v374 = vunpack.c.l.b16 %v308
      %v375 = vunpack.c.l.b16 %v309
      %v376 = vunpack.c.l.b16 %v310
      %v377 = vunpack.c.l.b16 %v311
      %v378 = vunpack.c.l.b16 %v312
      %v379 = vunpack.c.l.b16 %v313
      %v380 = vunpack.c.l.b16 %v314
      %v381 = vpack.c.b16 %v350, %v349
      %v382 = vpack.c.b16 %v352, %v351
      %v383 = vpack.c.b16 %v354, %v353
      %v384 = vpack.c.b16 %v356, %v355
      %v385 = vpack.c.b16 %v358, %v357
      %v386 = vpack.c.b16 %v360, %v359
      %v387 = vpack.c.b16 %v362, %v361
      %v388 = vpack.c.b16 %v364, %v363
      %v389 = vpack.c.b16 %v366, %v365
      %v390 = vpack.c.b16 %v368, %v367
      %v391 = vpack.c.b16 %v370, %v369
      %v392 = vpack.c.b16 %v372, %v371
      %v393 = vpack.c.b16 %v374, %v373
      %v394 = vpack.c.b16 %v376, %v375
      %v395 = vpack.c.b16 %v378, %v377
      %v396 = vpack.c.b16 %v380, %v379
      %vm397 = vcmask 31744
      %v399 = vsel %vm397, %v381, 0
      %v402 = vsel %vm397, %v382, 0
      %v405 = vsel %vm397, %v383, 0
      %v408 = vsel %vm397, %v384, 0
      %v411 = vsel %vm397, %v385, 0
      %v414 = vsel %vm397, %v386, 0
      %v417 = vsel %vm397, %v387, 0
      %v420 = vsel %vm397, %v388, 0
      %v423 = vsel %vm397, %v389, 0
      %v426 = vsel %vm397, %v390, 0
      %v429 = vsel %vm397, %v391, 0
      %v432 = vsel %vm397, %v392, 0
      %v435 = vsel %vm397, %v393, 0
      %v438 = vsel %vm397, %v394, 0
      %v441 = vsel %vm397, %v395, 0
      %v444 = vsel %vm397, %v396, 0
      %vm446 = vcmask 1041408
      %v448 = vsel %vm446, %v316, 0
      %450 = vmatprep.subr.bf16.mxu0 0
      %451 = vmatpush1.bf16.msra.mxu0 0
      %452 = vmatprep.subr.bf16.mxu0 0
      %453 = vmatpush1.bf16.msra.mxu0 0
      %454 = vmatprep.subr.bf16.mxu0 0
      %455 = vmatpush1.bf16.msra.mxu0 0
      %456 = vmatprep.subr.bf16.mxu0 0
      %457 = vmatpush1.bf16.msra.mxu0 0
      %458 = vmatprep.subr.bf16.mxu0 0
      %459 = vmatpush1.bf16.msra.mxu0 0
      %460 = vmatprep.subr.bf16.mxu0 0
      %461 = vmatpush1.bf16.msra.mxu0 0
      %462 = vmatprep.subr.bf16.mxu0 0
      %463 = vmatpush1.bf16.msra.mxu0 0
      %464 = vmatprep.subr.bf16.mxu0 0
      %465 = vmatpush1.bf16.msra.mxu0 %v448
      %466 = vmatprep.subr.bf16.mxu0 0
      %467 = vmatpush2.bf16.msra.mxu0 0
      %468 = vmatprep.subr.bf16.mxu0 0
      %469 = vmatpush2.bf16.msra.mxu0 0
      %470 = vmatprep.subr.bf16.mxu0 0
      %471 = vmatpush2.bf16.msra.mxu0 0
      %472 = vmatprep.subr.bf16.mxu0 0
      %473 = vmatpush2.bf16.msra.mxu0 0
      %474 = vmatprep.subr.bf16.mxu0 0
      %475 = vmatpush2.bf16.msra.mxu0 0
      %476 = vmatprep.subr.bf16.mxu0 0
      %477 = vmatpush2.bf16.msra.mxu0 0
      %478 = vmatprep.subr.bf16.mxu0 0
      %479 = vmatpush2.bf16.msra.mxu0 0
      %480 = vmatprep.subr.bf16.mxu0 0
      %481 = vmatpush2.bf16.msra.mxu0 0
      %482 = vmatprep.mubr.bf16.mxu0 0
      %483 = vmatmul.mubr.bf16.gmra.mxu0 %v399
      %v484 = vpop.f32.mrf.mxu0
      %v485 = vadd.f32 0.0, %v484
      %v486 = vpop.f32.mrf.mxu0
      %v487 = vpop.f32.mrf.mxu0
      %v488 = vadd.f32 0.0, %v487
      %v489 = vpop.f32.mrf.mxu0
      %490 = vmatprep.mubr.bf16.mxu0 0
      %491 = vmatmul.mubr.bf16.gmra.mxu0 %v402
      %v492 = vpop.f32.mrf.mxu0
      %v493 = vadd.f32 0.0, %v492
      %v494 = vpop.f32.mrf.mxu0
      %v495 = vpop.f32.mrf.mxu0
      %v496 = vadd.f32 0.0, %v495
      %v497 = vpop.f32.mrf.mxu0
      %498 = vmatprep.mubr.bf16.mxu0 0
      %499 = vmatmul.mubr.bf16.gmra.mxu0 %v405
      %v500 = vpop.f32.mrf.mxu0
      %v501 = vadd.f32 0.0, %v500
      %v502 = vpop.f32.mrf.mxu0
      %v503 = vpop.f32.mrf.mxu0
      %v504 = vadd.f32 0.0, %v503
      %v505 = vpop.f32.mrf.mxu0
      %506 = vmatprep.mubr.bf16.mxu0 0
      %507 = vmatmul.mubr.bf16.gmra.mxu0 %v408
      %v508 = vpop.f32.mrf.mxu0
      %v509 = vadd.f32 0.0, %v508
      %v510 = vpop.f32.mrf.mxu0
      %v511 = vpop.f32.mrf.mxu0
      %v512 = vadd.f32 0.0, %v511
      %v513 = vpop.f32.mrf.mxu0
      %514 = vmatprep.mubr.bf16.mxu0 0
      %515 = vmatmul.mubr.bf16.gmra.mxu0 %v411
      %v516 = vpop.f32.mrf.mxu0
      %v517 = vadd.f32 0.0, %v516
      %v518 = vpop.f32.mrf.mxu0
      %v519 = vpop.f32.mrf.mxu0
      %v520 = vadd.f32 0.0, %v519
      %v521 = vpop.f32.mrf.mxu0
      %522 = vmatprep.mubr.bf16.mxu0 0
      %523 = vmatmul.mubr.bf16.gmra.mxu0 %v414
      %v524 = vpop.f32.mrf.mxu0
      %v525 = vadd.f32 0.0, %v524
      %v526 = vpop.f32.mrf.mxu0
      %v527 = vpop.f32.mrf.mxu0
      %v528 = vadd.f32 0.0, %v527
      %v529 = vpop.f32.mrf.mxu0
      %530 = vmatprep.mubr.bf16.mxu0 0
      %531 = vmatmul.mubr.bf16.gmra.mxu0 %v417
      %v532 = vpop.f32.mrf.mxu0
      %v533 = vadd.f32 0.0, %v532
      %v534 = vpop.f32.mrf.mxu0
      %v535 = vpop.f32.mrf.mxu0
      %v536 = vadd.f32 0.0, %v535
      %v537 = vpop.f32.mrf.mxu0
      %538 = vmatprep.mubr.bf16.mxu0 0
      %539 = vmatmul.mubr.bf16.gmra.mxu0 %v420
      %v540 = vpop.f32.mrf.mxu0
      %v541 = vadd.f32 0.0, %v540
      %v542 = vpop.f32.mrf.mxu0
      %v543 = vpop.f32.mrf.mxu0
      %v544 = vadd.f32 0.0, %v543
      %v545 = vpop.f32.mrf.mxu0
      %546 = vmatprep.mubr.bf16.mxu0 0
      %547 = vmatmul.mubr.bf16.gmra.mxu0 %v423
      %v548 = vpop.f32.mrf.mxu0
      %v549 = vadd.f32 0.0, %v548
      %v550 = vpop.f32.mrf.mxu0
      %v551 = vpop.f32.mrf.mxu0
      %v552 = vadd.f32 0.0, %v551
      %v553 = vpop.f32.mrf.mxu0
      %554 = vmatprep.mubr.bf16.mxu0 0
      %555 = vmatmul.mubr.bf16.gmra.mxu0 %v426
      %v556 = vpop.f32.mrf.mxu0
      %v557 = vadd.f32 0.0, %v556
      %v558 = vpop.f32.mrf.mxu0
      %v559 = vpop.f32.mrf.mxu0
      %v560 = vadd.f32 0.0, %v559
      %v561 = vpop.f32.mrf.mxu0
      %562 = vmatprep.mubr.bf16.mxu0 0
      %563 = vmatmul.mubr.bf16.gmra.mxu0 %v429
      %v564 = vpop.f32.mrf.mxu0
      %v565 = vadd.f32 0.0, %v564
      %v566 = vpop.f32.mrf.mxu0
      %v567 = vpop.f32.mrf.mxu0
      %v568 = vadd.f32 0.0, %v567
      %v569 = vpop.f32.mrf.mxu0
      %570 = vmatprep.mubr.bf16.mxu0 0
      %571 = vmatmul.mubr.bf16.gmra.mxu0 %v432
      %v572 = vpop.f32.mrf.mxu0
      %v573 = vadd.f32 0.0, %v572
      %v574 = vpop.f32.mrf.mxu0
      %v575 = vpop.f32.mrf.mxu0
      %v576 = vadd.f32 0.0, %v575
      %v577 = vpop.f32.mrf.mxu0
      %578 = vmatprep.mubr.bf16.mxu0 0
      %579 = vmatmul.mubr.bf16.gmra.mxu0 %v435
      %v580 = vpop.f32.mrf.mxu0
      %v581 = vadd.f32 0.0, %v580
      %v582 = vpop.f32.mrf.mxu0
      %v583 = vpop.f32.mrf.mxu0
      %v584 = vadd.f32 0.0, %v583
      %v585 = vpop.f32.mrf.mxu0
      %586 = vmatprep.mubr.bf16.mxu0 0
      %587 = vmatmul.mubr.bf16.gmra.mxu0 %v438
      %v588 = vpop.f32.mrf.mxu0
      %v589 = vadd.f32 0.0, %v588
      %v590 = vpop.f32.mrf.mxu0
      %v591 = vpop.f32.mrf.mxu0
      %v592 = vadd.f32 0.0, %v591
      %v593 = vpop.f32.mrf.mxu0
      %594 = vmatprep.mubr.bf16.mxu0 0
      %595 = vmatmul.mubr.bf16.gmra.mxu0 %v441
      %v596 = vpop.f32.mrf.mxu0
      %v597 = vadd.f32 0.0, %v596
      %v598 = vpop.f32.mrf.mxu0
      %v599 = vpop.f32.mrf.mxu0
      %v600 = vadd.f32 0.0, %v599
      %v601 = vpop.f32.mrf.mxu0
      %602 = vmatprep.mubr.bf16.mxu0 0
      %603 = vmatmul.mubr.bf16.gmra.mxu0 %v444
      %v604 = vpop.f32.mrf.mxu0
      %v605 = vadd.f32 0.0, %v604
      %v606 = vpop.f32.mrf.mxu0
      %v607 = vpop.f32.mrf.mxu0
      %v608 = vadd.f32 0.0, %v607
      %v609 = vpop.f32.mrf.mxu0
      %610 = vdwg.mxu0
      %v643 = vunpack.c.l.b16 %v251
      %v644 = vunpack.c.l.b16 %v252
      %v645 = vunpack.c.l.b16 %v253
      %v646 = vunpack.c.l.b16 %v254
      %v647 = vunpack.c.l.b16 %v255
      %v648 = vunpack.c.l.b16 %v256
      %v649 = vunpack.c.l.b16 %v257
      %v650 = vunpack.c.l.b16 %v258
      %v651 = vunpack.c.l.b16 %v259
      %v652 = vunpack.c.l.b16 %v260
      %v653 = vunpack.c.l.b16 %v261
      %v654 = vunpack.c.l.b16 %v262
      %v655 = vunpack.c.l.b16 %v263
      %v656 = vunpack.c.l.b16 %v264
      %v657 = vunpack.c.l.b16 %v265
      %v658 = vunpack.c.l.b16 %v266
      %v659 = vunpack.c.l.b16 %v267
      %v660 = vunpack.c.l.b16 %v268
      %v661 = vunpack.c.l.b16 %v269
      %v662 = vunpack.c.l.b16 %v270
      %v663 = vunpack.c.l.b16 %v271
      %v664 = vunpack.c.l.b16 %v272
      %v665 = vunpack.c.l.b16 %v273
      %v666 = vunpack.c.l.b16 %v274
      %v667 = vunpack.c.l.b16 %v275
      %v668 = vunpack.c.l.b16 %v276
      %v669 = vunpack.c.l.b16 %v277
      %v670 = vunpack.c.l.b16 %v278
      %v671 = vunpack.c.l.b16 %v279
      %v672 = vunpack.c.l.b16 %v280
      %v673 = vunpack.c.l.b16 %v281
      %v674 = vunpack.c.l.b16 %v282
      %v675 = vpack.c.b16 %v644, %v643
      %v676 = vpack.c.b16 %v646, %v645
      %v677 = vpack.c.b16 %v648, %v647
      %v678 = vpack.c.b16 %v650, %v649
      %v679 = vpack.c.b16 %v652, %v651
      %v680 = vpack.c.b16 %v654, %v653
      %v681 = vpack.c.b16 %v656, %v655
      %v682 = vpack.c.b16 %v658, %v657
      %v683 = vpack.c.b16 %v660, %v659
      %v684 = vpack.c.b16 %v662, %v661
      %v685 = vpack.c.b16 %v664, %v663
      %v686 = vpack.c.b16 %v666, %v665
      %v687 = vpack.c.b16 %v668, %v667
      %v688 = vpack.c.b16 %v670, %v669
      %v689 = vpack.c.b16 %v672, %v671
      %v690 = vpack.c.b16 %v674, %v673
      %v692 = vsel %vm397, %v675, 0
      %v695 = vsel %vm397, %v676, 0
      %v698 = vsel %vm397, %v677, 0
      %v701 = vsel %vm397, %v678, 0
      %v704 = vsel %vm397, %v679, 0
      %v707 = vsel %vm397, %v680, 0
      %v710 = vsel %vm397, %v681, 0
      %v713 = vsel %vm397, %v682, 0
      %v716 = vsel %vm397, %v683, 0
      %v719 = vsel %vm397, %v684, 0
      %v722 = vsel %vm397, %v685, 0
      %v725 = vsel %vm397, %v686, 0
      %v728 = vsel %vm397, %v687, 0
      %v731 = vsel %vm397, %v688, 0
      %v734 = vsel %vm397, %v689, 0
      %v737 = vsel %vm397, %v690, 0
      %v740 = vsel %vm446, %v315, 0
      %742 = vmatprep.subr.bf16.mxu0 0
      %743 = vmatpush1.bf16.msra.mxu0 0
      %744 = vmatprep.subr.bf16.mxu0 0
      %745 = vmatpush1.bf16.msra.mxu0 0
      %746 = vmatprep.subr.bf16.mxu0 0
      %747 = vmatpush1.bf16.msra.mxu0 0
      %748 = vmatprep.subr.bf16.mxu0 0
      %749 = vmatpush1.bf16.msra.mxu0 0
      %750 = vmatprep.subr.bf16.mxu0 0
      %751 = vmatpush1.bf16.msra.mxu0 0
      %752 = vmatprep.subr.bf16.mxu0 0
      %753 = vmatpush1.bf16.msra.mxu0 0
      %754 = vmatprep.subr.bf16.mxu0 0
      %755 = vmatpush1.bf16.msra.mxu0 0
      %756 = vmatprep.subr.bf16.mxu0 0
      %757 = vmatpush1.bf16.msra.mxu0 %v740
      %758 = vmatprep.subr.bf16.mxu0 0
      %759 = vmatpush2.bf16.msra.mxu0 0
      %760 = vmatprep.subr.bf16.mxu0 0
      %761 = vmatpush2.bf16.msra.mxu0 0
      %762 = vmatprep.subr.bf16.mxu0 0
      %763 = vmatpush2.bf16.msra.mxu0 0
      %764 = vmatprep.subr.bf16.mxu0 0
      %765 = vmatpush2.bf16.msra.mxu0 0
      %766 = vmatprep.subr.bf16.mxu0 0
      %767 = vmatpush2.bf16.msra.mxu0 0
      %768 = vmatprep.subr.bf16.mxu0 0
      %769 = vmatpush2.bf16.msra.mxu0 0
      %770 = vmatprep.subr.bf16.mxu0 0
      %771 = vmatpush2.bf16.msra.mxu0 0
      %772 = vmatprep.subr.bf16.mxu0 0
      %773 = vmatpush2.bf16.msra.mxu0 0
      %774 = vmatprep.mubr.bf16.mxu0 0
      %775 = vmatmul.mubr.bf16.gmra.mxu0 %v692
      %v776 = vpop.f32.mrf.mxu0
      %v777 = vadd.f32 %v485, %v776
      %v778 = vpop.f32.mrf.mxu0
      %v779 = vpop.f32.mrf.mxu0
      %v780 = vadd.f32 %v488, %v779
      %v781 = vpop.f32.mrf.mxu0
      %782 = vmatprep.mubr.bf16.mxu0 0
      %783 = vmatmul.mubr.bf16.gmra.mxu0 %v695
      %v784 = vpop.f32.mrf.mxu0
      %v785 = vadd.f32 %v493, %v784
      %v786 = vpop.f32.mrf.mxu0
      %v787 = vpop.f32.mrf.mxu0
      %v788 = vadd.f32 %v496, %v787
      %v789 = vpop.f32.mrf.mxu0
      %790 = vmatprep.mubr.bf16.mxu0 0
      %791 = vmatmul.mubr.bf16.gmra.mxu0 %v698
      %v792 = vpop.f32.mrf.mxu0
      %v793 = vadd.f32 %v501, %v792
      %v794 = vpop.f32.mrf.mxu0
      %v795 = vpop.f32.mrf.mxu0
      %v796 = vadd.f32 %v504, %v795
      %v797 = vpop.f32.mrf.mxu0
      %798 = vmatprep.mubr.bf16.mxu0 0
      %799 = vmatmul.mubr.bf16.gmra.mxu0 %v701
      %v800 = vpop.f32.mrf.mxu0
      %v801 = vadd.f32 %v509, %v800
      %v802 = vpop.f32.mrf.mxu0
      %v803 = vpop.f32.mrf.mxu0
      %v804 = vadd.f32 %v512, %v803
      %v805 = vpop.f32.mrf.mxu0
      %806 = vmatprep.mubr.bf16.mxu0 0
      %807 = vmatmul.mubr.bf16.gmra.mxu0 %v704
      %v808 = vpop.f32.mrf.mxu0
      %v809 = vadd.f32 %v517, %v808
      %v810 = vpop.f32.mrf.mxu0
      %v811 = vpop.f32.mrf.mxu0
      %v812 = vadd.f32 %v520, %v811
      %v813 = vpop.f32.mrf.mxu0
      %814 = vmatprep.mubr.bf16.mxu0 0
      %815 = vmatmul.mubr.bf16.gmra.mxu0 %v707
      %v816 = vpop.f32.mrf.mxu0
      %v817 = vadd.f32 %v525, %v816
      %v818 = vpop.f32.mrf.mxu0
      %v819 = vpop.f32.mrf.mxu0
      %v820 = vadd.f32 %v528, %v819
      %v821 = vpop.f32.mrf.mxu0
      %822 = vmatprep.mubr.bf16.mxu0 0
      %823 = vmatmul.mubr.bf16.gmra.mxu0 %v710
      %v824 = vpop.f32.mrf.mxu0
      %v825 = vadd.f32 %v533, %v824
      %v826 = vpop.f32.mrf.mxu0
      %v827 = vpop.f32.mrf.mxu0
      %v828 = vadd.f32 %v536, %v827
      %v829 = vpop.f32.mrf.mxu0
      %830 = vmatprep.mubr.bf16.mxu0 0
      %831 = vmatmul.mubr.bf16.gmra.mxu0 %v713
      %v832 = vpop.f32.mrf.mxu0
      %v833 = vadd.f32 %v541, %v832
      %v834 = vpop.f32.mrf.mxu0
      %v835 = vpop.f32.mrf.mxu0
      %v836 = vadd.f32 %v544, %v835
      %v837 = vpop.f32.mrf.mxu0
      %838 = vmatprep.mubr.bf16.mxu0 0
      %839 = vmatmul.mubr.bf16.gmra.mxu0 %v716
      %v840 = vpop.f32.mrf.mxu0
      %v841 = vadd.f32 %v549, %v840
      %v842 = vpop.f32.mrf.mxu0
      %v843 = vpop.f32.mrf.mxu0
      %v844 = vadd.f32 %v552, %v843
      %v845 = vpop.f32.mrf.mxu0
      %846 = vmatprep.mubr.bf16.mxu0 0
      %847 = vmatmul.mubr.bf16.gmra.mxu0 %v719
      %v848 = vpop.f32.mrf.mxu0
      %v849 = vadd.f32 %v557, %v848
      %v850 = vpop.f32.mrf.mxu0
      %v851 = vpop.f32.mrf.mxu0
      %v852 = vadd.f32 %v560, %v851
      %v853 = vpop.f32.mrf.mxu0
      %854 = vmatprep.mubr.bf16.mxu0 0
      %855 = vmatmul.mubr.bf16.gmra.mxu0 %v722
      %v856 = vpop.f32.mrf.mxu0
      %v857 = vadd.f32 %v565, %v856
      %v858 = vpop.f32.mrf.mxu0
      %v859 = vpop.f32.mrf.mxu0
      %v860 = vadd.f32 %v568, %v859
      %v861 = vpop.f32.mrf.mxu0
      %862 = vmatprep.mubr.bf16.mxu0 0
      %863 = vmatmul.mubr.bf16.gmra.mxu0 %v725
      %v864 = vpop.f32.mrf.mxu0
      %v865 = vadd.f32 %v573, %v864
      %v866 = vpop.f32.mrf.mxu0
      %v867 = vpop.f32.mrf.mxu0
      %v868 = vadd.f32 %v576, %v867
      %v869 = vpop.f32.mrf.mxu0
      %870 = vmatprep.mubr.bf16.mxu0 0
      %871 = vmatmul.mubr.bf16.gmra.mxu0 %v728
      %v872 = vpop.f32.mrf.mxu0
      %v873 = vadd.f32 %v581, %v872
      %v874 = vpop.f32.mrf.mxu0
      %v875 = vpop.f32.mrf.mxu0
      %v876 = vadd.f32 %v584, %v875
      %v877 = vpop.f32.mrf.mxu0
      %878 = vmatprep.mubr.bf16.mxu0 0
      %879 = vmatmul.mubr.bf16.gmra.mxu0 %v731
      %v880 = vpop.f32.mrf.mxu0
      %v881 = vadd.f32 %v589, %v880
      %v882 = vpop.f32.mrf.mxu0
      %v883 = vpop.f32.mrf.mxu0
      %v884 = vadd.f32 %v592, %v883
      %v885 = vpop.f32.mrf.mxu0
      %886 = vmatprep.mubr.bf16.mxu0 0
      %887 = vmatmul.mubr.bf16.gmra.mxu0 %v734
      %v888 = vpop.f32.mrf.mxu0
      %v889 = vadd.f32 %v597, %v888
      %v890 = vpop.f32.mrf.mxu0
      %v891 = vpop.f32.mrf.mxu0
      %v892 = vadd.f32 %v600, %v891
      %v893 = vpop.f32.mrf.mxu0
      %894 = vmatprep.mubr.bf16.mxu0 0
      %895 = vmatmul.mubr.bf16.gmra.mxu0 %v737
      %v896 = vpop.f32.mrf.mxu0
      %v897 = vadd.f32 %v605, %v896
      %v898 = vpop.f32.mrf.mxu0
      %v899 = vpop.f32.mrf.mxu0
      %v900 = vadd.f32 %v608, %v899
      %v901 = vpop.f32.mrf.mxu0
      %902 = vdwg.mxu0
      %v903 = vld [vmem:[%s4] sm:$0x1]
      %v905 = vlaneseq
      %v906 = vshrl.u32 %v905, 7
      %v907 = vsub.s32 0, %v906
      %v908 = vrot.slane %v903, %v907
      %v910 = vadd.f32 %v777, %v908
      %v911 = vadd.f32 %v780, %v908
      %v912 = vadd.f32 %v785, %v908
      %v913 = vadd.f32 %v788, %v908
      %v914 = vadd.f32 %v793, %v908
      %v915 = vadd.f32 %v796, %v908
      %v916 = vadd.f32 %v801, %v908
      %v917 = vadd.f32 %v804, %v908
      %v918 = vadd.f32 %v809, %v908
      %v919 = vadd.f32 %v812, %v908
      %v920 = vadd.f32 %v817, %v908
      %v921 = vadd.f32 %v820, %v908
      %v922 = vadd.f32 %v825, %v908
      %v923 = vadd.f32 %v828, %v908
      %v924 = vadd.f32 %v833, %v908
      %v925 = vadd.f32 %v836, %v908
      %v926 = vadd.f32 %v841, %v908
      %v927 = vadd.f32 %v844, %v908
      %v928 = vadd.f32 %v849, %v908
      %v929 = vadd.f32 %v852, %v908
      %v930 = vadd.f32 %v857, %v908
      %v931 = vadd.f32 %v860, %v908
      %v932 = vadd.f32 %v865, %v908
      %v933 = vadd.f32 %v868, %v908
      %v934 = vadd.f32 %v873, %v908
      %v935 = vadd.f32 %v876, %v908
      %v936 = vadd.f32 %v881, %v908
      %v937 = vadd.f32 %v884, %v908
      %v938 = vadd.f32 %v889, %v908
      %v939 = vadd.f32 %v892, %v908
      %v940 = vadd.f32 %v897, %v908
      %v941 = vadd.f32 %v900, %v908
      %v942 = vxor.u32 %v910, 2147483648
      %v943 = vxor.u32 %v911, 2147483648
      %v944 = vxor.u32 %v912, 2147483648
      %v945 = vxor.u32 %v913, 2147483648
      %v946 = vxor.u32 %v914, 2147483648
      %v947 = vxor.u32 %v915, 2147483648
      %v948 = vxor.u32 %v916, 2147483648
      %v949 = vxor.u32 %v917, 2147483648
      %v950 = vxor.u32 %v918, 2147483648
      %v951 = vxor.u32 %v919, 2147483648
      %v952 = vxor.u32 %v920, 2147483648
      %v953 = vxor.u32 %v921, 2147483648
      %v954 = vxor.u32 %v922, 2147483648
      %v955 = vxor.u32 %v923, 2147483648
      %v956 = vxor.u32 %v924, 2147483648
      %v957 = vxor.u32 %v925, 2147483648
      %v958 = vxor.u32 %v926, 2147483648
      %v959 = vxor.u32 %v927, 2147483648
      %v960 = vxor.u32 %v928, 2147483648
      %v961 = vxor.u32 %v929, 2147483648
      %v962 = vxor.u32 %v930, 2147483648
      %v963 = vxor.u32 %v931, 2147483648
      %v964 = vxor.u32 %v932, 2147483648
      %v965 = vxor.u32 %v933, 2147483648
      %v966 = vxor.u32 %v934, 2147483648
      %v967 = vxor.u32 %v935, 2147483648
      %v968 = vxor.u32 %v936, 2147483648
      %v969 = vxor.u32 %v937, 2147483648
      %v970 = vxor.u32 %v938, 2147483648
      %v971 = vxor.u32 %v939, 2147483648
      %v972 = vxor.u32 %v940, 2147483648
      %v973 = vxor.u32 %v941, 2147483648
      %v974 = vmul.f32 %v942, 1.442695
      %v975 = vpow.pop %v974
      %v976 = vmul.f32 %v943, 1.442695
      %v977 = vpow.pop %v976
      %v978 = vmul.f32 %v944, 1.442695
      %v979 = vpow.pop %v978
      %v980 = vmul.f32 %v945, 1.442695
      %v981 = vpow.pop %v980
      %v982 = vmul.f32 %v946, 1.442695
      %v983 = vpow.pop %v982
      %v984 = vmul.f32 %v947, 1.442695
      %v985 = vpow.pop %v984
      %v986 = vmul.f32 %v948, 1.442695
      %v987 = vpow.pop %v986
      %v988 = vmul.f32 %v949, 1.442695
      %v989 = vpow.pop %v988
      %v990 = vmul.f32 %v950, 1.442695
      %v991 = vpow.pop %v990
      %v992 = vmul.f32 %v951, 1.442695
      %v993 = vpow.pop %v992
      %v994 = vmul.f32 %v952, 1.442695
      %v995 = vpow.pop %v994
      %v996 = vmul.f32 %v953, 1.442695
      %v997 = vpow.pop %v996
      %v998 = vmul.f32 %v954, 1.442695
      %v999 = vpow.pop %v998
      %v1000 = vmul.f32 %v955, 1.442695
      %v1001 = vpow.pop %v1000
      %v1002 = vmul.f32 %v956, 1.442695
      %v1003 = vpow.pop %v1002
      %v1004 = vmul.f32 %v957, 1.442695
      %v1005 = vpow.pop %v1004
      %v1006 = vmul.f32 %v958, 1.442695
      %v1007 = vpow.pop %v1006
      %v1008 = vmul.f32 %v959, 1.442695
      %v1009 = vpow.pop %v1008
      %v1010 = vmul.f32 %v960, 1.442695
      %v1011 = vpow.pop %v1010
      %v1012 = vmul.f32 %v961, 1.442695
      %v1013 = vpow.pop %v1012
      %v1014 = vmul.f32 %v962, 1.442695
      %v1015 = vpow.pop %v1014
      %v1016 = vmul.f32 %v963, 1.442695
      %v1017 = vpow.pop %v1016
      %v1018 = vmul.f32 %v964, 1.442695
      %v1019 = vpow.pop %v1018
      %v1020 = vmul.f32 %v965, 1.442695
      %v1021 = vpow.pop %v1020
      %v1022 = vmul.f32 %v966, 1.442695
      %v1023 = vpow.pop %v1022
      %v1024 = vmul.f32 %v967, 1.442695
      %v1025 = vpow.pop %v1024
      %v1026 = vmul.f32 %v968, 1.442695
      %v1027 = vpow.pop %v1026
      %v1028 = vmul.f32 %v969, 1.442695
      %v1029 = vpow.pop %v1028
      %v1030 = vmul.f32 %v970, 1.442695
      %v1031 = vpow.pop %v1030
      %v1032 = vmul.f32 %v971, 1.442695
      %v1033 = vpow.pop %v1032
      %v1034 = vmul.f32 %v972, 1.442695
      %v1035 = vpow.pop %v1034
      %v1036 = vmul.f32 %v973, 1.442695
      %v1037 = vpow.pop %v1036
      %v1038 = vadd.f32 %v975, 1.0
      %v1039 = vadd.f32 %v977, 1.0
      %v1040 = vadd.f32 %v979, 1.0
      %v1041 = vadd.f32 %v981, 1.0
      %v1042 = vadd.f32 %v983, 1.0
      %v1043 = vadd.f32 %v985, 1.0
      %v1044 = vadd.f32 %v987, 1.0
      %v1045 = vadd.f32 %v989, 1.0
      %v1046 = vadd.f32 %v991, 1.0
      %v1047 = vadd.f32 %v993, 1.0
      %v1048 = vadd.f32 %v995, 1.0
      %v1049 = vadd.f32 %v997, 1.0
      %v1050 = vadd.f32 %v999, 1.0
      %v1051 = vadd.f32 %v1001, 1.0
      %v1052 = vadd.f32 %v1003, 1.0
      %v1053 = vadd.f32 %v1005, 1.0
      %v1054 = vadd.f32 %v1007, 1.0
      %v1055 = vadd.f32 %v1009, 1.0
      %v1056 = vadd.f32 %v1011, 1.0
      %v1057 = vadd.f32 %v1013, 1.0
      %v1058 = vadd.f32 %v1015, 1.0
      %v1059 = vadd.f32 %v1017, 1.0
      %v1060 = vadd.f32 %v1019, 1.0
      %v1061 = vadd.f32 %v1021, 1.0
      %v1062 = vadd.f32 %v1023, 1.0
      %v1063 = vadd.f32 %v1025, 1.0
      %v1064 = vadd.f32 %v1027, 1.0
      %v1065 = vadd.f32 %v1029, 1.0
      %v1066 = vadd.f32 %v1031, 1.0
      %v1067 = vadd.f32 %v1033, 1.0
      %v1068 = vadd.f32 %v1035, 1.0
      %v1069 = vadd.f32 %v1037, 1.0
      %v1070 = vrcp.pop %v1038
      %v1071 = vmul.f32 1.0, %v1070
      %v1072 = vrcp.pop %v1039
      %v1073 = vmul.f32 1.0, %v1072
      %v1074 = vrcp.pop %v1040
      %v1075 = vmul.f32 1.0, %v1074
      %v1076 = vrcp.pop %v1041
      %v1077 = vmul.f32 1.0, %v1076
      %v1078 = vrcp.pop %v1042
      %v1079 = vmul.f32 1.0, %v1078
      %v1080 = vrcp.pop %v1043
      %v1081 = vmul.f32 1.0, %v1080
      %v1082 = vrcp.pop %v1044
      %v1083 = vmul.f32 1.0, %v1082
      %v1084 = vrcp.pop %v1045
      %v1085 = vmul.f32 1.0, %v1084
      %v1086 = vrcp.pop %v1046
      %v1087 = vmul.f32 1.0, %v1086
      %v1088 = vrcp.pop %v1047
      %v1089 = vmul.f32 1.0, %v1088
      %v1090 = vrcp.pop %v1048
      %v1091 = vmul.f32 1.0, %v1090
      %v1092 = vrcp.pop %v1049
      %v1093 = vmul.f32 1.0, %v1092
      %v1094 = vrcp.pop %v1050
      %v1095 = vmul.f32 1.0, %v1094
      %v1096 = vrcp.pop %v1051
      %v1097 = vmul.f32 1.0, %v1096
      %v1098 = vrcp.pop %v1052
      %v1099 = vmul.f32 1.0, %v1098
      %v1100 = vrcp.pop %v1053
      %v1101 = vmul.f32 1.0, %v1100
      %v1102 = vrcp.pop %v1054
      %v1103 = vmul.f32 1.0, %v1102
      %v1104 = vrcp.pop %v1055
      %v1105 = vmul.f32 1.0, %v1104
      %v1106 = vrcp.pop %v1056
      %v1107 = vmul.f32 1.0, %v1106
      %v1108 = vrcp.pop %v1057
      %v1109 = vmul.f32 1.0, %v1108
      %v1110 = vrcp.pop %v1058
      %v1111 = vmul.f32 1.0, %v1110
      %v1112 = vrcp.pop %v1059
      %v1113 = vmul.f32 1.0, %v1112
      %v1114 = vrcp.pop %v1060
      %v1115 = vmul.f32 1.0, %v1114
      %v1116 = vrcp.pop %v1061
      %v1117 = vmul.f32 1.0, %v1116
      %v1118 = vrcp.pop %v1062
      %v1119 = vmul.f32 1.0, %v1118
      %v1120 = vrcp.pop %v1063
      %v1121 = vmul.f32 1.0, %v1120
      %v1122 = vrcp.pop %v1064
      %v1123 = vmul.f32 1.0, %v1122
      %v1124 = vrcp.pop %v1065
      %v1125 = vmul.f32 1.0, %v1124
      %v1126 = vrcp.pop %v1066
      %v1127 = vmul.f32 1.0, %v1126
      %v1128 = vrcp.pop %v1067
      %v1129 = vmul.f32 1.0, %v1128
      %v1130 = vrcp.pop %v1068
      %v1131 = vmul.f32 1.0, %v1130
      %v1132 = vrcp.pop %v1069
      %v1133 = vmul.f32 1.0, %v1132
      %v1134 = vmul.f32 %v910, %v1071
      %v1135 = vmul.f32 %v911, %v1073
      %v1136 = vmul.f32 %v912, %v1075
      %v1137 = vmul.f32 %v913, %v1077
      %v1138 = vmul.f32 %v914, %v1079
      %v1139 = vmul.f32 %v915, %v1081
      %v1140 = vmul.f32 %v916, %v1083
      %v1141 = vmul.f32 %v917, %v1085
      %v1142 = vmul.f32 %v918, %v1087
      %v1143 = vmul.f32 %v919, %v1089
      %v1144 = vmul.f32 %v920, %v1091
      %v1145 = vmul.f32 %v921, %v1093
      %v1146 = vmul.f32 %v922, %v1095
      %v1147 = vmul.f32 %v923, %v1097
      %v1148 = vmul.f32 %v924, %v1099
      %v1149 = vmul.f32 %v925, %v1101
      %v1150 = vmul.f32 %v926, %v1103
      %v1151 = vmul.f32 %v927, %v1105
      %v1152 = vmul.f32 %v928, %v1107
      %v1153 = vmul.f32 %v929, %v1109
      %v1154 = vmul.f32 %v930, %v1111
      %v1155 = vmul.f32 %v931, %v1113
      %v1156 = vmul.f32 %v932, %v1115
      %v1157 = vmul.f32 %v933, %v1117
      %v1158 = vmul.f32 %v934, %v1119
      %v1159 = vmul.f32 %v935, %v1121
      %v1160 = vmul.f32 %v936, %v1123
      %v1161 = vmul.f32 %v937, %v1125
      %v1162 = vmul.f32 %v938, %v1127
      %v1163 = vmul.f32 %v939, %v1129
      %v1164 = vmul.f32 %v940, %v1131
      %v1165 = vmul.f32 %v941, %v1133
      %vm1166 = vcmask 64512
      %1167 = vst.msk [vmem:[%s248] sm:$0xff] %vm1166, %v1134
      %1168 = vst.msk [vmem:[%s248 + $0x8] sm:$0xff] %vm1166, %v1135
      %1169 = vst.msk [vmem:[%s248 + $0x10] sm:$0xff] %vm1166, %v1136
      %1170 = vst.msk [vmem:[%s248 + $0x18] sm:$0xff] %vm1166, %v1137
      %1171 = vst.msk [vmem:[%s248 + $0x20] sm:$0xff] %vm1166, %v1138
      %1172 = vst.msk [vmem:[%s248 + $0x28] sm:$0xff] %vm1166, %v1139
      %1173 = vst.msk [vmem:[%s248 + $0x30] sm:$0xff] %vm1166, %v1140
      %1174 = vst.msk [vmem:[%s248 + $0x38] sm:$0xff] %vm1166, %v1141
      %1175 = vst.msk [vmem:[%s248 + $0x40] sm:$0xff] %vm1166, %v1142
      %1176 = vst.msk [vmem:[%s248 + $0x48] sm:$0xff] %vm1166, %v1143
      %1177 = vst.msk [vmem:[%s248 + $0x50] sm:$0xff] %vm1166, %v1144
      %1178 = vst.msk [vmem:[%s248 + $0x58] sm:$0xff] %vm1166, %v1145
      %1179 = vst.msk [vmem:[%s248 + $0x60] sm:$0xff] %vm1166, %v1146
      %1180 = vst.msk [vmem:[%s248 + $0x68] sm:$0xff] %vm1166, %v1147
      %1181 = vst.msk [vmem:[%s248 + $0x70] sm:$0xff] %vm1166, %v1148
      %1182 = vst.msk [vmem:[%s248 + $0x78] sm:$0xff] %vm1166, %v1149
      %1183 = vst.msk [vmem:[%s248 + $0x80] sm:$0xff] %vm1166, %v1150
      %1184 = vst.msk [vmem:[%s248 + $0x88] sm:$0xff] %vm1166, %v1151
      %1185 = vst.msk [vmem:[%s248 + $0x90] sm:$0xff] %vm1166, %v1152
      %1186 = vst.msk [vmem:[%s248 + $0x98] sm:$0xff] %vm1166, %v1153
      %1187 = vst.msk [vmem:[%s248 + $0xa0] sm:$0xff] %vm1166, %v1154
      %1188 = vst.msk [vmem:[%s248 + $0xa8] sm:$0xff] %vm1166, %v1155
      %1189 = vst.msk [vmem:[%s248 + $0xb0] sm:$0xff] %vm1166, %v1156
      %1190 = vst.msk [vmem:[%s248 + $0xb8] sm:$0xff] %vm1166, %v1157
      %1191 = vst.msk [vmem:[%s248 + $0xc0] sm:$0xff] %vm1166, %v1158
      %1192 = vst.msk [vmem:[%s248 + $0xc8] sm:$0xff] %vm1166, %v1159
      %1193 = vst.msk [vmem:[%s248 + $0xd0] sm:$0xff] %vm1166, %v1160
      %1194 = vst.msk [vmem:[%s248 + $0xd8] sm:$0xff] %vm1166, %v1161
      %1195 = vst.msk [vmem:[%s248 + $0xe0] sm:$0xff] %vm1166, %v1162
      %1196 = vst.msk [vmem:[%s248 + $0xe8] sm:$0xff] %vm1166, %v1163
      %1197 = vst.msk [vmem:[%s248 + $0xf0] sm:$0xff] %vm1166, %v1164
      %1198 = vst.msk [vmem:[%s248 + $0xf8] sm:$0xff] %vm1166, %v1165
      %s1199 = smul.u32 32, %s16
      %p1200 = scmp.lt.s32.totalorder %s1199, 63
      %s1201 = scalar_select %p1200, %s1199, 63
      %s1202 = smul.addr %s1201, 8
      %s1203 = scalar_lea.vmem %s5, %s1202
      // Predicated region
      $region41: #{_lambda_.7} parent=39 // pred_check
        %p1204 = pneg %p149
      $region42: #{_lambda_.7} parent=39 // pred_check_branch
        %1206 = sbr.rel (%p1204) target = $region44
      $region43: #{_lambda_.7} parent=39 // pred_region
        %s1207 = smul.u32 32, %s16
      $region44: #{_lambda_.7} parent=39 // pred_fallthru
        _
    $region40: #{_lambda_.7} parent=5 // pred_fallthru
      _
    %p1208 = scmp.le.s32.totalorder 2, %s11
    // Predicated region
    $region45: #{_lambda_.7} parent=5 // pred_check
      %p1209 = pneg %p1208
    $region46: #{_lambda_.7} parent=5 // pred_check_branch
      %1211 = sbr.rel (%p1209) target = $region48
    $region47: #{_lambda_.7} parent=5 // pred_region
      %s1212 = ssub.s32 %s11, 2
      // Predicated region
      $region49: #{_lambda_.7} parent=47 // pred_check
        %p1213 = pneg %p155
      $region50: #{_lambda_.7} parent=47 // pred_check_branch
        %1215 = sbr.rel (%p1213) target = $region52
      $region51: #{_lambda_.7} parent=47 // pred_region
        %s1216 = smul.u32 32, %s17
        %p1217 = scmp.lt.s32.totalorder %s1216, 63
        %s1218 = scalar_select %p1217, %s1216, 63
        %s1219 = smul.addr %s1218, 8
        %s1220 = scalar_lea.vmem %s5, %s1219
      $region52: #{_lambda_.7} parent=47 // pred_fallthru
        _
    $region48: #{_lambda_.7} parent=5 // pred_fallthru
      _
  $region6: #{_lambda_.7} parent=0 // loop_footer
    %s15 = sadd.s32 1, %s11
  $region7: #{_lambda_.7} parent=0 // loop_footer_branch
    %10 = sbr.rel target = $region3
  $region8: #{_lambda_.7} parent=0 // loop_exit
    _

// kernel: _lambda_.6
$region0: #{_lambda_.6}
  #allocation0 [shape = 'u32[]', space=smem, size = 0x4, offset = 0x4, fixed_abs, tag = 'smem constant byte address 0x4 - core index']
  #allocation1 [shape = 'u32[144,128]{1,0:T(1,128)}', space=vmem, size = 0x12000, scoped, tag = 'internal scratch']
  #allocation2 [shape = 'f32[400,4]{1,0:T(8,128)}', space=vmem, size = 0x32000, scoped, tag = 'scratch operand']
  %s0 = inlined_call_operand.vmem [shape: bf16[1080,4], index: 0, kind: input, shape index: {}, may-alias: {0,1}]
  %s1 = inlined_call_operand.vmem [shape: bf16[1080,4], index: 1, kind: input, shape index: {}, may-alias: {0,1}]
  %s2 = inlined_call_operand.vmem [shape: bf16[9,4,4], index: 2, kind: input, shape index: {}]
  %s3 = inlined_call_operand.vmem [shape: f32[1,4], index: 3, kind: input, shape index: {}]
  %s4 = inlined_call_operand.vmem [shape: bf16[720,4], index: 4, kind: input, shape index: {}]
  %s5 = inlined_call_operand.vmem [shape: bf16[720,4], index: 5, kind: output, shape index: {}]
  %s6 = sld [smem:[#allocation0]]
  $region53: #{_lambda_.6} parent=0
    _
  %s8 = ssub.s32 1, %s6
  %s9 = scalar_select 0, %s8, %s6
  loop: start=0, step=1, limit=4
  $region2: #{_lambda_.6} parent=0 // loop_pre_header
    _
  $region3: #{_lambda_.6} parent=0 // loop_header
    %s11 = sphi 0, %s15
    %p12 = scmp.ge.s32.totalorder %s11, 4
    %s21 = sphi 0, %s23
    %s24 = sphi 0, %s21
    %s25 = sphi 0, %s24
    %s41 = sphi 0, %s25
    %s51 = sphi 0, %s53
    %s54 = sphi 0, %s51
    %s55 = sphi 0, %s54
    %s71 = sphi 0, %s55
    %s75 = sphi 0, %s75
    %s77 = sphi 0, %s75
    %s78 = sphi 0, %s77
    %s92 = sphi 0, %s78
    %s96 = sphi 0, %s96
    %s98 = sphi 0, %s96
    %s99 = sphi 0, %s98
    %s113 = sphi 0, %s99
    %s119 = sphi 0, %s121
    %s122 = sphi 0, %s119
    %s123 = sphi 0, %s122
    %s139 = sphi 0, %s123
    %s145 = sphi 0, %s147
    %s148 = sphi 0, %s145
    %s149 = sphi 0, %s148
    %s165 = sphi 0, %s149
  $region4: #{_lambda_.6} parent=0 // loop_header_branch
    %14 = sbr.rel (%p12) target = $region8
  $region5: #{_lambda_.6} parent=0 // loop_body
    %s16 = ssub.s32 %s11, 1
    %s17 = ssub.s32 %s11, 2
    %s18 = sadd.s32 %s11, 1
    %s19 = ssub.s32 %s11, %s18
    %p20 = scmp.eq.s32.totalorder %s19, 0
    %s22 = sadd.s32 %s21, 1
    %s23 = scalar_select %p20, %s21, %s22
    %p26 = pneg %p20
    %p27 = scmp.eq.s32.totalorder %s11, 1
    %p28 = por %p26, %p27
    %p29 = scmp.ne.s32.totalorder %s21, %s24
    %p30 = scmp.eq.s32.totalorder %s11, 0
    %p31 = por %p29, %p30
    %p32 = scmp.ne.s32.totalorder %s21, %s24
    %p33 = scmp.eq.s32.totalorder %s16, 1
    %p34 = por %p32, %p33
    %p35 = scmp.ne.s32.totalorder %s24, %s25
    %p36 = scmp.eq.s32.totalorder %s16, 0
    %p37 = por %p35, %p36
    %p38 = scmp.ne.s32.totalorder %s24, %s25
    %p39 = scmp.eq.s32.totalorder %s17, 1
    %p40 = por %p38, %p39
    %p42 = scmp.ne.s32.totalorder %s25, %s41
    %p43 = scmp.eq.s32.totalorder %s17, 0
    %p44 = por %p42, %p43
    %s45 = sadd.s32 %s11, 1
    %s46 = smul.u32 %s45, 9
    %s47 = sadd.s32 %s18, 1
    %s48 = smul.u32 %s47, 9
    %s49 = ssub.s32 %s46, %s48
    %p50 = scmp.eq.s32.totalorder %s49, 0
    %s52 = sadd.s32 %s51, 1
    %s53 = scalar_select %p50, %s51, %s52
    %p56 = pneg %p50
    %p57 = scmp.eq.s32.totalorder %s11, 1
    %p58 = por %p56, %p57
    %p59 = scmp.ne.s32.totalorder %s51, %s54
    %p60 = scmp.eq.s32.totalorder %s11, 0
    %p61 = por %p59, %p60
    %p62 = scmp.ne.s32.totalorder %s51, %s54
    %p63 = scmp.eq.s32.totalorder %s16, 1
    %p64 = por %p62, %p63
    %p65 = scmp.ne.s32.totalorder %s54, %s55
    %p66 = scmp.eq.s32.totalorder %s16, 0
    %p67 = por %p65, %p66
    %p68 = scmp.ne.s32.totalorder %s54, %s55
    %p69 = scmp.eq.s32.totalorder %s17, 1
    %p70 = por %p68, %p69
    %p72 = scmp.ne.s32.totalorder %s55, %s71
    %p73 = scmp.eq.s32.totalorder %s17, 0
    %p74 = por %p72, %p73
    %s76 = sadd.s32 %s75, 1
    %p79 = scmp.eq.s32.totalorder %s11, 1
    %p80 = scmp.ne.s32.totalorder %s75, %s77
    %p81 = scmp.eq.s32.totalorder %s11, 0
    %p82 = por %p80, %p81
    %p83 = scmp.ne.s32.totalorder %s75, %s77
    %p84 = scmp.eq.s32.totalorder %s16, 1
    %p85 = por %p83, %p84
    %p86 = scmp.ne.s32.totalorder %s77, %s78
    %p87 = scmp.eq.s32.totalorder %s16, 0
    %p88 = por %p86, %p87
    %p89 = scmp.ne.s32.totalorder %s77, %s78
    %p90 = scmp.eq.s32.totalorder %s17, 1
    %p91 = por %p89, %p90
    %p93 = scmp.ne.s32.totalorder %s78, %s92
    %p94 = scmp.eq.s32.totalorder %s17, 0
    %p95 = por %p93, %p94
    %s97 = sadd.s32 %s96, 1
    %p100 = scmp.eq.s32.totalorder %s11, 1
    %p101 = scmp.ne.s32.totalorder %s96, %s98
    %p102 = scmp.eq.s32.totalorder %s11, 0
    %p103 = por %p101, %p102
    %p104 = scmp.ne.s32.totalorder %s96, %s98
    %p105 = scmp.eq.s32.totalorder %s16, 1
    %p106 = por %p104, %p105
    %p107 = scmp.ne.s32.totalorder %s98, %s99
    %p108 = scmp.eq.s32.totalorder %s16, 0
    %p109 = por %p107, %p108
    %p110 = scmp.ne.s32.totalorder %s98, %s99
    %p111 = scmp.eq.s32.totalorder %s17, 1
    %p112 = por %p110, %p111
    %p114 = scmp.ne.s32.totalorder %s99, %s113
    %p115 = scmp.eq.s32.totalorder %s17, 0
    %p116 = por %p114, %p115
    %s117 = ssub.s32 %s11, %s18
    %p118 = scmp.eq.s32.totalorder %s117, 0
    %s120 = sadd.s32 %s119, 1
    %s121 = scalar_select %p118, %s119, %s120
    %p124 = pneg %p118
    %p125 = scmp.eq.s32.totalorder %s11, 1
    %p126 = por %p124, %p125
    %p127 = scmp.ne.s32.totalorder %s119, %s122
    %p128 = scmp.eq.s32.totalorder %s11, 0
    %p129 = por %p127, %p128
    %p130 = scmp.ne.s32.totalorder %s119, %s122
    %p131 = scmp.eq.s32.totalorder %s16, 1
    %p132 = por %p130, %p131
    %p133 = scmp.ne.s32.totalorder %s122, %s123
    %p134 = scmp.eq.s32.totalorder %s16, 0
    %p135 = por %p133, %p134
    %p136 = scmp.ne.s32.totalorder %s122, %s123
    %p137 = scmp.eq.s32.totalorder %s17, 1
    %p138 = por %p136, %p137
    %p140 = scmp.ne.s32.totalorder %s123, %s139
    %p141 = scmp.eq.s32.totalorder %s17, 0
    %p142 = por %p140, %p141
    %s143 = ssub.s32 %s11, %s18
    %p144 = scmp.eq.s32.totalorder %s143, 0
    %s146 = sadd.s32 %s145, 1
    %s147 = scalar_select %p144, %s145, %s146
    %p150 = pneg %p144
    %p151 = scmp.eq.s32.totalorder %s11, 1
    %p152 = por %p150, %p151
    %p153 = scmp.ne.s32.totalorder %s145, %s148
    %p154 = scmp.eq.s32.totalorder %s11, 0
    %p155 = por %p153, %p154
    %p156 = scmp.ne.s32.totalorder %s145, %s148
    %p157 = scmp.eq.s32.totalorder %s16, 1
    %p158 = por %p156, %p157
    %p159 = scmp.ne.s32.totalorder %s148, %s149
    %p160 = scmp.eq.s32.totalorder %s16, 0
    %p161 = por %p159, %p160
    %p162 = scmp.ne.s32.totalorder %s148, %s149
    %p163 = scmp.eq.s32.totalorder %s17, 1
    %p164 = por %p162, %p163
    %p166 = scmp.ne.s32.totalorder %s149, %s165
    %p167 = scmp.eq.s32.totalorder %s17, 0
    %p168 = por %p166, %p167
    %p169 = scmp.le.s32.totalorder 1, %s11
    %p170 = scmp.lt.s32.totalorder %s11, 3
    %p171 = pnand %p169, %p170
    %p172 = pneg %p171
    // Predicated region
    $region9: #{_lambda_.6} parent=5 // pred_check
      _
    $region10: #{_lambda_.6} parent=5 // pred_check_branch
      %174 = sbr.rel (%p171) target = $region12
    $region11: #{_lambda_.6} parent=5 // pred_region
      %s175 = ssub.s32 %s11, 1
      // Predicated region
      $region13: #{_lambda_.6} parent=11 // pred_check
        %p176 = pneg %p88
      $region14: #{_lambda_.6} parent=11 // pred_check_branch
        %178 = sbr.rel (%p176) target = $region16
      $region15: #{_lambda_.6} parent=11 // pred_region
        _
      $region16: #{_lambda_.6} parent=11 // pred_fallthru
        _
      // Predicated region
      $region17: #{_lambda_.6} parent=11 // pred_check
        %p179 = pneg %p109
      $region18: #{_lambda_.6} parent=11 // pred_check_branch
        %181 = sbr.rel (%p179) target = $region20
      $region19: #{_lambda_.6} parent=11 // pred_region
        _
      $region20: #{_lambda_.6} parent=11 // pred_fallthru
        _
    $region12: #{_lambda_.6} parent=5 // pred_fallthru
      _
    %p182 = scmp.lt.s32.totalorder %s11, 2
    // Predicated region
    $region21: #{_lambda_.6} parent=5 // pred_check
      %p183 = pneg %p182
    $region22: #{_lambda_.6} parent=5 // pred_check_branch
      %185 = sbr.rel (%p183) target = $region24
    $region23: #{_lambda_.6} parent=5 // pred_region
      // Predicated region
      $region25: #{_lambda_.6} parent=23 // pred_check
        %p186 = pneg %p31
      $region26: #{_lambda_.6} parent=23 // pred_check_branch
        %188 = sbr.rel (%p186) target = $region28
      $region27: #{_lambda_.6} parent=23 // pred_region
        %s189 = smul.u32 45, %s11
        %p190 = scmp.lt.s32.totalorder %s189, 134
        %s191 = scalar_select %p190, %s189, 134
        %s192 = smul.addr %s191, 4
        %s193 = scalar_lea.vmem %s0, %s192
        %s194 = smul.u32 45, %s11
      $region28: #{_lambda_.6} parent=23 // pred_fallthru
        _
      // Predicated region
      $region29: #{_lambda_.6} parent=23 // pred_check
        %p195 = pneg %p61
      $region30: #{_lambda_.6} parent=23 // pred_check_branch
        %197 = sbr.rel (%p195) target = $region32
      $region31: #{_lambda_.6} parent=23 // pred_region
        %s198 = sadd.s32 %s11, 1
        %s199 = smul.u32 %s198, 9
        %s200 = smul.u32 5, %s199
        %p201 = scmp.lt.s32.totalorder %s200, 134
        %s202 = scalar_select %p201, %s200, 134
        %s203 = smul.addr %s202, 4
        %s204 = scalar_lea.vmem %s1, %s203
        %s205 = sadd.s32 %s11, 1
        %s206 = smul.u32 %s205, 9
        %s207 = smul.u32 5, %s206
      $region32: #{_lambda_.6} parent=23 // pred_fallthru
        _
      // Predicated region
      $region33: #{_lambda_.6} parent=23 // pred_check
        %p208 = pneg %p129
      $region34: #{_lambda_.6} parent=23 // pred_check_branch
        %210 = sbr.rel (%p208) target = $region36
      $region35: #{_lambda_.6} parent=23 // pred_region
        %s211 = smul.u32 45, %s11
        %p212 = scmp.lt.s32.totalorder %s211, 89
        %s213 = scalar_select %p212, %s211, 89
        %s214 = smul.addr %s213, 4
        %s215 = scalar_lea.vmem %s4, %s214
        %s216 = smul.u32 45, %s11
      $region36: #{_lambda_.6} parent=23 // pred_fallthru
        _
    $region24: #{_lambda_.6} parent=5 // pred_fallthru
      _
    %p217 = scmp.le.s32.totalorder 1, %s11
    %p218 = scmp.lt.s32.totalorder %s11, 3
    %p219 = pnand %p217, %p218
    %p220 = pneg %p219
    // Predicated region
    $region37: #{_lambda_.6} parent=5 // pred_check
      _
    $region38: #{_lambda_.6} parent=5 // pred_check_branch
      %222 = sbr.rel (%p219) target = $region40
    $region39: #{_lambda_.6} parent=5 // pred_region
      %s223 = ssub.s32 %s11, 1
      %s224 = smul.u32 45, %s16
      %p225 = scmp.lt.s32.totalorder %s224, 134
      %s226 = scalar_select %p225, %s224, 134
      %s227 = smul.addr %s226, 4
      %s228 = scalar_lea.vmem %s0, %s227
      %p229 = pneg %p37
      %p230 = pneg %p34
      %s231 = sadd.s32 %s16, 1
      %s232 = smul.u32 %s231, 9
      %s233 = smul.u32 5, %s232
      %p234 = scmp.lt.s32.totalorder %s233, 134
      %s235 = scalar_select %p234, %s233, 134
      %s236 = smul.addr %s235, 4
      %s237 = scalar_lea.vmem %s1, %s236
      %p238 = pneg %p67
      %p239 = pneg %p64
      %p240 = pneg %p88
      %p241 = pneg %p85
      %p242 = pneg %p109
      %p243 = pneg %p106
      %s244 = smul.u32 45, %s16
      %p245 = scmp.lt.s32.totalorder %s244, 89
      %s246 = scalar_select %p245, %s244, 89
      %s247 = smul.addr %s246, 4
      %s248 = scalar_lea.vmem %s4, %s247
      %p249 = pneg %p135
      %p250 = pneg %p132
      %p251 = pneg %p161
      %p252 = pneg %p158
      %s253 = smul.u32 45, %s16
      %p254 = scmp.lt.s32.totalorder %s253, 89
      %s255 = scalar_select %p254, %s253, 89
      %s256 = smul.addr %s255, 4
      %s257 = scalar_lea.vmem %s5, %s256
      %s258 = smul.u32 45, %s16
      %p259 = scmp.lt.s32.totalorder %s258, 134
      %s260 = scalar_select %p259, %s258, 134
      %s261 = smul.addr %s260, 4
      %s262 = scalar_lea.vmem %s0, %s261
      %s263 = smul.u32 45, %s16
      %s264 = sadd.s32 %s16, 1
      %s265 = smul.u32 %s264, 9
      %s266 = smul.u32 5, %s265
      %p267 = scmp.lt.s32.totalorder %s266, 134
      %s268 = scalar_select %p267, %s266, 134
      %s269 = smul.addr %s268, 4
      %s270 = scalar_lea.vmem %s1, %s269
      %s271 = sadd.s32 %s16, 1
      %s272 = smul.u32 %s271, 9
      %s273 = smul.u32 5, %s272
      %s274 = smul.u32 45, %s16
      %p275 = scmp.lt.s32.totalorder %s274, 89
      %s276 = scalar_select %p275, %s274, 89
      %s277 = smul.addr %s276, 4
      %s278 = scalar_lea.vmem %s4, %s277
      %s279 = smul.u32 45, %s16
      %s280 = smul.u32 45, %s16
      %p281 = scmp.lt.s32.totalorder %s280, 89
      %s282 = scalar_select %p281, %s280, 89
      %s283 = smul.addr %s282, 4
      %s284 = scalar_lea.vmem %s5, %s283
      %s285 = smul.u32 45, %s16
      %v287 = vld [vmem:[%s262] sm:$0xf]
      %v288 = vld [vmem:[%s262 + $0x4] sm:$0xf]
      %v289 = vld [vmem:[%s262 + $0x8] sm:$0xf]
      %v290 = vld [vmem:[%s262 + $0xc] sm:$0xf]
      %v291 = vld [vmem:[%s262 + $0x10] sm:$0xf]
      %v292 = vld [vmem:[%s262 + $0x14] sm:$0xf]
      %v293 = vld [vmem:[%s262 + $0x18] sm:$0xf]
      %v294 = vld [vmem:[%s262 + $0x1c] sm:$0xf]
      %v295 = vld [vmem:[%s262 + $0x20] sm:$0xf]
      %v296 = vld [vmem:[%s262 + $0x24] sm:$0xf]
      %v297 = vld [vmem:[%s262 + $0x28] sm:$0xf]
      %v298 = vld [vmem:[%s262 + $0x2c] sm:$0xf]
      %v299 = vld [vmem:[%s262 + $0x30] sm:$0xf]
      %v300 = vld [vmem:[%s262 + $0x34] sm:$0xf]
      %v301 = vld [vmem:[%s262 + $0x38] sm:$0xf]
      %v302 = vld [vmem:[%s262 + $0x3c] sm:$0xf]
      %v303 = vld [vmem:[%s262 + $0x40] sm:$0xf]
      %v304 = vld [vmem:[%s262 + $0x44] sm:$0xf]
      %v305 = vld [vmem:[%s262 + $0x48] sm:$0xf]
      %v306 = vld [vmem:[%s262 + $0x4c] sm:$0xf]
      %v307 = vld [vmem:[%s262 + $0x50] sm:$0xf]
      %v308 = vld [vmem:[%s262 + $0x54] sm:$0xf]
      %v309 = vld [vmem:[%s262 + $0x58] sm:$0xf]
      %v310 = vld [vmem:[%s262 + $0x5c] sm:$0xf]
      %v311 = vld [vmem:[%s262 + $0x60] sm:$0xf]
      %v312 = vld [vmem:[%s262 + $0x64] sm:$0xf]
      %v313 = vld [vmem:[%s262 + $0x68] sm:$0xf]
      %v314 = vld [vmem:[%s262 + $0x6c] sm:$0xf]
      %v315 = vld [vmem:[%s262 + $0x70] sm:$0xf]
      %v316 = vld [vmem:[%s262 + $0x74] sm:$0xf]
      %v317 = vld [vmem:[%s262 + $0x78] sm:$0xf]
      %v318 = vld [vmem:[%s262 + $0x7c] sm:$0xf]
      %v319 = vld [vmem:[%s262 + $0x80] sm:$0xf]
      %v320 = vld [vmem:[%s262 + $0x84] sm:$0xf]
      %v321 = vld [vmem:[%s262 + $0x88] sm:$0xf]
      %v322 = vld [vmem:[%s262 + $0x8c] sm:$0xf]
      %v323 = vld [vmem:[%s262 + $0x90] sm:$0xf]
      %v324 = vld [vmem:[%s262 + $0x94] sm:$0xf]
      %v325 = vld [vmem:[%s262 + $0x98] sm:$0xf]
      %v326 = vld [vmem:[%s262 + $0x9c] sm:$0xf]
      %v327 = vld [vmem:[%s262 + $0xa0] sm:$0xf]
      %v328 = vld [vmem:[%s262 + $0xa4] sm:$0xf]
      %v329 = vld [vmem:[%s262 + $0xa8] sm:$0xf]
      %v330 = vld [vmem:[%s262 + $0xac] sm:$0xf]
      %v331 = vld [vmem:[%s262 + $0xb0] sm:$0xf]
      %v332 = vunpack.c.l.bf16 %v287
      %v333 = vunpack.c.l.bf16 %v288
      %v334 = vunpack.c.l.bf16 %v289
      %v335 = vunpack.c.l.bf16 %v290
      %v336 = vunpack.c.l.bf16 %v291
      %v337 = vunpack.c.l.bf16 %v292
      %v338 = vunpack.c.l.bf16 %v293
      %v339 = vunpack.c.l.bf16 %v294
      %v340 = vunpack.c.l.bf16 %v295
      %v341 = vunpack.c.l.bf16 %v296
      %v342 = vunpack.c.l.bf16 %v297
      %v343 = vunpack.c.l.bf16 %v298
      %v344 = vunpack.c.l.bf16 %v299
      %v345 = vunpack.c.l.bf16 %v300
      %v346 = vunpack.c.l.bf16 %v301
      %v347 = vunpack.c.l.bf16 %v302
      %v348 = vunpack.c.l.bf16 %v303
      %v349 = vunpack.c.l.bf16 %v304
      %v350 = vunpack.c.l.bf16 %v305
      %v351 = vunpack.c.l.bf16 %v306
      %v352 = vunpack.c.l.bf16 %v307
      %v353 = vunpack.c.l.bf16 %v308
      %v354 = vunpack.c.l.bf16 %v309
      %v355 = vunpack.c.l.bf16 %v310
      %v356 = vunpack.c.l.bf16 %v311
      %v357 = vunpack.c.l.bf16 %v312
      %v358 = vunpack.c.l.bf16 %v313
      %v359 = vunpack.c.l.bf16 %v314
      %v360 = vunpack.c.l.bf16 %v315
      %v361 = vunpack.c.l.bf16 %v316
      %v362 = vunpack.c.l.bf16 %v317
      %v363 = vunpack.c.l.bf16 %v318
      %v364 = vunpack.c.l.bf16 %v319
      %v365 = vunpack.c.l.bf16 %v320
      %v366 = vunpack.c.l.bf16 %v321
      %v367 = vunpack.c.l.bf16 %v322
      %v368 = vunpack.c.l.bf16 %v323
      %v369 = vunpack.c.l.bf16 %v324
      %v370 = vunpack.c.l.bf16 %v325
      %v371 = vunpack.c.l.bf16 %v326
      %v372 = vunpack.c.l.bf16 %v327
      %v373 = vunpack.c.l.bf16 %v328
      %v374 = vunpack.c.l.bf16 %v329
      %v375 = vunpack.c.l.bf16 %v330
      %v376 = vunpack.c.l.bf16 %v331
      %vm377 = vcmask 31744
      %378 = vst.msk [vmem:[#allocation2] sm:$0xff] %vm377, %v332
      %379 = vst.msk [vmem:[#allocation2 + $0x8] sm:$0xff] %vm377, %v333
      %380 = vst.msk [vmem:[#allocation2 + $0x10] sm:$0xff] %vm377, %v334
      %381 = vst.msk [vmem:[#allocation2 + $0x18] sm:$0xff] %vm377, %v335
      %382 = vst.msk [vmem:[#allocation2 + $0x20] sm:$0xff] %vm377, %v336
      %383 = vst.msk [vmem:[#allocation2 + $0x28] sm:$0xff] %vm377, %v337
      %384 = vst.msk [vmem:[#allocation2 + $0x30] sm:$0xff] %vm377, %v338
      %385 = vst.msk [vmem:[#allocation2 + $0x38] sm:$0xff] %vm377, %v339
      %386 = vst.msk [vmem:[#allocation2 + $0x40] sm:$0xff] %vm377, %v340
      %387 = vst.msk [vmem:[#allocation2 + $0x48] sm:$0xff] %vm377, %v341
      %388 = vst.msk [vmem:[#allocation2 + $0x50] sm:$0xff] %vm377, %v342
      %389 = vst.msk [vmem:[#allocation2 + $0x58] sm:$0xff] %vm377, %v343
      %390 = vst.msk [vmem:[#allocation2 + $0x60] sm:$0xff] %vm377, %v344
      %391 = vst.msk [vmem:[#allocation2 + $0x68] sm:$0xff] %vm377, %v345
      %392 = vst.msk [vmem:[#allocation2 + $0x70] sm:$0xff] %vm377, %v346
      %393 = vst.msk [vmem:[#allocation2 + $0x78] sm:$0xff] %vm377, %v347
      %394 = vst.msk [vmem:[#allocation2 + $0x80] sm:$0xff] %vm377, %v348
      %395 = vst.msk [vmem:[#allocation2 + $0x88] sm:$0xff] %vm377, %v349
      %396 = vst.msk [vmem:[#allocation2 + $0x90] sm:$0xff] %vm377, %v350
      %397 = vst.msk [vmem:[#allocation2 + $0x98] sm:$0xff] %vm377, %v351
      %398 = vst.msk [vmem:[#allocation2 + $0xa0] sm:$0xff] %vm377, %v352
      %399 = vst.msk [vmem:[#allocation2 + $0xa8] sm:$0xff] %vm377, %v353
      %400 = vst.msk [vmem:[#allocation2 + $0xb0] sm:$0xff] %vm377, %v354
      %401 = vst.msk [vmem:[#allocation2 + $0xb8] sm:$0xff] %vm377, %v355
      %402 = vst.msk [vmem:[#allocation2 + $0xc0] sm:$0xff] %vm377, %v356
      %403 = vst.msk [vmem:[#allocation2 + $0xc8] sm:$0xff] %vm377, %v357
      %404 = vst.msk [vmem:[#allocation2 + $0xd0] sm:$0xff] %vm377, %v358
      %405 = vst.msk [vmem:[#allocation2 + $0xd8] sm:$0xff] %vm377, %v359
      %406 = vst.msk [vmem:[#allocation2 + $0xe0] sm:$0xff] %vm377, %v360
      %407 = vst.msk [vmem:[#allocation2 + $0xe8] sm:$0xff] %vm377, %v361
      %408 = vst.msk [vmem:[#allocation2 + $0xf0] sm:$0xff] %vm377, %v362
      %409 = vst.msk [vmem:[#allocation2 + $0xf8] sm:$0xff] %vm377, %v363
      %410 = vst.msk [vmem:[#allocation2 + $0x100] sm:$0xff] %vm377, %v364
      %411 = vst.msk [vmem:[#allocation2 + $0x108] sm:$0xff] %vm377, %v365
      %412 = vst.msk [vmem:[#allocation2 + $0x110] sm:$0xff] %vm377, %v366
      %413 = vst.msk [vmem:[#allocation2 + $0x118] sm:$0xff] %vm377, %v367
      %414 = vst.msk [vmem:[#allocation2 + $0x120] sm:$0xff] %vm377, %v368
      %415 = vst.msk [vmem:[#allocation2 + $0x128] sm:$0xff] %vm377, %v369
      %416 = vst.msk [vmem:[#allocation2 + $0x130] sm:$0xff] %vm377, %v370
      %417 = vst.msk [vmem:[#allocation2 + $0x138] sm:$0xff] %vm377, %v371
      %418 = vst.msk [vmem:[#allocation2 + $0x140] sm:$0xff] %vm377, %v372
      %419 = vst.msk [vmem:[#allocation2 + $0x148] sm:$0xff] %vm377, %v373
      %420 = vst.msk [vmem:[#allocation2 + $0x150] sm:$0xff] %vm377, %v374
      %421 = vst.msk [vmem:[#allocation2 + $0x158] sm:$0xff] %vm377, %v375
      %422 = vst.msk [vmem:[#allocation2 + $0x160] sm:$0xff] %vm377, %v376
      %v423 = vld [vmem:[%s270] sm:$0xf]
      %v424 = vld [vmem:[%s270 + $0x4] sm:$0xf]
      %v425 = vld [vmem:[%s270 + $0x8] sm:$0xf]
      %v426 = vld [vmem:[%s270 + $0xc] sm:$0xf]
      %v427 = vld [vmem:[%s270 + $0x10] sm:$0xf]
      %v428 = vunpack.c.l.bf16 %v423
      %v429 = vunpack.c.l.bf16 %v424
      %v430 = vunpack.c.l.bf16 %v425
      %v431 = vunpack.c.l.bf16 %v426
      %v432 = vunpack.c.l.bf16 %v427
      %433 = vst.msk [vmem:[#allocation2 + $0x168] sm:$0xff] %vm377, %v428
      %434 = vst.msk [vmem:[#allocation2 + $0x170] sm:$0xff] %vm377, %v429
      %435 = vst.msk [vmem:[#allocation2 + $0x178] sm:$0xff] %vm377, %v430
      %436 = vst.msk [vmem:[#allocation2 + $0x180] sm:$0xff] %vm377, %v431
      %437 = vst.msk [vmem:[#allocation2 + $0x188] sm:$0xff] %vm377, %v432
      %v438 = vld [vmem:[#allocation2] sm:$0xff]
      %v439 = vld [vmem:[#allocation2 + $0x8] sm:$0xff]
      %v440 = vld [vmem:[#allocation2 + $0x10] sm:$0xff]
      %v441 = vld [vmem:[#allocation2 + $0x18] sm:$0xff]
      %v442 = vld [vmem:[#allocation2 + $0x20] sm:$0xff]
      %v443 = vld [vmem:[#allocation2 + $0x28] sm:$0xff]
      %v444 = vld [vmem:[#allocation2 + $0x30] sm:$0xff]
      %v445 = vld [vmem:[#allocation2 + $0x38] sm:$0xff]
      %v446 = vld [vmem:[#allocation2 + $0x40] sm:$0xff]
      %v447 = vld [vmem:[#allocation2 + $0x48] sm:$0xff]
      %v448 = vld [vmem:[#allocation2 + $0x50] sm:$0xff]
      %v449 = vld [vmem:[#allocation2 + $0x58] sm:$0xff]
      %v450 = vld [vmem:[#allocation2 + $0x60] sm:$0xff]
      %v451 = vld [vmem:[#allocation2 + $0x68] sm:$0xff]
      %v452 = vld [vmem:[#allocation2 + $0x70] sm:$0xff]
      %v453 = vld [vmem:[#allocation2 + $0x78] sm:$0xff]
      %v454 = vld [vmem:[#allocation2 + $0x80] sm:$0xff]
      %v455 = vld [vmem:[#allocation2 + $0x88] sm:$0xff]
      %v456 = vld [vmem:[#allocation2 + $0x90] sm:$0xff]
      %v457 = vld [vmem:[#allocation2 + $0x98] sm:$0xff]
      %v458 = vld [vmem:[#allocation2 + $0xa0] sm:$0xff]
      %v459 = vld [vmem:[#allocation2 + $0xa8] sm:$0xff]
      %v460 = vld [vmem:[#allocation2 + $0xb0] sm:$0xff]
      %v461 = vld [vmem:[#allocation2 + $0xb8] sm:$0xff]
      %v462 = vld [vmem:[#allocation2 + $0xc0] sm:$0xff]
      %v463 = vld [vmem:[#allocation2 + $0xc8] sm:$0xff]
      %v464 = vld [vmem:[#allocation2 + $0xd0] sm:$0xff]
      %v465 = vld [vmem:[#allocation2 + $0xd8] sm:$0xff]
      %v466 = vld [vmem:[#allocation2 + $0xe0] sm:$0xff]
      %v467 = vld [vmem:[#allocation2 + $0xe8] sm:$0xff]
      %v468 = vld [vmem:[#allocation2 + $0xf0] sm:$0xff]
      %v469 = vld [vmem:[#allocation2 + $0xf8] sm:$0xff]
      %v470 = vld [vmem:[#allocation2 + $0x100] sm:$0xff]
      %v471 = vld [vmem:[#allocation2 + $0x108] sm:$0xff]
      %v472 = vld [vmem:[#allocation2 + $0x110] sm:$0xff]
      %v473 = vld [vmem:[#allocation2 + $0x118] sm:$0xff]
      %v474 = vld [vmem:[#allocation2 + $0x120] sm:$0xff]
      %v475 = vld [vmem:[#allocation2 + $0x128] sm:$0xff]
      %v476 = vld [vmem:[#allocation2 + $0x130] sm:$0xff]
      %v477 = vld [vmem:[#allocation2 + $0x138] sm:$0xff]
      %v478 = vld [vmem:[#allocation2 + $0x140] sm:$0xff]
      %v479 = vld [vmem:[#allocation2 + $0x148] sm:$0xff]
      %v480 = vld [vmem:[#allocation2 + $0x150] sm:$0xff]
      %v481 = vld [vmem:[#allocation2 + $0x158] sm:$0xff]
      %v482 = vld [vmem:[#allocation2 + $0x160] sm:$0xff]
      %v483 = vpack.c.bf16 %v439, %v438
      %v484 = vpack.c.bf16 %v441, %v440
      %v485 = vpack.c.bf16 %v443, %v442
      %v486 = vpack.c.bf16 %v445, %v444
      %v487 = vpack.c.bf16 %v447, %v446
      %v488 = vpack.c.bf16 %v449, %v448
      %v489 = vpack.c.bf16 %v451, %v450
      %v490 = vpack.c.bf16 %v453, %v452
      %v491 = vpack.c.bf16 %v455, %v454
      %v492 = vpack.c.bf16 %v457, %v456
      %v493 = vpack.c.bf16 %v459, %v458
      %v494 = vpack.c.bf16 %v461, %v460
      %v495 = vpack.c.bf16 %v463, %v462
      %v496 = vpack.c.bf16 %v465, %v464
      %v497 = vpack.c.bf16 %v467, %v466
      %v498 = vpack.c.bf16 %v469, %v468
      %v499 = vpack.c.bf16 %v471, %v470
      %v500 = vpack.c.bf16 %v473, %v472
      %v501 = vpack.c.bf16 %v475, %v474
      %v502 = vpack.c.bf16 %v477, %v476
      %v503 = vpack.c.bf16 %v479, %v478
      %v504 = vpack.c.bf16 %v481, %v480
      %v505 = vpack.c.bf16 %v482, %v482
      %v506 = vld [vmem:[%s2] sm:$0x3]
      %v507 = vld [vmem:[#allocation2 + $0x1] sm:$0xff]
      %v508 = vld [vmem:[#allocation2 + $0x9] sm:$0xff]
      %v509 = vld [vmem:[#allocation2 + $0x11] sm:$0xff]
      %v510 = vld [vmem:[#allocation2 + $0x19] sm:$0xff]
      %v511 = vld [vmem:[#allocation2 + $0x21] sm:$0xff]
      %v512 = vld [vmem:[#allocation2 + $0x29] sm:$0xff]
      %v513 = vld [vmem:[#allocation2 + $0x31] sm:$0xff]
      %v514 = vld [vmem:[#allocation2 + $0x39] sm:$0xff]
      %v515 = vld [vmem:[#allocation2 + $0x41] sm:$0xff]
      %v516 = vld [vmem:[#allocation2 + $0x49] sm:$0xff]
      %v517 = vld [vmem:[#allocation2 + $0x51] sm:$0xff]
      %v518 = vld [vmem:[#allocation2 + $0x59] sm:$0xff]
      %v519 = vld [vmem:[#allocation2 + $0x61] sm:$0xff]
      %v520 = vld [vmem:[#allocation2 + $0x69] sm:$0xff]
      %v521 = vld [vmem:[#allocation2 + $0x71] sm:$0xff]
      %v522 = vld [vmem:[#allocation2 + $0x79] sm:$0xff]
      %v523 = vld [vmem:[#allocation2 + $0x81] sm:$0xff]
      %v524 = vld [vmem:[#allocation2 + $0x89] sm:$0xff]
      %v525 = vld [vmem:[#allocation2 + $0x91] sm:$0xff]
      %v526 = vld [vmem:[#allocation2 + $0x99] sm:$0xff]
      %v527 = vld [vmem:[#allocation2 + $0xa1] sm:$0xff]
      %v528 = vld [vmem:[#allocation2 + $0xa9] sm:$0xff]
      %v529 = vld [vmem:[#allocation2 + $0xb1] sm:$0xff]
      %v530 = vld [vmem:[#allocation2 + $0xb9] sm:$0xff]
      %v531 = vld [vmem:[#allocation2 + $0xc1] sm:$0xff]
      %v532 = vld [vmem:[#allocation2 + $0xc9] sm:$0xff]
      %v533 = vld [vmem:[#allocation2 + $0xd1] sm:$0xff]
      %v534 = vld [vmem:[#allocation2 + $0xd9] sm:$0xff]
      %v535 = vld [vmem:[#allocation2 + $0xe1] sm:$0xff]
      %v536 = vld [vmem:[#allocation2 + $0xe9] sm:$0xff]
      %v537 = vld [vmem:[#allocation2 + $0xf1] sm:$0xff]
      %v538 = vld [vmem:[#allocation2 + $0xf9] sm:$0xff]
      %v539 = vld [vmem:[#allocation2 + $0x101] sm:$0xff]
      %v540 = vld [vmem:[#allocation2 + $0x109] sm:$0xff]
      %v541 = vld [vmem:[#allocation2 + $0x111] sm:$0xff]
      %v542 = vld [vmem:[#allocation2 + $0x119] sm:$0xff]
      %v543 = vld [vmem:[#allocation2 + $0x121] sm:$0xff]
      %v544 = vld [vmem:[#allocation2 + $0x129] sm:$0xff]
      %v545 = vld [vmem:[#allocation2 + $0x131] sm:$0xff]
      %v546 = vld [vmem:[#allocation2 + $0x139] sm:$0xff]
      %v547 = vld [vmem:[#allocation2 + $0x141] sm:$0xff]
      %v548 = vld [vmem:[#allocation2 + $0x149] sm:$0xff]
      %v549 = vld [vmem:[#allocation2 + $0x151] sm:$0xff]
      %v550 = vld [vmem:[#allocation2 + $0x159] sm:$0xff]
      %v551 = vld [vmem:[#allocation2 + $0x161] sm:$0xff]
      %v552 = vpack.c.bf16 %v508, %v507
      %v553 = vpack.c.bf16 %v510, %v509
      %v554 = vpack.c.bf16 %v512, %v511
      %v555 = vpack.c.bf16 %v514, %v513
      %v556 = vpack.c.bf16 %v516, %v515
      %v557 = vpack.c.bf16 %v518, %v517
      %v558 = vpack.c.bf16 %v520, %v519
      %v559 = vpack.c.bf16 %v522, %v521
      %v560 = vpack.c.bf16 %v524, %v523
      %v561 = vpack.c.bf16 %v526, %v525
      %v562 = vpack.c.bf16 %v528, %v527
      %v563 = vpack.c.bf16 %v530, %v529
      %v564 = vpack.c.bf16 %v532, %v531
      %v565 = vpack.c.bf16 %v534, %v533
      %v566 = vpack.c.bf16 %v536, %v535
      %v567 = vpack.c.bf16 %v538, %v537
      %v568 = vpack.c.bf16 %v540, %v539
      %v569 = vpack.c.bf16 %v542, %v541
      %v570 = vpack.c.bf16 %v544, %v543
      %v571 = vpack.c.bf16 %v546, %v545
      %v572 = vpack.c.bf16 %v548, %v547
      %v573 = vpack.c.bf16 %v550, %v549
      %v574 = vpack.c.bf16 %v551, %v551
      %s575 = scalar_lea.vmem %s2, 2
      %v576 = vld [vmem:[%s575] sm:$0x3]
      %v578 = vsel %vm377, %v552, 0
      %v581 = vsel %vm377, %v553, 0
      %v584 = vsel %vm377, %v554, 0
      %v587 = vsel %vm377, %v555, 0
      %v590 = vsel %vm377, %v556, 0
      %v593 = vsel %vm377, %v557, 0
      %v596 = vsel %vm377, %v558, 0
      %v599 = vsel %vm377, %v559, 0
      %v602 = vsel %vm377, %v560, 0
      %v605 = vsel %vm377, %v561, 0
      %v608 = vsel %vm377, %v562, 0
      %v611 = vsel %vm377, %v563, 0
      %v614 = vsel %vm377, %v564, 0
      %v617 = vsel %vm377, %v565, 0
      %v620 = vsel %vm377, %v566, 0
      %v623 = vsel %vm377, %v567, 0
      %v626 = vsel %vm377, %v568, 0
      %v629 = vsel %vm377, %v569, 0
      %v632 = vsel %vm377, %v570, 0
      %v635 = vsel %vm377, %v571, 0
      %v638 = vsel %vm377, %v572, 0
      %v641 = vsel %vm377, %v573, 0
      %v644 = vsel %vm377, %v574, 0
      %vm646 = vcmask 1041408
      %v648 = vsel %vm646, %v576, 0
      %650 = vmatprep.subr.bf16.mxu0 0
      %651 = vmatpush1.bf16.msra.mxu0 0
      %652 = vmatprep.subr.bf16.mxu0 0
      %653 = vmatpush1.bf16.msra.mxu0 0
      %654 = vmatprep.subr.bf16.mxu0 0
      %655 = vmatpush1.bf16.msra.mxu0 0
      %656 = vmatprep.subr.bf16.mxu0 0
      %657 = vmatpush1.bf16.msra.mxu0 0
      %658 = vmatprep.subr.bf16.mxu0 0
      %659 = vmatpush1.bf16.msra.mxu0 0
      %660 = vmatprep.subr.bf16.mxu0 0
      %661 = vmatpush1.bf16.msra.mxu0 0
      %662 = vmatprep.subr.bf16.mxu0 0
      %663 = vmatpush1.bf16.msra.mxu0 0
      %664 = vmatprep.subr.bf16.mxu0 0
      %665 = vmatpush1.bf16.msra.mxu0 %v648
      %666 = vmatprep.subr.bf16.mxu0 0
      %667 = vmatpush2.bf16.msra.mxu0 0
      %668 = vmatprep.subr.bf16.mxu0 0
      %669 = vmatpush2.bf16.msra.mxu0 0
      %670 = vmatprep.subr.bf16.mxu0 0
      %671 = vmatpush2.bf16.msra.mxu0 0
      %672 = vmatprep.subr.bf16.mxu0 0
      %673 = vmatpush2.bf16.msra.mxu0 0
      %674 = vmatprep.subr.bf16.mxu0 0
      %675 = vmatpush2.bf16.msra.mxu0 0
      %676 = vmatprep.subr.bf16.mxu0 0
      %677 = vmatpush2.bf16.msra.mxu0 0
      %678 = vmatprep.subr.bf16.mxu0 0
      %679 = vmatpush2.bf16.msra.mxu0 0
      %680 = vmatprep.subr.bf16.mxu0 0
      %681 = vmatpush2.bf16.msra.mxu0 0
      %682 = vmatprep.mubr.bf16.mxu0 0
      %683 = vmatmul.mubr.bf16.gmra.mxu0 %v578
      %v684 = vpop.f32.mrf.mxu0
      %v685 = vadd.f32 0.0, %v684
      %v686 = vpop.f32.mrf.mxu0
      %v687 = vpop.f32.mrf.mxu0
      %v688 = vadd.f32 0.0, %v687
      %v689 = vpop.f32.mrf.mxu0
      %690 = vmatprep.mubr.bf16.mxu0 0
      %691 = vmatmul.mubr.bf16.gmra.mxu0 %v581
      %v692 = vpop.f32.mrf.mxu0
      %v693 = vadd.f32 0.0, %v692
      %v694 = vpop.f32.mrf.mxu0
      %v695 = vpop.f32.mrf.mxu0
      %v696 = vadd.f32 0.0, %v695
      %v697 = vpop.f32.mrf.mxu0
      %698 = vmatprep.mubr.bf16.mxu0 0
      %699 = vmatmul.mubr.bf16.gmra.mxu0 %v584
      %v700 = vpop.f32.mrf.mxu0
      %v701 = vadd.f32 0.0, %v700
      %v702 = vpop.f32.mrf.mxu0
      %v703 = vpop.f32.mrf.mxu0
      %v704 = vadd.f32 0.0, %v703
      %v705 = vpop.f32.mrf.mxu0
      %706 = vmatprep.mubr.bf16.mxu0 0
      %707 = vmatmul.mubr.bf16.gmra.mxu0 %v587
      %v708 = vpop.f32.mrf.mxu0
      %v709 = vadd.f32 0.0, %v708
      %v710 = vpop.f32.mrf.mxu0
      %v711 = vpop.f32.mrf.mxu0
      %v712 = vadd.f32 0.0, %v711
      %v713 = vpop.f32.mrf.mxu0
      %714 = vmatprep.mubr.bf16.mxu0 0
      %715 = vmatmul.mubr.bf16.gmra.mxu0 %v590
      %v716 = vpop.f32.mrf.mxu0
      %v717 = vadd.f32 0.0, %v716
      %v718 = vpop.f32.mrf.mxu0
      %v719 = vpop.f32.mrf.mxu0
      %v720 = vadd.f32 0.0, %v719
      %v721 = vpop.f32.mrf.mxu0
      %722 = vmatprep.mubr.bf16.mxu0 0
      %723 = vmatmul.mubr.bf16.gmra.mxu0 %v593
      %v724 = vpop.f32.mrf.mxu0
      %v725 = vadd.f32 0.0, %v724
      %v726 = vpop.f32.mrf.mxu0
      %v727 = vpop.f32.mrf.mxu0
      %v728 = vadd.f32 0.0, %v727
      %v729 = vpop.f32.mrf.mxu0
      %730 = vmatprep.mubr.bf16.mxu0 0
      %731 = vmatmul.mubr.bf16.gmra.mxu0 %v596
      %v732 = vpop.f32.mrf.mxu0
      %v733 = vadd.f32 0.0, %v732
      %v734 = vpop.f32.mrf.mxu0
      %v735 = vpop.f32.mrf.mxu0
      %v736 = vadd.f32 0.0, %v735
      %v737 = vpop.f32.mrf.mxu0
      %738 = vmatprep.mubr.bf16.mxu0 0
      %739 = vmatmul.mubr.bf16.gmra.mxu0 %v599
      %v740 = vpop.f32.mrf.mxu0
      %v741 = vadd.f32 0.0, %v740
      %v742 = vpop.f32.mrf.mxu0
      %v743 = vpop.f32.mrf.mxu0
      %v744 = vadd.f32 0.0, %v743
      %v745 = vpop.f32.mrf.mxu0
      %746 = vmatprep.mubr.bf16.mxu0 0
      %747 = vmatmul.mubr.bf16.gmra.mxu0 %v602
      %v748 = vpop.f32.mrf.mxu0
      %v749 = vadd.f32 0.0, %v748
      %v750 = vpop.f32.mrf.mxu0
      %v751 = vpop.f32.mrf.mxu0
      %v752 = vadd.f32 0.0, %v751
      %v753 = vpop.f32.mrf.mxu0
      %754 = vmatprep.mubr.bf16.mxu0 0
      %755 = vmatmul.mubr.bf16.gmra.mxu0 %v605
      %v756 = vpop.f32.mrf.mxu0
      %v757 = vadd.f32 0.0, %v756
      %v758 = vpop.f32.mrf.mxu0
      %v759 = vpop.f32.mrf.mxu0
      %v760 = vadd.f32 0.0, %v759
      %v761 = vpop.f32.mrf.mxu0
      %762 = vmatprep.mubr.bf16.mxu0 0
      %763 = vmatmul.mubr.bf16.gmra.mxu0 %v608
      %v764 = vpop.f32.mrf.mxu0
      %v765 = vadd.f32 0.0, %v764
      %v766 = vpop.f32.mrf.mxu0
      %v767 = vpop.f32.mrf.mxu0
      %v768 = vadd.f32 0.0, %v767
      %v769 = vpop.f32.mrf.mxu0
      %770 = vmatprep.mubr.bf16.mxu0 0
      %771 = vmatmul.mubr.bf16.gmra.mxu0 %v611
      %v772 = vpop.f32.mrf.mxu0
      %v773 = vadd.f32 0.0, %v772
      %v774 = vpop.f32.mrf.mxu0
      %v775 = vpop.f32.mrf.mxu0
      %v776 = vadd.f32 0.0, %v775
      %v777 = vpop.f32.mrf.mxu0
      %778 = vmatprep.mubr.bf16.mxu0 0
      %779 = vmatmul.mubr.bf16.gmra.mxu0 %v614
      %v780 = vpop.f32.mrf.mxu0
      %v781 = vadd.f32 0.0, %v780
      %v782 = vpop.f32.mrf.mxu0
      %v783 = vpop.f32.mrf.mxu0
      %v784 = vadd.f32 0.0, %v783
      %v785 = vpop.f32.mrf.mxu0
      %786 = vmatprep.mubr.bf16.mxu0 0
      %787 = vmatmul.mubr.bf16.gmra.mxu0 %v617
      %v788 = vpop.f32.mrf.mxu0
      %v789 = vadd.f32 0.0, %v788
      %v790 = vpop.f32.mrf.mxu0
      %v791 = vpop.f32.mrf.mxu0
      %v792 = vadd.f32 0.0, %v791
      %v793 = vpop.f32.mrf.mxu0
      %794 = vmatprep.mubr.bf16.mxu0 0
      %795 = vmatmul.mubr.bf16.gmra.mxu0 %v620
      %v796 = vpop.f32.mrf.mxu0
      %v797 = vadd.f32 0.0, %v796
      %v798 = vpop.f32.mrf.mxu0
      %v799 = vpop.f32.mrf.mxu0
      %v800 = vadd.f32 0.0, %v799
      %v801 = vpop.f32.mrf.mxu0
      %802 = vmatprep.mubr.bf16.mxu0 0
      %803 = vmatmul.mubr.bf16.gmra.mxu0 %v623
      %v804 = vpop.f32.mrf.mxu0
      %v805 = vadd.f32 0.0, %v804
      %v806 = vpop.f32.mrf.mxu0
      %v807 = vpop.f32.mrf.mxu0
      %v808 = vadd.f32 0.0, %v807
      %v809 = vpop.f32.mrf.mxu0
      %810 = vmatprep.mubr.bf16.mxu0 0
      %811 = vmatmul.mubr.bf16.gmra.mxu0 %v626
      %v812 = vpop.f32.mrf.mxu0
      %v813 = vadd.f32 0.0, %v812
      %v814 = vpop.f32.mrf.mxu0
      %v815 = vpop.f32.mrf.mxu0
      %v816 = vadd.f32 0.0, %v815
      %v817 = vpop.f32.mrf.mxu0
      %818 = vmatprep.mubr.bf16.mxu0 0
      %819 = vmatmul.mubr.bf16.gmra.mxu0 %v629
      %v820 = vpop.f32.mrf.mxu0
      %v821 = vadd.f32 0.0, %v820
      %v822 = vpop.f32.mrf.mxu0
      %v823 = vpop.f32.mrf.mxu0
      %v824 = vadd.f32 0.0, %v823
      %v825 = vpop.f32.mrf.mxu0
      %826 = vmatprep.mubr.bf16.mxu0 0
      %827 = vmatmul.mubr.bf16.gmra.mxu0 %v632
      %v828 = vpop.f32.mrf.mxu0
      %v829 = vadd.f32 0.0, %v828
      %v830 = vpop.f32.mrf.mxu0
      %v831 = vpop.f32.mrf.mxu0
      %v832 = vadd.f32 0.0, %v831
      %v833 = vpop.f32.mrf.mxu0
      %834 = vmatprep.mubr.bf16.mxu0 0
      %835 = vmatmul.mubr.bf16.gmra.mxu0 %v635
      %v836 = vpop.f32.mrf.mxu0
      %v837 = vadd.f32 0.0, %v836
      %v838 = vpop.f32.mrf.mxu0
      %v839 = vpop.f32.mrf.mxu0
      %v840 = vadd.f32 0.0, %v839
      %v841 = vpop.f32.mrf.mxu0
      %842 = vmatprep.mubr.bf16.mxu0 0
      %843 = vmatmul.mubr.bf16.gmra.mxu0 %v638
      %v844 = vpop.f32.mrf.mxu0
      %v845 = vadd.f32 0.0, %v844
      %v846 = vpop.f32.mrf.mxu0
      %v847 = vpop.f32.mrf.mxu0
      %v848 = vadd.f32 0.0, %v847
      %v849 = vpop.f32.mrf.mxu0
      %850 = vmatprep.mubr.bf16.mxu0 0
      %851 = vmatmul.mubr.bf16.gmra.mxu0 %v641
      %v852 = vpop.f32.mrf.mxu0
      %v853 = vadd.f32 0.0, %v852
      %v854 = vpop.f32.mrf.mxu0
      %v855 = vpop.f32.mrf.mxu0
      %v856 = vadd.f32 0.0, %v855
      %v857 = vpop.f32.mrf.mxu0
      %858 = vmatprep.mubr.bf16.mxu0 0
      %859 = vmatmul.mubr.bf16.gmra.mxu0 %v644
      %v860 = vpop.f32.mrf.mxu0
      %v861 = vadd.f32 0.0, %v860
      %v862 = vpop.f32.mrf.mxu0
      %v863 = vpop.f32.mrf.mxu0
      %v864 = vpop.f32.mrf.mxu0
      %865 = vdwg.mxu0
      %v867 = vsel %vm377, %v483, 0
      %v870 = vsel %vm377, %v484, 0
      %v873 = vsel %vm377, %v485, 0
      %v876 = vsel %vm377, %v486, 0
      %v879 = vsel %vm377, %v487, 0
      %v882 = vsel %vm377, %v488, 0
      %v885 = vsel %vm377, %v489, 0
      %v888 = vsel %vm377, %v490, 0
      %v891 = vsel %vm377, %v491, 0
      %v894 = vsel %vm377, %v492, 0
      %v897 = vsel %vm377, %v493, 0
      %v900 = vsel %vm377, %v494, 0
      %v903 = vsel %vm377, %v495, 0
      %v906 = vsel %vm377, %v496, 0
      %v909 = vsel %vm377, %v497, 0
      %v912 = vsel %vm377, %v498, 0
      %v915 = vsel %vm377, %v499, 0
      %v918 = vsel %vm377, %v500, 0
      %v921 = vsel %vm377, %v501, 0
      %v924 = vsel %vm377, %v502, 0
      %v927 = vsel %vm377, %v503, 0
      %v930 = vsel %vm377, %v504, 0
      %v933 = vsel %vm377, %v505, 0
      %v936 = vsel %vm646, %v506, 0
      %938 = vmatprep.subr.bf16.mxu0 0
      %939 = vmatpush1.bf16.msra.mxu0 0
      %940 = vmatprep.subr.bf16.mxu0 0
      %941 = vmatpush1.bf16.msra.mxu0 0
      %942 = vmatprep.subr.bf16.mxu0 0
      %943 = vmatpush1.bf16.msra.mxu0 0
      %944 = vmatprep.subr.bf16.mxu0 0
      %945 = vmatpush1.bf16.msra.mxu0 0
      %946 = vmatprep.subr.bf16.mxu0 0
      %947 = vmatpush1.bf16.msra.mxu0 0
      %948 = vmatprep.subr.bf16.mxu0 0
      %949 = vmatpush1.bf16.msra.mxu0 0
      %950 = vmatprep.subr.bf16.mxu0 0
      %951 = vmatpush1.bf16.msra.mxu0 0
      %952 = vmatprep.subr.bf16.mxu0 0
      %953 = vmatpush1.bf16.msra.mxu0 %v936
      %954 = vmatprep.subr.bf16.mxu0 0
      %955 = vmatpush2.bf16.msra.mxu0 0
      %956 = vmatprep.subr.bf16.mxu0 0
      %957 = vmatpush2.bf16.msra.mxu0 0
      %958 = vmatprep.subr.bf16.mxu0 0
      %959 = vmatpush2.bf16.msra.mxu0 0
      %960 = vmatprep.subr.bf16.mxu0 0
      %961 = vmatpush2.bf16.msra.mxu0 0
      %962 = vmatprep.subr.bf16.mxu0 0
      %963 = vmatpush2.bf16.msra.mxu0 0
      %964 = vmatprep.subr.bf16.mxu0 0
      %965 = vmatpush2.bf16.msra.mxu0 0
      %966 = vmatprep.subr.bf16.mxu0 0
      %967 = vmatpush2.bf16.msra.mxu0 0
      %968 = vmatprep.subr.bf16.mxu0 0
      %969 = vmatpush2.bf16.msra.mxu0 0
      %970 = vmatprep.mubr.bf16.mxu0 0
      %971 = vmatmul.mubr.bf16.gmra.mxu0 %v867
      %v972 = vpop.f32.mrf.mxu0
      %v973 = vadd.f32 %v685, %v972
      %v974 = vpop.f32.mrf.mxu0
      %v975 = vpop.f32.mrf.mxu0
      %v976 = vadd.f32 %v688, %v975
      %v977 = vpop.f32.mrf.mxu0
      %978 = vmatprep.mubr.bf16.mxu0 0
      %979 = vmatmul.mubr.bf16.gmra.mxu0 %v870
      %v980 = vpop.f32.mrf.mxu0
      %v981 = vadd.f32 %v693, %v980
      %v982 = vpop.f32.mrf.mxu0
      %v983 = vpop.f32.mrf.mxu0
      %v984 = vadd.f32 %v696, %v983
      %v985 = vpop.f32.mrf.mxu0
      %986 = vmatprep.mubr.bf16.mxu0 0
      %987 = vmatmul.mubr.bf16.gmra.mxu0 %v873
      %v988 = vpop.f32.mrf.mxu0
      %v989 = vadd.f32 %v701, %v988
      %v990 = vpop.f32.mrf.mxu0
      %v991 = vpop.f32.mrf.mxu0
      %v992 = vadd.f32 %v704, %v991
      %v993 = vpop.f32.mrf.mxu0
      %994 = vmatprep.mubr.bf16.mxu0 0
      %995 = vmatmul.mubr.bf16.gmra.mxu0 %v876
      %v996 = vpop.f32.mrf.mxu0
      %v997 = vadd.f32 %v709, %v996
      %v998 = vpop.f32.mrf.mxu0
      %v999 = vpop.f32.mrf.mxu0
      %v1000 = vadd.f32 %v712, %v999
      %v1001 = vpop.f32.mrf.mxu0
      %1002 = vmatprep.mubr.bf16.mxu0 0
      %1003 = vmatmul.mubr.bf16.gmra.mxu0 %v879
      %v1004 = vpop.f32.mrf.mxu0
      %v1005 = vadd.f32 %v717, %v1004
      %v1006 = vpop.f32.mrf.mxu0
      %v1007 = vpop.f32.mrf.mxu0
      %v1008 = vadd.f32 %v720, %v1007
      %v1009 = vpop.f32.mrf.mxu0
      %1010 = vmatprep.mubr.bf16.mxu0 0
      %1011 = vmatmul.mubr.bf16.gmra.mxu0 %v882
      %v1012 = vpop.f32.mrf.mxu0
      %v1013 = vadd.f32 %v725, %v1012
      %v1014 = vpop.f32.mrf.mxu0
      %v1015 = vpop.f32.mrf.mxu0
      %v1016 = vadd.f32 %v728, %v1015
      %v1017 = vpop.f32.mrf.mxu0
      %1018 = vmatprep.mubr.bf16.mxu0 0
      %1019 = vmatmul.mubr.bf16.gmra.mxu0 %v885
      %v1020 = vpop.f32.mrf.mxu0
      %v1021 = vadd.f32 %v733, %v1020
      %v1022 = vpop.f32.mrf.mxu0
      %v1023 = vpop.f32.mrf.mxu0
      %v1024 = vadd.f32 %v736, %v1023
      %v1025 = vpop.f32.mrf.mxu0
      %1026 = vmatprep.mubr.bf16.mxu0 0
      %1027 = vmatmul.mubr.bf16.gmra.mxu0 %v888
      %v1028 = vpop.f32.mrf.mxu0
      %v1029 = vadd.f32 %v741, %v1028
      %v1030 = vpop.f32.mrf.mxu0
      %v1031 = vpop.f32.mrf.mxu0
      %v1032 = vadd.f32 %v744, %v1031
      %v1033 = vpop.f32.mrf.mxu0
      %1034 = vmatprep.mubr.bf16.mxu0 0
      %1035 = vmatmul.mubr.bf16.gmra.mxu0 %v891
      %v1036 = vpop.f32.mrf.mxu0
      %v1037 = vadd.f32 %v749, %v1036
      %v1038 = vpop.f32.mrf.mxu0
      %v1039 = vpop.f32.mrf.mxu0
      %v1040 = vadd.f32 %v752, %v1039
      %v1041 = vpop.f32.mrf.mxu0
      %1042 = vmatprep.mubr.bf16.mxu0 0
      %1043 = vmatmul.mubr.bf16.gmra.mxu0 %v894
      %v1044 = vpop.f32.mrf.mxu0
      %v1045 = vadd.f32 %v757, %v1044
      %v1046 = vpop.f32.mrf.mxu0
      %v1047 = vpop.f32.mrf.mxu0
      %v1048 = vadd.f32 %v760, %v1047
      %v1049 = vpop.f32.mrf.mxu0
      %1050 = vmatprep.mubr.bf16.mxu0 0
      %1051 = vmatmul.mubr.bf16.gmra.mxu0 %v897
      %v1052 = vpop.f32.mrf.mxu0
      %v1053 = vadd.f32 %v765, %v1052
      %v1054 = vpop.f32.mrf.mxu0
      %v1055 = vpop.f32.mrf.mxu0
      %v1056 = vadd.f32 %v768, %v1055
      %v1057 = vpop.f32.mrf.mxu0
      %1058 = vmatprep.mubr.bf16.mxu0 0
      %1059 = vmatmul.mubr.bf16.gmra.mxu0 %v900
      %v1060 = vpop.f32.mrf.mxu0
      %v1061 = vadd.f32 %v773, %v1060
      %v1062 = vpop.f32.mrf.mxu0
      %v1063 = vpop.f32.mrf.mxu0
      %v1064 = vadd.f32 %v776, %v1063
      %v1065 = vpop.f32.mrf.mxu0
      %1066 = vmatprep.mubr.bf16.mxu0 0
      %1067 = vmatmul.mubr.bf16.gmra.mxu0 %v903
      %v1068 = vpop.f32.mrf.mxu0
      %v1069 = vadd.f32 %v781, %v1068
      %v1070 = vpop.f32.mrf.mxu0
      %v1071 = vpop.f32.mrf.mxu0
      %v1072 = vadd.f32 %v784, %v1071
      %v1073 = vpop.f32.mrf.mxu0
      %1074 = vmatprep.mubr.bf16.mxu0 0
      %1075 = vmatmul.mubr.bf16.gmra.mxu0 %v906
      %v1076 = vpop.f32.mrf.mxu0
      %v1077 = vadd.f32 %v789, %v1076
      %v1078 = vpop.f32.mrf.mxu0
      %v1079 = vpop.f32.mrf.mxu0
      %v1080 = vadd.f32 %v792, %v1079
      %v1081 = vpop.f32.mrf.mxu0
      %1082 = vmatprep.mubr.bf16.mxu0 0
      %1083 = vmatmul.mubr.bf16.gmra.mxu0 %v909
      %v1084 = vpop.f32.mrf.mxu0
      %v1085 = vadd.f32 %v797, %v1084
      %v1086 = vpop.f32.mrf.mxu0
      %v1087 = vpop.f32.mrf.mxu0
      %v1088 = vadd.f32 %v800, %v1087
      %v1089 = vpop.f32.mrf.mxu0
      %1090 = vmatprep.mubr.bf16.mxu0 0
      %1091 = vmatmul.mubr.bf16.gmra.mxu0 %v912
      %v1092 = vpop.f32.mrf.mxu0
      %v1093 = vadd.f32 %v805, %v1092
      %v1094 = vpop.f32.mrf.mxu0
      %v1095 = vpop.f32.mrf.mxu0
      %v1096 = vadd.f32 %v808, %v1095
      %v1097 = vpop.f32.mrf.mxu0
      %1098 = vmatprep.mubr.bf16.mxu0 0
      %1099 = vmatmul.mubr.bf16.gmra.mxu0 %v915
      %v1100 = vpop.f32.mrf.mxu0
      %v1101 = vadd.f32 %v813, %v1100
      %v1102 = vpop.f32.mrf.mxu0
      %v1103 = vpop.f32.mrf.mxu0
      %v1104 = vadd.f32 %v816, %v1103
      %v1105 = vpop.f32.mrf.mxu0
      %1106 = vmatprep.mubr.bf16.mxu0 0
      %1107 = vmatmul.mubr.bf16.gmra.mxu0 %v918
      %v1108 = vpop.f32.mrf.mxu0
      %v1109 = vadd.f32 %v821, %v1108
      %v1110 = vpop.f32.mrf.mxu0
      %v1111 = vpop.f32.mrf.mxu0
      %v1112 = vadd.f32 %v824, %v1111
      %v1113 = vpop.f32.mrf.mxu0
      %1114 = vmatprep.mubr.bf16.mxu0 0
      %1115 = vmatmul.mubr.bf16.gmra.mxu0 %v921
      %v1116 = vpop.f32.mrf.mxu0
      %v1117 = vadd.f32 %v829, %v1116
      %v1118 = vpop.f32.mrf.mxu0
      %v1119 = vpop.f32.mrf.mxu0
      %v1120 = vadd.f32 %v832, %v1119
      %v1121 = vpop.f32.mrf.mxu0
      %1122 = vmatprep.mubr.bf16.mxu0 0
      %1123 = vmatmul.mubr.bf16.gmra.mxu0 %v924
      %v1124 = vpop.f32.mrf.mxu0
      %v1125 = vadd.f32 %v837, %v1124
      %v1126 = vpop.f32.mrf.mxu0
      %v1127 = vpop.f32.mrf.mxu0
      %v1128 = vadd.f32 %v840, %v1127
      %v1129 = vpop.f32.mrf.mxu0
      %1130 = vmatprep.mubr.bf16.mxu0 0
      %1131 = vmatmul.mubr.bf16.gmra.mxu0 %v927
      %v1132 = vpop.f32.mrf.mxu0
      %v1133 = vadd.f32 %v845, %v1132
      %v1134 = vpop.f32.mrf.mxu0
      %v1135 = vpop.f32.mrf.mxu0
      %v1136 = vadd.f32 %v848, %v1135
      %v1137 = vpop.f32.mrf.mxu0
      %1138 = vmatprep.mubr.bf16.mxu0 0
      %1139 = vmatmul.mubr.bf16.gmra.mxu0 %v930
      %v1140 = vpop.f32.mrf.mxu0
      %v1141 = vadd.f32 %v853, %v1140
      %v1142 = vpop.f32.mrf.mxu0
      %v1143 = vpop.f32.mrf.mxu0
      %v1144 = vadd.f32 %v856, %v1143
      %v1145 = vpop.f32.mrf.mxu0
      %1146 = vmatprep.mubr.bf16.mxu0 0
      %1147 = vmatmul.mubr.bf16.gmra.mxu0 %v933
      %v1148 = vpop.f32.mrf.mxu0
      %v1149 = vadd.f32 %v861, %v1148
      %v1150 = vpop.f32.mrf.mxu0
      %v1151 = vpop.f32.mrf.mxu0
      %v1152 = vpop.f32.mrf.mxu0
      %1153 = vdwg.mxu0
      %v1154 = vld [vmem:[#allocation2 + $0x2] sm:$0xff]
      %v1155 = vld [vmem:[#allocation2 + $0xa] sm:$0xff]
      %v1156 = vld [vmem:[#allocation2 + $0x12] sm:$0xff]
      %v1157 = vld [vmem:[#allocation2 + $0x1a] sm:$0xff]
      %v1158 = vld [vmem:[#allocation2 + $0x22] sm:$0xff]
      %v1159 = vld [vmem:[#allocation2 + $0x2a] sm:$0xff]
      %v1160 = vld [vmem:[#allocation2 + $0x32] sm:$0xff]
      %v1161 = vld [vmem:[#allocation2 + $0x3a] sm:$0xff]
      %v1162 = vld [vmem:[#allocation2 + $0x42] sm:$0xff]
      %v1163 = vld [vmem:[#allocation2 + $0x4a] sm:$0xff]
      %v1164 = vld [vmem:[#allocation2 + $0x52] sm:$0xff]
      %v1165 = vld [vmem:[#allocation2 + $0x5a] sm:$0xff]
      %v1166 = vld [vmem:[#allocation2 + $0x62] sm:$0xff]
      %v1167 = vld [vmem:[#allocation2 + $0x6a] sm:$0xff]
      %v1168 = vld [vmem:[#allocation2 + $0x72] sm:$0xff]
      %v1169 = vld [vmem:[#allocation2 + $0x7a] sm:$0xff]
      %v1170 = vld [vmem:[#allocation2 + $0x82] sm:$0xff]
      %v1171 = vld [vmem:[#allocation2 + $0x8a] sm:$0xff]
      %v1172 = vld [vmem:[#allocation2 + $0x92] sm:$0xff]
      %v1173 = vld [vmem:[#allocation2 + $0x9a] sm:$0xff]
      %v1174 = vld [vmem:[#allocation2 + $0xa2] sm:$0xff]
      %v1175 = vld [vmem:[#allocation2 + $0xaa] sm:$0xff]
      %v1176 = vld [vmem:[#allocation2 + $0xb2] sm:$0xff]
      %v1177 = vld [vmem:[#allocation2 + $0xba] sm:$0xff]
      %v1178 = vld [vmem:[#allocation2 + $0xc2] sm:$0xff]
      %v1179 = vld [vmem:[#allocation2 + $0xca] sm:$0xff]
      %v1180 = vld [vmem:[#allocation2 + $0xd2] sm:$0xff]
      %v1181 = vld [vmem:[#allocation2 + $0xda] sm:$0xff]
      %v1182 = vld [vmem:[#allocation2 + $0xe2] sm:$0xff]
      %v1183 = vld [vmem:[#allocation2 + $0xea] sm:$0xff]
      %v1184 = vld [vmem:[#allocation2 + $0xf2] sm:$0xff]
      %v1185 = vld [vmem:[#allocation2 + $0xfa] sm:$0xff]
      %v1186 = vld [vmem:[#allocation2 + $0x102] sm:$0xff]
      %v1187 = vld [vmem:[#allocation2 + $0x10a] sm:$0xff]
      %v1188 = vld [vmem:[#allocation2 + $0x112] sm:$0xff]
      %v1189 = vld [vmem:[#allocation2 + $0x11a] sm:$0xff]
      %v1190 = vld [vmem:[#allocation2 + $0x122] sm:$0xff]
      %v1191 = vld [vmem:[#allocation2 + $0x12a] sm:$0xff]
      %v1192 = vld [vmem:[#allocation2 + $0x132] sm:$0xff]
      %v1193 = vld [vmem:[#allocation2 + $0x13a] sm:$0xff]
      %v1194 = vld [vmem:[#allocation2 + $0x142] sm:$0xff]
      %v1195 = vld [vmem:[#allocation2 + $0x14a] sm:$0xff]
      %v1196 = vld [vmem:[#allocation2 + $0x152] sm:$0xff]
      %v1197 = vld [vmem:[#allocation2 + $0x15a] sm:$0xff]
      %v1198 = vld [vmem:[#allocation2 + $0x162] sm:$0xff]
      %v1199 = vpack.c.bf16 %v1155, %v1154
      %v1200 = vpack.c.bf16 %v1157, %v1156
      %v1201 = vpack.c.bf16 %v1159, %v1158
      %v1202 = vpack.c.bf16 %v1161, %v1160
      %v1203 = vpack.c.bf16 %v1163, %v1162
      %v1204 = vpack.c.bf16 %v1165, %v1164
      %v1205 = vpack.c.bf16 %v1167, %v1166
      %v1206 = vpack.c.bf16 %v1169, %v1168
      %v1207 = vpack.c.bf16 %v1171, %v1170
      %v1208 = vpack.c.bf16 %v1173, %v1172
      %v1209 = vpack.c.bf16 %v1175, %v1174
      %v1210 = vpack.c.bf16 %v1177, %v1176
      %v1211 = vpack.c.bf16 %v1179, %v1178
      %v1212 = vpack.c.bf16 %v1181, %v1180
      %v1213 = vpack.c.bf16 %v1183, %v1182
      %v1214 = vpack.c.bf16 %v1185, %v1184
      %v1215 = vpack.c.bf16 %v1187, %v1186
      %v1216 = vpack.c.bf16 %v1189, %v1188
      %v1217 = vpack.c.bf16 %v1191, %v1190
      %v1218 = vpack.c.bf16 %v1193, %v1192
      %v1219 = vpack.c.bf16 %v1195, %v1194
      %v1220 = vpack.c.bf16 %v1197, %v1196
      %v1221 = vpack.c.bf16 %v1198, %v1198
      %s1222 = scalar_lea.vmem %s2, 4
      %v1223 = vld [vmem:[%s1222] sm:$0x3]
      %v1225 = vsel %vm377, %v1199, 0
      %v1228 = vsel %vm377, %v1200, 0
      %v1231 = vsel %vm377, %v1201, 0
      %v1234 = vsel %vm377, %v1202, 0
      %v1237 = vsel %vm377, %v1203, 0
      %v1240 = vsel %vm377, %v1204, 0
      %v1243 = vsel %vm377, %v1205, 0
      %v1246 = vsel %vm377, %v1206, 0
      %v1249 = vsel %vm377, %v1207, 0
      %v1252 = vsel %vm377, %v1208, 0
      %v1255 = vsel %vm377, %v1209, 0
      %v1258 = vsel %vm377, %v1210, 0
      %v1261 = vsel %vm377, %v1211, 0
      %v1264 = vsel %vm377, %v1212, 0
      %v1267 = vsel %vm377, %v1213, 0
      %v1270 = vsel %vm377, %v1214, 0
      %v1273 = vsel %vm377, %v1215, 0
      %v1276 = vsel %vm377, %v1216, 0
      %v1279 = vsel %vm377, %v1217, 0
      %v1282 = vsel %vm377, %v1218, 0
      %v1285 = vsel %vm377, %v1219, 0
      %v1288 = vsel %vm377, %v1220, 0
      %v1291 = vsel %vm377, %v1221, 0
      %v1294 = vsel %vm646, %v1223, 0
      %1296 = vmatprep.subr.bf16.mxu0 0
      %1297 = vmatpush1.bf16.msra.mxu0 0
      %1298 = vmatprep.subr.bf16.mxu0 0
      %1299 = vmatpush1.bf16.msra.mxu0 0
      %1300 = vmatprep.subr.bf16.mxu0 0
      %1301 = vmatpush1.bf16.msra.mxu0 0
      %1302 = vmatprep.subr.bf16.mxu0 0
      %1303 = vmatpush1.bf16.msra.mxu0 0
      %1304 = vmatprep.subr.bf16.mxu0 0
      %1305 = vmatpush1.bf16.msra.mxu0 0
      %1306 = vmatprep.subr.bf16.mxu0 0
      %1307 = vmatpush1.bf16.msra.mxu0 0
      %1308 = vmatprep.subr.bf16.mxu0 0
      %1309 = vmatpush1.bf16.msra.mxu0 0
      %1310 = vmatprep.subr.bf16.mxu0 0
      %1311 = vmatpush1.bf16.msra.mxu0 %v1294
      %1312 = vmatprep.subr.bf16.mxu0 0
      %1313 = vmatpush2.bf16.msra.mxu0 0
      %1314 = vmatprep.subr.bf16.mxu0 0
      %1315 = vmatpush2.bf16.msra.mxu0 0
      %1316 = vmatprep.subr.bf16.mxu0 0
      %1317 = vmatpush2.bf16.msra.mxu0 0
      %1318 = vmatprep.subr.bf16.mxu0 0
      %1319 = vmatpush2.bf16.msra.mxu0 0
      %1320 = vmatprep.subr.bf16.mxu0 0
      %1321 = vmatpush2.bf16.msra.mxu0 0
      %1322 = vmatprep.subr.bf16.mxu0 0
      %1323 = vmatpush2.bf16.msra.mxu0 0
      %1324 = vmatprep.subr.bf16.mxu0 0
      %1325 = vmatpush2.bf16.msra.mxu0 0
      %1326 = vmatprep.subr.bf16.mxu0 0
      %1327 = vmatpush2.bf16.msra.mxu0 0
      %1328 = vmatprep.mubr.bf16.mxu0 0
      %1329 = vmatmul.mubr.bf16.gmra.mxu0 %v1225
      %v1330 = vpop.f32.mrf.mxu0
      %v1331 = vadd.f32 0.0, %v1330
      %v1332 = vpop.f32.mrf.mxu0
      %v1333 = vpop.f32.mrf.mxu0
      %v1334 = vadd.f32 0.0, %v1333
      %v1335 = vpop.f32.mrf.mxu0
      %1336 = vmatprep.mubr.bf16.mxu0 0
      %1337 = vmatmul.mubr.bf16.gmra.mxu0 %v1228
      %v1338 = vpop.f32.mrf.mxu0
      %v1339 = vadd.f32 0.0, %v1338
      %v1340 = vpop.f32.mrf.mxu0
      %v1341 = vpop.f32.mrf.mxu0
      %v1342 = vadd.f32 0.0, %v1341
      %v1343 = vpop.f32.mrf.mxu0
      %1344 = vmatprep.mubr.bf16.mxu0 0
      %1345 = vmatmul.mubr.bf16.gmra.mxu0 %v1231
      %v1346 = vpop.f32.mrf.mxu0
      %v1347 = vadd.f32 0.0, %v1346
      %v1348 = vpop.f32.mrf.mxu0
      %v1349 = vpop.f32.mrf.mxu0
      %v1350 = vadd.f32 0.0, %v1349
      %v1351 = vpop.f32.mrf.mxu0
      %1352 = vmatprep.mubr.bf16.mxu0 0
      %1353 = vmatmul.mubr.bf16.gmra.mxu0 %v1234
      %v1354 = vpop.f32.mrf.mxu0
      %v1355 = vadd.f32 0.0, %v1354
      %v1356 = vpop.f32.mrf.mxu0
      %v1357 = vpop.f32.mrf.mxu0
      %v1358 = vadd.f32 0.0, %v1357
      %v1359 = vpop.f32.mrf.mxu0
      %1360 = vmatprep.mubr.bf16.mxu0 0
      %1361 = vmatmul.mubr.bf16.gmra.mxu0 %v1237
      %v1362 = vpop.f32.mrf.mxu0
      %v1363 = vadd.f32 0.0, %v1362
      %v1364 = vpop.f32.mrf.mxu0
      %v1365 = vpop.f32.mrf.mxu0
      %v1366 = vadd.f32 0.0, %v1365
      %v1367 = vpop.f32.mrf.mxu0
      %1368 = vmatprep.mubr.bf16.mxu0 0
      %1369 = vmatmul.mubr.bf16.gmra.mxu0 %v1240
      %v1370 = vpop.f32.mrf.mxu0
      %v1371 = vadd.f32 0.0, %v1370
      %v1372 = vpop.f32.mrf.mxu0
      %v1373 = vpop.f32.mrf.mxu0
      %v1374 = vadd.f32 0.0, %v1373
      %v1375 = vpop.f32.mrf.mxu0
      %1376 = vmatprep.mubr.bf16.mxu0 0
      %1377 = vmatmul.mubr.bf16.gmra.mxu0 %v1243
      %v1378 = vpop.f32.mrf.mxu0
      %v1379 = vadd.f32 0.0, %v1378
      %v1380 = vpop.f32.mrf.mxu0
      %v1381 = vpop.f32.mrf.mxu0
      %v1382 = vadd.f32 0.0, %v1381
      %v1383 = vpop.f32.mrf.mxu0
      %1384 = vmatprep.mubr.bf16.mxu0 0
      %1385 = vmatmul.mubr.bf16.gmra.mxu0 %v1246
      %v1386 = vpop.f32.mrf.mxu0
      %v1387 = vadd.f32 0.0, %v1386
      %v1388 = vpop.f32.mrf.mxu0
      %v1389 = vpop.f32.mrf.mxu0
      %v1390 = vadd.f32 0.0, %v1389
      %v1391 = vpop.f32.mrf.mxu0
      %1392 = vmatprep.mubr.bf16.mxu0 0
      %1393 = vmatmul.mubr.bf16.gmra.mxu0 %v1249
      %v1394 = vpop.f32.mrf.mxu0
      %v1395 = vadd.f32 0.0, %v1394
      %v1396 = vpop.f32.mrf.mxu0
      %v1397 = vpop.f32.mrf.mxu0
      %v1398 = vadd.f32 0.0, %v1397
      %v1399 = vpop.f32.mrf.mxu0
      %1400 = vmatprep.mubr.bf16.mxu0 0
      %1401 = vmatmul.mubr.bf16.gmra.mxu0 %v1252
      %v1402 = vpop.f32.mrf.mxu0
      %v1403 = vadd.f32 0.0, %v1402
      %v1404 = vpop.f32.mrf.mxu0
      %v1405 = vpop.f32.mrf.mxu0
      %v1406 = vadd.f32 0.0, %v1405
      %v1407 = vpop.f32.mrf.mxu0
      %1408 = vmatprep.mubr.bf16.mxu0 0
      %1409 = vmatmul.mubr.bf16.gmra.mxu0 %v1255
      %v1410 = vpop.f32.mrf.mxu0
      %v1411 = vadd.f32 0.0, %v1410
      %v1412 = vpop.f32.mrf.mxu0
      %v1413 = vpop.f32.mrf.mxu0
      %v1414 = vadd.f32 0.0, %v1413
      %v1415 = vpop.f32.mrf.mxu0
      %1416 = vmatprep.mubr.bf16.mxu0 0
      %1417 = vmatmul.mubr.bf16.gmra.mxu0 %v1258
      %v1418 = vpop.f32.mrf.mxu0
      %v1419 = vadd.f32 0.0, %v1418
      %v1420 = vpop.f32.mrf.mxu0
      %v1421 = vpop.f32.mrf.mxu0
      %v1422 = vadd.f32 0.0, %v1421
      %v1423 = vpop.f32.mrf.mxu0
      %1424 = vmatprep.mubr.bf16.mxu0 0
      %1425 = vmatmul.mubr.bf16.gmra.mxu0 %v1261
      %v1426 = vpop.f32.mrf.mxu0
      %v1427 = vadd.f32 0.0, %v1426
      %v1428 = vpop.f32.mrf.mxu0
      %v1429 = vpop.f32.mrf.mxu0
      %v1430 = vadd.f32 0.0, %v1429
      %v1431 = vpop.f32.mrf.mxu0
      %1432 = vmatprep.mubr.bf16.mxu0 0
      %1433 = vmatmul.mubr.bf16.gmra.mxu0 %v1264
      %v1434 = vpop.f32.mrf.mxu0
      %v1435 = vadd.f32 0.0, %v1434
      %v1436 = vpop.f32.mrf.mxu0
      %v1437 = vpop.f32.mrf.mxu0
      %v1438 = vadd.f32 0.0, %v1437
      %v1439 = vpop.f32.mrf.mxu0
      %1440 = vmatprep.mubr.bf16.mxu0 0
      %1441 = vmatmul.mubr.bf16.gmra.mxu0 %v1267
      %v1442 = vpop.f32.mrf.mxu0
      %v1443 = vadd.f32 0.0, %v1442
      %v1444 = vpop.f32.mrf.mxu0
      %v1445 = vpop.f32.mrf.mxu0
      %v1446 = vadd.f32 0.0, %v1445
      %v1447 = vpop.f32.mrf.mxu0
      %1448 = vmatprep.mubr.bf16.mxu0 0
      %1449 = vmatmul.mubr.bf16.gmra.mxu0 %v1270
      %v1450 = vpop.f32.mrf.mxu0
      %v1451 = vadd.f32 0.0, %v1450
      %v1452 = vpop.f32.mrf.mxu0
      %v1453 = vpop.f32.mrf.mxu0
      %v1454 = vadd.f32 0.0, %v1453
      %v1455 = vpop.f32.mrf.mxu0
      %1456 = vmatprep.mubr.bf16.mxu0 0
      %1457 = vmatmul.mubr.bf16.gmra.mxu0 %v1273
      %v1458 = vpop.f32.mrf.mxu0
      %v1459 = vadd.f32 0.0, %v1458
      %v1460 = vpop.f32.mrf.mxu0
      %v1461 = vpop.f32.mrf.mxu0
      %v1462 = vadd.f32 0.0, %v1461
      %v1463 = vpop.f32.mrf.mxu0
      %1464 = vmatprep.mubr.bf16.mxu0 0
      %1465 = vmatmul.mubr.bf16.gmra.mxu0 %v1276
      %v1466 = vpop.f32.mrf.mxu0
      %v1467 = vadd.f32 0.0, %v1466
      %v1468 = vpop.f32.mrf.mxu0
      %v1469 = vpop.f32.mrf.mxu0
      %v1470 = vadd.f32 0.0, %v1469
      %v1471 = vpop.f32.mrf.mxu0
      %1472 = vmatprep.mubr.bf16.mxu0 0
      %1473 = vmatmul.mubr.bf16.gmra.mxu0 %v1279
      %v1474 = vpop.f32.mrf.mxu0
      %v1475 = vadd.f32 0.0, %v1474
      %v1476 = vpop.f32.mrf.mxu0
      %v1477 = vpop.f32.mrf.mxu0
      %v1478 = vadd.f32 0.0, %v1477
      %v1479 = vpop.f32.mrf.mxu0
      %1480 = vmatprep.mubr.bf16.mxu0 0
      %1481 = vmatmul.mubr.bf16.gmra.mxu0 %v1282
      %v1482 = vpop.f32.mrf.mxu0
      %v1483 = vadd.f32 0.0, %v1482
      %v1484 = vpop.f32.mrf.mxu0
      %v1485 = vpop.f32.mrf.mxu0
      %v1486 = vadd.f32 0.0, %v1485
      %v1487 = vpop.f32.mrf.mxu0
      %1488 = vmatprep.mubr.bf16.mxu0 0
      %1489 = vmatmul.mubr.bf16.gmra.mxu0 %v1285
      %v1490 = vpop.f32.mrf.mxu0
      %v1491 = vadd.f32 0.0, %v1490
      %v1492 = vpop.f32.mrf.mxu0
      %v1493 = vpop.f32.mrf.mxu0
      %v1494 = vadd.f32 0.0, %v1493
      %v1495 = vpop.f32.mrf.mxu0
      %1496 = vmatprep.mubr.bf16.mxu0 0
      %1497 = vmatmul.mubr.bf16.gmra.mxu0 %v1288
      %v1498 = vpop.f32.mrf.mxu0
      %v1499 = vadd.f32 0.0, %v1498
      %v1500 = vpop.f32.mrf.mxu0
      %v1501 = vpop.f32.mrf.mxu0
      %v1502 = vadd.f32 0.0, %v1501
      %v1503 = vpop.f32.mrf.mxu0
      %1504 = vmatprep.mubr.bf16.mxu0 0
      %1505 = vmatmul.mubr.bf16.gmra.mxu0 %v1291
      %v1506 = vpop.f32.mrf.mxu0
      %v1507 = vadd.f32 0.0, %v1506
      %v1508 = vpop.f32.mrf.mxu0
      %v1509 = vpop.f32.mrf.mxu0
      %v1510 = vpop.f32.mrf.mxu0
      %1511 = vdwg.mxu0
      %v1512 = vadd.f32 %v973, %v1331
      %v1513 = vadd.f32 %v976, %v1334
      %v1514 = vadd.f32 %v981, %v1339
      %v1515 = vadd.f32 %v984, %v1342
      %v1516 = vadd.f32 %v989, %v1347
      %v1517 = vadd.f32 %v992, %v1350
      %v1518 = vadd.f32 %v997, %v1355
      %v1519 = vadd.f32 %v1000, %v1358
      %v1520 = vadd.f32 %v1005, %v1363
      %v1521 = vadd.f32 %v1008, %v1366
      %v1522 = vadd.f32 %v1013, %v1371
      %v1523 = vadd.f32 %v1016, %v1374
      %v1524 = vadd.f32 %v1021, %v1379
      %v1525 = vadd.f32 %v1024, %v1382
      %v1526 = vadd.f32 %v1029, %v1387
      %v1527 = vadd.f32 %v1032, %v1390
      %v1528 = vadd.f32 %v1037, %v1395
      %v1529 = vadd.f32 %v1040, %v1398
      %v1530 = vadd.f32 %v1045, %v1403
      %v1531 = vadd.f32 %v1048, %v1406
      %v1532 = vadd.f32 %v1053, %v1411
      %v1533 = vadd.f32 %v1056, %v1414
      %v1534 = vadd.f32 %v1061, %v1419
      %v1535 = vadd.f32 %v1064, %v1422
      %v1536 = vadd.f32 %v1069, %v1427
      %v1537 = vadd.f32 %v1072, %v1430
      %v1538 = vadd.f32 %v1077, %v1435
      %v1539 = vadd.f32 %v1080, %v1438
      %v1540 = vadd.f32 %v1085, %v1443
      %v1541 = vadd.f32 %v1088, %v1446
      %v1542 = vadd.f32 %v1093, %v1451
      %v1543 = vadd.f32 %v1096, %v1454
      %v1544 = vadd.f32 %v1101, %v1459
      %v1545 = vadd.f32 %v1104, %v1462
      %v1546 = vadd.f32 %v1109, %v1467
      %v1547 = vadd.f32 %v1112, %v1470
      %v1548 = vadd.f32 %v1117, %v1475
      %v1549 = vadd.f32 %v1120, %v1478
      %v1550 = vadd.f32 %v1125, %v1483
      %v1551 = vadd.f32 %v1128, %v1486
      %v1552 = vadd.f32 %v1133, %v1491
      %v1553 = vadd.f32 %v1136, %v1494
      %v1554 = vadd.f32 %v1141, %v1499
      %v1555 = vadd.f32 %v1144, %v1502
      %v1556 = vadd.f32 %v1149, %v1507
      %v1557 = vld [vmem:[#allocation2 + $0x12] sm:$0xff]
      %v1558 = vld [vmem:[#allocation2 + $0x1a] sm:$0xff]
      %v1559 = vld [vmem:[#allocation2 + $0x22] sm:$0xff]
      %v1560 = vld [vmem:[#allocation2 + $0x2a] sm:$0xff]
      %v1561 = vld [vmem:[#allocation2 + $0x32] sm:$0xff]
      %v1562 = vld [vmem:[#allocation2 + $0x3a] sm:$0xff]
      %v1563 = vld [vmem:[#allocation2 + $0x42] sm:$0xff]
      %v1564 = vld [vmem:[#allocation2 + $0x4a] sm:$0xff]
      %v1565 = vld [vmem:[#allocation2 + $0x52] sm:$0xff]
      %v1566 = vld [vmem:[#allocation2 + $0x5a] sm:$0xff]
      %v1567 = vld [vmem:[#allocation2 + $0x62] sm:$0xff]
      %v1568 = vld [vmem:[#allocation2 + $0x6a] sm:$0xff]
      %v1569 = vld [vmem:[#allocation2 + $0x72] sm:$0xff]
      %v1570 = vld [vmem:[#allocation2 + $0x7a] sm:$0xff]
      %v1571 = vld [vmem:[#allocation2 + $0x82] sm:$0xff]
      %v1572 = vld [vmem:[#allocation2 + $0x8a] sm:$0xff]
      %v1573 = vld [vmem:[#allocation2 + $0x92] sm:$0xff]
      %v1574 = vld [vmem:[#allocation2 + $0x9a] sm:$0xff]
      %v1575 = vld [vmem:[#allocation2 + $0xa2] sm:$0xff]
      %v1576 = vld [vmem:[#allocation2 + $0xaa] sm:$0xff]
      %v1577 = vld [vmem:[#allocation2 + $0xb2] sm:$0xff]
      %v1578 = vld [vmem:[#allocation2 + $0xba] sm:$0xff]
      %v1579 = vld [vmem:[#allocation2 + $0xc2] sm:$0xff]
      %v1580 = vld [vmem:[#allocation2 + $0xca] sm:$0xff]
      %v1581 = vld [vmem:[#allocation2 + $0xd2] sm:$0xff]
      %v1582 = vld [vmem:[#allocation2 + $0xda] sm:$0xff]
      %v1583 = vld [vmem:[#allocation2 + $0xe2] sm:$0xff]
      %v1584 = vld [vmem:[#allocation2 + $0xea] sm:$0xff]
      %v1585 = vld [vmem:[#allocation2 + $0xf2] sm:$0xff]
      %v1586 = vld [vmem:[#allocation2 + $0xfa] sm:$0xff]
      %v1587 = vld [vmem:[#allocation2 + $0x102] sm:$0xff]
      %v1588 = vld [vmem:[#allocation2 + $0x10a] sm:$0xff]
      %v1589 = vld [vmem:[#allocation2 + $0x112] sm:$0xff]
      %v1590 = vld [vmem:[#allocation2 + $0x11a] sm:$0xff]
      %v1591 = vld [vmem:[#allocation2 + $0x122] sm:$0xff]
      %v1592 = vld [vmem:[#allocation2 + $0x12a] sm:$0xff]
      %v1593 = vld [vmem:[#allocation2 + $0x132] sm:$0xff]
      %v1594 = vld [vmem:[#allocation2 + $0x13a] sm:$0xff]
      %v1595 = vld [vmem:[#allocation2 + $0x142] sm:$0xff]
      %v1596 = vld [vmem:[#allocation2 + $0x14a] sm:$0xff]
      %v1597 = vld [vmem:[#allocation2 + $0x152] sm:$0xff]
      %v1598 = vld [vmem:[#allocation2 + $0x15a] sm:$0xff]
      %v1599 = vld [vmem:[#allocation2 + $0x162] sm:$0xff]
      %v1600 = vld [vmem:[#allocation2 + $0x16a] sm:$0xff]
      %v1601 = vld [vmem:[#allocation2 + $0x172] sm:$0xff]
      %v1602 = vpack.c.bf16 %v1558, %v1557
      %v1603 = vpack.c.bf16 %v1560, %v1559
      %v1604 = vpack.c.bf16 %v1562, %v1561
      %v1605 = vpack.c.bf16 %v1564, %v1563
      %v1606 = vpack.c.bf16 %v1566, %v1565
      %v1607 = vpack.c.bf16 %v1568, %v1567
      %v1608 = vpack.c.bf16 %v1570, %v1569
      %v1609 = vpack.c.bf16 %v1572, %v1571
      %v1610 = vpack.c.bf16 %v1574, %v1573
      %v1611 = vpack.c.bf16 %v1576, %v1575
      %v1612 = vpack.c.bf16 %v1578, %v1577
      %v1613 = vpack.c.bf16 %v1580, %v1579
      %v1614 = vpack.c.bf16 %v1582, %v1581
      %v1615 = vpack.c.bf16 %v1584, %v1583
      %v1616 = vpack.c.bf16 %v1586, %v1585
      %v1617 = vpack.c.bf16 %v1588, %v1587
      %v1618 = vpack.c.bf16 %v1590, %v1589
      %v1619 = vpack.c.bf16 %v1592, %v1591
      %v1620 = vpack.c.bf16 %v1594, %v1593
      %v1621 = vpack.c.bf16 %v1596, %v1595
      %v1622 = vpack.c.bf16 %v1598, %v1597
      %v1623 = vpack.c.bf16 %v1600, %v1599
      %v1624 = vpack.c.bf16 %v1601, %v1601
      %s1625 = scalar_lea.vmem %s2, 6
      %v1626 = vld [vmem:[%s1625] sm:$0x3]
      %v1628 = vsel %vm377, %v1602, 0
      %v1631 = vsel %vm377, %v1603, 0
      %v1634 = vsel %vm377, %v1604, 0
      %v1637 = vsel %vm377, %v1605, 0
      %v1640 = vsel %vm377, %v1606, 0
      %v1643 = vsel %vm377, %v1607, 0
      %v1646 = vsel %vm377, %v1608, 0
      %v1649 = vsel %vm377, %v1609, 0
      %v1652 = vsel %vm377, %v1610, 0
      %v1655 = vsel %vm377, %v1611, 0
      %v1658 = vsel %vm377, %v1612, 0
      %v1661 = vsel %vm377, %v1613, 0
      %v1664 = vsel %vm377, %v1614, 0
      %v1667 = vsel %vm377, %v1615, 0
      %v1670 = vsel %vm377, %v1616, 0
      %v1673 = vsel %vm377, %v1617, 0
      %v1676 = vsel %vm377, %v1618, 0
      %v1679 = vsel %vm377, %v1619, 0
      %v1682 = vsel %vm377, %v1620, 0
      %v1685 = vsel %vm377, %v1621, 0
      %v1688 = vsel %vm377, %v1622, 0
      %v1691 = vsel %vm377, %v1623, 0
      %v1694 = vsel %vm377, %v1624, 0
      %v1697 = vsel %vm646, %v1626, 0
      %1699 = vmatprep.subr.bf16.mxu0 0
      %1700 = vmatpush1.bf16.msra.mxu0 0
      %1701 = vmatprep.subr.bf16.mxu0 0
      %1702 = vmatpush1.bf16.msra.mxu0 0
      %1703 = vmatprep.subr.bf16.mxu0 0
      %1704 = vmatpush1.bf16.msra.mxu0 0
      %1705 = vmatprep.subr.bf16.mxu0 0
      %1706 = vmatpush1.bf16.msra.mxu0 0
      %1707 = vmatprep.subr.bf16.mxu0 0
      %1708 = vmatpush1.bf16.msra.mxu0 0
      %1709 = vmatprep.subr.bf16.mxu0 0
      %1710 = vmatpush1.bf16.msra.mxu0 0
      %1711 = vmatprep.subr.bf16.mxu0 0
      %1712 = vmatpush1.bf16.msra.mxu0 0
      %1713 = vmatprep.subr.bf16.mxu0 0
      %1714 = vmatpush1.bf16.msra.mxu0 %v1697
      %1715 = vmatprep.subr.bf16.mxu0 0
      %1716 = vmatpush2.bf16.msra.mxu0 0
      %1717 = vmatprep.subr.bf16.mxu0 0
      %1718 = vmatpush2.bf16.msra.mxu0 0
      %1719 = vmatprep.subr.bf16.mxu0 0
      %1720 = vmatpush2.bf16.msra.mxu0 0
      %1721 = vmatprep.subr.bf16.mxu0 0
      %1722 = vmatpush2.bf16.msra.mxu0 0
      %1723 = vmatprep.subr.bf16.mxu0 0
      %1724 = vmatpush2.bf16.msra.mxu0 0
      %1725 = vmatprep.subr.bf16.mxu0 0
      %1726 = vmatpush2.bf16.msra.mxu0 0
      %1727 = vmatprep.subr.bf16.mxu0 0
      %1728 = vmatpush2.bf16.msra.mxu0 0
      %1729 = vmatprep.subr.bf16.mxu0 0
      %1730 = vmatpush2.bf16.msra.mxu0 0
      %1731 = vmatprep.mubr.bf16.mxu0 0
      %1732 = vmatmul.mubr.bf16.gmra.mxu0 %v1628
      %v1733 = vpop.f32.mrf.mxu0
      %v1734 = vadd.f32 0.0, %v1733
      %v1735 = vpop.f32.mrf.mxu0
      %v1736 = vpop.f32.mrf.mxu0
      %v1737 = vadd.f32 0.0, %v1736
      %v1738 = vpop.f32.mrf.mxu0
      %1739 = vmatprep.mubr.bf16.mxu0 0
      %1740 = vmatmul.mubr.bf16.gmra.mxu0 %v1631
      %v1741 = vpop.f32.mrf.mxu0
      %v1742 = vadd.f32 0.0, %v1741
      %v1743 = vpop.f32.mrf.mxu0
      %v1744 = vpop.f32.mrf.mxu0
      %v1745 = vadd.f32 0.0, %v1744
      %v1746 = vpop.f32.mrf.mxu0
      %1747 = vmatprep.mubr.bf16.mxu0 0
      %1748 = vmatmul.mubr.bf16.gmra.mxu0 %v1634
      %v1749 = vpop.f32.mrf.mxu0
      %v1750 = vadd.f32 0.0, %v1749
      %v1751 = vpop.f32.mrf.mxu0
      %v1752 = vpop.f32.mrf.mxu0
      %v1753 = vadd.f32 0.0, %v1752
      %v1754 = vpop.f32.mrf.mxu0
      %1755 = vmatprep.mubr.bf16.mxu0 0
      %1756 = vmatmul.mubr.bf16.gmra.mxu0 %v1637
      %v1757 = vpop.f32.mrf.mxu0
      %v1758 = vadd.f32 0.0, %v1757
      %v1759 = vpop.f32.mrf.mxu0
      %v1760 = vpop.f32.mrf.mxu0
      %v1761 = vadd.f32 0.0, %v1760
      %v1762 = vpop.f32.mrf.mxu0
      %1763 = vmatprep.mubr.bf16.mxu0 0
      %1764 = vmatmul.mubr.bf16.gmra.mxu0 %v1640
      %v1765 = vpop.f32.mrf.mxu0
      %v1766 = vadd.f32 0.0, %v1765
      %v1767 = vpop.f32.mrf.mxu0
      %v1768 = vpop.f32.mrf.mxu0
      %v1769 = vadd.f32 0.0, %v1768
      %v1770 = vpop.f32.mrf.mxu0
      %1771 = vmatprep.mubr.bf16.mxu0 0
      %1772 = vmatmul.mubr.bf16.gmra.mxu0 %v1643
      %v1773 = vpop.f32.mrf.mxu0
      %v1774 = vadd.f32 0.0, %v1773
      %v1775 = vpop.f32.mrf.mxu0
      %v1776 = vpop.f32.mrf.mxu0
      %v1777 = vadd.f32 0.0, %v1776
      %v1778 = vpop.f32.mrf.mxu0
      %1779 = vmatprep.mubr.bf16.mxu0 0
      %1780 = vmatmul.mubr.bf16.gmra.mxu0 %v1646
      %v1781 = vpop.f32.mrf.mxu0
      %v1782 = vadd.f32 0.0, %v1781
      %v1783 = vpop.f32.mrf.mxu0
      %v1784 = vpop.f32.mrf.mxu0
      %v1785 = vadd.f32 0.0, %v1784
      %v1786 = vpop.f32.mrf.mxu0
      %1787 = vmatprep.mubr.bf16.mxu0 0
      %1788 = vmatmul.mubr.bf16.gmra.mxu0 %v1649
      %v1789 = vpop.f32.mrf.mxu0
      %v1790 = vadd.f32 0.0, %v1789
      %v1791 = vpop.f32.mrf.mxu0
      %v1792 = vpop.f32.mrf.mxu0
      %v1793 = vadd.f32 0.0, %v1792
      %v1794 = vpop.f32.mrf.mxu0
      %1795 = vmatprep.mubr.bf16.mxu0 0
      %1796 = vmatmul.mubr.bf16.gmra.mxu0 %v1652
      %v1797 = vpop.f32.mrf.mxu0
      %v1798 = vadd.f32 0.0, %v1797
      %v1799 = vpop.f32.mrf.mxu0
      %v1800 = vpop.f32.mrf.mxu0
      %v1801 = vadd.f32 0.0, %v1800
      %v1802 = vpop.f32.mrf.mxu0
      %1803 = vmatprep.mubr.bf16.mxu0 0
      %1804 = vmatmul.mubr.bf16.gmra.mxu0 %v1655
      %v1805 = vpop.f32.mrf.mxu0
      %v1806 = vadd.f32 0.0, %v1805
      %v1807 = vpop.f32.mrf.mxu0
      %v1808 = vpop.f32.mrf.mxu0
      %v1809 = vadd.f32 0.0, %v1808
      %v1810 = vpop.f32.mrf.mxu0
      %1811 = vmatprep.mubr.bf16.mxu0 0
      %1812 = vmatmul.mubr.bf16.gmra.mxu0 %v1658
      %v1813 = vpop.f32.mrf.mxu0
      %v1814 = vadd.f32 0.0, %v1813
      %v1815 = vpop.f32.mrf.mxu0
      %v1816 = vpop.f32.mrf.mxu0
      %v1817 = vadd.f32 0.0, %v1816
      %v1818 = vpop.f32.mrf.mxu0
      %1819 = vmatprep.mubr.bf16.mxu0 0
      %1820 = vmatmul.mubr.bf16.gmra.mxu0 %v1661
      %v1821 = vpop.f32.mrf.mxu0
      %v1822 = vadd.f32 0.0, %v1821
      %v1823 = vpop.f32.mrf.mxu0
      %v1824 = vpop.f32.mrf.mxu0
      %v1825 = vadd.f32 0.0, %v1824
      %v1826 = vpop.f32.mrf.mxu0
      %1827 = vmatprep.mubr.bf16.mxu0 0
      %1828 = vmatmul.mubr.bf16.gmra.mxu0 %v1664
      %v1829 = vpop.f32.mrf.mxu0
      %v1830 = vadd.f32 0.0, %v1829
      %v1831 = vpop.f32.mrf.mxu0
      %v1832 = vpop.f32.mrf.mxu0
      %v1833 = vadd.f32 0.0, %v1832
      %v1834 = vpop.f32.mrf.mxu0
      %1835 = vmatprep.mubr.bf16.mxu0 0
      %1836 = vmatmul.mubr.bf16.gmra.mxu0 %v1667
      %v1837 = vpop.f32.mrf.mxu0
      %v1838 = vadd.f32 0.0, %v1837
      %v1839 = vpop.f32.mrf.mxu0
      %v1840 = vpop.f32.mrf.mxu0
      %v1841 = vadd.f32 0.0, %v1840
      %v1842 = vpop.f32.mrf.mxu0
      %1843 = vmatprep.mubr.bf16.mxu0 0
      %1844 = vmatmul.mubr.bf16.gmra.mxu0 %v1670
      %v1845 = vpop.f32.mrf.mxu0
      %v1846 = vadd.f32 0.0, %v1845
      %v1847 = vpop.f32.mrf.mxu0
      %v1848 = vpop.f32.mrf.mxu0
      %v1849 = vadd.f32 0.0, %v1848
      %v1850 = vpop.f32.mrf.mxu0
      %1851 = vmatprep.mubr.bf16.mxu0 0
      %1852 = vmatmul.mubr.bf16.gmra.mxu0 %v1673
      %v1853 = vpop.f32.mrf.mxu0
      %v1854 = vadd.f32 0.0, %v1853
      %v1855 = vpop.f32.mrf.mxu0
      %v1856 = vpop.f32.mrf.mxu0
      %v1857 = vadd.f32 0.0, %v1856
      %v1858 = vpop.f32.mrf.mxu0
      %1859 = vmatprep.mubr.bf16.mxu0 0
      %1860 = vmatmul.mubr.bf16.gmra.mxu0 %v1676
      %v1861 = vpop.f32.mrf.mxu0
      %v1862 = vadd.f32 0.0, %v1861
      %v1863 = vpop.f32.mrf.mxu0
      %v1864 = vpop.f32.mrf.mxu0
      %v1865 = vadd.f32 0.0, %v1864
      %v1866 = vpop.f32.mrf.mxu0
      %1867 = vmatprep.mubr.bf16.mxu0 0
      %1868 = vmatmul.mubr.bf16.gmra.mxu0 %v1679
      %v1869 = vpop.f32.mrf.mxu0
      %v1870 = vadd.f32 0.0, %v1869
      %v1871 = vpop.f32.mrf.mxu0
      %v1872 = vpop.f32.mrf.mxu0
      %v1873 = vadd.f32 0.0, %v1872
      %v1874 = vpop.f32.mrf.mxu0
      %1875 = vmatprep.mubr.bf16.mxu0 0
      %1876 = vmatmul.mubr.bf16.gmra.mxu0 %v1682
      %v1877 = vpop.f32.mrf.mxu0
      %v1878 = vadd.f32 0.0, %v1877
      %v1879 = vpop.f32.mrf.mxu0
      %v1880 = vpop.f32.mrf.mxu0
      %v1881 = vadd.f32 0.0, %v1880
      %v1882 = vpop.f32.mrf.mxu0
      %1883 = vmatprep.mubr.bf16.mxu0 0
      %1884 = vmatmul.mubr.bf16.gmra.mxu0 %v1685
      %v1885 = vpop.f32.mrf.mxu0
      %v1886 = vadd.f32 0.0, %v1885
      %v1887 = vpop.f32.mrf.mxu0
      %v1888 = vpop.f32.mrf.mxu0
      %v1889 = vadd.f32 0.0, %v1888
      %v1890 = vpop.f32.mrf.mxu0
      %1891 = vmatprep.mubr.bf16.mxu0 0
      %1892 = vmatmul.mubr.bf16.gmra.mxu0 %v1688
      %v1893 = vpop.f32.mrf.mxu0
      %v1894 = vadd.f32 0.0, %v1893
      %v1895 = vpop.f32.mrf.mxu0
      %v1896 = vpop.f32.mrf.mxu0
      %v1897 = vadd.f32 0.0, %v1896
      %v1898 = vpop.f32.mrf.mxu0
      %1899 = vmatprep.mubr.bf16.mxu0 0
      %1900 = vmatmul.mubr.bf16.gmra.mxu0 %v1691
      %v1901 = vpop.f32.mrf.mxu0
      %v1902 = vadd.f32 0.0, %v1901
      %v1903 = vpop.f32.mrf.mxu0
      %v1904 = vpop.f32.mrf.mxu0
      %v1905 = vadd.f32 0.0, %v1904
      %v1906 = vpop.f32.mrf.mxu0
      %1907 = vmatprep.mubr.bf16.mxu0 0
      %1908 = vmatmul.mubr.bf16.gmra.mxu0 %v1694
      %v1909 = vpop.f32.mrf.mxu0
      %v1910 = vadd.f32 0.0, %v1909
      %v1911 = vpop.f32.mrf.mxu0
      %v1912 = vpop.f32.mrf.mxu0
      %v1913 = vpop.f32.mrf.mxu0
      %1914 = vdwg.mxu0
      %v1915 = vadd.f32 %v1512, %v1734
      %v1916 = vadd.f32 %v1513, %v1737
      %v1917 = vadd.f32 %v1514, %v1742
      %v1918 = vadd.f32 %v1515, %v1745
      %v1919 = vadd.f32 %v1516, %v1750
      %v1920 = vadd.f32 %v1517, %v1753
      %v1921 = vadd.f32 %v1518, %v1758
      %v1922 = vadd.f32 %v1519, %v1761
      %v1923 = vadd.f32 %v1520, %v1766
      %v1924 = vadd.f32 %v1521, %v1769
      %v1925 = vadd.f32 %v1522, %v1774
      %v1926 = vadd.f32 %v1523, %v1777
      %v1927 = vadd.f32 %v1524, %v1782
      %v1928 = vadd.f32 %v1525, %v1785
      %v1929 = vadd.f32 %v1526, %v1790
      %v1930 = vadd.f32 %v1527, %v1793
      %v1931 = vadd.f32 %v1528, %v1798
      %v1932 = vadd.f32 %v1529, %v1801
      %v1933 = vadd.f32 %v1530, %v1806
      %v1934 = vadd.f32 %v1531, %v1809
      %v1935 = vadd.f32 %v1532, %v1814
      %v1936 = vadd.f32 %v1533, %v1817
      %v1937 = vadd.f32 %v1534, %v1822
      %v1938 = vadd.f32 %v1535, %v1825
      %v1939 = vadd.f32 %v1536, %v1830
      %v1940 = vadd.f32 %v1537, %v1833
      %v1941 = vadd.f32 %v1538, %v1838
      %v1942 = vadd.f32 %v1539, %v1841
      %v1943 = vadd.f32 %v1540, %v1846
      %v1944 = vadd.f32 %v1541, %v1849
      %v1945 = vadd.f32 %v1542, %v1854
      %v1946 = vadd.f32 %v1543, %v1857
      %v1947 = vadd.f32 %v1544, %v1862
      %v1948 = vadd.f32 %v1545, %v1865
      %v1949 = vadd.f32 %v1546, %v1870
      %v1950 = vadd.f32 %v1547, %v1873
      %v1951 = vadd.f32 %v1548, %v1878
      %v1952 = vadd.f32 %v1549, %v1881
      %v1953 = vadd.f32 %v1550, %v1886
      %v1954 = vadd.f32 %v1551, %v1889
      %v1955 = vadd.f32 %v1552, %v1894
      %v1956 = vadd.f32 %v1553, %v1897
      %v1957 = vadd.f32 %v1554, %v1902
      %v1958 = vadd.f32 %v1555, %v1905
      %v1959 = vadd.f32 %v1556, %v1910
      %v1960 = vld [vmem:[#allocation2 + $0x13] sm:$0xff]
      %v1961 = vld [vmem:[#allocation2 + $0x1b] sm:$0xff]
      %v1962 = vld [vmem:[#allocation2 + $0x23] sm:$0xff]
      %v1963 = vld [vmem:[#allocation2 + $0x2b] sm:$0xff]
      %v1964 = vld [vmem:[#allocation2 + $0x33] sm:$0xff]
      %v1965 = vld [vmem:[#allocation2 + $0x3b] sm:$0xff]
      %v1966 = vld [vmem:[#allocation2 + $0x43] sm:$0xff]
      %v1967 = vld [vmem:[#allocation2 + $0x4b] sm:$0xff]
      %v1968 = vld [vmem:[#allocation2 + $0x53] sm:$0xff]
      %v1969 = vld [vmem:[#allocation2 + $0x5b] sm:$0xff]
      %v1970 = vld [vmem:[#allocation2 + $0x63] sm:$0xff]
      %v1971 = vld [vmem:[#allocation2 + $0x6b] sm:$0xff]
      %v1972 = vld [vmem:[#allocation2 + $0x73] sm:$0xff]
      %v1973 = vld [vmem:[#allocation2 + $0x7b] sm:$0xff]
      %v1974 = vld [vmem:[#allocation2 + $0x83] sm:$0xff]
      %v1975 = vld [vmem:[#allocation2 + $0x8b] sm:$0xff]
      %v1976 = vld [vmem:[#allocation2 + $0x93] sm:$0xff]
      %v1977 = vld [vmem:[#allocation2 + $0x9b] sm:$0xff]
      %v1978 = vld [vmem:[#allocation2 + $0xa3] sm:$0xff]
      %v1979 = vld [vmem:[#allocation2 + $0xab] sm:$0xff]
      %v1980 = vld [vmem:[#allocation2 + $0xb3] sm:$0xff]
      %v1981 = vld [vmem:[#allocation2 + $0xbb] sm:$0xff]
      %v1982 = vld [vmem:[#allocation2 + $0xc3] sm:$0xff]
      %v1983 = vld [vmem:[#allocation2 + $0xcb] sm:$0xff]
      %v1984 = vld [vmem:[#allocation2 + $0xd3] sm:$0xff]
      %v1985 = vld [vmem:[#allocation2 + $0xdb] sm:$0xff]
      %v1986 = vld [vmem:[#allocation2 + $0xe3] sm:$0xff]
      %v1987 = vld [vmem:[#allocation2 + $0xeb] sm:$0xff]
      %v1988 = vld [vmem:[#allocation2 + $0xf3] sm:$0xff]
      %v1989 = vld [vmem:[#allocation2 + $0xfb] sm:$0xff]
      %v1990 = vld [vmem:[#allocation2 + $0x103] sm:$0xff]
      %v1991 = vld [vmem:[#allocation2 + $0x10b] sm:$0xff]
      %v1992 = vld [vmem:[#allocation2 + $0x113] sm:$0xff]
      %v1993 = vld [vmem:[#allocation2 + $0x11b] sm:$0xff]
      %v1994 = vld [vmem:[#allocation2 + $0x123] sm:$0xff]
      %v1995 = vld [vmem:[#allocation2 + $0x12b] sm:$0xff]
      %v1996 = vld [vmem:[#allocation2 + $0x133] sm:$0xff]
      %v1997 = vld [vmem:[#allocation2 + $0x13b] sm:$0xff]
      %v1998 = vld [vmem:[#allocation2 + $0x143] sm:$0xff]
      %v1999 = vld [vmem:[#allocation2 + $0x14b] sm:$0xff]
      %v2000 = vld [vmem:[#allocation2 + $0x153] sm:$0xff]
      %v2001 = vld [vmem:[#allocation2 + $0x15b] sm:$0xff]
      %v2002 = vld [vmem:[#allocation2 + $0x163] sm:$0xff]
      %v2003 = vld [vmem:[#allocation2 + $0x16b] sm:$0xff]
      %v2004 = vld [vmem:[#allocation2 + $0x173] sm:$0xff]
      %v2005 = vpack.c.bf16 %v1961, %v1960
      %v2006 = vpack.c.bf16 %v1963, %v1962
      %v2007 = vpack.c.bf16 %v1965, %v1964
      %v2008 = vpack.c.bf16 %v1967, %v1966
      %v2009 = vpack.c.bf16 %v1969, %v1968
      %v2010 = vpack.c.bf16 %v1971, %v1970
      %v2011 = vpack.c.bf16 %v1973, %v1972
      %v2012 = vpack.c.bf16 %v1975, %v1974
      %v2013 = vpack.c.bf16 %v1977, %v1976
      %v2014 = vpack.c.bf16 %v1979, %v1978
      %v2015 = vpack.c.bf16 %v1981, %v1980
      %v2016 = vpack.c.bf16 %v1983, %v1982
      %v2017 = vpack.c.bf16 %v1985, %v1984
      %v2018 = vpack.c.bf16 %v1987, %v1986
      %v2019 = vpack.c.bf16 %v1989, %v1988
      %v2020 = vpack.c.bf16 %v1991, %v1990
      %v2021 = vpack.c.bf16 %v1993, %v1992
      %v2022 = vpack.c.bf16 %v1995, %v1994
      %v2023 = vpack.c.bf16 %v1997, %v1996
      %v2024 = vpack.c.bf16 %v1999, %v1998
      %v2025 = vpack.c.bf16 %v2001, %v2000
      %v2026 = vpack.c.bf16 %v2003, %v2002
      %v2027 = vpack.c.bf16 %v2004, %v2004
      %s2028 = scalar_lea.vmem %s2, 8
      %v2029 = vld [vmem:[%s2028] sm:$0x3]
      %v2031 = vsel %vm377, %v2005, 0
      %v2034 = vsel %vm377, %v2006, 0
      %v2037 = vsel %vm377, %v2007, 0
      %v2040 = vsel %vm377, %v2008, 0
      %v2043 = vsel %vm377, %v2009, 0
      %v2046 = vsel %vm377, %v2010, 0
      %v2049 = vsel %vm377, %v2011, 0
      %v2052 = vsel %vm377, %v2012, 0
      %v2055 = vsel %vm377, %v2013, 0
      %v2058 = vsel %vm377, %v2014, 0
      %v2061 = vsel %vm377, %v2015, 0
      %v2064 = vsel %vm377, %v2016, 0
      %v2067 = vsel %vm377, %v2017, 0
      %v2070 = vsel %vm377, %v2018, 0
      %v2073 = vsel %vm377, %v2019, 0
      %v2076 = vsel %vm377, %v2020, 0
      %v2079 = vsel %vm377, %v2021, 0
      %v2082 = vsel %vm377, %v2022, 0
      %v2085 = vsel %vm377, %v2023, 0
      %v2088 = vsel %vm377, %v2024, 0
      %v2091 = vsel %vm377, %v2025, 0
      %v2094 = vsel %vm377, %v2026, 0
      %v2097 = vsel %vm377, %v2027, 0
      %v2100 = vsel %vm646, %v2029, 0
      %2102 = vmatprep.subr.bf16.mxu0 0
      %2103 = vmatpush1.bf16.msra.mxu0 0
      %2104 = vmatprep.subr.bf16.mxu0 0
      %2105 = vmatpush1.bf16.msra.mxu0 0
      %2106 = vmatprep.subr.bf16.mxu0 0
      %2107 = vmatpush1.bf16.msra.mxu0 0
      %2108 = vmatprep.subr.bf16.mxu0 0
      %2109 = vmatpush1.bf16.msra.mxu0 0
      %2110 = vmatprep.subr.bf16.mxu0 0
      %2111 = vmatpush1.bf16.msra.mxu0 0
      %2112 = vmatprep.subr.bf16.mxu0 0
      %2113 = vmatpush1.bf16.msra.mxu0 0
      %2114 = vmatprep.subr.bf16.mxu0 0
      %2115 = vmatpush1.bf16.msra.mxu0 0
      %2116 = vmatprep.subr.bf16.mxu0 0
      %2117 = vmatpush1.bf16.msra.mxu0 %v2100
      %2118 = vmatprep.subr.bf16.mxu0 0
      %2119 = vmatpush2.bf16.msra.mxu0 0
      %2120 = vmatprep.subr.bf16.mxu0 0
      %2121 = vmatpush2.bf16.msra.mxu0 0
      %2122 = vmatprep.subr.bf16.mxu0 0
      %2123 = vmatpush2.bf16.msra.mxu0 0
      %2124 = vmatprep.subr.bf16.mxu0 0
      %2125 = vmatpush2.bf16.msra.mxu0 0
      %2126 = vmatprep.subr.bf16.mxu0 0
      %2127 = vmatpush2.bf16.msra.mxu0 0
      %2128 = vmatprep.subr.bf16.mxu0 0
      %2129 = vmatpush2.bf16.msra.mxu0 0
      %2130 = vmatprep.subr.bf16.mxu0 0
      %2131 = vmatpush2.bf16.msra.mxu0 0
      %2132 = vmatprep.subr.bf16.mxu0 0
      %2133 = vmatpush2.bf16.msra.mxu0 0
      %2134 = vmatprep.mubr.bf16.mxu0 0
      %2135 = vmatmul.mubr.bf16.gmra.mxu0 %v2031
      %v2136 = vpop.f32.mrf.mxu0
      %v2137 = vadd.f32 0.0, %v2136
      %v2138 = vpop.f32.mrf.mxu0
      %v2139 = vpop.f32.mrf.mxu0
      %v2140 = vadd.f32 0.0, %v2139
      %v2141 = vpop.f32.mrf.mxu0
      %2142 = vmatprep.mubr.bf16.mxu0 0
      %2143 = vmatmul.mubr.bf16.gmra.mxu0 %v2034
      %v2144 = vpop.f32.mrf.mxu0
      %v2145 = vadd.f32 0.0, %v2144
      %v2146 = vpop.f32.mrf.mxu0
      %v2147 = vpop.f32.mrf.mxu0
      %v2148 = vadd.f32 0.0, %v2147
      %v2149 = vpop.f32.mrf.mxu0
      %2150 = vmatprep.mubr.bf16.mxu0 0
      %2151 = vmatmul.mubr.bf16.gmra.mxu0 %v2037
      %v2152 = vpop.f32.mrf.mxu0
      %v2153 = vadd.f32 0.0, %v2152
      %v2154 = vpop.f32.mrf.mxu0
      %v2155 = vpop.f32.mrf.mxu0
      %v2156 = vadd.f32 0.0, %v2155
      %v2157 = vpop.f32.mrf.mxu0
      %2158 = vmatprep.mubr.bf16.mxu0 0
      %2159 = vmatmul.mubr.bf16.gmra.mxu0 %v2040
      %v2160 = vpop.f32.mrf.mxu0
      %v2161 = vadd.f32 0.0, %v2160
      %v2162 = vpop.f32.mrf.mxu0
      %v2163 = vpop.f32.mrf.mxu0
      %v2164 = vadd.f32 0.0, %v2163
      %v2165 = vpop.f32.mrf.mxu0
      %2166 = vmatprep.mubr.bf16.mxu0 0
      %2167 = vmatmul.mubr.bf16.gmra.mxu0 %v2043
      %v2168 = vpop.f32.mrf.mxu0
      %v2169 = vadd.f32 0.0, %v2168
      %v2170 = vpop.f32.mrf.mxu0
      %v2171 = vpop.f32.mrf.mxu0
      %v2172 = vadd.f32 0.0, %v2171
      %v2173 = vpop.f32.mrf.mxu0
      %2174 = vmatprep.mubr.bf16.mxu0 0
      %2175 = vmatmul.mubr.bf16.gmra.mxu0 %v2046
      %v2176 = vpop.f32.mrf.mxu0
      %v2177 = vadd.f32 0.0, %v2176
      %v2178 = vpop.f32.mrf.mxu0
      %v2179 = vpop.f32.mrf.mxu0
      %v2180 = vadd.f32 0.0, %v2179
      %v2181 = vpop.f32.mrf.mxu0
      %2182 = vmatprep.mubr.bf16.mxu0 0
      %2183 = vmatmul.mubr.bf16.gmra.mxu0 %v2049
      %v2184 = vpop.f32.mrf.mxu0
      %v2185 = vadd.f32 0.0, %v2184
      %v2186 = vpop.f32.mrf.mxu0
      %v2187 = vpop.f32.mrf.mxu0
      %v2188 = vadd.f32 0.0, %v2187
      %v2189 = vpop.f32.mrf.mxu0
      %2190 = vmatprep.mubr.bf16.mxu0 0
      %2191 = vmatmul.mubr.bf16.gmra.mxu0 %v2052
      %v2192 = vpop.f32.mrf.mxu0
      %v2193 = vadd.f32 0.0, %v2192
      %v2194 = vpop.f32.mrf.mxu0
      %v2195 = vpop.f32.mrf.mxu0
      %v2196 = vadd.f32 0.0, %v2195
      %v2197 = vpop.f32.mrf.mxu0
      %2198 = vmatprep.mubr.bf16.mxu0 0
      %2199 = vmatmul.mubr.bf16.gmra.mxu0 %v2055
      %v2200 = vpop.f32.mrf.mxu0
      %v2201 = vadd.f32 0.0, %v2200
      %v2202 = vpop.f32.mrf.mxu0
      %v2203 = vpop.f32.mrf.mxu0
      %v2204 = vadd.f32 0.0, %v2203
      %v2205 = vpop.f32.mrf.mxu0
      %2206 = vmatprep.mubr.bf16.mxu0 0
      %2207 = vmatmul.mubr.bf16.gmra.mxu0 %v2058
      %v2208 = vpop.f32.mrf.mxu0
      %v2209 = vadd.f32 0.0, %v2208
      %v2210 = vpop.f32.mrf.mxu0
      %v2211 = vpop.f32.mrf.mxu0
      %v2212 = vadd.f32 0.0, %v2211
      %v2213 = vpop.f32.mrf.mxu0
      %2214 = vmatprep.mubr.bf16.mxu0 0
      %2215 = vmatmul.mubr.bf16.gmra.mxu0 %v2061
      %v2216 = vpop.f32.mrf.mxu0
      %v2217 = vadd.f32 0.0, %v2216
      %v2218 = vpop.f32.mrf.mxu0
      %v2219 = vpop.f32.mrf.mxu0
      %v2220 = vadd.f32 0.0, %v2219
      %v2221 = vpop.f32.mrf.mxu0
      %2222 = vmatprep.mubr.bf16.mxu0 0
      %2223 = vmatmul.mubr.bf16.gmra.mxu0 %v2064
      %v2224 = vpop.f32.mrf.mxu0
      %v2225 = vadd.f32 0.0, %v2224
      %v2226 = vpop.f32.mrf.mxu0
      %v2227 = vpop.f32.mrf.mxu0
      %v2228 = vadd.f32 0.0, %v2227
      %v2229 = vpop.f32.mrf.mxu0
      %2230 = vmatprep.mubr.bf16.mxu0 0
      %2231 = vmatmul.mubr.bf16.gmra.mxu0 %v2067
      %v2232 = vpop.f32.mrf.mxu0
      %v2233 = vadd.f32 0.0, %v2232
      %v2234 = vpop.f32.mrf.mxu0
      %v2235 = vpop.f32.mrf.mxu0
      %v2236 = vadd.f32 0.0, %v2235
      %v2237 = vpop.f32.mrf.mxu0
      %2238 = vmatprep.mubr.bf16.mxu0 0
      %2239 = vmatmul.mubr.bf16.gmra.mxu0 %v2070
      %v2240 = vpop.f32.mrf.mxu0
      %v2241 = vadd.f32 0.0, %v2240
      %v2242 = vpop.f32.mrf.mxu0
      %v2243 = vpop.f32.mrf.mxu0
      %v2244 = vadd.f32 0.0, %v2243
      %v2245 = vpop.f32.mrf.mxu0
      %2246 = vmatprep.mubr.bf16.mxu0 0
      %2247 = vmatmul.mubr.bf16.gmra.mxu0 %v2073
      %v2248 = vpop.f32.mrf.mxu0
      %v2249 = vadd.f32 0.0, %v2248
      %v2250 = vpop.f32.mrf.mxu0
      %v2251 = vpop.f32.mrf.mxu0
      %v2252 = vadd.f32 0.0, %v2251
      %v2253 = vpop.f32.mrf.mxu0
      %2254 = vmatprep.mubr.bf16.mxu0 0
      %2255 = vmatmul.mubr.bf16.gmra.mxu0 %v2076
      %v2256 = vpop.f32.mrf.mxu0
      %v2257 = vadd.f32 0.0, %v2256
      %v2258 = vpop.f32.mrf.mxu0
      %v2259 = vpop.f32.mrf.mxu0
      %v2260 = vadd.f32 0.0, %v2259
      %v2261 = vpop.f32.mrf.mxu0
      %2262 = vmatprep.mubr.bf16.mxu0 0
      %2263 = vmatmul.mubr.bf16.gmra.mxu0 %v2079
      %v2264 = vpop.f32.mrf.mxu0
      %v2265 = vadd.f32 0.0, %v2264
      %v2266 = vpop.f32.mrf.mxu0
      %v2267 = vpop.f32.mrf.mxu0
      %v2268 = vadd.f32 0.0, %v2267
      %v2269 = vpop.f32.mrf.mxu0
      %2270 = vmatprep.mubr.bf16.mxu0 0
      %2271 = vmatmul.mubr.bf16.gmra.mxu0 %v2082
      %v2272 = vpop.f32.mrf.mxu0
      %v2273 = vadd.f32 0.0, %v2272
      %v2274 = vpop.f32.mrf.mxu0
      %v2275 = vpop.f32.mrf.mxu0
      %v2276 = vadd.f32 0.0, %v2275
      %v2277 = vpop.f32.mrf.mxu0
      %2278 = vmatprep.mubr.bf16.mxu0 0
      %2279 = vmatmul.mubr.bf16.gmra.mxu0 %v2085
      %v2280 = vpop.f32.mrf.mxu0
      %v2281 = vadd.f32 0.0, %v2280
      %v2282 = vpop.f32.mrf.mxu0
      %v2283 = vpop.f32.mrf.mxu0
      %v2284 = vadd.f32 0.0, %v2283
      %v2285 = vpop.f32.mrf.mxu0
      %2286 = vmatprep.mubr.bf16.mxu0 0
      %2287 = vmatmul.mubr.bf16.gmra.mxu0 %v2088
      %v2288 = vpop.f32.mrf.mxu0
      %v2289 = vadd.f32 0.0, %v2288
      %v2290 = vpop.f32.mrf.mxu0
      %v2291 = vpop.f32.mrf.mxu0
      %v2292 = vadd.f32 0.0, %v2291
      %v2293 = vpop.f32.mrf.mxu0
      %2294 = vmatprep.mubr.bf16.mxu0 0
      %2295 = vmatmul.mubr.bf16.gmra.mxu0 %v2091
      %v2296 = vpop.f32.mrf.mxu0
      %v2297 = vadd.f32 0.0, %v2296
      %v2298 = vpop.f32.mrf.mxu0
      %v2299 = vpop.f32.mrf.mxu0
      %v2300 = vadd.f32 0.0, %v2299
      %v2301 = vpop.f32.mrf.mxu0
      %2302 = vmatprep.mubr.bf16.mxu0 0
      %2303 = vmatmul.mubr.bf16.gmra.mxu0 %v2094
      %v2304 = vpop.f32.mrf.mxu0
      %v2305 = vadd.f32 0.0, %v2304
      %v2306 = vpop.f32.mrf.mxu0
      %v2307 = vpop.f32.mrf.mxu0
      %v2308 = vadd.f32 0.0, %v2307
      %v2309 = vpop.f32.mrf.mxu0
      %2310 = vmatprep.mubr.bf16.mxu0 0
      %2311 = vmatmul.mubr.bf16.gmra.mxu0 %v2097
      %v2312 = vpop.f32.mrf.mxu0
      %v2313 = vadd.f32 0.0, %v2312
      %v2314 = vpop.f32.mrf.mxu0
      %v2315 = vpop.f32.mrf.mxu0
      %v2316 = vpop.f32.mrf.mxu0
      %2317 = vdwg.mxu0
      %v2318 = vadd.f32 %v1915, %v2137
      %v2319 = vadd.f32 %v1916, %v2140
      %v2320 = vadd.f32 %v1917, %v2145
      %v2321 = vadd.f32 %v1918, %v2148
      %v2322 = vadd.f32 %v1919, %v2153
      %v2323 = vadd.f32 %v1920, %v2156
      %v2324 = vadd.f32 %v1921, %v2161
      %v2325 = vadd.f32 %v1922, %v2164
      %v2326 = vadd.f32 %v1923, %v2169
      %v2327 = vadd.f32 %v1924, %v2172
      %v2328 = vadd.f32 %v1925, %v2177
      %v2329 = vadd.f32 %v1926, %v2180
      %v2330 = vadd.f32 %v1927, %v2185
      %v2331 = vadd.f32 %v1928, %v2188
      %v2332 = vadd.f32 %v1929, %v2193
      %v2333 = vadd.f32 %v1930, %v2196
      %v2334 = vadd.f32 %v1931, %v2201
      %v2335 = vadd.f32 %v1932, %v2204
      %v2336 = vadd.f32 %v1933, %v2209
      %v2337 = vadd.f32 %v1934, %v2212
      %v2338 = vadd.f32 %v1935, %v2217
      %v2339 = vadd.f32 %v1936, %v2220
      %v2340 = vadd.f32 %v1937, %v2225
      %v2341 = vadd.f32 %v1938, %v2228
      %v2342 = vadd.f32 %v1939, %v2233
      %v2343 = vadd.f32 %v1940, %v2236
      %v2344 = vadd.f32 %v1941, %v2241
      %v2345 = vadd.f32 %v1942, %v2244
      %v2346 = vadd.f32 %v1943, %v2249
      %v2347 = vadd.f32 %v1944, %v2252
      %v2348 = vadd.f32 %v1945, %v2257
      %v2349 = vadd.f32 %v1946, %v2260
      %v2350 = vadd.f32 %v1947, %v2265
      %v2351 = vadd.f32 %v1948, %v2268
      %v2352 = vadd.f32 %v1949, %v2273
      %v2353 = vadd.f32 %v1950, %v2276
      %v2354 = vadd.f32 %v1951, %v2281
      %v2355 = vadd.f32 %v1952, %v2284
      %v2356 = vadd.f32 %v1953, %v2289
      %v2357 = vadd.f32 %v1954, %v2292
      %v2358 = vadd.f32 %v1955, %v2297
      %v2359 = vadd.f32 %v1956, %v2300
      %v2360 = vadd.f32 %v1957, %v2305
      %v2361 = vadd.f32 %v1958, %v2308
      %v2362 = vadd.f32 %v1959, %v2313
      %v2363 = vld [vmem:[#allocation2 + $0x14] sm:$0xff]
      %v2364 = vld [vmem:[#allocation2 + $0x1c] sm:$0xff]
      %v2365 = vld [vmem:[#allocation2 + $0x24] sm:$0xff]
      %v2366 = vld [vmem:[#allocation2 + $0x2c] sm:$0xff]
      %v2367 = vld [vmem:[#allocation2 + $0x34] sm:$0xff]
      %v2368 = vld [vmem:[#allocation2 + $0x3c] sm:$0xff]
      %v2369 = vld [vmem:[#allocation2 + $0x44] sm:$0xff]
      %v2370 = vld [vmem:[#allocation2 + $0x4c] sm:$0xff]
      %v2371 = vld [vmem:[#allocation2 + $0x54] sm:$0xff]
      %v2372 = vld [vmem:[#allocation2 + $0x5c] sm:$0xff]
      %v2373 = vld [vmem:[#allocation2 + $0x64] sm:$0xff]
      %v2374 = vld [vmem:[#allocation2 + $0x6c] sm:$0xff]
      %v2375 = vld [vmem:[#allocation2 + $0x74] sm:$0xff]
      %v2376 = vld [vmem:[#allocation2 + $0x7c] sm:$0xff]
      %v2377 = vld [vmem:[#allocation2 + $0x84] sm:$0xff]
      %v2378 = vld [vmem:[#allocation2 + $0x8c] sm:$0xff]
      %v2379 = vld [vmem:[#allocation2 + $0x94] sm:$0xff]
      %v2380 = vld [vmem:[#allocation2 + $0x9c] sm:$0xff]
      %v2381 = vld [vmem:[#allocation2 + $0xa4] sm:$0xff]
      %v2382 = vld [vmem:[#allocation2 + $0xac] sm:$0xff]
      %v2383 = vld [vmem:[#allocation2 + $0xb4] sm:$0xff]
      %v2384 = vld [vmem:[#allocation2 + $0xbc] sm:$0xff]
      %v2385 = vld [vmem:[#allocation2 + $0xc4] sm:$0xff]
      %v2386 = vld [vmem:[#allocation2 + $0xcc] sm:$0xff]
      %v2387 = vld [vmem:[#allocation2 + $0xd4] sm:$0xff]
      %v2388 = vld [vmem:[#allocation2 + $0xdc] sm:$0xff]
      %v2389 = vld [vmem:[#allocation2 + $0xe4] sm:$0xff]
      %v2390 = vld [vmem:[#allocation2 + $0xec] sm:$0xff]
      %v2391 = vld [vmem:[#allocation2 + $0xf4] sm:$0xff]
      %v2392 = vld [vmem:[#allocation2 + $0xfc] sm:$0xff]
      %v2393 = vld [vmem:[#allocation2 + $0x104] sm:$0xff]
      %v2394 = vld [vmem:[#allocation2 + $0x10c] sm:$0xff]
      %v2395 = vld [vmem:[#allocation2 + $0x114] sm:$0xff]
      %v2396 = vld [vmem:[#allocation2 + $0x11c] sm:$0xff]
      %v2397 = vld [vmem:[#allocation2 + $0x124] sm:$0xff]
      %v2398 = vld [vmem:[#allocation2 + $0x12c] sm:$0xff]
      %v2399 = vld [vmem:[#allocation2 + $0x134] sm:$0xff]
      %v2400 = vld [vmem:[#allocation2 + $0x13c] sm:$0xff]
      %v2401 = vld [vmem:[#allocation2 + $0x144] sm:$0xff]
      %v2402 = vld [vmem:[#allocation2 + $0x14c] sm:$0xff]
      %v2403 = vld [vmem:[#allocation2 + $0x154] sm:$0xff]
      %v2404 = vld [vmem:[#allocation2 + $0x15c] sm:$0xff]
      %v2405 = vld [vmem:[#allocation2 + $0x164] sm:$0xff]
      %v2406 = vld [vmem:[#allocation2 + $0x16c] sm:$0xff]
      %v2407 = vld [vmem:[#allocation2 + $0x174] sm:$0xff]
      %v2408 = vpack.c.bf16 %v2364, %v2363
      %v2409 = vpack.c.bf16 %v2366, %v2365
      %v2410 = vpack.c.bf16 %v2368, %v2367
      %v2411 = vpack.c.bf16 %v2370, %v2369
      %v2412 = vpack.c.bf16 %v2372, %v2371
      %v2413 = vpack.c.bf16 %v2374, %v2373
      %v2414 = vpack.c.bf16 %v2376, %v2375
      %v2415 = vpack.c.bf16 %v2378, %v2377
      %v2416 = vpack.c.bf16 %v2380, %v2379
      %v2417 = vpack.c.bf16 %v2382, %v2381
      %v2418 = vpack.c.bf16 %v2384, %v2383
      %v2419 = vpack.c.bf16 %v2386, %v2385
      %v2420 = vpack.c.bf16 %v2388, %v2387
      %v2421 = vpack.c.bf16 %v2390, %v2389
      %v2422 = vpack.c.bf16 %v2392, %v2391
      %v2423 = vpack.c.bf16 %v2394, %v2393
      %v2424 = vpack.c.bf16 %v2396, %v2395
      %v2425 = vpack.c.bf16 %v2398, %v2397
      %v2426 = vpack.c.bf16 %v2400, %v2399
      %v2427 = vpack.c.bf16 %v2402, %v2401
      %v2428 = vpack.c.bf16 %v2404, %v2403
      %v2429 = vpack.c.bf16 %v2406, %v2405
      %v2430 = vpack.c.bf16 %v2407, %v2407
      %s2431 = scalar_lea.vmem %s2, 10
      %v2432 = vld [vmem:[%s2431] sm:$0x3]
      %v2434 = vsel %vm377, %v2408, 0
      %v2437 = vsel %vm377, %v2409, 0
      %v2440 = vsel %vm377, %v2410, 0
      %v2443 = vsel %vm377, %v2411, 0
      %v2446 = vsel %vm377, %v2412, 0
      %v2449 = vsel %vm377, %v2413, 0
      %v2452 = vsel %vm377, %v2414, 0
      %v2455 = vsel %vm377, %v2415, 0
      %v2458 = vsel %vm377, %v2416, 0
      %v2461 = vsel %vm377, %v2417, 0
      %v2464 = vsel %vm377, %v2418, 0
      %v2467 = vsel %vm377, %v2419, 0
      %v2470 = vsel %vm377, %v2420, 0
      %v2473 = vsel %vm377, %v2421, 0
      %v2476 = vsel %vm377, %v2422, 0
      %v2479 = vsel %vm377, %v2423, 0
      %v2482 = vsel %vm377, %v2424, 0
      %v2485 = vsel %vm377, %v2425, 0
      %v2488 = vsel %vm377, %v2426, 0
      %v2491 = vsel %vm377, %v2427, 0
      %v2494 = vsel %vm377, %v2428, 0
      %v2497 = vsel %vm377, %v2429, 0
      %v2500 = vsel %vm377, %v2430, 0
      %v2503 = vsel %vm646, %v2432, 0
      %2505 = vmatprep.subr.bf16.mxu0 0
      %2506 = vmatpush1.bf16.msra.mxu0 0
      %2507 = vmatprep.subr.bf16.mxu0 0
      %2508 = vmatpush1.bf16.msra.mxu0 0
      %2509 = vmatprep.subr.bf16.mxu0 0
      %2510 = vmatpush1.bf16.msra.mxu0 0
      %2511 = vmatprep.subr.bf16.mxu0 0
      %2512 = vmatpush1.bf16.msra.mxu0 0
      %2513 = vmatprep.subr.bf16.mxu0 0
      %2514 = vmatpush1.bf16.msra.mxu0 0
      %2515 = vmatprep.subr.bf16.mxu0 0
      %2516 = vmatpush1.bf16.msra.mxu0 0
      %2517 = vmatprep.subr.bf16.mxu0 0
      %2518 = vmatpush1.bf16.msra.mxu0 0
      %2519 = vmatprep.subr.bf16.mxu0 0
      %2520 = vmatpush1.bf16.msra.mxu0 %v2503
      %2521 = vmatprep.subr.bf16.mxu0 0
      %2522 = vmatpush2.bf16.msra.mxu0 0
      %2523 = vmatprep.subr.bf16.mxu0 0
      %2524 = vmatpush2.bf16.msra.mxu0 0
      %2525 = vmatprep.subr.bf16.mxu0 0
      %2526 = vmatpush2.bf16.msra.mxu0 0
      %2527 = vmatprep.subr.bf16.mxu0 0
      %2528 = vmatpush2.bf16.msra.mxu0 0
      %2529 = vmatprep.subr.bf16.mxu0 0
      %2530 = vmatpush2.bf16.msra.mxu0 0
      %2531 = vmatprep.subr.bf16.mxu0 0
      %2532 = vmatpush2.bf16.msra.mxu0 0
      %2533 = vmatprep.subr.bf16.mxu0 0
      %2534 = vmatpush2.bf16.msra.mxu0 0
      %2535 = vmatprep.subr.bf16.mxu0 0
      %2536 = vmatpush2.bf16.msra.mxu0 0
      %2537 = vmatprep.mubr.bf16.mxu0 0
      %2538 = vmatmul.mubr.bf16.gmra.mxu0 %v2434
      %v2539 = vpop.f32.mrf.mxu0
      %v2540 = vadd.f32 0.0, %v2539
      %v2541 = vpop.f32.mrf.mxu0
      %v2542 = vpop.f32.mrf.mxu0
      %v2543 = vadd.f32 0.0, %v2542
      %v2544 = vpop.f32.mrf.mxu0
      %2545 = vmatprep.mubr.bf16.mxu0 0
      %2546 = vmatmul.mubr.bf16.gmra.mxu0 %v2437
      %v2547 = vpop.f32.mrf.mxu0
      %v2548 = vadd.f32 0.0, %v2547
      %v2549 = vpop.f32.mrf.mxu0
      %v2550 = vpop.f32.mrf.mxu0
      %v2551 = vadd.f32 0.0, %v2550
      %v2552 = vpop.f32.mrf.mxu0
      %2553 = vmatprep.mubr.bf16.mxu0 0
      %2554 = vmatmul.mubr.bf16.gmra.mxu0 %v2440
      %v2555 = vpop.f32.mrf.mxu0
      %v2556 = vadd.f32 0.0, %v2555
      %v2557 = vpop.f32.mrf.mxu0
      %v2558 = vpop.f32.mrf.mxu0
      %v2559 = vadd.f32 0.0, %v2558
      %v2560 = vpop.f32.mrf.mxu0
      %2561 = vmatprep.mubr.bf16.mxu0 0
      %2562 = vmatmul.mubr.bf16.gmra.mxu0 %v2443
      %v2563 = vpop.f32.mrf.mxu0
      %v2564 = vadd.f32 0.0, %v2563
      %v2565 = vpop.f32.mrf.mxu0
      %v2566 = vpop.f32.mrf.mxu0
      %v2567 = vadd.f32 0.0, %v2566
      %v2568 = vpop.f32.mrf.mxu0
      %2569 = vmatprep.mubr.bf16.mxu0 0
      %2570 = vmatmul.mubr.bf16.gmra.mxu0 %v2446
      %v2571 = vpop.f32.mrf.mxu0
      %v2572 = vadd.f32 0.0, %v2571
      %v2573 = vpop.f32.mrf.mxu0
      %v2574 = vpop.f32.mrf.mxu0
      %v2575 = vadd.f32 0.0, %v2574
      %v2576 = vpop.f32.mrf.mxu0
      %2577 = vmatprep.mubr.bf16.mxu0 0
      %2578 = vmatmul.mubr.bf16.gmra.mxu0 %v2449
      %v2579 = vpop.f32.mrf.mxu0
      %v2580 = vadd.f32 0.0, %v2579
      %v2581 = vpop.f32.mrf.mxu0
      %v2582 = vpop.f32.mrf.mxu0
      %v2583 = vadd.f32 0.0, %v2582
      %v2584 = vpop.f32.mrf.mxu0
      %2585 = vmatprep.mubr.bf16.mxu0 0
      %2586 = vmatmul.mubr.bf16.gmra.mxu0 %v2452
      %v2587 = vpop.f32.mrf.mxu0
      %v2588 = vadd.f32 0.0, %v2587
      %v2589 = vpop.f32.mrf.mxu0
      %v2590 = vpop.f32.mrf.mxu0
      %v2591 = vadd.f32 0.0, %v2590
      %v2592 = vpop.f32.mrf.mxu0
      %2593 = vmatprep.mubr.bf16.mxu0 0
      %2594 = vmatmul.mubr.bf16.gmra.mxu0 %v2455
      %v2595 = vpop.f32.mrf.mxu0
      %v2596 = vadd.f32 0.0, %v2595
      %v2597 = vpop.f32.mrf.mxu0
      %v2598 = vpop.f32.mrf.mxu0
      %v2599 = vadd.f32 0.0, %v2598
      %v2600 = vpop.f32.mrf.mxu0
      %2601 = vmatprep.mubr.bf16.mxu0 0
      %2602 = vmatmul.mubr.bf16.gmra.mxu0 %v2458
      %v2603 = vpop.f32.mrf.mxu0
      %v2604 = vadd.f32 0.0, %v2603
      %v2605 = vpop.f32.mrf.mxu0
      %v2606 = vpop.f32.mrf.mxu0
      %v2607 = vadd.f32 0.0, %v2606
      %v2608 = vpop.f32.mrf.mxu0
      %2609 = vmatprep.mubr.bf16.mxu0 0
      %2610 = vmatmul.mubr.bf16.gmra.mxu0 %v2461
      %v2611 = vpop.f32.mrf.mxu0
      %v2612 = vadd.f32 0.0, %v2611
      %v2613 = vpop.f32.mrf.mxu0
      %v2614 = vpop.f32.mrf.mxu0
      %v2615 = vadd.f32 0.0, %v2614
      %v2616 = vpop.f32.mrf.mxu0
      %2617 = vmatprep.mubr.bf16.mxu0 0
      %2618 = vmatmul.mubr.bf16.gmra.mxu0 %v2464
      %v2619 = vpop.f32.mrf.mxu0
      %v2620 = vadd.f32 0.0, %v2619
      %v2621 = vpop.f32.mrf.mxu0
      %v2622 = vpop.f32.mrf.mxu0
      %v2623 = vadd.f32 0.0, %v2622
      %v2624 = vpop.f32.mrf.mxu0
      %2625 = vmatprep.mubr.bf16.mxu0 0
      %2626 = vmatmul.mubr.bf16.gmra.mxu0 %v2467
      %v2627 = vpop.f32.mrf.mxu0
      %v2628 = vadd.f32 0.0, %v2627
      %v2629 = vpop.f32.mrf.mxu0
      %v2630 = vpop.f32.mrf.mxu0
      %v2631 = vadd.f32 0.0, %v2630
      %v2632 = vpop.f32.mrf.mxu0
      %2633 = vmatprep.mubr.bf16.mxu0 0
      %2634 = vmatmul.mubr.bf16.gmra.mxu0 %v2470
      %v2635 = vpop.f32.mrf.mxu0
      %v2636 = vadd.f32 0.0, %v2635
      %v2637 = vpop.f32.mrf.mxu0
      %v2638 = vpop.f32.mrf.mxu0
      %v2639 = vadd.f32 0.0, %v2638
      %v2640 = vpop.f32.mrf.mxu0
      %2641 = vmatprep.mubr.bf16.mxu0 0
      %2642 = vmatmul.mubr.bf16.gmra.mxu0 %v2473
      %v2643 = vpop.f32.mrf.mxu0
      %v2644 = vadd.f32 0.0, %v2643
      %v2645 = vpop.f32.mrf.mxu0
      %v2646 = vpop.f32.mrf.mxu0
      %v2647 = vadd.f32 0.0, %v2646
      %v2648 = vpop.f32.mrf.mxu0
      %2649 = vmatprep.mubr.bf16.mxu0 0
      %2650 = vmatmul.mubr.bf16.gmra.mxu0 %v2476
      %v2651 = vpop.f32.mrf.mxu0
      %v2652 = vadd.f32 0.0, %v2651
      %v2653 = vpop.f32.mrf.mxu0
      %v2654 = vpop.f32.mrf.mxu0
      %v2655 = vadd.f32 0.0, %v2654
      %v2656 = vpop.f32.mrf.mxu0
      %2657 = vmatprep.mubr.bf16.mxu0 0
      %2658 = vmatmul.mubr.bf16.gmra.mxu0 %v2479
      %v2659 = vpop.f32.mrf.mxu0
      %v2660 = vadd.f32 0.0, %v2659
      %v2661 = vpop.f32.mrf.mxu0
      %v2662 = vpop.f32.mrf.mxu0
      %v2663 = vadd.f32 0.0, %v2662
      %v2664 = vpop.f32.mrf.mxu0
      %2665 = vmatprep.mubr.bf16.mxu0 0
      %2666 = vmatmul.mubr.bf16.gmra.mxu0 %v2482
      %v2667 = vpop.f32.mrf.mxu0
      %v2668 = vadd.f32 0.0, %v2667
      %v2669 = vpop.f32.mrf.mxu0
      %v2670 = vpop.f32.mrf.mxu0
      %v2671 = vadd.f32 0.0, %v2670
      %v2672 = vpop.f32.mrf.mxu0
      %2673 = vmatprep.mubr.bf16.mxu0 0
      %2674 = vmatmul.mubr.bf16.gmra.mxu0 %v2485
      %v2675 = vpop.f32.mrf.mxu0
      %v2676 = vadd.f32 0.0, %v2675
      %v2677 = vpop.f32.mrf.mxu0
      %v2678 = vpop.f32.mrf.mxu0
      %v2679 = vadd.f32 0.0, %v2678
      %v2680 = vpop.f32.mrf.mxu0
      %2681 = vmatprep.mubr.bf16.mxu0 0
      %2682 = vmatmul.mubr.bf16.gmra.mxu0 %v2488
      %v2683 = vpop.f32.mrf.mxu0
      %v2684 = vadd.f32 0.0, %v2683
      %v2685 = vpop.f32.mrf.mxu0
      %v2686 = vpop.f32.mrf.mxu0
      %v2687 = vadd.f32 0.0, %v2686
      %v2688 = vpop.f32.mrf.mxu0
      %2689 = vmatprep.mubr.bf16.mxu0 0
      %2690 = vmatmul.mubr.bf16.gmra.mxu0 %v2491
      %v2691 = vpop.f32.mrf.mxu0
      %v2692 = vadd.f32 0.0, %v2691
      %v2693 = vpop.f32.mrf.mxu0
      %v2694 = vpop.f32.mrf.mxu0
      %v2695 = vadd.f32 0.0, %v2694
      %v2696 = vpop.f32.mrf.mxu0
      %2697 = vmatprep.mubr.bf16.mxu0 0
      %2698 = vmatmul.mubr.bf16.gmra.mxu0 %v2494
      %v2699 = vpop.f32.mrf.mxu0
      %v2700 = vadd.f32 0.0, %v2699
      %v2701 = vpop.f32.mrf.mxu0
      %v2702 = vpop.f32.mrf.mxu0
      %v2703 = vadd.f32 0.0, %v2702
      %v2704 = vpop.f32.mrf.mxu0
      %2705 = vmatprep.mubr.bf16.mxu0 0
      %2706 = vmatmul.mubr.bf16.gmra.mxu0 %v2497
      %v2707 = vpop.f32.mrf.mxu0
      %v2708 = vadd.f32 0.0, %v2707
      %v2709 = vpop.f32.mrf.mxu0
      %v2710 = vpop.f32.mrf.mxu0
      %v2711 = vadd.f32 0.0, %v2710
      %v2712 = vpop.f32.mrf.mxu0
      %2713 = vmatprep.mubr.bf16.mxu0 0
      %2714 = vmatmul.mubr.bf16.gmra.mxu0 %v2500
      %v2715 = vpop.f32.mrf.mxu0
      %v2716 = vadd.f32 0.0, %v2715
      %v2717 = vpop.f32.mrf.mxu0
      %v2718 = vpop.f32.mrf.mxu0
      %v2719 = vpop.f32.mrf.mxu0
      %2720 = vdwg.mxu0
      %v2721 = vadd.f32 %v2318, %v2540
      %v2722 = vadd.f32 %v2319, %v2543
      %v2723 = vadd.f32 %v2320, %v2548
      %v2724 = vadd.f32 %v2321, %v2551
      %v2725 = vadd.f32 %v2322, %v2556
      %v2726 = vadd.f32 %v2323, %v2559
      %v2727 = vadd.f32 %v2324, %v2564
      %v2728 = vadd.f32 %v2325, %v2567
      %v2729 = vadd.f32 %v2326, %v2572
      %v2730 = vadd.f32 %v2327, %v2575
      %v2731 = vadd.f32 %v2328, %v2580
      %v2732 = vadd.f32 %v2329, %v2583
      %v2733 = vadd.f32 %v2330, %v2588
      %v2734 = vadd.f32 %v2331, %v2591
      %v2735 = vadd.f32 %v2332, %v2596
      %v2736 = vadd.f32 %v2333, %v2599
      %v2737 = vadd.f32 %v2334, %v2604
      %v2738 = vadd.f32 %v2335, %v2607
      %v2739 = vadd.f32 %v2336, %v2612
      %v2740 = vadd.f32 %v2337, %v2615
      %v2741 = vadd.f32 %v2338, %v2620
      %v2742 = vadd.f32 %v2339, %v2623
      %v2743 = vadd.f32 %v2340, %v2628
      %v2744 = vadd.f32 %v2341, %v2631
      %v2745 = vadd.f32 %v2342, %v2636
      %v2746 = vadd.f32 %v2343, %v2639
      %v2747 = vadd.f32 %v2344, %v2644
      %v2748 = vadd.f32 %v2345, %v2647
      %v2749 = vadd.f32 %v2346, %v2652
      %v2750 = vadd.f32 %v2347, %v2655
      %v2751 = vadd.f32 %v2348, %v2660
      %v2752 = vadd.f32 %v2349, %v2663
      %v2753 = vadd.f32 %v2350, %v2668
      %v2754 = vadd.f32 %v2351, %v2671
      %v2755 = vadd.f32 %v2352, %v2676
      %v2756 = vadd.f32 %v2353, %v2679
      %v2757 = vadd.f32 %v2354, %v2684
      %v2758 = vadd.f32 %v2355, %v2687
      %v2759 = vadd.f32 %v2356, %v2692
      %v2760 = vadd.f32 %v2357, %v2695
      %v2761 = vadd.f32 %v2358, %v2700
      %v2762 = vadd.f32 %v2359, %v2703
      %v2763 = vadd.f32 %v2360, %v2708
      %v2764 = vadd.f32 %v2361, %v2711
      %v2765 = vadd.f32 %v2362, %v2716
      %v2766 = vld [vmem:[#allocation2 + $0x24] sm:$0xff]
      %v2767 = vld [vmem:[#allocation2 + $0x2c] sm:$0xff]
      %v2768 = vld [vmem:[#allocation2 + $0x34] sm:$0xff]
      %v2769 = vld [vmem:[#allocation2 + $0x3c] sm:$0xff]
      %v2770 = vld [vmem:[#allocation2 + $0x44] sm:$0xff]
      %v2771 = vld [vmem:[#allocation2 + $0x4c] sm:$0xff]
      %v2772 = vld [vmem:[#allocation2 + $0x54] sm:$0xff]
      %v2773 = vld [vmem:[#allocation2 + $0x5c] sm:$0xff]
      %v2774 = vld [vmem:[#allocation2 + $0x64] sm:$0xff]
      %v2775 = vld [vmem:[#allocation2 + $0x6c] sm:$0xff]
      %v2776 = vld [vmem:[#allocation2 + $0x74] sm:$0xff]
      %v2777 = vld [vmem:[#allocation2 + $0x7c] sm:$0xff]
      %v2778 = vld [vmem:[#allocation2 + $0x84] sm:$0xff]
      %v2779 = vld [vmem:[#allocation2 + $0x8c] sm:$0xff]
      %v2780 = vld [vmem:[#allocation2 + $0x94] sm:$0xff]
      %v2781 = vld [vmem:[#allocation2 + $0x9c] sm:$0xff]
      %v2782 = vld [vmem:[#allocation2 + $0xa4] sm:$0xff]
      %v2783 = vld [vmem:[#allocation2 + $0xac] sm:$0xff]
      %v2784 = vld [vmem:[#allocation2 + $0xb4] sm:$0xff]
      %v2785 = vld [vmem:[#allocation2 + $0xbc] sm:$0xff]
      %v2786 = vld [vmem:[#allocation2 + $0xc4] sm:$0xff]
      %v2787 = vld [vmem:[#allocation2 + $0xcc] sm:$0xff]
      %v2788 = vld [vmem:[#allocation2 + $0xd4] sm:$0xff]
      %v2789 = vld [vmem:[#allocation2 + $0xdc] sm:$0xff]
      %v2790 = vld [vmem:[#allocation2 + $0xe4] sm:$0xff]
      %v2791 = vld [vmem:[#allocation2 + $0xec] sm:$0xff]
      %v2792 = vld [vmem:[#allocation2 + $0xf4] sm:$0xff]
      %v2793 = vld [vmem:[#allocation2 + $0xfc] sm:$0xff]
      %v2794 = vld [vmem:[#allocation2 + $0x104] sm:$0xff]
      %v2795 = vld [vmem:[#allocation2 + $0x10c] sm:$0xff]
      %v2796 = vld [vmem:[#allocation2 + $0x114] sm:$0xff]
      %v2797 = vld [vmem:[#allocation2 + $0x11c] sm:$0xff]
      %v2798 = vld [vmem:[#allocation2 + $0x124] sm:$0xff]
      %v2799 = vld [vmem:[#allocation2 + $0x12c] sm:$0xff]
      %v2800 = vld [vmem:[#allocation2 + $0x134] sm:$0xff]
      %v2801 = vld [vmem:[#allocation2 + $0x13c] sm:$0xff]
      %v2802 = vld [vmem:[#allocation2 + $0x144] sm:$0xff]
      %v2803 = vld [vmem:[#allocation2 + $0x14c] sm:$0xff]
      %v2804 = vld [vmem:[#allocation2 + $0x154] sm:$0xff]
      %v2805 = vld [vmem:[#allocation2 + $0x15c] sm:$0xff]
      %v2806 = vld [vmem:[#allocation2 + $0x164] sm:$0xff]
      %v2807 = vld [vmem:[#allocation2 + $0x16c] sm:$0xff]
      %v2808 = vld [vmem:[#allocation2 + $0x174] sm:$0xff]
      %v2809 = vld [vmem:[#allocation2 + $0x17c] sm:$0xff]
      %v2810 = vld [vmem:[#allocation2 + $0x184] sm:$0xff]
      %v2811 = vpack.c.bf16 %v2767, %v2766
      %v2812 = vpack.c.bf16 %v2769, %v2768
      %v2813 = vpack.c.bf16 %v2771, %v2770
      %v2814 = vpack.c.bf16 %v2773, %v2772
      %v2815 = vpack.c.bf16 %v2775, %v2774
      %v2816 = vpack.c.bf16 %v2777, %v2776
      %v2817 = vpack.c.bf16 %v2779, %v2778
      %v2818 = vpack.c.bf16 %v2781, %v2780
      %v2819 = vpack.c.bf16 %v2783, %v2782
      %v2820 = vpack.c.bf16 %v2785, %v2784
      %v2821 = vpack.c.bf16 %v2787, %v2786
      %v2822 = vpack.c.bf16 %v2789, %v2788
      %v2823 = vpack.c.bf16 %v2791, %v2790
      %v2824 = vpack.c.bf16 %v2793, %v2792
      %v2825 = vpack.c.bf16 %v2795, %v2794
      %v2826 = vpack.c.bf16 %v2797, %v2796
      %v2827 = vpack.c.bf16 %v2799, %v2798
      %v2828 = vpack.c.bf16 %v2801, %v2800
      %v2829 = vpack.c.bf16 %v2803, %v2802
      %v2830 = vpack.c.bf16 %v2805, %v2804
      %v2831 = vpack.c.bf16 %v2807, %v2806
      %v2832 = vpack.c.bf16 %v2809, %v2808
      %v2833 = vpack.c.bf16 %v2810, %v2810
      %s2834 = scalar_lea.vmem %s2, 12
      %v2835 = vld [vmem:[%s2834] sm:$0x3]
      %v2837 = vsel %vm377, %v2811, 0
      %v2840 = vsel %vm377, %v2812, 0
      %v2843 = vsel %vm377, %v2813, 0
      %v2846 = vsel %vm377, %v2814, 0
      %v2849 = vsel %vm377, %v2815, 0
      %v2852 = vsel %vm377, %v2816, 0
      %v2855 = vsel %vm377, %v2817, 0
      %v2858 = vsel %vm377, %v2818, 0
      %v2861 = vsel %vm377, %v2819, 0
      %v2864 = vsel %vm377, %v2820, 0
      %v2867 = vsel %vm377, %v2821, 0
      %v2870 = vsel %vm377, %v2822, 0
      %v2873 = vsel %vm377, %v2823, 0
      %v2876 = vsel %vm377, %v2824, 0
      %v2879 = vsel %vm377, %v2825, 0
      %v2882 = vsel %vm377, %v2826, 0
      %v2885 = vsel %vm377, %v2827, 0
      %v2888 = vsel %vm377, %v2828, 0
      %v2891 = vsel %vm377, %v2829, 0
      %v2894 = vsel %vm377, %v2830, 0
      %v2897 = vsel %vm377, %v2831, 0
      %v2900 = vsel %vm377, %v2832, 0
      %v2903 = vsel %vm377, %v2833, 0
      %v2906 = vsel %vm646, %v2835, 0
      %2908 = vmatprep.subr.bf16.mxu0 0
      %2909 = vmatpush1.bf16.msra.mxu0 0
      %2910 = vmatprep.subr.bf16.mxu0 0
      %2911 = vmatpush1.bf16.msra.mxu0 0
      %2912 = vmatprep.subr.bf16.mxu0 0
      %2913 = vmatpush1.bf16.msra.mxu0 0
      %2914 = vmatprep.subr.bf16.mxu0 0
      %2915 = vmatpush1.bf16.msra.mxu0 0
      %2916 = vmatprep.subr.bf16.mxu0 0
      %2917 = vmatpush1.bf16.msra.mxu0 0
      %2918 = vmatprep.subr.bf16.mxu0 0
      %2919 = vmatpush1.bf16.msra.mxu0 0
      %2920 = vmatprep.subr.bf16.mxu0 0
      %2921 = vmatpush1.bf16.msra.mxu0 0
      %2922 = vmatprep.subr.bf16.mxu0 0
      %2923 = vmatpush1.bf16.msra.mxu0 %v2906
      %2924 = vmatprep.subr.bf16.mxu0 0
      %2925 = vmatpush2.bf16.msra.mxu0 0
      %2926 = vmatprep.subr.bf16.mxu0 0
      %2927 = vmatpush2.bf16.msra.mxu0 0
      %2928 = vmatprep.subr.bf16.mxu0 0
      %2929 = vmatpush2.bf16.msra.mxu0 0
      %2930 = vmatprep.subr.bf16.mxu0 0
      %2931 = vmatpush2.bf16.msra.mxu0 0
      %2932 = vmatprep.subr.bf16.mxu0 0
      %2933 = vmatpush2.bf16.msra.mxu0 0
      %2934 = vmatprep.subr.bf16.mxu0 0
      %2935 = vmatpush2.bf16.msra.mxu0 0
      %2936 = vmatprep.subr.bf16.mxu0 0
      %2937 = vmatpush2.bf16.msra.mxu0 0
      %2938 = vmatprep.subr.bf16.mxu0 0
      %2939 = vmatpush2.bf16.msra.mxu0 0
      %2940 = vmatprep.mubr.bf16.mxu0 0
      %2941 = vmatmul.mubr.bf16.gmra.mxu0 %v2837
      %v2942 = vpop.f32.mrf.mxu0
      %v2943 = vadd.f32 0.0, %v2942
      %v2944 = vpop.f32.mrf.mxu0
      %v2945 = vpop.f32.mrf.mxu0
      %v2946 = vadd.f32 0.0, %v2945
      %v2947 = vpop.f32.mrf.mxu0
      %2948 = vmatprep.mubr.bf16.mxu0 0
      %2949 = vmatmul.mubr.bf16.gmra.mxu0 %v2840
      %v2950 = vpop.f32.mrf.mxu0
      %v2951 = vadd.f32 0.0, %v2950
      %v2952 = vpop.f32.mrf.mxu0
      %v2953 = vpop.f32.mrf.mxu0
      %v2954 = vadd.f32 0.0, %v2953
      %v2955 = vpop.f32.mrf.mxu0
      %2956 = vmatprep.mubr.bf16.mxu0 0
      %2957 = vmatmul.mubr.bf16.gmra.mxu0 %v2843
      %v2958 = vpop.f32.mrf.mxu0
      %v2959 = vadd.f32 0.0, %v2958
      %v2960 = vpop.f32.mrf.mxu0
      %v2961 = vpop.f32.mrf.mxu0
      %v2962 = vadd.f32 0.0, %v2961
      %v2963 = vpop.f32.mrf.mxu0
      %2964 = vmatprep.mubr.bf16.mxu0 0
      %2965 = vmatmul.mubr.bf16.gmra.mxu0 %v2846
      %v2966 = vpop.f32.mrf.mxu0
      %v2967 = vadd.f32 0.0, %v2966
      %v2968 = vpop.f32.mrf.mxu0
      %v2969 = vpop.f32.mrf.mxu0
      %v2970 = vadd.f32 0.0, %v2969
      %v2971 = vpop.f32.mrf.mxu0
      %2972 = vmatprep.mubr.bf16.mxu0 0
      %2973 = vmatmul.mubr.bf16.gmra.mxu0 %v2849
      %v2974 = vpop.f32.mrf.mxu0
      %v2975 = vadd.f32 0.0, %v2974
      %v2976 = vpop.f32.mrf.mxu0
      %v2977 = vpop.f32.mrf.mxu0
      %v2978 = vadd.f32 0.0, %v2977
      %v2979 = vpop.f32.mrf.mxu0
      %2980 = vmatprep.mubr.bf16.mxu0 0
      %2981 = vmatmul.mubr.bf16.gmra.mxu0 %v2852
      %v2982 = vpop.f32.mrf.mxu0
      %v2983 = vadd.f32 0.0, %v2982
      %v2984 = vpop.f32.mrf.mxu0
      %v2985 = vpop.f32.mrf.mxu0
      %v2986 = vadd.f32 0.0, %v2985
      %v2987 = vpop.f32.mrf.mxu0
      %2988 = vmatprep.mubr.bf16.mxu0 0
      %2989 = vmatmul.mubr.bf16.gmra.mxu0 %v2855
      %v2990 = vpop.f32.mrf.mxu0
      %v2991 = vadd.f32 0.0, %v2990
      %v2992 = vpop.f32.mrf.mxu0
      %v2993 = vpop.f32.mrf.mxu0
      %v2994 = vadd.f32 0.0, %v2993
      %v2995 = vpop.f32.mrf.mxu0
      %2996 = vmatprep.mubr.bf16.mxu0 0
      %2997 = vmatmul.mubr.bf16.gmra.mxu0 %v2858
      %v2998 = vpop.f32.mrf.mxu0
      %v2999 = vadd.f32 0.0, %v2998
      %v3000 = vpop.f32.mrf.mxu0
      %v3001 = vpop.f32.mrf.mxu0
      %v3002 = vadd.f32 0.0, %v3001
      %v3003 = vpop.f32.mrf.mxu0
      %3004 = vmatprep.mubr.bf16.mxu0 0
      %3005 = vmatmul.mubr.bf16.gmra.mxu0 %v2861
      %v3006 = vpop.f32.mrf.mxu0
      %v3007 = vadd.f32 0.0, %v3006
      %v3008 = vpop.f32.mrf.mxu0
      %v3009 = vpop.f32.mrf.mxu0
      %v3010 = vadd.f32 0.0, %v3009
      %v3011 = vpop.f32.mrf.mxu0
      %3012 = vmatprep.mubr.bf16.mxu0 0
      %3013 = vmatmul.mubr.bf16.gmra.mxu0 %v2864
      %v3014 = vpop.f32.mrf.mxu0
      %v3015 = vadd.f32 0.0, %v3014
      %v3016 = vpop.f32.mrf.mxu0
      %v3017 = vpop.f32.mrf.mxu0
      %v3018 = vadd.f32 0.0, %v3017
      %v3019 = vpop.f32.mrf.mxu0
      %3020 = vmatprep.mubr.bf16.mxu0 0
      %3021 = vmatmul.mubr.bf16.gmra.mxu0 %v2867
      %v3022 = vpop.f32.mrf.mxu0
      %v3023 = vadd.f32 0.0, %v3022
      %v3024 = vpop.f32.mrf.mxu0
      %v3025 = vpop.f32.mrf.mxu0
      %v3026 = vadd.f32 0.0, %v3025
      %v3027 = vpop.f32.mrf.mxu0
      %3028 = vmatprep.mubr.bf16.mxu0 0
      %3029 = vmatmul.mubr.bf16.gmra.mxu0 %v2870
      %v3030 = vpop.f32.mrf.mxu0
      %v3031 = vadd.f32 0.0, %v3030
      %v3032 = vpop.f32.mrf.mxu0
      %v3033 = vpop.f32.mrf.mxu0
      %v3034 = vadd.f32 0.0, %v3033
      %v3035 = vpop.f32.mrf.mxu0
      %3036 = vmatprep.mubr.bf16.mxu0 0
      %3037 = vmatmul.mubr.bf16.gmra.mxu0 %v2873
      %v3038 = vpop.f32.mrf.mxu0
      %v3039 = vadd.f32 0.0, %v3038
      %v3040 = vpop.f32.mrf.mxu0
      %v3041 = vpop.f32.mrf.mxu0
      %v3042 = vadd.f32 0.0, %v3041
      %v3043 = vpop.f32.mrf.mxu0
      %3044 = vmatprep.mubr.bf16.mxu0 0
      %3045 = vmatmul.mubr.bf16.gmra.mxu0 %v2876
      %v3046 = vpop.f32.mrf.mxu0
      %v3047 = vadd.f32 0.0, %v3046
      %v3048 = vpop.f32.mrf.mxu0
      %v3049 = vpop.f32.mrf.mxu0
      %v3050 = vadd.f32 0.0, %v3049
      %v3051 = vpop.f32.mrf.mxu0
      %3052 = vmatprep.mubr.bf16.mxu0 0
      %3053 = vmatmul.mubr.bf16.gmra.mxu0 %v2879
      %v3054 = vpop.f32.mrf.mxu0
      %v3055 = vadd.f32 0.0, %v3054
      %v3056 = vpop.f32.mrf.mxu0
      %v3057 = vpop.f32.mrf.mxu0
      %v3058 = vadd.f32 0.0, %v3057
      %v3059 = vpop.f32.mrf.mxu0
      %3060 = vmatprep.mubr.bf16.mxu0 0
      %3061 = vmatmul.mubr.bf16.gmra.mxu0 %v2882
      %v3062 = vpop.f32.mrf.mxu0
      %v3063 = vadd.f32 0.0, %v3062
      %v3064 = vpop.f32.mrf.mxu0
      %v3065 = vpop.f32.mrf.mxu0
      %v3066 = vadd.f32 0.0, %v3065
      %v3067 = vpop.f32.mrf.mxu0
      %3068 = vmatprep.mubr.bf16.mxu0 0
      %3069 = vmatmul.mubr.bf16.gmra.mxu0 %v2885
      %v3070 = vpop.f32.mrf.mxu0
      %v3071 = vadd.f32 0.0, %v3070
      %v3072 = vpop.f32.mrf.mxu0
      %v3073 = vpop.f32.mrf.mxu0
      %v3074 = vadd.f32 0.0, %v3073
      %v3075 = vpop.f32.mrf.mxu0
      %3076 = vmatprep.mubr.bf16.mxu0 0
      %3077 = vmatmul.mubr.bf16.gmra.mxu0 %v2888
      %v3078 = vpop.f32.mrf.mxu0
      %v3079 = vadd.f32 0.0, %v3078
      %v3080 = vpop.f32.mrf.mxu0
      %v3081 = vpop.f32.mrf.mxu0
      %v3082 = vadd.f32 0.0, %v3081
      %v3083 = vpop.f32.mrf.mxu0
      %3084 = vmatprep.mubr.bf16.mxu0 0
      %3085 = vmatmul.mubr.bf16.gmra.mxu0 %v2891
      %v3086 = vpop.f32.mrf.mxu0
      %v3087 = vadd.f32 0.0, %v3086
      %v3088 = vpop.f32.mrf.mxu0
      %v3089 = vpop.f32.mrf.mxu0
      %v3090 = vadd.f32 0.0, %v3089
      %v3091 = vpop.f32.mrf.mxu0
      %3092 = vmatprep.mubr.bf16.mxu0 0
      %3093 = vmatmul.mubr.bf16.gmra.mxu0 %v2894
      %v3094 = vpop.f32.mrf.mxu0
      %v3095 = vadd.f32 0.0, %v3094
      %v3096 = vpop.f32.mrf.mxu0
      %v3097 = vpop.f32.mrf.mxu0
      %v3098 = vadd.f32 0.0, %v3097
      %v3099 = vpop.f32.mrf.mxu0
      %3100 = vmatprep.mubr.bf16.mxu0 0
      %3101 = vmatmul.mubr.bf16.gmra.mxu0 %v2897
      %v3102 = vpop.f32.mrf.mxu0
      %v3103 = vadd.f32 0.0, %v3102
      %v3104 = vpop.f32.mrf.mxu0
      %v3105 = vpop.f32.mrf.mxu0
      %v3106 = vadd.f32 0.0, %v3105
      %v3107 = vpop.f32.mrf.mxu0
      %3108 = vmatprep.mubr.bf16.mxu0 0
      %3109 = vmatmul.mubr.bf16.gmra.mxu0 %v2900
      %v3110 = vpop.f32.mrf.mxu0
      %v3111 = vadd.f32 0.0, %v3110
      %v3112 = vpop.f32.mrf.mxu0
      %v3113 = vpop.f32.mrf.mxu0
      %v3114 = vadd.f32 0.0, %v3113
      %v3115 = vpop.f32.mrf.mxu0
      %3116 = vmatprep.mubr.bf16.mxu0 0
      %3117 = vmatmul.mubr.bf16.gmra.mxu0 %v2903
      %v3118 = vpop.f32.mrf.mxu0
      %v3119 = vadd.f32 0.0, %v3118
      %v3120 = vpop.f32.mrf.mxu0
      %v3121 = vpop.f32.mrf.mxu0
      %v3122 = vpop.f32.mrf.mxu0
      %3123 = vdwg.mxu0
      %v3124 = vadd.f32 %v2721, %v2943
      %v3125 = vadd.f32 %v2722, %v2946
      %v3126 = vadd.f32 %v2723, %v2951
      %v3127 = vadd.f32 %v2724, %v2954
      %v3128 = vadd.f32 %v2725, %v2959
      %v3129 = vadd.f32 %v2726, %v2962
      %v3130 = vadd.f32 %v2727, %v2967
      %v3131 = vadd.f32 %v2728, %v2970
      %v3132 = vadd.f32 %v2729, %v2975
      %v3133 = vadd.f32 %v2730, %v2978
      %v3134 = vadd.f32 %v2731, %v2983
      %v3135 = vadd.f32 %v2732, %v2986
      %v3136 = vadd.f32 %v2733, %v2991
      %v3137 = vadd.f32 %v2734, %v2994
      %v3138 = vadd.f32 %v2735, %v2999
      %v3139 = vadd.f32 %v2736, %v3002
      %v3140 = vadd.f32 %v2737, %v3007
      %v3141 = vadd.f32 %v2738, %v3010
      %v3142 = vadd.f32 %v2739, %v3015
      %v3143 = vadd.f32 %v2740, %v3018
      %v3144 = vadd.f32 %v2741, %v3023
      %v3145 = vadd.f32 %v2742, %v3026
      %v3146 = vadd.f32 %v2743, %v3031
      %v3147 = vadd.f32 %v2744, %v3034
      %v3148 = vadd.f32 %v2745, %v3039
      %v3149 = vadd.f32 %v2746, %v3042
      %v3150 = vadd.f32 %v2747, %v3047
      %v3151 = vadd.f32 %v2748, %v3050
      %v3152 = vadd.f32 %v2749, %v3055
      %v3153 = vadd.f32 %v2750, %v3058
      %v3154 = vadd.f32 %v2751, %v3063
      %v3155 = vadd.f32 %v2752, %v3066
      %v3156 = vadd.f32 %v2753, %v3071
      %v3157 = vadd.f32 %v2754, %v3074
      %v3158 = vadd.f32 %v2755, %v3079
      %v3159 = vadd.f32 %v2756, %v3082
      %v3160 = vadd.f32 %v2757, %v3087
      %v3161 = vadd.f32 %v2758, %v3090
      %v3162 = vadd.f32 %v2759, %v3095
      %v3163 = vadd.f32 %v2760, %v3098
      %v3164 = vadd.f32 %v2761, %v3103
      %v3165 = vadd.f32 %v2762, %v3106
      %v3166 = vadd.f32 %v2763, %v3111
      %v3167 = vadd.f32 %v2764, %v3114
      %v3168 = vadd.f32 %v2765, %v3119
      %v3169 = vld [vmem:[#allocation2 + $0x25] sm:$0xff]
      %v3170 = vld [vmem:[#allocation2 + $0x2d] sm:$0xff]
      %v3171 = vld [vmem:[#allocation2 + $0x35] sm:$0xff]
      %v3172 = vld [vmem:[#allocation2 + $0x3d] sm:$0xff]
      %v3173 = vld [vmem:[#allocation2 + $0x45] sm:$0xff]
      %v3174 = vld [vmem:[#allocation2 + $0x4d] sm:$0xff]
      %v3175 = vld [vmem:[#allocation2 + $0x55] sm:$0xff]
      %v3176 = vld [vmem:[#allocation2 + $0x5d] sm:$0xff]
      %v3177 = vld [vmem:[#allocation2 + $0x65] sm:$0xff]
      %v3178 = vld [vmem:[#allocation2 + $0x6d] sm:$0xff]
      %v3179 = vld [vmem:[#allocation2 + $0x75] sm:$0xff]
      %v3180 = vld [vmem:[#allocation2 + $0x7d] sm:$0xff]
      %v3181 = vld [vmem:[#allocation2 + $0x85] sm:$0xff]
      %v3182 = vld [vmem:[#allocation2 + $0x8d] sm:$0xff]
      %v3183 = vld [vmem:[#allocation2 + $0x95] sm:$0xff]
      %v3184 = vld [vmem:[#allocation2 + $0x9d] sm:$0xff]
      %v3185 = vld [vmem:[#allocation2 + $0xa5] sm:$0xff]
      %v3186 = vld [vmem:[#allocation2 + $0xad] sm:$0xff]
      %v3187 = vld [vmem:[#allocation2 + $0xb5] sm:$0xff]
      %v3188 = vld [vmem:[#allocation2 + $0xbd] sm:$0xff]
      %v3189 = vld [vmem:[#allocation2 + $0xc5] sm:$0xff]
      %v3190 = vld [vmem:[#allocation2 + $0xcd] sm:$0xff]
      %v3191 = vld [vmem:[#allocation2 + $0xd5] sm:$0xff]
      %v3192 = vld [vmem:[#allocation2 + $0xdd] sm:$0xff]
      %v3193 = vld [vmem:[#allocation2 + $0xe5] sm:$0xff]
      %v3194 = vld [vmem:[#allocation2 + $0xed] sm:$0xff]
      %v3195 = vld [vmem:[#allocation2 + $0xf5] sm:$0xff]
      %v3196 = vld [vmem:[#allocation2 + $0xfd] sm:$0xff]
      %v3197 = vld [vmem:[#allocation2 + $0x105] sm:$0xff]
      %v3198 = vld [vmem:[#allocation2 + $0x10d] sm:$0xff]
      %v3199 = vld [vmem:[#allocation2 + $0x115] sm:$0xff]
      %v3200 = vld [vmem:[#allocation2 + $0x11d] sm:$0xff]
      %v3201 = vld [vmem:[#allocation2 + $0x125] sm:$0xff]
      %v3202 = vld [vmem:[#allocation2 + $0x12d] sm:$0xff]
      %v3203 = vld [vmem:[#allocation2 + $0x135] sm:$0xff]
      %v3204 = vld [vmem:[#allocation2 + $0x13d] sm:$0xff]
      %v3205 = vld [vmem:[#allocation2 + $0x145] sm:$0xff]
      %v3206 = vld [vmem:[#allocation2 + $0x14d] sm:$0xff]
      %v3207 = vld [vmem:[#allocation2 + $0x155] sm:$0xff]
      %v3208 = vld [vmem:[#allocation2 + $0x15d] sm:$0xff]
      %v3209 = vld [vmem:[#allocation2 + $0x165] sm:$0xff]
      %v3210 = vld [vmem:[#allocation2 + $0x16d] sm:$0xff]
      %v3211 = vld [vmem:[#allocation2 + $0x175] sm:$0xff]
      %v3212 = vld [vmem:[#allocation2 + $0x17d] sm:$0xff]
      %v3213 = vld [vmem:[#allocation2 + $0x185] sm:$0xff]
      %v3214 = vpack.c.bf16 %v3170, %v3169
      %v3215 = vpack.c.bf16 %v3172, %v3171
      %v3216 = vpack.c.bf16 %v3174, %v3173
      %v3217 = vpack.c.bf16 %v3176, %v3175
      %v3218 = vpack.c.bf16 %v3178, %v3177
      %v3219 = vpack.c.bf16 %v3180, %v3179
      %v3220 = vpack.c.bf16 %v3182, %v3181
      %v3221 = vpack.c.bf16 %v3184, %v3183
      %v3222 = vpack.c.bf16 %v3186, %v3185
      %v3223 = vpack.c.bf16 %v3188, %v3187
      %v3224 = vpack.c.bf16 %v3190, %v3189
      %v3225 = vpack.c.bf16 %v3192, %v3191
      %v3226 = vpack.c.bf16 %v3194, %v3193
      %v3227 = vpack.c.bf16 %v3196, %v3195
      %v3228 = vpack.c.bf16 %v3198, %v3197
      %v3229 = vpack.c.bf16 %v3200, %v3199
      %v3230 = vpack.c.bf16 %v3202, %v3201
      %v3231 = vpack.c.bf16 %v3204, %v3203
      %v3232 = vpack.c.bf16 %v3206, %v3205
      %v3233 = vpack.c.bf16 %v3208, %v3207
      %v3234 = vpack.c.bf16 %v3210, %v3209
      %v3235 = vpack.c.bf16 %v3212, %v3211
      %v3236 = vpack.c.bf16 %v3213, %v3213
      %s3237 = scalar_lea.vmem %s2, 14
      %v3238 = vld [vmem:[%s3237] sm:$0x3]
      %v3240 = vsel %vm377, %v3214, 0
      %v3243 = vsel %vm377, %v3215, 0
      %v3246 = vsel %vm377, %v3216, 0
      %v3249 = vsel %vm377, %v3217, 0
      %v3252 = vsel %vm377, %v3218, 0
      %v3255 = vsel %vm377, %v3219, 0
      %v3258 = vsel %vm377, %v3220, 0
      %v3261 = vsel %vm377, %v3221, 0
      %v3264 = vsel %vm377, %v3222, 0
      %v3267 = vsel %vm377, %v3223, 0
      %v3270 = vsel %vm377, %v3224, 0
      %v3273 = vsel %vm377, %v3225, 0
      %v3276 = vsel %vm377, %v3226, 0
      %v3279 = vsel %vm377, %v3227, 0
      %v3282 = vsel %vm377, %v3228, 0
      %v3285 = vsel %vm377, %v3229, 0
      %v3288 = vsel %vm377, %v3230, 0
      %v3291 = vsel %vm377, %v3231, 0
      %v3294 = vsel %vm377, %v3232, 0
      %v3297 = vsel %vm377, %v3233, 0
      %v3300 = vsel %vm377, %v3234, 0
      %v3303 = vsel %vm377, %v3235, 0
      %v3306 = vsel %vm377, %v3236, 0
      %v3309 = vsel %vm646, %v3238, 0
      %3311 = vmatprep.subr.bf16.mxu0 0
      %3312 = vmatpush1.bf16.msra.mxu0 0
      %3313 = vmatprep.subr.bf16.mxu0 0
      %3314 = vmatpush1.bf16.msra.mxu0 0
      %3315 = vmatprep.subr.bf16.mxu0 0
      %3316 = vmatpush1.bf16.msra.mxu0 0
      %3317 = vmatprep.subr.bf16.mxu0 0
      %3318 = vmatpush1.bf16.msra.mxu0 0
      %3319 = vmatprep.subr.bf16.mxu0 0
      %3320 = vmatpush1.bf16.msra.mxu0 0
      %3321 = vmatprep.subr.bf16.mxu0 0
      %3322 = vmatpush1.bf16.msra.mxu0 0
      %3323 = vmatprep.subr.bf16.mxu0 0
      %3324 = vmatpush1.bf16.msra.mxu0 0
      %3325 = vmatprep.subr.bf16.mxu0 0
      %3326 = vmatpush1.bf16.msra.mxu0 %v3309
      %3327 = vmatprep.subr.bf16.mxu0 0
      %3328 = vmatpush2.bf16.msra.mxu0 0
      %3329 = vmatprep.subr.bf16.mxu0 0
      %3330 = vmatpush2.bf16.msra.mxu0 0
      %3331 = vmatprep.subr.bf16.mxu0 0
      %3332 = vmatpush2.bf16.msra.mxu0 0
      %3333 = vmatprep.subr.bf16.mxu0 0
      %3334 = vmatpush2.bf16.msra.mxu0 0
      %3335 = vmatprep.subr.bf16.mxu0 0
      %3336 = vmatpush2.bf16.msra.mxu0 0
      %3337 = vmatprep.subr.bf16.mxu0 0
      %3338 = vmatpush2.bf16.msra.mxu0 0
      %3339 = vmatprep.subr.bf16.mxu0 0
      %3340 = vmatpush2.bf16.msra.mxu0 0
      %3341 = vmatprep.subr.bf16.mxu0 0
      %3342 = vmatpush2.bf16.msra.mxu0 0
      %3343 = vmatprep.mubr.bf16.mxu0 0
      %3344 = vmatmul.mubr.bf16.gmra.mxu0 %v3240
      %v3345 = vpop.f32.mrf.mxu0
      %v3346 = vadd.f32 0.0, %v3345
      %v3347 = vpop.f32.mrf.mxu0
      %v3348 = vpop.f32.mrf.mxu0
      %v3349 = vadd.f32 0.0, %v3348
      %v3350 = vpop.f32.mrf.mxu0
      %3351 = vmatprep.mubr.bf16.mxu0 0
      %3352 = vmatmul.mubr.bf16.gmra.mxu0 %v3243
      %v3353 = vpop.f32.mrf.mxu0
      %v3354 = vadd.f32 0.0, %v3353
      %v3355 = vpop.f32.mrf.mxu0
      %v3356 = vpop.f32.mrf.mxu0
      %v3357 = vadd.f32 0.0, %v3356
      %v3358 = vpop.f32.mrf.mxu0
      %3359 = vmatprep.mubr.bf16.mxu0 0
      %3360 = vmatmul.mubr.bf16.gmra.mxu0 %v3246
      %v3361 = vpop.f32.mrf.mxu0
      %v3362 = vadd.f32 0.0, %v3361
      %v3363 = vpop.f32.mrf.mxu0
      %v3364 = vpop.f32.mrf.mxu0
      %v3365 = vadd.f32 0.0, %v3364
      %v3366 = vpop.f32.mrf.mxu0
      %3367 = vmatprep.mubr.bf16.mxu0 0
      %3368 = vmatmul.mubr.bf16.gmra.mxu0 %v3249
      %v3369 = vpop.f32.mrf.mxu0
      %v3370 = vadd.f32 0.0, %v3369
      %v3371 = vpop.f32.mrf.mxu0
      %v3372 = vpop.f32.mrf.mxu0
      %v3373 = vadd.f32 0.0, %v3372
      %v3374 = vpop.f32.mrf.mxu0
      %3375 = vmatprep.mubr.bf16.mxu0 0
      %3376 = vmatmul.mubr.bf16.gmra.mxu0 %v3252
      %v3377 = vpop.f32.mrf.mxu0
      %v3378 = vadd.f32 0.0, %v3377
      %v3379 = vpop.f32.mrf.mxu0
      %v3380 = vpop.f32.mrf.mxu0
      %v3381 = vadd.f32 0.0, %v3380
      %v3382 = vpop.f32.mrf.mxu0
      %3383 = vmatprep.mubr.bf16.mxu0 0
      %3384 = vmatmul.mubr.bf16.gmra.mxu0 %v3255
      %v3385 = vpop.f32.mrf.mxu0
      %v3386 = vadd.f32 0.0, %v3385
      %v3387 = vpop.f32.mrf.mxu0
      %v3388 = vpop.f32.mrf.mxu0
      %v3389 = vadd.f32 0.0, %v3388
      %v3390 = vpop.f32.mrf.mxu0
      %3391 = vmatprep.mubr.bf16.mxu0 0
      %3392 = vmatmul.mubr.bf16.gmra.mxu0 %v3258
      %v3393 = vpop.f32.mrf.mxu0
      %v3394 = vadd.f32 0.0, %v3393
      %v3395 = vpop.f32.mrf.mxu0
      %v3396 = vpop.f32.mrf.mxu0
      %v3397 = vadd.f32 0.0, %v3396
      %v3398 = vpop.f32.mrf.mxu0
      %3399 = vmatprep.mubr.bf16.mxu0 0
      %3400 = vmatmul.mubr.bf16.gmra.mxu0 %v3261
      %v3401 = vpop.f32.mrf.mxu0
      %v3402 = vadd.f32 0.0, %v3401
      %v3403 = vpop.f32.mrf.mxu0
      %v3404 = vpop.f32.mrf.mxu0
      %v3405 = vadd.f32 0.0, %v3404
      %v3406 = vpop.f32.mrf.mxu0
      %3407 = vmatprep.mubr.bf16.mxu0 0
      %3408 = vmatmul.mubr.bf16.gmra.mxu0 %v3264
      %v3409 = vpop.f32.mrf.mxu0
      %v3410 = vadd.f32 0.0, %v3409
      %v3411 = vpop.f32.mrf.mxu0
      %v3412 = vpop.f32.mrf.mxu0
      %v3413 = vadd.f32 0.0, %v3412
      %v3414 = vpop.f32.mrf.mxu0
      %3415 = vmatprep.mubr.bf16.mxu0 0
      %3416 = vmatmul.mubr.bf16.gmra.mxu0 %v3267
      %v3417 = vpop.f32.mrf.mxu0
      %v3418 = vadd.f32 0.0, %v3417
      %v3419 = vpop.f32.mrf.mxu0
      %v3420 = vpop.f32.mrf.mxu0
      %v3421 = vadd.f32 0.0, %v3420
      %v3422 = vpop.f32.mrf.mxu0
      %3423 = vmatprep.mubr.bf16.mxu0 0
      %3424 = vmatmul.mubr.bf16.gmra.mxu0 %v3270
      %v3425 = vpop.f32.mrf.mxu0
      %v3426 = vadd.f32 0.0, %v3425
      %v3427 = vpop.f32.mrf.mxu0
      %v3428 = vpop.f32.mrf.mxu0
      %v3429 = vadd.f32 0.0, %v3428
      %v3430 = vpop.f32.mrf.mxu0
      %3431 = vmatprep.mubr.bf16.mxu0 0
      %3432 = vmatmul.mubr.bf16.gmra.mxu0 %v3273
      %v3433 = vpop.f32.mrf.mxu0
      %v3434 = vadd.f32 0.0, %v3433
      %v3435 = vpop.f32.mrf.mxu0
      %v3436 = vpop.f32.mrf.mxu0
      %v3437 = vadd.f32 0.0, %v3436
      %v3438 = vpop.f32.mrf.mxu0
      %3439 = vmatprep.mubr.bf16.mxu0 0
      %3440 = vmatmul.mubr.bf16.gmra.mxu0 %v3276
      %v3441 = vpop.f32.mrf.mxu0
      %v3442 = vadd.f32 0.0, %v3441
      %v3443 = vpop.f32.mrf.mxu0
      %v3444 = vpop.f32.mrf.mxu0
      %v3445 = vadd.f32 0.0, %v3444
      %v3446 = vpop.f32.mrf.mxu0
      %3447 = vmatprep.mubr.bf16.mxu0 0
      %3448 = vmatmul.mubr.bf16.gmra.mxu0 %v3279
      %v3449 = vpop.f32.mrf.mxu0
      %v3450 = vadd.f32 0.0, %v3449
      %v3451 = vpop.f32.mrf.mxu0
      %v3452 = vpop.f32.mrf.mxu0
      %v3453 = vadd.f32 0.0, %v3452
      %v3454 = vpop.f32.mrf.mxu0
      %3455 = vmatprep.mubr.bf16.mxu0 0
      %3456 = vmatmul.mubr.bf16.gmra.mxu0 %v3282
      %v3457 = vpop.f32.mrf.mxu0
      %v3458 = vadd.f32 0.0, %v3457
      %v3459 = vpop.f32.mrf.mxu0
      %v3460 = vpop.f32.mrf.mxu0
      %v3461 = vadd.f32 0.0, %v3460
      %v3462 = vpop.f32.mrf.mxu0
      %3463 = vmatprep.mubr.bf16.mxu0 0
      %3464 = vmatmul.mubr.bf16.gmra.mxu0 %v3285
      %v3465 = vpop.f32.mrf.mxu0
      %v3466 = vadd.f32 0.0, %v3465
      %v3467 = vpop.f32.mrf.mxu0
      %v3468 = vpop.f32.mrf.mxu0
      %v3469 = vadd.f32 0.0, %v3468
      %v3470 = vpop.f32.mrf.mxu0
      %3471 = vmatprep.mubr.bf16.mxu0 0
      %3472 = vmatmul.mubr.bf16.gmra.mxu0 %v3288
      %v3473 = vpop.f32.mrf.mxu0
      %v3474 = vadd.f32 0.0, %v3473
      %v3475 = vpop.f32.mrf.mxu0
      %v3476 = vpop.f32.mrf.mxu0
      %v3477 = vadd.f32 0.0, %v3476
      %v3478 = vpop.f32.mrf.mxu0
      %3479 = vmatprep.mubr.bf16.mxu0 0
      %3480 = vmatmul.mubr.bf16.gmra.mxu0 %v3291
      %v3481 = vpop.f32.mrf.mxu0
      %v3482 = vadd.f32 0.0, %v3481
      %v3483 = vpop.f32.mrf.mxu0
      %v3484 = vpop.f32.mrf.mxu0
      %v3485 = vadd.f32 0.0, %v3484
      %v3486 = vpop.f32.mrf.mxu0
      %3487 = vmatprep.mubr.bf16.mxu0 0
      %3488 = vmatmul.mubr.bf16.gmra.mxu0 %v3294
      %v3489 = vpop.f32.mrf.mxu0
      %v3490 = vadd.f32 0.0, %v3489
      %v3491 = vpop.f32.mrf.mxu0
      %v3492 = vpop.f32.mrf.mxu0
      %v3493 = vadd.f32 0.0, %v3492
      %v3494 = vpop.f32.mrf.mxu0
      %3495 = vmatprep.mubr.bf16.mxu0 0
      %3496 = vmatmul.mubr.bf16.gmra.mxu0 %v3297
      %v3497 = vpop.f32.mrf.mxu0
      %v3498 = vadd.f32 0.0, %v3497
      %v3499 = vpop.f32.mrf.mxu0
      %v3500 = vpop.f32.mrf.mxu0
      %v3501 = vadd.f32 0.0, %v3500
      %v3502 = vpop.f32.mrf.mxu0
      %3503 = vmatprep.mubr.bf16.mxu0 0
      %3504 = vmatmul.mubr.bf16.gmra.mxu0 %v3300
      %v3505 = vpop.f32.mrf.mxu0
      %v3506 = vadd.f32 0.0, %v3505
      %v3507 = vpop.f32.mrf.mxu0
      %v3508 = vpop.f32.mrf.mxu0
      %v3509 = vadd.f32 0.0, %v3508
      %v3510 = vpop.f32.mrf.mxu0
      %3511 = vmatprep.mubr.bf16.mxu0 0
      %3512 = vmatmul.mubr.bf16.gmra.mxu0 %v3303
      %v3513 = vpop.f32.mrf.mxu0
      %v3514 = vadd.f32 0.0, %v3513
      %v3515 = vpop.f32.mrf.mxu0
      %v3516 = vpop.f32.mrf.mxu0
      %v3517 = vadd.f32 0.0, %v3516
      %v3518 = vpop.f32.mrf.mxu0
      %3519 = vmatprep.mubr.bf16.mxu0 0
      %3520 = vmatmul.mubr.bf16.gmra.mxu0 %v3306
      %v3521 = vpop.f32.mrf.mxu0
      %v3522 = vadd.f32 0.0, %v3521
      %v3523 = vpop.f32.mrf.mxu0
      %v3524 = vpop.f32.mrf.mxu0
      %v3525 = vpop.f32.mrf.mxu0
      %3526 = vdwg.mxu0
      %v3527 = vadd.f32 %v3124, %v3346
      %v3528 = vadd.f32 %v3125, %v3349
      %v3529 = vadd.f32 %v3126, %v3354
      %v3530 = vadd.f32 %v3127, %v3357
      %v3531 = vadd.f32 %v3128, %v3362
      %v3532 = vadd.f32 %v3129, %v3365
      %v3533 = vadd.f32 %v3130, %v3370
      %v3534 = vadd.f32 %v3131, %v3373
      %v3535 = vadd.f32 %v3132, %v3378
      %v3536 = vadd.f32 %v3133, %v3381
      %v3537 = vadd.f32 %v3134, %v3386
      %v3538 = vadd.f32 %v3135, %v3389
      %v3539 = vadd.f32 %v3136, %v3394
      %v3540 = vadd.f32 %v3137, %v3397
      %v3541 = vadd.f32 %v3138, %v3402
      %v3542 = vadd.f32 %v3139, %v3405
      %v3543 = vadd.f32 %v3140, %v3410
      %v3544 = vadd.f32 %v3141, %v3413
      %v3545 = vadd.f32 %v3142, %v3418
      %v3546 = vadd.f32 %v3143, %v3421
      %v3547 = vadd.f32 %v3144, %v3426
      %v3548 = vadd.f32 %v3145, %v3429
      %v3549 = vadd.f32 %v3146, %v3434
      %v3550 = vadd.f32 %v3147, %v3437
      %v3551 = vadd.f32 %v3148, %v3442
      %v3552 = vadd.f32 %v3149, %v3445
      %v3553 = vadd.f32 %v3150, %v3450
      %v3554 = vadd.f32 %v3151, %v3453
      %v3555 = vadd.f32 %v3152, %v3458
      %v3556 = vadd.f32 %v3153, %v3461
      %v3557 = vadd.f32 %v3154, %v3466
      %v3558 = vadd.f32 %v3155, %v3469
      %v3559 = vadd.f32 %v3156, %v3474
      %v3560 = vadd.f32 %v3157, %v3477
      %v3561 = vadd.f32 %v3158, %v3482
      %v3562 = vadd.f32 %v3159, %v3485
      %v3563 = vadd.f32 %v3160, %v3490
      %v3564 = vadd.f32 %v3161, %v3493
      %v3565 = vadd.f32 %v3162, %v3498
      %v3566 = vadd.f32 %v3163, %v3501
      %v3567 = vadd.f32 %v3164, %v3506
      %v3568 = vadd.f32 %v3165, %v3509
      %v3569 = vadd.f32 %v3166, %v3514
      %v3570 = vadd.f32 %v3167, %v3517
      %v3571 = vadd.f32 %v3168, %v3522
      %v3572 = vld [vmem:[#allocation2 + $0x26] sm:$0xff]
      %v3573 = vld [vmem:[#allocation2 + $0x2e] sm:$0xff]
      %v3574 = vld [vmem:[#allocation2 + $0x36] sm:$0xff]
      %v3575 = vld [vmem:[#allocation2 + $0x3e] sm:$0xff]
      %v3576 = vld [vmem:[#allocation2 + $0x46] sm:$0xff]
      %v3577 = vld [vmem:[#allocation2 + $0x4e] sm:$0xff]
      %v3578 = vld [vmem:[#allocation2 + $0x56] sm:$0xff]
      %v3579 = vld [vmem:[#allocation2 + $0x5e] sm:$0xff]
      %v3580 = vld [vmem:[#allocation2 + $0x66] sm:$0xff]
      %v3581 = vld [vmem:[#allocation2 + $0x6e] sm:$0xff]
      %v3582 = vld [vmem:[#allocation2 + $0x76] sm:$0xff]
      %v3583 = vld [vmem:[#allocation2 + $0x7e] sm:$0xff]
      %v3584 = vld [vmem:[#allocation2 + $0x86] sm:$0xff]
      %v3585 = vld [vmem:[#allocation2 + $0x8e] sm:$0xff]
      %v3586 = vld [vmem:[#allocation2 + $0x96] sm:$0xff]
      %v3587 = vld [vmem:[#allocation2 + $0x9e] sm:$0xff]
      %v3588 = vld [vmem:[#allocation2 + $0xa6] sm:$0xff]
      %v3589 = vld [vmem:[#allocation2 + $0xae] sm:$0xff]
      %v3590 = vld [vmem:[#allocation2 + $0xb6] sm:$0xff]
      %v3591 = vld [vmem:[#allocation2 + $0xbe] sm:$0xff]
      %v3592 = vld [vmem:[#allocation2 + $0xc6] sm:$0xff]
      %v3593 = vld [vmem:[#allocation2 + $0xce] sm:$0xff]
      %v3594 = vld [vmem:[#allocation2 + $0xd6] sm:$0xff]
      %v3595 = vld [vmem:[#allocation2 + $0xde] sm:$0xff]
      %v3596 = vld [vmem:[#allocation2 + $0xe6] sm:$0xff]
      %v3597 = vld [vmem:[#allocation2 + $0xee] sm:$0xff]
      %v3598 = vld [vmem:[#allocation2 + $0xf6] sm:$0xff]
      %v3599 = vld [vmem:[#allocation2 + $0xfe] sm:$0xff]
      %v3600 = vld [vmem:[#allocation2 + $0x106] sm:$0xff]
      %v3601 = vld [vmem:[#allocation2 + $0x10e] sm:$0xff]
      %v3602 = vld [vmem:[#allocation2 + $0x116] sm:$0xff]
      %v3603 = vld [vmem:[#allocation2 + $0x11e] sm:$0xff]
      %v3604 = vld [vmem:[#allocation2 + $0x126] sm:$0xff]
      %v3605 = vld [vmem:[#allocation2 + $0x12e] sm:$0xff]
      %v3606 = vld [vmem:[#allocation2 + $0x136] sm:$0xff]
      %v3607 = vld [vmem:[#allocation2 + $0x13e] sm:$0xff]
      %v3608 = vld [vmem:[#allocation2 + $0x146] sm:$0xff]
      %v3609 = vld [vmem:[#allocation2 + $0x14e] sm:$0xff]
      %v3610 = vld [vmem:[#allocation2 + $0x156] sm:$0xff]
      %v3611 = vld [vmem:[#allocation2 + $0x15e] sm:$0xff]
      %v3612 = vld [vmem:[#allocation2 + $0x166] sm:$0xff]
      %v3613 = vld [vmem:[#allocation2 + $0x16e] sm:$0xff]
      %v3614 = vld [vmem:[#allocation2 + $0x176] sm:$0xff]
      %v3615 = vld [vmem:[#allocation2 + $0x17e] sm:$0xff]
      %v3616 = vld [vmem:[#allocation2 + $0x186] sm:$0xff]
      %v3617 = vpack.c.bf16 %v3573, %v3572
      %v3618 = vpack.c.bf16 %v3575, %v3574
      %v3619 = vpack.c.bf16 %v3577, %v3576
      %v3620 = vpack.c.bf16 %v3579, %v3578
      %v3621 = vpack.c.bf16 %v3581, %v3580
      %v3622 = vpack.c.bf16 %v3583, %v3582
      %v3623 = vpack.c.bf16 %v3585, %v3584
      %v3624 = vpack.c.bf16 %v3587, %v3586
      %v3625 = vpack.c.bf16 %v3589, %v3588
      %v3626 = vpack.c.bf16 %v3591, %v3590
      %v3627 = vpack.c.bf16 %v3593, %v3592
      %v3628 = vpack.c.bf16 %v3595, %v3594
      %v3629 = vpack.c.bf16 %v3597, %v3596
      %v3630 = vpack.c.bf16 %v3599, %v3598
      %v3631 = vpack.c.bf16 %v3601, %v3600
      %v3632 = vpack.c.bf16 %v3603, %v3602
      %v3633 = vpack.c.bf16 %v3605, %v3604
      %v3634 = vpack.c.bf16 %v3607, %v3606
      %v3635 = vpack.c.bf16 %v3609, %v3608
      %v3636 = vpack.c.bf16 %v3611, %v3610
      %v3637 = vpack.c.bf16 %v3613, %v3612
      %v3638 = vpack.c.bf16 %v3615, %v3614
      %v3639 = vpack.c.bf16 %v3616, %v3616
      %s3640 = scalar_lea.vmem %s2, 16
      %v3641 = vld [vmem:[%s3640] sm:$0x3]
      %v3643 = vsel %vm377, %v3617, 0
      %v3646 = vsel %vm377, %v3618, 0
      %v3649 = vsel %vm377, %v3619, 0
      %v3652 = vsel %vm377, %v3620, 0
      %v3655 = vsel %vm377, %v3621, 0
      %v3658 = vsel %vm377, %v3622, 0
      %v3661 = vsel %vm377, %v3623, 0
      %v3664 = vsel %vm377, %v3624, 0
      %v3667 = vsel %vm377, %v3625, 0
      %v3670 = vsel %vm377, %v3626, 0
      %v3673 = vsel %vm377, %v3627, 0
      %v3676 = vsel %vm377, %v3628, 0
      %v3679 = vsel %vm377, %v3629, 0
      %v3682 = vsel %vm377, %v3630, 0
      %v3685 = vsel %vm377, %v3631, 0
      %v3688 = vsel %vm377, %v3632, 0
      %v3691 = vsel %vm377, %v3633, 0
      %v3694 = vsel %vm377, %v3634, 0
      %v3697 = vsel %vm377, %v3635, 0
      %v3700 = vsel %vm377, %v3636, 0
      %v3703 = vsel %vm377, %v3637, 0
      %v3706 = vsel %vm377, %v3638, 0
      %v3709 = vsel %vm377, %v3639, 0
      %v3712 = vsel %vm646, %v3641, 0
      %3714 = vmatprep.subr.bf16.mxu0 0
      %3715 = vmatpush1.bf16.msra.mxu0 0
      %3716 = vmatprep.subr.bf16.mxu0 0
      %3717 = vmatpush1.bf16.msra.mxu0 0
      %3718 = vmatprep.subr.bf16.mxu0 0
      %3719 = vmatpush1.bf16.msra.mxu0 0
      %3720 = vmatprep.subr.bf16.mxu0 0
      %3721 = vmatpush1.bf16.msra.mxu0 0
      %3722 = vmatprep.subr.bf16.mxu0 0
      %3723 = vmatpush1.bf16.msra.mxu0 0
      %3724 = vmatprep.subr.bf16.mxu0 0
      %3725 = vmatpush1.bf16.msra.mxu0 0
      %3726 = vmatprep.subr.bf16.mxu0 0
      %3727 = vmatpush1.bf16.msra.mxu0 0
      %3728 = vmatprep.subr.bf16.mxu0 0
      %3729 = vmatpush1.bf16.msra.mxu0 %v3712
      %3730 = vmatprep.subr.bf16.mxu0 0
      %3731 = vmatpush2.bf16.msra.mxu0 0
      %3732 = vmatprep.subr.bf16.mxu0 0
      %3733 = vmatpush2.bf16.msra.mxu0 0
      %3734 = vmatprep.subr.bf16.mxu0 0
      %3735 = vmatpush2.bf16.msra.mxu0 0
      %3736 = vmatprep.subr.bf16.mxu0 0
      %3737 = vmatpush2.bf16.msra.mxu0 0
      %3738 = vmatprep.subr.bf16.mxu0 0
      %3739 = vmatpush2.bf16.msra.mxu0 0
      %3740 = vmatprep.subr.bf16.mxu0 0
      %3741 = vmatpush2.bf16.msra.mxu0 0
      %3742 = vmatprep.subr.bf16.mxu0 0
      %3743 = vmatpush2.bf16.msra.mxu0 0
      %3744 = vmatprep.subr.bf16.mxu0 0
      %3745 = vmatpush2.bf16.msra.mxu0 0
      %3746 = vmatprep.mubr.bf16.mxu0 0
      %3747 = vmatmul.mubr.bf16.gmra.mxu0 %v3643
      %v3748 = vpop.f32.mrf.mxu0
      %v3749 = vadd.f32 0.0, %v3748
      %v3750 = vpop.f32.mrf.mxu0
      %v3751 = vpop.f32.mrf.mxu0
      %v3752 = vadd.f32 0.0, %v3751
      %v3753 = vpop.f32.mrf.mxu0
      %3754 = vmatprep.mubr.bf16.mxu0 0
      %3755 = vmatmul.mubr.bf16.gmra.mxu0 %v3646
      %v3756 = vpop.f32.mrf.mxu0
      %v3757 = vadd.f32 0.0, %v3756
      %v3758 = vpop.f32.mrf.mxu0
      %v3759 = vpop.f32.mrf.mxu0
      %v3760 = vadd.f32 0.0, %v3759
      %v3761 = vpop.f32.mrf.mxu0
      %3762 = vmatprep.mubr.bf16.mxu0 0
      %3763 = vmatmul.mubr.bf16.gmra.mxu0 %v3649
      %v3764 = vpop.f32.mrf.mxu0
      %v3765 = vadd.f32 0.0, %v3764
      %v3766 = vpop.f32.mrf.mxu0
      %v3767 = vpop.f32.mrf.mxu0
      %v3768 = vadd.f32 0.0, %v3767
      %v3769 = vpop.f32.mrf.mxu0
      %3770 = vmatprep.mubr.bf16.mxu0 0
      %3771 = vmatmul.mubr.bf16.gmra.mxu0 %v3652
      %v3772 = vpop.f32.mrf.mxu0
      %v3773 = vadd.f32 0.0, %v3772
      %v3774 = vpop.f32.mrf.mxu0
      %v3775 = vpop.f32.mrf.mxu0
      %v3776 = vadd.f32 0.0, %v3775
      %v3777 = vpop.f32.mrf.mxu0
      %3778 = vmatprep.mubr.bf16.mxu0 0
      %3779 = vmatmul.mubr.bf16.gmra.mxu0 %v3655
      %v3780 = vpop.f32.mrf.mxu0
      %v3781 = vadd.f32 0.0, %v3780
      %v3782 = vpop.f32.mrf.mxu0
      %v3783 = vpop.f32.mrf.mxu0
      %v3784 = vadd.f32 0.0, %v3783
      %v3785 = vpop.f32.mrf.mxu0
      %3786 = vmatprep.mubr.bf16.mxu0 0
      %3787 = vmatmul.mubr.bf16.gmra.mxu0 %v3658
      %v3788 = vpop.f32.mrf.mxu0
      %v3789 = vadd.f32 0.0, %v3788
      %v3790 = vpop.f32.mrf.mxu0
      %v3791 = vpop.f32.mrf.mxu0
      %v3792 = vadd.f32 0.0, %v3791
      %v3793 = vpop.f32.mrf.mxu0
      %3794 = vmatprep.mubr.bf16.mxu0 0
      %3795 = vmatmul.mubr.bf16.gmra.mxu0 %v3661
      %v3796 = vpop.f32.mrf.mxu0
      %v3797 = vadd.f32 0.0, %v3796
      %v3798 = vpop.f32.mrf.mxu0
      %v3799 = vpop.f32.mrf.mxu0
      %v3800 = vadd.f32 0.0, %v3799
      %v3801 = vpop.f32.mrf.mxu0
      %3802 = vmatprep.mubr.bf16.mxu0 0
      %3803 = vmatmul.mubr.bf16.gmra.mxu0 %v3664
      %v3804 = vpop.f32.mrf.mxu0
      %v3805 = vadd.f32 0.0, %v3804
      %v3806 = vpop.f32.mrf.mxu0
      %v3807 = vpop.f32.mrf.mxu0
      %v3808 = vadd.f32 0.0, %v3807
      %v3809 = vpop.f32.mrf.mxu0
      %3810 = vmatprep.mubr.bf16.mxu0 0
      %3811 = vmatmul.mubr.bf16.gmra.mxu0 %v3667
      %v3812 = vpop.f32.mrf.mxu0
      %v3813 = vadd.f32 0.0, %v3812
      %v3814 = vpop.f32.mrf.mxu0
      %v3815 = vpop.f32.mrf.mxu0
      %v3816 = vadd.f32 0.0, %v3815
      %v3817 = vpop.f32.mrf.mxu0
      %3818 = vmatprep.mubr.bf16.mxu0 0
      %3819 = vmatmul.mubr.bf16.gmra.mxu0 %v3670
      %v3820 = vpop.f32.mrf.mxu0
      %v3821 = vadd.f32 0.0, %v3820
      %v3822 = vpop.f32.mrf.mxu0
      %v3823 = vpop.f32.mrf.mxu0
      %v3824 = vadd.f32 0.0, %v3823
      %v3825 = vpop.f32.mrf.mxu0
      %3826 = vmatprep.mubr.bf16.mxu0 0
      %3827 = vmatmul.mubr.bf16.gmra.mxu0 %v3673
      %v3828 = vpop.f32.mrf.mxu0
      %v3829 = vadd.f32 0.0, %v3828
      %v3830 = vpop.f32.mrf.mxu0
      %v3831 = vpop.f32.mrf.mxu0
      %v3832 = vadd.f32 0.0, %v3831
      %v3833 = vpop.f32.mrf.mxu0
      %3834 = vmatprep.mubr.bf16.mxu0 0
      %3835 = vmatmul.mubr.bf16.gmra.mxu0 %v3676
      %v3836 = vpop.f32.mrf.mxu0
      %v3837 = vadd.f32 0.0, %v3836
      %v3838 = vpop.f32.mrf.mxu0
      %v3839 = vpop.f32.mrf.mxu0
      %v3840 = vadd.f32 0.0, %v3839
      %v3841 = vpop.f32.mrf.mxu0
      %3842 = vmatprep.mubr.bf16.mxu0 0
      %3843 = vmatmul.mubr.bf16.gmra.mxu0 %v3679
      %v3844 = vpop.f32.mrf.mxu0
      %v3845 = vadd.f32 0.0, %v3844
      %v3846 = vpop.f32.mrf.mxu0
      %v3847 = vpop.f32.mrf.mxu0
      %v3848 = vadd.f32 0.0, %v3847
      %v3849 = vpop.f32.mrf.mxu0
      %3850 = vmatprep.mubr.bf16.mxu0 0
      %3851 = vmatmul.mubr.bf16.gmra.mxu0 %v3682
      %v3852 = vpop.f32.mrf.mxu0
      %v3853 = vadd.f32 0.0, %v3852
      %v3854 = vpop.f32.mrf.mxu0
      %v3855 = vpop.f32.mrf.mxu0
      %v3856 = vadd.f32 0.0, %v3855
      %v3857 = vpop.f32.mrf.mxu0
      %3858 = vmatprep.mubr.bf16.mxu0 0
      %3859 = vmatmul.mubr.bf16.gmra.mxu0 %v3685
      %v3860 = vpop.f32.mrf.mxu0
      %v3861 = vadd.f32 0.0, %v3860
      %v3862 = vpop.f32.mrf.mxu0
      %v3863 = vpop.f32.mrf.mxu0
      %v3864 = vadd.f32 0.0, %v3863
      %v3865 = vpop.f32.mrf.mxu0
      %3866 = vmatprep.mubr.bf16.mxu0 0
      %3867 = vmatmul.mubr.bf16.gmra.mxu0 %v3688
      %v3868 = vpop.f32.mrf.mxu0
      %v3869 = vadd.f32 0.0, %v3868
      %v3870 = vpop.f32.mrf.mxu0
      %v3871 = vpop.f32.mrf.mxu0
      %v3872 = vadd.f32 0.0, %v3871
      %v3873 = vpop.f32.mrf.mxu0
      %3874 = vmatprep.mubr.bf16.mxu0 0
      %3875 = vmatmul.mubr.bf16.gmra.mxu0 %v3691
      %v3876 = vpop.f32.mrf.mxu0
      %v3877 = vadd.f32 0.0, %v3876
      %v3878 = vpop.f32.mrf.mxu0
      %v3879 = vpop.f32.mrf.mxu0
      %v3880 = vadd.f32 0.0, %v3879
      %v3881 = vpop.f32.mrf.mxu0
      %3882 = vmatprep.mubr.bf16.mxu0 0
      %3883 = vmatmul.mubr.bf16.gmra.mxu0 %v3694
      %v3884 = vpop.f32.mrf.mxu0
      %v3885 = vadd.f32 0.0, %v3884
      %v3886 = vpop.f32.mrf.mxu0
      %v3887 = vpop.f32.mrf.mxu0
      %v3888 = vadd.f32 0.0, %v3887
      %v3889 = vpop.f32.mrf.mxu0
      %3890 = vmatprep.mubr.bf16.mxu0 0
      %3891 = vmatmul.mubr.bf16.gmra.mxu0 %v3697
      %v3892 = vpop.f32.mrf.mxu0
      %v3893 = vadd.f32 0.0, %v3892
      %v3894 = vpop.f32.mrf.mxu0
      %v3895 = vpop.f32.mrf.mxu0
      %v3896 = vadd.f32 0.0, %v3895
      %v3897 = vpop.f32.mrf.mxu0
      %3898 = vmatprep.mubr.bf16.mxu0 0
      %3899 = vmatmul.mubr.bf16.gmra.mxu0 %v3700
      %v3900 = vpop.f32.mrf.mxu0
      %v3901 = vadd.f32 0.0, %v3900
      %v3902 = vpop.f32.mrf.mxu0
      %v3903 = vpop.f32.mrf.mxu0
      %v3904 = vadd.f32 0.0, %v3903
      %v3905 = vpop.f32.mrf.mxu0
      %3906 = vmatprep.mubr.bf16.mxu0 0
      %3907 = vmatmul.mubr.bf16.gmra.mxu0 %v3703
      %v3908 = vpop.f32.mrf.mxu0
      %v3909 = vadd.f32 0.0, %v3908
      %v3910 = vpop.f32.mrf.mxu0
      %v3911 = vpop.f32.mrf.mxu0
      %v3912 = vadd.f32 0.0, %v3911
      %v3913 = vpop.f32.mrf.mxu0
      %3914 = vmatprep.mubr.bf16.mxu0 0
      %3915 = vmatmul.mubr.bf16.gmra.mxu0 %v3706
      %v3916 = vpop.f32.mrf.mxu0
      %v3917 = vadd.f32 0.0, %v3916
      %v3918 = vpop.f32.mrf.mxu0
      %v3919 = vpop.f32.mrf.mxu0
      %v3920 = vadd.f32 0.0, %v3919
      %v3921 = vpop.f32.mrf.mxu0
      %3922 = vmatprep.mubr.bf16.mxu0 0
      %3923 = vmatmul.mubr.bf16.gmra.mxu0 %v3709
      %v3924 = vpop.f32.mrf.mxu0
      %v3925 = vadd.f32 0.0, %v3924
      %v3926 = vpop.f32.mrf.mxu0
      %v3927 = vpop.f32.mrf.mxu0
      %v3928 = vpop.f32.mrf.mxu0
      %3929 = vdwg.mxu0
      %v3930 = vadd.f32 %v3527, %v3749
      %v3931 = vadd.f32 %v3528, %v3752
      %v3932 = vadd.f32 %v3529, %v3757
      %v3933 = vadd.f32 %v3530, %v3760
      %v3934 = vadd.f32 %v3531, %v3765
      %v3935 = vadd.f32 %v3532, %v3768
      %v3936 = vadd.f32 %v3533, %v3773
      %v3937 = vadd.f32 %v3534, %v3776
      %v3938 = vadd.f32 %v3535, %v3781
      %v3939 = vadd.f32 %v3536, %v3784
      %v3940 = vadd.f32 %v3537, %v3789
      %v3941 = vadd.f32 %v3538, %v3792
      %v3942 = vadd.f32 %v3539, %v3797
      %v3943 = vadd.f32 %v3540, %v3800
      %v3944 = vadd.f32 %v3541, %v3805
      %v3945 = vadd.f32 %v3542, %v3808
      %v3946 = vadd.f32 %v3543, %v3813
      %v3947 = vadd.f32 %v3544, %v3816
      %v3948 = vadd.f32 %v3545, %v3821
      %v3949 = vadd.f32 %v3546, %v3824
      %v3950 = vadd.f32 %v3547, %v3829
      %v3951 = vadd.f32 %v3548, %v3832
      %v3952 = vadd.f32 %v3549, %v3837
      %v3953 = vadd.f32 %v3550, %v3840
      %v3954 = vadd.f32 %v3551, %v3845
      %v3955 = vadd.f32 %v3552, %v3848
      %v3956 = vadd.f32 %v3553, %v3853
      %v3957 = vadd.f32 %v3554, %v3856
      %v3958 = vadd.f32 %v3555, %v3861
      %v3959 = vadd.f32 %v3556, %v3864
      %v3960 = vadd.f32 %v3557, %v3869
      %v3961 = vadd.f32 %v3558, %v3872
      %v3962 = vadd.f32 %v3559, %v3877
      %v3963 = vadd.f32 %v3560, %v3880
      %v3964 = vadd.f32 %v3561, %v3885
      %v3965 = vadd.f32 %v3562, %v3888
      %v3966 = vadd.f32 %v3563, %v3893
      %v3967 = vadd.f32 %v3564, %v3896
      %v3968 = vadd.f32 %v3565, %v3901
      %v3969 = vadd.f32 %v3566, %v3904
      %v3970 = vadd.f32 %v3567, %v3909
      %v3971 = vadd.f32 %v3568, %v3912
      %v3972 = vadd.f32 %v3569, %v3917
      %v3973 = vadd.f32 %v3570, %v3920
      %v3974 = vadd.f32 %v3571, %v3925
      %v3975 = vld [vmem:[%s3] sm:$0x1]
      %v3977 = vlaneseq
      %v3978 = vshrl.u32 %v3977, 7
      %v3979 = vsub.s32 0, %v3978
      %v3980 = vrot.slane %v3975, %v3979
      %v3982 = vadd.f32 %v3930, %v3980
      %v3983 = vadd.f32 %v3931, %v3980
      %v3984 = vadd.f32 %v3932, %v3980
      %v3985 = vadd.f32 %v3933, %v3980
      %v3986 = vadd.f32 %v3934, %v3980
      %v3987 = vadd.f32 %v3935, %v3980
      %v3988 = vadd.f32 %v3936, %v3980
      %v3989 = vadd.f32 %v3937, %v3980
      %v3990 = vadd.f32 %v3938, %v3980
      %v3991 = vadd.f32 %v3939, %v3980
      %v3992 = vadd.f32 %v3940, %v3980
      %v3993 = vadd.f32 %v3941, %v3980
      %v3994 = vadd.f32 %v3942, %v3980
      %v3995 = vadd.f32 %v3943, %v3980
      %v3996 = vadd.f32 %v3944, %v3980
      %v3997 = vadd.f32 %v3945, %v3980
      %v3998 = vadd.f32 %v3946, %v3980
      %v3999 = vadd.f32 %v3947, %v3980
      %v4000 = vadd.f32 %v3948, %v3980
      %v4001 = vadd.f32 %v3949, %v3980
      %v4002 = vadd.f32 %v3950, %v3980
      %v4003 = vadd.f32 %v3951, %v3980
      %v4004 = vadd.f32 %v3952, %v3980
      %v4005 = vadd.f32 %v3953, %v3980
      %v4006 = vadd.f32 %v3954, %v3980
      %v4007 = vadd.f32 %v3955, %v3980
      %v4008 = vadd.f32 %v3956, %v3980
      %v4009 = vadd.f32 %v3957, %v3980
      %v4010 = vadd.f32 %v3958, %v3980
      %v4011 = vadd.f32 %v3959, %v3980
      %v4012 = vadd.f32 %v3960, %v3980
      %v4013 = vadd.f32 %v3961, %v3980
      %v4014 = vadd.f32 %v3962, %v3980
      %v4015 = vadd.f32 %v3963, %v3980
      %v4016 = vadd.f32 %v3964, %v3980
      %v4017 = vadd.f32 %v3965, %v3980
      %v4018 = vadd.f32 %v3966, %v3980
      %v4019 = vadd.f32 %v3967, %v3980
      %v4020 = vadd.f32 %v3968, %v3980
      %v4021 = vadd.f32 %v3969, %v3980
      %v4022 = vadd.f32 %v3970, %v3980
      %v4023 = vadd.f32 %v3971, %v3980
      %v4024 = vadd.f32 %v3972, %v3980
      %v4025 = vadd.f32 %v3973, %v3980
      %v4026 = vadd.f32 %v3974, %v3980
      %v4027 = vxor.u32 %v3982, 2147483648
      %v4028 = vxor.u32 %v3983, 2147483648
      %v4029 = vxor.u32 %v3984, 2147483648
      %v4030 = vxor.u32 %v3985, 2147483648
      %v4031 = vxor.u32 %v3986, 2147483648
      %v4032 = vxor.u32 %v3987, 2147483648
      %v4033 = vxor.u32 %v3988, 2147483648
      %v4034 = vxor.u32 %v3989, 2147483648
      %v4035 = vxor.u32 %v3990, 2147483648
      %v4036 = vxor.u32 %v3991, 2147483648
      %v4037 = vxor.u32 %v3992, 2147483648
      %v4038 = vxor.u32 %v3993, 2147483648
      %v4039 = vxor.u32 %v3994, 2147483648
      %v4040 = vxor.u32 %v3995, 2147483648
      %v4041 = vxor.u32 %v3996, 2147483648
      %v4042 = vxor.u32 %v3997, 2147483648
      %v4043 = vxor.u32 %v3998, 2147483648
      %v4044 = vxor.u32 %v3999, 2147483648
      %v4045 = vxor.u32 %v4000, 2147483648
      %v4046 = vxor.u32 %v4001, 2147483648
      %v4047 = vxor.u32 %v4002, 2147483648
      %v4048 = vxor.u32 %v4003, 2147483648
      %v4049 = vxor.u32 %v4004, 2147483648
      %v4050 = vxor.u32 %v4005, 2147483648
      %v4051 = vxor.u32 %v4006, 2147483648
      %v4052 = vxor.u32 %v4007, 2147483648
      %v4053 = vxor.u32 %v4008, 2147483648
      %v4054 = vxor.u32 %v4009, 2147483648
      %v4055 = vxor.u32 %v4010, 2147483648
      %v4056 = vxor.u32 %v4011, 2147483648
      %v4057 = vxor.u32 %v4012, 2147483648
      %v4058 = vxor.u32 %v4013, 2147483648
      %v4059 = vxor.u32 %v4014, 2147483648
      %v4060 = vxor.u32 %v4015, 2147483648
      %v4061 = vxor.u32 %v4016, 2147483648
      %v4062 = vxor.u32 %v4017, 2147483648
      %v4063 = vxor.u32 %v4018, 2147483648
      %v4064 = vxor.u32 %v4019, 2147483648
      %v4065 = vxor.u32 %v4020, 2147483648
      %v4066 = vxor.u32 %v4021, 2147483648
      %v4067 = vxor.u32 %v4022, 2147483648
      %v4068 = vxor.u32 %v4023, 2147483648
      %v4069 = vxor.u32 %v4024, 2147483648
      %v4070 = vxor.u32 %v4025, 2147483648
      %v4071 = vxor.u32 %v4026, 2147483648
      %v4072 = vmul.f32 %v4027, 1.442695
      %v4073 = vpow.pop %v4072
      %v4074 = vmul.f32 %v4028, 1.442695
      %v4075 = vpow.pop %v4074
      %v4076 = vmul.f32 %v4029, 1.442695
      %v4077 = vpow.pop %v4076
      %v4078 = vmul.f32 %v4030, 1.442695
      %v4079 = vpow.pop %v4078
      %v4080 = vmul.f32 %v4031, 1.442695
      %v4081 = vpow.pop %v4080
      %v4082 = vmul.f32 %v4032, 1.442695
      %v4083 = vpow.pop %v4082
      %v4084 = vmul.f32 %v4033, 1.442695
      %v4085 = vpow.pop %v4084
      %v4086 = vmul.f32 %v4034, 1.442695
      %v4087 = vpow.pop %v4086
      %v4088 = vmul.f32 %v4035, 1.442695
      %v4089 = vpow.pop %v4088
      %v4090 = vmul.f32 %v4036, 1.442695
      %v4091 = vpow.pop %v4090
      %v4092 = vmul.f32 %v4037, 1.442695
      %v4093 = vpow.pop %v4092
      %v4094 = vmul.f32 %v4038, 1.442695
      %v4095 = vpow.pop %v4094
      %v4096 = vmul.f32 %v4039, 1.442695
      %v4097 = vpow.pop %v4096
      %v4098 = vmul.f32 %v4040, 1.442695
      %v4099 = vpow.pop %v4098
      %v4100 = vmul.f32 %v4041, 1.442695
      %v4101 = vpow.pop %v4100
      %v4102 = vmul.f32 %v4042, 1.442695
      %v4103 = vpow.pop %v4102
      %v4104 = vmul.f32 %v4043, 1.442695
      %v4105 = vpow.pop %v4104
      %v4106 = vmul.f32 %v4044, 1.442695
      %v4107 = vpow.pop %v4106
      %v4108 = vmul.f32 %v4045, 1.442695
      %v4109 = vpow.pop %v4108
      %v4110 = vmul.f32 %v4046, 1.442695
      %v4111 = vpow.pop %v4110
      %v4112 = vmul.f32 %v4047, 1.442695
      %v4113 = vpow.pop %v4112
      %v4114 = vmul.f32 %v4048, 1.442695
      %v4115 = vpow.pop %v4114
      %v4116 = vmul.f32 %v4049, 1.442695
      %v4117 = vpow.pop %v4116
      %v4118 = vmul.f32 %v4050, 1.442695
      %v4119 = vpow.pop %v4118
      %v4120 = vmul.f32 %v4051, 1.442695
      %v4121 = vpow.pop %v4120
      %v4122 = vmul.f32 %v4052, 1.442695
      %v4123 = vpow.pop %v4122
      %v4124 = vmul.f32 %v4053, 1.442695
      %v4125 = vpow.pop %v4124
      %v4126 = vmul.f32 %v4054, 1.442695
      %v4127 = vpow.pop %v4126
      %v4128 = vmul.f32 %v4055, 1.442695
      %v4129 = vpow.pop %v4128
      %v4130 = vmul.f32 %v4056, 1.442695
      %v4131 = vpow.pop %v4130
      %v4132 = vmul.f32 %v4057, 1.442695
      %v4133 = vpow.pop %v4132
      %v4134 = vmul.f32 %v4058, 1.442695
      %v4135 = vpow.pop %v4134
      %v4136 = vmul.f32 %v4059, 1.442695
      %v4137 = vpow.pop %v4136
      %v4138 = vmul.f32 %v4060, 1.442695
      %v4139 = vpow.pop %v4138
      %v4140 = vmul.f32 %v4061, 1.442695
      %v4141 = vpow.pop %v4140
      %v4142 = vmul.f32 %v4062, 1.442695
      %v4143 = vpow.pop %v4142
      %v4144 = vmul.f32 %v4063, 1.442695
      %v4145 = vpow.pop %v4144
      %v4146 = vmul.f32 %v4064, 1.442695
      %v4147 = vpow.pop %v4146
      %v4148 = vmul.f32 %v4065, 1.442695
      %v4149 = vpow.pop %v4148
      %v4150 = vmul.f32 %v4066, 1.442695
      %v4151 = vpow.pop %v4150
      %v4152 = vmul.f32 %v4067, 1.442695
      %v4153 = vpow.pop %v4152
      %v4154 = vmul.f32 %v4068, 1.442695
      %v4155 = vpow.pop %v4154
      %v4156 = vmul.f32 %v4069, 1.442695
      %v4157 = vpow.pop %v4156
      %v4158 = vmul.f32 %v4070, 1.442695
      %v4159 = vpow.pop %v4158
      %v4160 = vmul.f32 %v4071, 1.442695
      %v4161 = vpow.pop %v4160
      %v4162 = vadd.f32 %v4073, 1.0
      %v4163 = vadd.f32 %v4075, 1.0
      %v4164 = vadd.f32 %v4077, 1.0
      %v4165 = vadd.f32 %v4079, 1.0
      %v4166 = vadd.f32 %v4081, 1.0
      %v4167 = vadd.f32 %v4083, 1.0
      %v4168 = vadd.f32 %v4085, 1.0
      %v4169 = vadd.f32 %v4087, 1.0
      %v4170 = vadd.f32 %v4089, 1.0
      %v4171 = vadd.f32 %v4091, 1.0
      %v4172 = vadd.f32 %v4093, 1.0
      %v4173 = vadd.f32 %v4095, 1.0
      %v4174 = vadd.f32 %v4097, 1.0
      %v4175 = vadd.f32 %v4099, 1.0
      %v4176 = vadd.f32 %v4101, 1.0
      %v4177 = vadd.f32 %v4103, 1.0
      %v4178 = vadd.f32 %v4105, 1.0
      %v4179 = vadd.f32 %v4107, 1.0
      %v4180 = vadd.f32 %v4109, 1.0
      %v4181 = vadd.f32 %v4111, 1.0
      %v4182 = vadd.f32 %v4113, 1.0
      %v4183 = vadd.f32 %v4115, 1.0
      %v4184 = vadd.f32 %v4117, 1.0
      %v4185 = vadd.f32 %v4119, 1.0
      %v4186 = vadd.f32 %v4121, 1.0
      %v4187 = vadd.f32 %v4123, 1.0
      %v4188 = vadd.f32 %v4125, 1.0
      %v4189 = vadd.f32 %v4127, 1.0
      %v4190 = vadd.f32 %v4129, 1.0
      %v4191 = vadd.f32 %v4131, 1.0
      %v4192 = vadd.f32 %v4133, 1.0
      %v4193 = vadd.f32 %v4135, 1.0
      %v4194 = vadd.f32 %v4137, 1.0
      %v4195 = vadd.f32 %v4139, 1.0
      %v4196 = vadd.f32 %v4141, 1.0
      %v4197 = vadd.f32 %v4143, 1.0
      %v4198 = vadd.f32 %v4145, 1.0
      %v4199 = vadd.f32 %v4147, 1.0
      %v4200 = vadd.f32 %v4149, 1.0
      %v4201 = vadd.f32 %v4151, 1.0
      %v4202 = vadd.f32 %v4153, 1.0
      %v4203 = vadd.f32 %v4155, 1.0
      %v4204 = vadd.f32 %v4157, 1.0
      %v4205 = vadd.f32 %v4159, 1.0
      %v4206 = vadd.f32 %v4161, 1.0
      %v4207 = vrcp.pop %v4162
      %v4208 = vmul.f32 1.0, %v4207
      %v4209 = vrcp.pop %v4163
      %v4210 = vmul.f32 1.0, %v4209
      %v4211 = vrcp.pop %v4164
      %v4212 = vmul.f32 1.0, %v4211
      %v4213 = vrcp.pop %v4165
      %v4214 = vmul.f32 1.0, %v4213
      %v4215 = vrcp.pop %v4166
      %v4216 = vmul.f32 1.0, %v4215
      %v4217 = vrcp.pop %v4167
      %v4218 = vmul.f32 1.0, %v4217
      %v4219 = vrcp.pop %v4168
      %v4220 = vmul.f32 1.0, %v4219
      %v4221 = vrcp.pop %v4169
      %v4222 = vmul.f32 1.0, %v4221
      %v4223 = vrcp.pop %v4170
      %v4224 = vmul.f32 1.0, %v4223
      %v4225 = vrcp.pop %v4171
      %v4226 = vmul.f32 1.0, %v4225
      %v4227 = vrcp.pop %v4172
      %v4228 = vmul.f32 1.0, %v4227
      %v4229 = vrcp.pop %v4173
      %v4230 = vmul.f32 1.0, %v4229
      %v4231 = vrcp.pop %v4174
      %v4232 = vmul.f32 1.0, %v4231
      %v4233 = vrcp.pop %v4175
      %v4234 = vmul.f32 1.0, %v4233
      %v4235 = vrcp.pop %v4176
      %v4236 = vmul.f32 1.0, %v4235
      %v4237 = vrcp.pop %v4177
      %v4238 = vmul.f32 1.0, %v4237
      %v4239 = vrcp.pop %v4178
      %v4240 = vmul.f32 1.0, %v4239
      %v4241 = vrcp.pop %v4179
      %v4242 = vmul.f32 1.0, %v4241
      %v4243 = vrcp.pop %v4180
      %v4244 = vmul.f32 1.0, %v4243
      %v4245 = vrcp.pop %v4181
      %v4246 = vmul.f32 1.0, %v4245
      %v4247 = vrcp.pop %v4182
      %v4248 = vmul.f32 1.0, %v4247
      %v4249 = vrcp.pop %v4183
      %v4250 = vmul.f32 1.0, %v4249
      %v4251 = vrcp.pop %v4184
      %v4252 = vmul.f32 1.0, %v4251
      %v4253 = vrcp.pop %v4185
      %v4254 = vmul.f32 1.0, %v4253
      %v4255 = vrcp.pop %v4186
      %v4256 = vmul.f32 1.0, %v4255
      %v4257 = vrcp.pop %v4187
      %v4258 = vmul.f32 1.0, %v4257
      %v4259 = vrcp.pop %v4188
      %v4260 = vmul.f32 1.0, %v4259
      %v4261 = vrcp.pop %v4189
      %v4262 = vmul.f32 1.0, %v4261
      %v4263 = vrcp.pop %v4190
      %v4264 = vmul.f32 1.0, %v4263
      %v4265 = vrcp.pop %v4191
      %v4266 = vmul.f32 1.0, %v4265
      %v4267 = vrcp.pop %v4192
      %v4268 = vmul.f32 1.0, %v4267
      %v4269 = vrcp.pop %v4193
      %v4270 = vmul.f32 1.0, %v4269
      %v4271 = vrcp.pop %v4194
      %v4272 = vmul.f32 1.0, %v4271
      %v4273 = vrcp.pop %v4195
      %v4274 = vmul.f32 1.0, %v4273
      %v4275 = vrcp.pop %v4196
      %v4276 = vmul.f32 1.0, %v4275
      %v4277 = vrcp.pop %v4197
      %v4278 = vmul.f32 1.0, %v4277
      %v4279 = vrcp.pop %v4198
      %v4280 = vmul.f32 1.0, %v4279
      %v4281 = vrcp.pop %v4199
      %v4282 = vmul.f32 1.0, %v4281
      %v4283 = vrcp.pop %v4200
      %v4284 = vmul.f32 1.0, %v4283
      %v4285 = vrcp.pop %v4201
      %v4286 = vmul.f32 1.0, %v4285
      %v4287 = vrcp.pop %v4202
      %v4288 = vmul.f32 1.0, %v4287
      %v4289 = vrcp.pop %v4203
      %v4290 = vmul.f32 1.0, %v4289
      %v4291 = vrcp.pop %v4204
      %v4292 = vmul.f32 1.0, %v4291
      %v4293 = vrcp.pop %v4205
      %v4294 = vmul.f32 1.0, %v4293
      %v4295 = vrcp.pop %v4206
      %v4296 = vmul.f32 1.0, %v4295
      %v4297 = vmul.f32 %v3982, %v4208
      %v4298 = vmul.f32 %v3983, %v4210
      %v4299 = vmul.f32 %v3984, %v4212
      %v4300 = vmul.f32 %v3985, %v4214
      %v4301 = vmul.f32 %v3986, %v4216
      %v4302 = vmul.f32 %v3987, %v4218
      %v4303 = vmul.f32 %v3988, %v4220
      %v4304 = vmul.f32 %v3989, %v4222
      %v4305 = vmul.f32 %v3990, %v4224
      %v4306 = vmul.f32 %v3991, %v4226
      %v4307 = vmul.f32 %v3992, %v4228
      %v4308 = vmul.f32 %v3993, %v4230
      %v4309 = vmul.f32 %v3994, %v4232
      %v4310 = vmul.f32 %v3995, %v4234
      %v4311 = vmul.f32 %v3996, %v4236
      %v4312 = vmul.f32 %v3997, %v4238
      %v4313 = vmul.f32 %v3998, %v4240
      %v4314 = vmul.f32 %v3999, %v4242
      %v4315 = vmul.f32 %v4000, %v4244
      %v4316 = vmul.f32 %v4001, %v4246
      %v4317 = vmul.f32 %v4002, %v4248
      %v4318 = vmul.f32 %v4003, %v4250
      %v4319 = vmul.f32 %v4004, %v4252
      %v4320 = vmul.f32 %v4005, %v4254
      %v4321 = vmul.f32 %v4006, %v4256
      %v4322 = vmul.f32 %v4007, %v4258
      %v4323 = vmul.f32 %v4008, %v4260
      %v4324 = vmul.f32 %v4009, %v4262
      %v4325 = vmul.f32 %v4010, %v4264
      %v4326 = vmul.f32 %v4011, %v4266
      %v4327 = vmul.f32 %v4012, %v4268
      %v4328 = vmul.f32 %v4013, %v4270
      %v4329 = vmul.f32 %v4014, %v4272
      %v4330 = vmul.f32 %v4015, %v4274
      %v4331 = vmul.f32 %v4016, %v4276
      %v4332 = vmul.f32 %v4017, %v4278
      %v4333 = vmul.f32 %v4018, %v4280
      %v4334 = vmul.f32 %v4019, %v4282
      %v4335 = vmul.f32 %v4020, %v4284
      %v4336 = vmul.f32 %v4021, %v4286
      %v4337 = vmul.f32 %v4022, %v4288
      %v4338 = vmul.f32 %v4023, %v4290
      %v4339 = vmul.f32 %v4024, %v4292
      %v4340 = vmul.f32 %v4025, %v4294
      %v4341 = vmul.f32 %v4026, %v4296
      %v4342 = vld [vmem:[%s278] sm:$0xf]
      %v4343 = vld [vmem:[%s278 + $0x4] sm:$0xf]
      %v4344 = vld [vmem:[%s278 + $0x8] sm:$0xf]
      %v4345 = vld [vmem:[%s278 + $0xc] sm:$0xf]
      %v4346 = vld [vmem:[%s278 + $0x10] sm:$0xf]
      %v4347 = vld [vmem:[%s278 + $0x14] sm:$0xf]
      %v4348 = vld [vmem:[%s278 + $0x18] sm:$0xf]
      %v4349 = vld [vmem:[%s278 + $0x1c] sm:$0xf]
      %v4350 = vld [vmem:[%s278 + $0x20] sm:$0xf]
      %v4351 = vld [vmem:[%s278 + $0x24] sm:$0xf]
      %v4352 = vld [vmem:[%s278 + $0x28] sm:$0xf]
      %v4353 = vld [vmem:[%s278 + $0x2c] sm:$0xf]
      %v4354 = vld [vmem:[%s278 + $0x30] sm:$0xf]
      %v4355 = vld [vmem:[%s278 + $0x34] sm:$0xf]
      %v4356 = vld [vmem:[%s278 + $0x38] sm:$0xf]
      %v4357 = vld [vmem:[%s278 + $0x3c] sm:$0xf]
      %v4358 = vld [vmem:[%s278 + $0x40] sm:$0xf]
      %v4359 = vld [vmem:[%s278 + $0x44] sm:$0xf]
      %v4360 = vld [vmem:[%s278 + $0x48] sm:$0xf]
      %v4361 = vld [vmem:[%s278 + $0x4c] sm:$0xf]
      %v4362 = vld [vmem:[%s278 + $0x50] sm:$0xf]
      %v4363 = vld [vmem:[%s278 + $0x54] sm:$0xf]
      %v4364 = vld [vmem:[%s278 + $0x58] sm:$0xf]
      %v4365 = vld [vmem:[%s278 + $0x5c] sm:$0xf]
      %v4366 = vld [vmem:[%s278 + $0x60] sm:$0xf]
      %v4367 = vld [vmem:[%s278 + $0x64] sm:$0xf]
      %v4368 = vld [vmem:[%s278 + $0x68] sm:$0xf]
      %v4369 = vld [vmem:[%s278 + $0x6c] sm:$0xf]
      %v4370 = vld [vmem:[%s278 + $0x70] sm:$0xf]
      %v4371 = vld [vmem:[%s278 + $0x74] sm:$0xf]
      %v4372 = vld [vmem:[%s278 + $0x78] sm:$0xf]
      %v4373 = vld [vmem:[%s278 + $0x7c] sm:$0xf]
      %v4374 = vld [vmem:[%s278 + $0x80] sm:$0xf]
      %v4375 = vld [vmem:[%s278 + $0x84] sm:$0xf]
      %v4376 = vld [vmem:[%s278 + $0x88] sm:$0xf]
      %v4377 = vld [vmem:[%s278 + $0x8c] sm:$0xf]
      %v4378 = vld [vmem:[%s278 + $0x90] sm:$0xf]
      %v4379 = vld [vmem:[%s278 + $0x94] sm:$0xf]
      %v4380 = vld [vmem:[%s278 + $0x98] sm:$0xf]
      %v4381 = vld [vmem:[%s278 + $0x9c] sm:$0xf]
      %v4382 = vld [vmem:[%s278 + $0xa0] sm:$0xf]
      %v4383 = vld [vmem:[%s278 + $0xa4] sm:$0xf]
      %v4384 = vld [vmem:[%s278 + $0xa8] sm:$0xf]
      %v4385 = vld [vmem:[%s278 + $0xac] sm:$0xf]
      %v4386 = vld [vmem:[%s278 + $0xb0] sm:$0xf]
      %v4387 = vunpack.c.l.bf16 %v4342
      %v4388 = vunpack.c.l.bf16 %v4343
      %v4389 = vunpack.c.l.bf16 %v4344
      %v4390 = vunpack.c.l.bf16 %v4345
      %v4391 = vunpack.c.l.bf16 %v4346
      %v4392 = vunpack.c.l.bf16 %v4347
      %v4393 = vunpack.c.l.bf16 %v4348
      %v4394 = vunpack.c.l.bf16 %v4349
      %v4395 = vunpack.c.l.bf16 %v4350
      %v4396 = vunpack.c.l.bf16 %v4351
      %v4397 = vunpack.c.l.bf16 %v4352
      %v4398 = vunpack.c.l.bf16 %v4353
      %v4399 = vunpack.c.l.bf16 %v4354
      %v4400 = vunpack.c.l.bf16 %v4355
      %v4401 = vunpack.c.l.bf16 %v4356
      %v4402 = vunpack.c.l.bf16 %v4357
      %v4403 = vunpack.c.l.bf16 %v4358
      %v4404 = vunpack.c.l.bf16 %v4359
      %v4405 = vunpack.c.l.bf16 %v4360
      %v4406 = vunpack.c.l.bf16 %v4361
      %v4407 = vunpack.c.l.bf16 %v4362
      %v4408 = vunpack.c.l.bf16 %v4363
      %v4409 = vunpack.c.l.bf16 %v4364
      %v4410 = vunpack.c.l.bf16 %v4365
      %v4411 = vunpack.c.l.bf16 %v4366
      %v4412 = vunpack.c.l.bf16 %v4367
      %v4413 = vunpack.c.l.bf16 %v4368
      %v4414 = vunpack.c.l.bf16 %v4369
      %v4415 = vunpack.c.l.bf16 %v4370
      %v4416 = vunpack.c.l.bf16 %v4371
      %v4417 = vunpack.c.l.bf16 %v4372
      %v4418 = vunpack.c.l.bf16 %v4373
      %v4419 = vunpack.c.l.bf16 %v4374
      %v4420 = vunpack.c.l.bf16 %v4375
      %v4421 = vunpack.c.l.bf16 %v4376
      %v4422 = vunpack.c.l.bf16 %v4377
      %v4423 = vunpack.c.l.bf16 %v4378
      %v4424 = vunpack.c.l.bf16 %v4379
      %v4425 = vunpack.c.l.bf16 %v4380
      %v4426 = vunpack.c.l.bf16 %v4381
      %v4427 = vunpack.c.l.bf16 %v4382
      %v4428 = vunpack.c.l.bf16 %v4383
      %v4429 = vunpack.c.l.bf16 %v4384
      %v4430 = vunpack.c.l.bf16 %v4385
      %v4431 = vunpack.c.l.bf16 %v4386
      %v4432 = vadd.f32 %v4297, %v4387
      %v4433 = vadd.f32 %v4298, %v4388
      %v4434 = vadd.f32 %v4299, %v4389
      %v4435 = vadd.f32 %v4300, %v4390
      %v4436 = vadd.f32 %v4301, %v4391
      %v4437 = vadd.f32 %v4302, %v4392
      %v4438 = vadd.f32 %v4303, %v4393
      %v4439 = vadd.f32 %v4304, %v4394
      %v4440 = vadd.f32 %v4305, %v4395
      %v4441 = vadd.f32 %v4306, %v4396
      %v4442 = vadd.f32 %v4307, %v4397
      %v4443 = vadd.f32 %v4308, %v4398
      %v4444 = vadd.f32 %v4309, %v4399
      %v4445 = vadd.f32 %v4310, %v4400
      %v4446 = vadd.f32 %v4311, %v4401
      %v4447 = vadd.f32 %v4312, %v4402
      %v4448 = vadd.f32 %v4313, %v4403
      %v4449 = vadd.f32 %v4314, %v4404
      %v4450 = vadd.f32 %v4315, %v4405
      %v4451 = vadd.f32 %v4316, %v4406
      %v4452 = vadd.f32 %v4317, %v4407
      %v4453 = vadd.f32 %v4318, %v4408
      %v4454 = vadd.f32 %v4319, %v4409
      %v4455 = vadd.f32 %v4320, %v4410
      %v4456 = vadd.f32 %v4321, %v4411
      %v4457 = vadd.f32 %v4322, %v4412
      %v4458 = vadd.f32 %v4323, %v4413
      %v4459 = vadd.f32 %v4324, %v4414
      %v4460 = vadd.f32 %v4325, %v4415
      %v4461 = vadd.f32 %v4326, %v4416
      %v4462 = vadd.f32 %v4327, %v4417
      %v4463 = vadd.f32 %v4328, %v4418
      %v4464 = vadd.f32 %v4329, %v4419
      %v4465 = vadd.f32 %v4330, %v4420
      %v4466 = vadd.f32 %v4331, %v4421
      %v4467 = vadd.f32 %v4332, %v4422
      %v4468 = vadd.f32 %v4333, %v4423
      %v4469 = vadd.f32 %v4334, %v4424
      %v4470 = vadd.f32 %v4335, %v4425
      %v4471 = vadd.f32 %v4336, %v4426
      %v4472 = vadd.f32 %v4337, %v4427
      %v4473 = vadd.f32 %v4338, %v4428
      %v4474 = vadd.f32 %v4339, %v4429
      %v4475 = vadd.f32 %v4340, %v4430
      %v4476 = vadd.f32 %v4341, %v4431
      %v4477 = vpack.c.bf16 %v4433, %v4432
      %v4478 = vpack.c.bf16 %v4435, %v4434
      %v4479 = vpack.c.bf16 %v4437, %v4436
      %v4480 = vpack.c.bf16 %v4439, %v4438
      %v4481 = vpack.c.bf16 %v4441, %v4440
      %v4482 = vpack.c.bf16 %v4443, %v4442
      %v4483 = vpack.c.bf16 %v4445, %v4444
      %v4484 = vpack.c.bf16 %v4447, %v4446
      %v4485 = vpack.c.bf16 %v4449, %v4448
      %v4486 = vpack.c.bf16 %v4451, %v4450
      %v4487 = vpack.c.bf16 %v4453, %v4452
      %v4488 = vpack.c.bf16 %v4455, %v4454
      %v4489 = vpack.c.bf16 %v4457, %v4456
      %v4490 = vpack.c.bf16 %v4459, %v4458
      %v4491 = vpack.c.bf16 %v4461, %v4460
      %v4492 = vpack.c.bf16 %v4463, %v4462
      %v4493 = vpack.c.bf16 %v4465, %v4464
      %v4494 = vpack.c.bf16 %v4467, %v4466
      %v4495 = vpack.c.bf16 %v4469, %v4468
      %v4496 = vpack.c.bf16 %v4471, %v4470
      %v4497 = vpack.c.bf16 %v4473, %v4472
      %v4498 = vpack.c.bf16 %v4475, %v4474
      %v4499 = vpack.c.bf16 %v4476, %v4476
      %v4523 = vunpack.c.l.b16 %v4477
      %v4524 = vunpack.c.h.b16 %v4477
      %v4525 = vunpack.c.l.b16 %v4478
      %v4526 = vunpack.c.h.b16 %v4478
      %v4527 = vunpack.c.l.b16 %v4479
      %v4528 = vunpack.c.h.b16 %v4479
      %v4529 = vunpack.c.l.b16 %v4480
      %v4530 = vunpack.c.h.b16 %v4480
      %v4531 = vunpack.c.l.b16 %v4481
      %v4532 = vunpack.c.h.b16 %v4481
      %v4533 = vunpack.c.l.b16 %v4482
      %v4534 = vunpack.c.h.b16 %v4482
      %v4535 = vunpack.c.l.b16 %v4483
      %v4536 = vunpack.c.h.b16 %v4483
      %v4537 = vunpack.c.l.b16 %v4484
      %v4538 = vunpack.c.h.b16 %v4484
      %v4539 = vunpack.c.l.b16 %v4485
      %v4540 = vunpack.c.h.b16 %v4485
      %v4541 = vunpack.c.l.b16 %v4486
      %v4542 = vunpack.c.h.b16 %v4486
      %v4543 = vunpack.c.l.b16 %v4487
      %v4544 = vunpack.c.h.b16 %v4487
      %v4545 = vunpack.c.l.b16 %v4488
      %v4546 = vunpack.c.h.b16 %v4488
      %v4547 = vunpack.c.l.b16 %v4489
      %v4548 = vunpack.c.h.b16 %v4489
      %v4549 = vunpack.c.l.b16 %v4490
      %v4550 = vunpack.c.h.b16 %v4490
      %v4551 = vunpack.c.l.b16 %v4491
      %v4552 = vunpack.c.h.b16 %v4491
      %v4553 = vunpack.c.l.b16 %v4492
      %v4554 = vunpack.c.h.b16 %v4492
      %v4555 = vunpack.c.l.b16 %v4493
      %v4556 = vunpack.c.h.b16 %v4493
      %v4557 = vunpack.c.l.b16 %v4494
      %v4558 = vunpack.c.h.b16 %v4494
      %v4559 = vunpack.c.l.b16 %v4495
      %v4560 = vunpack.c.h.b16 %v4495
      %v4561 = vunpack.c.l.b16 %v4496
      %v4562 = vunpack.c.h.b16 %v4496
      %v4563 = vunpack.c.l.b16 %v4497
      %v4564 = vunpack.c.h.b16 %v4497
      %v4565 = vunpack.c.l.b16 %v4498
      %v4566 = vunpack.c.h.b16 %v4498
      %v4567 = vunpack.c.l.b16 %v4499
      %v4568 = vpack.c.b16 %v4523, %v4523
      %v4569 = vpack.c.b16 %v4524, %v4524
      %v4570 = vpack.c.b16 %v4525, %v4525
      %v4571 = vpack.c.b16 %v4526, %v4526
      %v4572 = vpack.c.b16 %v4527, %v4527
      %v4573 = vpack.c.b16 %v4528, %v4528
      %v4574 = vpack.c.b16 %v4529, %v4529
      %v4575 = vpack.c.b16 %v4530, %v4530
      %v4576 = vpack.c.b16 %v4531, %v4531
      %v4577 = vpack.c.b16 %v4532, %v4532
      %v4578 = vpack.c.b16 %v4533, %v4533
      %v4579 = vpack.c.b16 %v4534, %v4534
      %v4580 = vpack.c.b16 %v4535, %v4535
      %v4581 = vpack.c.b16 %v4536, %v4536
      %v4582 = vpack.c.b16 %v4537, %v4537
      %v4583 = vpack.c.b16 %v4538, %v4538
      %v4584 = vpack.c.b16 %v4539, %v4539
      %v4585 = vpack.c.b16 %v4540, %v4540
      %v4586 = vpack.c.b16 %v4541, %v4541
      %v4587 = vpack.c.b16 %v4542, %v4542
      %v4588 = vpack.c.b16 %v4543, %v4543
      %v4589 = vpack.c.b16 %v4544, %v4544
      %v4590 = vpack.c.b16 %v4545, %v4545
      %v4591 = vpack.c.b16 %v4546, %v4546
      %v4592 = vpack.c.b16 %v4547, %v4547
      %v4593 = vpack.c.b16 %v4548, %v4548
      %v4594 = vpack.c.b16 %v4549, %v4549
      %v4595 = vpack.c.b16 %v4550, %v4550
      %v4596 = vpack.c.b16 %v4551, %v4551
      %v4597 = vpack.c.b16 %v4552, %v4552
      %v4598 = vpack.c.b16 %v4553, %v4553
      %v4599 = vpack.c.b16 %v4554, %v4554
      %v4600 = vpack.c.b16 %v4555, %v4555
      %v4601 = vpack.c.b16 %v4556, %v4556
      %v4602 = vpack.c.b16 %v4557, %v4557
      %v4603 = vpack.c.b16 %v4558, %v4558
      %v4604 = vpack.c.b16 %v4559, %v4559
      %v4605 = vpack.c.b16 %v4560, %v4560
      %v4606 = vpack.c.b16 %v4561, %v4561
      %v4607 = vpack.c.b16 %v4562, %v4562
      %v4608 = vpack.c.b16 %v4563, %v4563
      %v4609 = vpack.c.b16 %v4564, %v4564
      %v4610 = vpack.c.b16 %v4565, %v4565
      %v4611 = vpack.c.b16 %v4566, %v4566
      %v4612 = vpack.c.b16 %v4567, %v4567
      %vm4658 = vcmask 27648
      %4659 = vst.msk [vmem:[%s284] sm:$0xf] %vm4658, %v4568
      %4660 = vst.msk [vmem:[%s284 + $0x4] sm:$0xf] %vm4658, %v4569
      %4661 = vst.msk [vmem:[%s284 + $0x8] sm:$0xf] %vm4658, %v4570
      %4662 = vst.msk [vmem:[%s284 + $0xc] sm:$0xf] %vm4658, %v4571
      %4663 = vst.msk [vmem:[%s284 + $0x10] sm:$0xf] %vm4658, %v4572
      %4664 = vst.msk [vmem:[%s284 + $0x14] sm:$0xf] %vm4658, %v4573
      %4665 = vst.msk [vmem:[%s284 + $0x18] sm:$0xf] %vm4658, %v4574
      %4666 = vst.msk [vmem:[%s284 + $0x1c] sm:$0xf] %vm4658, %v4575
      %4667 = vst.msk [vmem:[%s284 + $0x20] sm:$0xf] %vm4658, %v4576
      %4668 = vst.msk [vmem:[%s284 + $0x24] sm:$0xf] %vm4658, %v4577
      %4669 = vst.msk [vmem:[%s284 + $0x28] sm:$0xf] %vm4658, %v4578
      %4670 = vst.msk [vmem:[%s284 + $0x2c] sm:$0xf] %vm4658, %v4579
      %4671 = vst.msk [vmem:[%s284 + $0x30] sm:$0xf] %vm4658, %v4580
      %4672 = vst.msk [vmem:[%s284 + $0x34] sm:$0xf] %vm4658, %v4581
      %4673 = vst.msk [vmem:[%s284 + $0x38] sm:$0xf] %vm4658, %v4582
      %4674 = vst.msk [vmem:[%s284 + $0x3c] sm:$0xf] %vm4658, %v4583
      %4675 = vst.msk [vmem:[%s284 + $0x40] sm:$0xf] %vm4658, %v4584
      %4676 = vst.msk [vmem:[%s284 + $0x44] sm:$0xf] %vm4658, %v4585
      %4677 = vst.msk [vmem:[%s284 + $0x48] sm:$0xf] %vm4658, %v4586
      %4678 = vst.msk [vmem:[%s284 + $0x4c] sm:$0xf] %vm4658, %v4587
      %4679 = vst.msk [vmem:[%s284 + $0x50] sm:$0xf] %vm4658, %v4588
      %4680 = vst.msk [vmem:[%s284 + $0x54] sm:$0xf] %vm4658, %v4589
      %4681 = vst.msk [vmem:[%s284 + $0x58] sm:$0xf] %vm4658, %v4590
      %4682 = vst.msk [vmem:[%s284 + $0x5c] sm:$0xf] %vm4658, %v4591
      %4683 = vst.msk [vmem:[%s284 + $0x60] sm:$0xf] %vm4658, %v4592
      %4684 = vst.msk [vmem:[%s284 + $0x64] sm:$0xf] %vm4658, %v4593
      %4685 = vst.msk [vmem:[%s284 + $0x68] sm:$0xf] %vm4658, %v4594
      %4686 = vst.msk [vmem:[%s284 + $0x6c] sm:$0xf] %vm4658, %v4595
      %4687 = vst.msk [vmem:[%s284 + $0x70] sm:$0xf] %vm4658, %v4596
      %4688 = vst.msk [vmem:[%s284 + $0x74] sm:$0xf] %vm4658, %v4597
      %4689 = vst.msk [vmem:[%s284 + $0x78] sm:$0xf] %vm4658, %v4598
      %4690 = vst.msk [vmem:[%s284 + $0x7c] sm:$0xf] %vm4658, %v4599
      %4691 = vst.msk [vmem:[%s284 + $0x80] sm:$0xf] %vm4658, %v4600
      %4692 = vst.msk [vmem:[%s284 + $0x84] sm:$0xf] %vm4658, %v4601
      %4693 = vst.msk [vmem:[%s284 + $0x88] sm:$0xf] %vm4658, %v4602
      %4694 = vst.msk [vmem:[%s284 + $0x8c] sm:$0xf] %vm4658, %v4603
      %4695 = vst.msk [vmem:[%s284 + $0x90] sm:$0xf] %vm4658, %v4604
      %4696 = vst.msk [vmem:[%s284 + $0x94] sm:$0xf] %vm4658, %v4605
      %4697 = vst.msk [vmem:[%s284 + $0x98] sm:$0xf] %vm4658, %v4606
      %4698 = vst.msk [vmem:[%s284 + $0x9c] sm:$0xf] %vm4658, %v4607
      %4699 = vst.msk [vmem:[%s284 + $0xa0] sm:$0xf] %vm4658, %v4608
      %4700 = vst.msk [vmem:[%s284 + $0xa4] sm:$0xf] %vm4658, %v4609
      %4701 = vst.msk [vmem:[%s284 + $0xa8] sm:$0xf] %vm4658, %v4610
      %4702 = vst.msk [vmem:[%s284 + $0xac] sm:$0xf] %vm4658, %v4611
      %4703 = vst.msk [vmem:[%s284 + $0xb0] sm:$0xf] %vm4658, %v4612
      %s4704 = smul.u32 45, %s16
      %p4705 = scmp.lt.s32.totalorder %s4704, 89
      %s4706 = scalar_select %p4705, %s4704, 89
      %s4707 = smul.addr %s4706, 4
      %s4708 = scalar_lea.vmem %s5, %s4707
      // Predicated region
      $region41: #{_lambda_.6} parent=39 // pred_check
        %p4709 = pneg %p158
      $region42: #{_lambda_.6} parent=39 // pred_check_branch
        %4711 = sbr.rel (%p4709) target = $region44
      $region43: #{_lambda_.6} parent=39 // pred_region
        %s4712 = smul.u32 45, %s16
      $region44: #{_lambda_.6} parent=39 // pred_fallthru
        _
    $region40: #{_lambda_.6} parent=5 // pred_fallthru
      _
    %p4713 = scmp.le.s32.totalorder 2, %s11
    // Predicated region
    $region45: #{_lambda_.6} parent=5 // pred_check
      %p4714 = pneg %p4713
    $region46: #{_lambda_.6} parent=5 // pred_check_branch
      %4716 = sbr.rel (%p4714) target = $region48
    $region47: #{_lambda_.6} parent=5 // pred_region
      %s4717 = ssub.s32 %s11, 2
      // Predicated region
      $region49: #{_lambda_.6} parent=47 // pred_check
        %p4718 = pneg %p164
      $region50: #{_lambda_.6} parent=47 // pred_check_branch
        %4720 = sbr.rel (%p4718) target = $region52
      $region51: #{_lambda_.6} parent=47 // pred_region
        %s4721 = smul.u32 45, %s17
        %p4722 = scmp.lt.s32.totalorder %s4721, 89
        %s4723 = scalar_select %p4722, %s4721, 89
        %s4724 = smul.addr %s4723, 4
        %s4725 = scalar_lea.vmem %s5, %s4724
      $region52: #{_lambda_.6} parent=47 // pred_fallthru
        _
    $region48: #{_lambda_.6} parent=5 // pred_fallthru
      _
  $region6: #{_lambda_.6} parent=0 // loop_footer
    %s15 = sadd.s32 1, %s11
  $region7: #{_lambda_.6} parent=0 // loop_footer_branch
    %10 = sbr.rel target = $region3
  $region8: #{_lambda_.6} parent=0 // loop_exit
    _

</llo_original>
